<compile_context>
chip_gen: v7x
topology: tpu7x:2x2x1
jax: 0.10.0
libtpu: 0.0.40
codegen_flags: <defaults>
</compile_context>

<pallas_src>
import functools

import jax
import jax.numpy as jnp
from jax.experimental import pallas as pl
from jax.experimental.pallas import tpu as pltpu

BN_EPS = 1e-5
LANE = 128
PADL = 8  # left halo pad inside the conv3x3 VMEM scratch (keeps stores aligned)


def _round_up(x, m):
    return (x + m - 1) // m * m


@functools.lru_cache(maxsize=None)
def _vmem_limit_bytes():
    """Per-generation scoped-VMEM budget (<= ~60% of physical, capped)."""
    cap = 64 * 1024 * 1024  # conservative default = v7x per-core physical VMEM
    try:
        info = pltpu.get_tpu_info()
        cap = int(getattr(info, "vmem_capacity_bytes", cap))
    except Exception:
        pass
    return max(16 * 1024 * 1024, min(int(cap * 0.6), 100 * 1024 * 1024))


def _pick_tile_m(m, bytes_per_row, vmem_budget):
    """Largest row tile dividing M whose double-buffered footprint fits VMEM."""
    max_rows = max(8, vmem_budget // (4 * max(bytes_per_row, 1)))
    ladder = (4096, 2048, 1024, 512, 256, 128, 64, 32, 16, 8)
    for t in ladder:                      # prefer >= 2 grid steps (pipelining /
        if t <= max_rows and m % t == 0 and m // t >= 2:  # 2-core split)
            return t
    for t in ladder:
        if t <= max_rows and m % t == 0:
            return t
    return m


def _compiler_params(semantics):
    return pltpu.CompilerParams(
        dimension_semantics=semantics,
        vmem_limit_bytes=_vmem_limit_bytes(),
    )


# ---------------------------------------------------------------------------
# Kernels
# ---------------------------------------------------------------------------
def _mm_stats_kernel(*refs, apply_norm):
    """[optional fused BN+ReLU of the input] -> (TM,Cin)@(Cin,Cout) -> raw tile
    + per-core, per-sublane (8, Cout) sum / sum-of-squares accumulators."""
    if apply_norm:
        x_ref, scale_ref, shift_ref, w_ref, y_ref, sum_ref, sq_ref = refs
        x = jnp.maximum(
            x_ref[...].astype(jnp.float32) * scale_ref[...] + shift_ref[...],
            0.0).astype(jnp.bfloat16)
    else:
        x_ref, w_ref, y_ref, sum_ref, sq_ref = refs
        x = x_ref[...]

    y = jnp.dot(x, w_ref[...], preferred_element_type=jnp.float32)
    y_ref[...] = y.astype(y_ref.dtype)

    @pl.when(pl.program_id(1) == 0)
    def _():
        sum_ref[...] = jnp.zeros_like(sum_ref)
        sq_ref[...] = jnp.zeros_like(sq_ref)

    tm, c = y.shape
    part = y.reshape(tm // 8, 8, c)          # VALU adds, no per-tile XLU reduce
    sum_ref[...] += jnp.sum(part, axis=0)
    sq_ref[...] += jnp.sum(part * part, axis=0)


def _norm_conv3x3_stats_kernel(yraw_ref, scale_ref, shift_ref, w_ref,
                               out_ref, sum_ref, sq_ref, xpad_ref, col_ref,
                               *, hh, ww, c):
    """Fused: BN1+ReLU in-register, 3x3 conv (stride 1, pad 1) as a single
    K=9C MXU dot via an in-VMEM im2col, + BN2 partial stats.

    yraw_ref : (H, W, C)  raw pre-BN1 stage-1 output (bf16)
    w_ref    : (9*C, C)   tap-major merged weights (bf16)
    out_ref  : (H, W, C)  raw pre-BN2 output (bf16)
    xpad_ref : (H+2, PADL+W+8, C) bf16 VMEM halo scratch (image at [1, PADL])
    col_ref  : (H*W, 9*C) bf16 VMEM im2col scratch
    """
    yn = jnp.maximum(
        yraw_ref[...].astype(jnp.float32) * scale_ref[...] + shift_ref[...],
        0.0).astype(jnp.bfloat16)

    # In-VMEM halo pad: zero the scratch, drop the image at (1, PADL) so the
    # interior store is tile-aligned.  No HBM pad round trip.
    xpad_ref[...] = jnp.zeros_like(xpad_ref)
    xpad_ref[1:hh + 1, PADL:PADL + ww, :] = yn

    # im2col with the 9 taps merged along the contraction dim (K = 9C): one
    # full-K MXU dot instead of 9 half-filled K=C dots + 8 accumulate sweeps.
    for k in range(9):
        dy, dx = k // 3, k % 3
        col_ref[:, k * c:(k + 1) * c] = (
            xpad_ref[dy:dy + hh, PADL - 1 + dx:PADL - 1 + dx + ww, :]
            .reshape(hh * ww, c))

    y = jnp.dot(col_ref[...], w_ref[...], preferred_element_type=jnp.float32)
    out_ref[...] = y.reshape(hh, ww, c).astype(out_ref.dtype)

    @pl.when(pl.program_id(1) == 0)
    def _():
        sum_ref[...] = jnp.zeros_like(sum_ref)
        sq_ref[...] = jnp.zeros_like(sq_ref)

    part = y.reshape(hh * ww // 8, 8, c)
    sum_ref[...] += jnp.sum(part, axis=0)
    sq_ref[...] += jnp.sum(part * part, axis=0)


def _norm_add_relu_kernel(y_ref, res_ref, scale_ref, shift_ref, o_ref):
    y = y_ref[...].astype(jnp.float32) * scale_ref[...] + shift_ref[...]
    o_ref[...] = jnp.maximum(
        y + res_ref[...].astype(jnp.float32), 0.0).astype(o_ref.dtype)


# ---------------------------------------------------------------------------
# pallas_call wrappers
# ---------------------------------------------------------------------------
def _mm_stats(x_bf16, w_bf16, scale, shift, tile_m):
    """conv1x1 (+ optional fused input BN/ReLU) + BN partial stats."""
    m, cin = x_bf16.shape
    cout = w_bf16.shape[1]
    assert m % tile_m == 0 and tile_m % 8 == 0
    tiles = m // tile_m
    nsplit = 2 if tiles % 2 == 0 else 1    # leading parallel axis: v7x 2-TC split
    steps = tiles // nsplit
    apply_norm = scale is not None

    x_spec = pl.BlockSpec((tile_m, cin), lambda p, i: (p * steps + i, 0))
    vec_spec = pl.BlockSpec((1, cin), lambda p, i: (0, 0))
    w_spec = pl.BlockSpec((cin, cout), lambda p, i: (0, 0))
    if apply_norm:
        in_specs = [x_spec, vec_spec, vec_spec, w_spec]
        operands = (x_bf16, scale, shift, w_bf16)
    else:
        in_specs = [x_spec, w_spec]
        operands = (x_bf16, w_bf16)

    return pl.pallas_call(
        functools.partial(_mm_stats_kernel, apply_norm=apply_norm),
        out_shape=(
            jax.ShapeDtypeStruct((m, cout), jnp.bfloat16),
            jax.ShapeDtypeStruct((nsplit, 8, cout), jnp.float32),
            jax.ShapeDtypeStruct((nsplit, 8, cout), jnp.float32),
        ),
        grid=(nsplit, steps),
        in_specs=in_specs,
        out_specs=(
            pl.BlockSpec((tile_m, cout), lambda p, i: (p * steps + i, 0)),
            pl.BlockSpec((None, 8, cout), lambda p, i: (p, 0, 0)),
            pl.BlockSpec((None, 8, cout), lambda p, i: (p, 0, 0)),
        ),
        compiler_params=_compiler_params(("parallel", "arbitrary")),
        cost_estimate=pl.CostEstimate(
            flops=2 * m * cin * cout + 6 * m * cout,
            transcendentals=0,
            bytes_accessed=2 * (m * cin + m * cout + cin * cout) + 64 * cout),
    )(*operands)


def _norm_conv3x3_stats(y1_raw_nhwc, w2_merged, scale, shift):
    """Fused BN1+ReLU -> 3x3 conv (K=9C merged) -> raw y2 + BN2 partial stats."""
    n, hh, ww, c = y1_raw_nhwc.shape
    assert (hh * ww) % 8 == 0
    nsplit = 2 if n % 2 == 0 else 1
    steps = n // nsplit
    wpad = PADL + ww + 8
    # TODO(synk): for large H*W, tile spatially over rows (halo blocks) instead
    # of one whole image per grid step, to bound VMEM and add pipeline depth.
    kernel = functools.partial(_norm_conv3x3_stats_kernel, hh=hh, ww=ww, c=c)
    return pl.pallas_call(
        kernel,
        out_shape=(
            jax.ShapeDtypeStruct((n, hh, ww, c), jnp.bfloat16),
            jax.ShapeDtypeStruct((nsplit, 8, c), jnp.float32),
            jax.ShapeDtypeStruct((nsplit, 8, c), jnp.float32),
        ),
        grid=(nsplit, steps),
        in_specs=[
            pl.BlockSpec((None, hh, ww, c), lambda p, i: (p * steps + i, 0, 0, 0)),
            pl.BlockSpec((1, c), lambda p, i: (0, 0)),
            pl.BlockSpec((1, c), lambda p, i: (0, 0)),
            pl.BlockSpec((9 * c, c), lambda p, i: (0, 0)),
        ],
        out_specs=(
            pl.BlockSpec((None, hh, ww, c), lambda p, i: (p * steps + i, 0, 0, 0)),
            pl.BlockSpec((None, 8, c), lambda p, i: (p, 0, 0)),
            pl.BlockSpec((None, 8, c), lambda p, i: (p, 0, 0)),
        ),
        scratch_shapes=[
            pltpu.VMEM((hh + 2, wpad, c), jnp.bfloat16),   # halo-padded image
            pltpu.VMEM((hh * ww, 9 * c), jnp.bfloat16),    # im2col
        ],
        compiler_params=_compiler_params(("parallel", "arbitrary")),
        cost_estimate=pl.CostEstimate(
            flops=2 * n * hh * ww * 9 * c * c,
            transcendentals=0,
            bytes_accessed=4 * n * hh * ww * c + 2 * 9 * c * c + 64 * c),
    )(y1_raw_nhwc, scale, shift, w2_merged)


def _norm_add_relu(yraw, residual, scale, shift, tile_m):
    """Final pass: BN3 scale/shift + residual add + ReLU (lane-dense f32 out)."""
    m, c = yraw.shape
    assert m % tile_m == 0
    row = pl.BlockSpec((tile_m, c), lambda i: (i, 0))
    vec = pl.BlockSpec((1, c), lambda i: (0, 0))
    return pl.pallas_call(
        _norm_add_relu_kernel,
        out_shape=jax.ShapeDtypeStruct((m, c), jnp.float32),
        grid=(m // tile_m,),
        in_specs=[row, row, vec, vec],
        out_specs=row,
        compiler_params=_compiler_params(("parallel",)),
        cost_estimate=pl.CostEstimate(
            flops=5 * m * c, transcendentals=0, bytes_accessed=8 * m * c),
    )(yraw, residual, scale, shift)


def _bn_fold(s_part, sq_part, count, gamma, beta):
    """Fold per-core/per-sublane partial sums + affine params into scale/shift."""
    # TODO(synk): for very large M use a compensated (shifted) accumulation; the
    # E[y^2]-E[y]^2 form in f32 is fine at these sizes.
    s = jnp.sum(s_part, axis=(0, 1))[None, :]
    sq = jnp.sum(sq_part, axis=(0, 1))[None, :]
    mean = s / count
    var = jnp.maximum(sq / count - mean * mean, 0.0)   # biased variance
    scale = gamma * jax.lax.rsqrt(var + BN_EPS)
    shift = beta - mean * scale
    return scale, shift


# ---------------------------------------------------------------------------
# Parameters
# ---------------------------------------------------------------------------
def init_block_params(key, in_channels, out_channels, expansion=4):
    """Deterministic parameters matching the torch module's shapes.

    Returns (kernel_params, reference_params)."""
    cexp = out_channels * expansion
    cin_p = _round_up(in_channels, LANE)
    cmid_p = _round_up(out_channels, LANE)
    cexp_p = _round_up(cexp, LANE)
    ks = jax.random.split(key, 6)
    sc = 0.1

    # torch-shaped conv weights: (out, in, kh, kw)
    w1_t = sc * jax.random.normal(ks[0], (out_channels, in_channels, 1, 1), jnp.float32)
    w2_t = sc * jax.random.normal(ks[1], (out_channels, out_channels, 3, 3), jnp.float32)
    w3_t = sc * jax.random.normal(ks[2], (cexp, out_channels, 1, 1), jnp.float32)
    b1 = sc * jax.random.normal(ks[3], (out_channels,), jnp.float32)
    b2 = sc * jax.random.normal(ks[4], (out_channels,), jnp.float32)
    b3 = sc * jax.random.normal(ks[5], (cexp,), jnp.float32)

    w1 = w1_t[:, :, 0, 0].T                                              # (Cin, Cmid)
    w2_taps = jnp.transpose(w2_t, (2, 3, 1, 0)).reshape(9, out_channels, out_channels)
    w3 = w3_t[:, :, 0, 0].T                                              # (Cmid, Cexp)

    g1 = 1.0 + 0.01 * jnp.arange(out_channels, dtype=jnp.float32)
    be1 = 0.02 * jnp.arange(out_channels, dtype=jnp.float32)
    g2 = 1.0 - 0.01 * jnp.arange(out_channels, dtype=jnp.float32)
    be2 = -0.01 * jnp.arange(out_channels, dtype=jnp.float32)
    g3 = 1.0 + 0.005 * jnp.arange(cexp, dtype=jnp.float32)
    be3 = 0.01 * jnp.arange(cexp, dtype=jnp.float32)

    def pad2(a, r, c):
        return jnp.pad(a, ((0, r - a.shape[0]), (0, c - a.shape[1])))

    def padvec(v, c):
        return jnp.pad(v, (0, c - v.shape[0]))[None, :]

    params = {
        # lane-padded, matmul-ready bf16 weights (conv biases dropped: they are
        # exactly cancelled by the training-mode BN mean subtraction)
        "w1": pad2(w1, cin_p, cmid_p).astype(jnp.bfloat16),
        # 3x3 weights merged tap-major along the contraction dim: (9*Cmid, Cmid)
        "w2": jnp.concatenate(
            [pad2(w2_taps[k], cmid_p, cmid_p) for k in range(9)],
            axis=0).astype(jnp.bfloat16),
        "w3": pad2(w3, cmid_p, cexp_p).astype(jnp.bfloat16),
        # lane-padded BN affine params (zero on padded lanes)
        "g1": padvec(g1, cmid_p), "be1": padvec(be1, cmid_p),
        "g2": padvec(g2, cmid_p), "be2": padvec(be2, cmid_p),
        "g3": padvec(g3, cexp_p), "be3": padvec(be3, cexp_p),
    }
    ref = {
        "w1": w1,
        "w2": jnp.concatenate([w2_taps[k] for k in range(9)], axis=0),
        "w3": w3,
        "b1": b1, "b2": b2, "b3": b3,
        "g1": g1, "be1": be1, "g2": g2, "be2": be2, "g3": g3, "be3": be3,
    }
    return params, ref


# ---------------------------------------------------------------------------
# Forward
# ---------------------------------------------------------------------------
@jax.jit
def block_forward(x_nchw, params):
    """Pallas implementation of Block.forward (identity_downsample=None, stride=1)."""
    n, cin, h, w = x_nchw.shape
    m = n * h * w
    cin_p, cmid_p = params["w1"].shape
    cexp_p = params["w3"].shape[1]
    cexp = cin                      # residual requires in_channels == out*expansion
    assert cexp_p == cin_p
    vmem = _vmem_limit_bytes()
    count = float(m)

    # Single wrapper HBM pass for x: NCHW -> NHWC -> (M, Cin_pad) bf16.  This
    # one bf16 copy feeds both the stage-1 matmul and the stage-4 residual.
    # TODO(synk): if the caller accepted NHWC in/out, both transposes could go.
    x_bf16 = jnp.pad(
        jnp.transpose(x_nchw, (0, 2, 3, 1)).reshape(m, cin),
        ((0, 0), (0, cin_p - cin))).astype(jnp.bfloat16)

    # ---- pass 1: conv1x1 raw + BN1 partial stats ----------------------------
    tile1 = _pick_tile_m(m, 2 * (cin_p + cmid_p), vmem)
    y1_raw, s1, q1 = _mm_stats(x_bf16, params["w1"], None, None, tile1)
    sc1, sh1 = _bn_fold(s1, q1, count, params["g1"], params["be1"])

    # ---- pass 2: fused BN1+ReLU -> conv3x3 raw + BN2 partial stats ----------
    y2_raw, s2, q2 = _norm_conv3x3_stats(
        y1_raw.reshape(n, h, w, cmid_p), params["w2"], sc1, sh1)
    sc2, sh2 = _bn_fold(s2, q2, count, params["g2"], params["be2"])

    # ---- pass 3: fused BN2+ReLU -> conv1x1 raw + BN3 partial stats ----------
    tile3 = _pick_tile_m(m, 2 * (cmid_p + cexp_p), vmem)
    y3_raw, s3, q3 = _mm_stats(
        y2_raw.reshape(m, cmid_p), params["w3"], sc2, sh2, tile3)
    sc3, sh3 = _bn_fold(s3, q3, count, params["g3"], params["be3"])

    # ---- pass 4: BN3 + residual (bf16) + ReLU --------------------------------
    tile4 = _pick_tile_m(m, 8 * cexp_p, vmem)
    out = _norm_add_relu(y3_raw, x_bf16, sc3, sh3, tile4)

    # (M, Cexp_pad) -> NCHW, dropping channel padding.
    return jnp.transpose(out[:, :cexp].reshape(n, h, w, cexp), (0, 3, 1, 2))


# ---------------------------------------------------------------------------
# Pure-JAX f32 reference (same math, with the torch conv biases included)
# ---------------------------------------------------------------------------
def block_forward_ref(x_nchw, ref):
    n, cin, h, w = x_nchw.shape
    m = n * h * w
    x = jnp.transpose(x_nchw, (0, 2, 3, 1)).reshape(m, cin).astype(jnp.float32)
    identity = x

    def bn(y, g, b):
        mean = jnp.mean(y, axis=0, keepdims=True)
        var = jnp.mean((y - mean) ** 2, axis=0, keepdims=True)
        return (y - mean) * jax.lax.rsqrt(var + BN_EPS) * g[None, :] + b[None, :]

    y = jnp.maximum(bn(x @ ref["w1"] + ref["b1"][None, :], ref["g1"], ref["be1"]), 0.0)
    cmid = ref["w1"].shape[1]
    yp = jnp.pad(y.reshape(n, h, w, cmid), ((0, 0), (1, 1), (1, 1), (0, 0)))
    cols = [yp[:, dy:dy + h, dx:dx + w, :] for dy in range(3) for dx in range(3)]
    patches = jnp.concatenate(cols, axis=-1).reshape(m, 9 * cmid)
    y = jnp.maximum(bn(patches @ ref["w2"] + ref["b2"][None, :], ref["g2"], ref["be2"]), 0.0)
    y = jnp.maximum(
        bn(y @ ref["w3"] + ref["b3"][None, :], ref["g3"], ref["be3"]) + identity, 0.0)
    cexp = ref["w3"].shape[1]
    return jnp.transpose(y.reshape(n, h, w, cexp), (0, 3, 1, 2))


if __name__ == "__main__":
    # in_channels must equal out_channels * expansion so the residual add is
    # valid with identity_downsample=None (same config as the original test).
    N, H, W = 2, 16, 16
    out_channels = 4
    in_channels = out_channels * 4  # = 16

    key = jax.random.PRNGKey(0)
    kx, kp = jax.random.split(key)
    x = jax.random.normal(kx, (N, in_channels, H, W), jnp.float32)  # NCHW like torch
    params, ref_params = init_block_params(kp, in_channels, out_channels)

    out = jax.block_until_ready(block_forward(x, params))
    ref = jax.block_until_ready(block_forward_ref(x, ref_params))

    assert out.shape == (N, out_channels * 4, H, W), out.shape
    max_err = float(jnp.max(jnp.abs(out - ref)))
    assert jnp.allclose(out, ref, rtol=5e-2, atol=5e-2), max_err

    print("KERNEL_OK")
</pallas_src>

<mosaic_0001>
module attributes {stable_mosaic.version = 11 : i64} {
  func.func @_mm_stats_kernel(%arg0: i32, %arg1: i32, %arg2: memref<256x128xbf16, #tpu.memory_space<vmem>>, %arg3: memref<128x128xbf16, #tpu.memory_space<vmem>>, %arg4: memref<256x128xbf16, #tpu.memory_space<vmem>>, %arg5: memref<1x8x128xf32, #tpu.memory_space<vmem>>, %arg6: memref<1x8x128xf32, #tpu.memory_space<vmem>>) attributes {dimension_semantics = [#tpu.dimension_semantics<parallel>, #tpu.dimension_semantics<arbitrary>], iteration_bounds = array<i64: 2, 1>, scalar_prefetch = 0 : i64, scratch_operands = 0 : i64, tpu.core_type = #tpu.core_type<tc>, window_params = [{transform_indices = @transform_0, window_bounds = array<i64: 256, 128>}, {pipeline_mode = #tpu.pipeline_mode<synchronous>, transform_indices = @transform_1, window_bounds = array<i64: 128, 128>}, {transform_indices = @transform_2, window_bounds = array<i64: 256, 128>}, {transform_indices = @transform_3, window_bounds = array<i64: 1, 8, 128>}, {transform_indices = @transform_4, window_bounds = array<i64: 1, 8, 128>}]} {
    %c0 = arith.constant 0 : index
    %c0_0 = arith.constant 0 : index
    %0 = vector.load %arg2[%c0, %c0_0] : memref<256x128xbf16, #tpu.memory_space<vmem>>, vector<256x128xbf16>
    %c0_1 = arith.constant 0 : index
    %c0_2 = arith.constant 0 : index
    %1 = vector.load %arg3[%c0_1, %c0_2] : memref<128x128xbf16, #tpu.memory_space<vmem>>, vector<128x128xbf16>
    %cst = arith.constant dense<0.000000e+00> : vector<256x128xf32>
    %2 = tpu.matmul %0, %1, %cst {dimension_numbers = #tpu.dot_dimension_numbers<[1], [0], [0], [1], [0, 0, 1, 1], [], []>} : vector<256x128xbf16>, vector<128x128xbf16>, vector<256x128xf32> -> vector<256x128xf32>
    %3 = arith.truncf %2 : vector<256x128xf32> to vector<256x128xbf16>
    %c0_3 = arith.constant 0 : index
    %c0_4 = arith.constant 0 : index
    %4 = vector.load %arg4[%c0_3, %c0_4] : memref<256x128xbf16, #tpu.memory_space<vmem>>, vector<256x128xbf16>
    tpu.vector_store %arg4[%c0_3, %c0_4], %3 {strides = array<i32>} : memref<256x128xbf16, #tpu.memory_space<vmem>>, vector<256x128xbf16>,
    %c0_i32 = arith.constant 0 : i32
    %5 = arith.cmpi eq, %arg1, %c0_i32 : i32
    %6 = arith.extui %5 : i1 to i32
    %c0_i32_5 = arith.constant 0 : i32
    %7 = arith.cmpi ne, %6, %c0_i32_5 : i32
    scf.if %7 {
      %cst_20 = arith.constant 0.000000e+00 : f32
      %24 = vector.broadcast %cst_20 : f32 to vector<8x128xf32>
      %c0_21 = arith.constant 0 : index
      %c0_22 = arith.constant 0 : index
      %c0_23 = arith.constant 0 : index
      %25 = vector.load %arg5[%c0_21, %c0_22, %c0_23] : memref<1x8x128xf32, #tpu.memory_space<vmem>>, vector<1x8x128xf32>
      %26 = vector.shape_cast %25 : vector<1x8x128xf32> to vector<8x128xf32>
      %27 = vector.shape_cast %24 : vector<8x128xf32> to vector<1x8x128xf32>
      tpu.vector_store %arg5[%c0_21, %c0_22, %c0_23], %27 {strides = array<i32>} : memref<1x8x128xf32, #tpu.memory_space<vmem>>, vector<1x8x128xf32>,
      %cst_24 = arith.constant 0.000000e+00 : f32
      %28 = vector.broadcast %cst_24 : f32 to vector<8x128xf32>
      %c0_25 = arith.constant 0 : index
      %c0_26 = arith.constant 0 : index
      %c0_27 = arith.constant 0 : index
      %29 = vector.load %arg6[%c0_25, %c0_26, %c0_27] : memref<1x8x128xf32, #tpu.memory_space<vmem>>, vector<1x8x128xf32>
      %30 = vector.shape_cast %29 : vector<1x8x128xf32> to vector<8x128xf32>
      %31 = vector.shape_cast %28 : vector<8x128xf32> to vector<1x8x128xf32>
      tpu.vector_store %arg6[%c0_25, %c0_26, %c0_27], %31 {strides = array<i32>} : memref<1x8x128xf32, #tpu.memory_space<vmem>>, vector<1x8x128xf32>,
    } else {
    }
    %8 = vector.shape_cast %2 : vector<256x128xf32> to vector<32x8x128xf32>
    %c0_6 = arith.constant 0 : index
    %c0_7 = arith.constant 0 : index
    %c0_8 = arith.constant 0 : index
    %9 = vector.load %arg5[%c0_6, %c0_7, %c0_8] : memref<1x8x128xf32, #tpu.memory_space<vmem>>, vector<1x8x128xf32>
    %10 = vector.shape_cast %9 : vector<1x8x128xf32> to vector<8x128xf32>
    %cst_9 = arith.constant dense<0.000000e+00> : vector<8x128xf32>
    %11 = vector.multi_reduction <add>, %8, %cst_9 [0] : vector<32x8x128xf32> to vector<8x128xf32>
    %12 = arith.addf %10, %11 : vector<8x128xf32>
    %c0_10 = arith.constant 0 : index
    %c0_11 = arith.constant 0 : index
    %c0_12 = arith.constant 0 : index
    %13 = vector.load %arg5[%c0_10, %c0_11, %c0_12] : memref<1x8x128xf32, #tpu.memory_space<vmem>>, vector<1x8x128xf32>
    %14 = vector.shape_cast %13 : vector<1x8x128xf32> to vector<8x128xf32>
    %15 = vector.shape_cast %12 : vector<8x128xf32> to vector<1x8x128xf32>
    tpu.vector_store %arg5[%c0_10, %c0_11, %c0_12], %15 {strides = array<i32>} : memref<1x8x128xf32, #tpu.memory_space<vmem>>, vector<1x8x128xf32>,
    %c0_13 = arith.constant 0 : index
    %c0_14 = arith.constant 0 : index
    %c0_15 = arith.constant 0 : index
    %16 = vector.load %arg6[%c0_13, %c0_14, %c0_15] : memref<1x8x128xf32, #tpu.memory_space<vmem>>, vector<1x8x128xf32>
    %17 = vector.shape_cast %16 : vector<1x8x128xf32> to vector<8x128xf32>
    %18 = arith.mulf %8, %8 : vector<32x8x128xf32>
    %cst_16 = arith.constant dense<0.000000e+00> : vector<8x128xf32>
    %19 = vector.multi_reduction <add>, %18, %cst_16 [0] : vector<32x8x128xf32> to vector<8x128xf32>
    %20 = arith.addf %17, %19 : vector<8x128xf32>
    %c0_17 = arith.constant 0 : index
    %c0_18 = arith.constant 0 : index
    %c0_19 = arith.constant 0 : index
    %21 = vector.load %arg6[%c0_17, %c0_18, %c0_19] : memref<1x8x128xf32, #tpu.memory_space<vmem>>, vector<1x8x128xf32>
    %22 = vector.shape_cast %21 : vector<1x8x128xf32> to vector<8x128xf32>
    %23 = vector.shape_cast %20 : vector<8x128xf32> to vector<1x8x128xf32>
    tpu.vector_store %arg6[%c0_17, %c0_18, %c0_19], %23 {strides = array<i32>} : memref<1x8x128xf32, #tpu.memory_space<vmem>>, vector<1x8x128xf32>,
    return
  }
  func.func @transform_0(%arg0: i32, %arg1: i32) -> (i32, i32) {
    %c1_i32 = arith.constant 1 : i32
    %0 = arith.muli %arg0, %c1_i32 : i32
    %1 = arith.addi %0, %arg1 : i32
    %c0_i32 = arith.constant 0 : i32
    %c0_i32_0 = arith.constant 0 : i32
    return %1, %c0_i32 : i32, i32
  }
  func.func @transform_1(%arg0: i32, %arg1: i32) -> (i32, i32) {
    %c0_i32 = arith.constant 0 : i32
    %c0_i32_0 = arith.constant 0 : i32
    %c0_i32_1 = arith.constant 0 : i32
    return %c0_i32, %c0_i32_0 : i32, i32
  }
  func.func @transform_2(%arg0: i32, %arg1: i32) -> (i32, i32) {
    %c1_i32 = arith.constant 1 : i32
    %0 = arith.muli %arg0, %c1_i32 : i32
    %1 = arith.addi %0, %arg1 : i32
    %c0_i32 = arith.constant 0 : i32
    %c0_i32_0 = arith.constant 0 : i32
    return %1, %c0_i32 : i32, i32
  }
  func.func @transform_3(%arg0: i32, %arg1: i32) -> (i32, i32, i32) {
    %c0_i32 = arith.constant 0 : i32
    %c0_i32_0 = arith.constant 0 : i32
    %c0_i32_1 = arith.constant 0 : i32
    return %arg0, %c0_i32, %c0_i32_0 : i32, i32, i32
  }
  func.func @transform_4(%arg0: i32, %arg1: i32) -> (i32, i32, i32) {
    %c0_i32 = arith.constant 0 : i32
    %c0_i32_0 = arith.constant 0 : i32
    %c0_i32_1 = arith.constant 0 : i32
    return %arg0, %c0_i32, %c0_i32_0 : i32, i32, i32
  }
}

module attributes {stable_mosaic.version = 11 : i64} {
  func.func @_mm_stats_kernel(%arg0: i32, %arg1: i32, %arg2: memref<256x128xbf16, #tpu.memory_space<vmem>>, %arg3: memref<1x128xf32, #tpu.memory_space<vmem>>, %arg4: memref<1x128xf32, #tpu.memory_space<vmem>>, %arg5: memref<128x128xbf16, #tpu.memory_space<vmem>>, %arg6: memref<256x128xbf16, #tpu.memory_space<vmem>>, %arg7: memref<1x8x128xf32, #tpu.memory_space<vmem>>, %arg8: memref<1x8x128xf32, #tpu.memory_space<vmem>>) attributes {dimension_semantics = [#tpu.dimension_semantics<parallel>, #tpu.dimension_semantics<arbitrary>], iteration_bounds = array<i64: 2, 1>, scalar_prefetch = 0 : i64, scratch_operands = 0 : i64, tpu.core_type = #tpu.core_type<tc>, window_params = [{transform_indices = @transform_0, window_bounds = array<i64: 256, 128>}, {pipeline_mode = #tpu.pipeline_mode<synchronous>, transform_indices = @transform_1, window_bounds = array<i64: 1, 128>}, {pipeline_mode = #tpu.pipeline_mode<synchronous>, transform_indices = @transform_2, window_bounds = array<i64: 1, 128>}, {pipeline_mode = #tpu.pipeline_mode<synchronous>, transform_indices = @transform_3, window_bounds = array<i64: 128, 128>}, {transform_indices = @transform_4, window_bounds = array<i64: 256, 128>}, {transform_indices = @transform_5, window_bounds = array<i64: 1, 8, 128>}, {transform_indices = @transform_6, window_bounds = array<i64: 1, 8, 128>}]} {
    %c0 = arith.constant 0 : index
    %c0_0 = arith.constant 0 : index
    %0 = vector.load %arg2[%c0, %c0_0] : memref<256x128xbf16, #tpu.memory_space<vmem>>, vector<256x128xbf16>
    %1 = arith.extf %0 : vector<256x128xbf16> to vector<256x128xf32>
    %c0_1 = arith.constant 0 : index
    %c0_2 = arith.constant 0 : index
    %2 = vector.load %arg3[%c0_1, %c0_2] : memref<1x128xf32, #tpu.memory_space<vmem>>, vector<1x128xf32>
    %3 = vector.broadcast %2 : vector<1x128xf32> to vector<256x128xf32>
    %4 = arith.mulf %1, %3 : vector<256x128xf32>
    %c0_3 = arith.constant 0 : index
    %c0_4 = arith.constant 0 : index
    %5 = vector.load %arg4[%c0_3, %c0_4] : memref<1x128xf32, #tpu.memory_space<vmem>>, vector<1x128xf32>
    %6 = vector.broadcast %5 : vector<1x128xf32> to vector<256x128xf32>
    %7 = arith.addf %4, %6 : vector<256x128xf32>
    %cst = arith.constant 0.000000e+00 : f32
    %8 = vector.broadcast %cst : f32 to vector<256x128xf32>
    %9 = arith.maximumf %7, %8 : vector<256x128xf32>
    %10 = arith.truncf %9 : vector<256x128xf32> to vector<256x128xbf16>
    %c0_5 = arith.constant 0 : index
    %c0_6 = arith.constant 0 : index
    %11 = vector.load %arg5[%c0_5, %c0_6] : memref<128x128xbf16, #tpu.memory_space<vmem>>, vector<128x128xbf16>
    %cst_7 = arith.constant dense<0.000000e+00> : vector<256x128xf32>
    %12 = tpu.matmul %10, %11, %cst_7 {dimension_numbers = #tpu.dot_dimension_numbers<[1], [0], [0], [1], [0, 0, 1, 1], [], []>} : vector<256x128xbf16>, vector<128x128xbf16>, vector<256x128xf32> -> vector<256x128xf32>
    %13 = arith.truncf %12 : vector<256x128xf32> to vector<256x128xbf16>
    %c0_8 = arith.constant 0 : index
    %c0_9 = arith.constant 0 : index
    %14 = vector.load %arg6[%c0_8, %c0_9] : memref<256x128xbf16, #tpu.memory_space<vmem>>, vector<256x128xbf16>
    tpu.vector_store %arg6[%c0_8, %c0_9], %13 {strides = array<i32>} : memref<256x128xbf16, #tpu.memory_space<vmem>>, vector<256x128xbf16>,
    %c0_i32 = arith.constant 0 : i32
    %15 = arith.cmpi eq, %arg1, %c0_i32 : i32
    %16 = arith.extui %15 : i1 to i32
    %c0_i32_10 = arith.constant 0 : i32
    %17 = arith.cmpi ne, %16, %c0_i32_10 : i32
    scf.if %17 {
      %cst_25 = arith.constant 0.000000e+00 : f32
      %34 = vector.broadcast %cst_25 : f32 to vector<8x128xf32>
      %c0_26 = arith.constant 0 : index
      %c0_27 = arith.constant 0 : index
      %c0_28 = arith.constant 0 : index
      %35 = vector.load %arg7[%c0_26, %c0_27, %c0_28] : memref<1x8x128xf32, #tpu.memory_space<vmem>>, vector<1x8x128xf32>
      %36 = vector.shape_cast %35 : vector<1x8x128xf32> to vector<8x128xf32>
      %37 = vector.shape_cast %34 : vector<8x128xf32> to vector<1x8x128xf32>
      tpu.vector_store %arg7[%c0_26, %c0_27, %c0_28], %37 {strides = array<i32>} : memref<1x8x128xf32, #tpu.memory_space<vmem>>, vector<1x8x128xf32>,
      %cst_29 = arith.constant 0.000000e+00 : f32
      %38 = vector.broadcast %cst_29 : f32 to vector<8x128xf32>
      %c0_30 = arith.constant 0 : index
      %c0_31 = arith.constant 0 : index
      %c0_32 = arith.constant 0 : index
      %39 = vector.load %arg8[%c0_30, %c0_31, %c0_32] : memref<1x8x128xf32, #tpu.memory_space<vmem>>, vector<1x8x128xf32>
      %40 = vector.shape_cast %39 : vector<1x8x128xf32> to vector<8x128xf32>
      %41 = vector.shape_cast %38 : vector<8x128xf32> to vector<1x8x128xf32>
      tpu.vector_store %arg8[%c0_30, %c0_31, %c0_32], %41 {strides = array<i32>} : memref<1x8x128xf32, #tpu.memory_space<vmem>>, vector<1x8x128xf32>,
    } else {
    }
    %18 = vector.shape_cast %12 : vector<256x128xf32> to vector<32x8x128xf32>
    %c0_11 = arith.constant 0 : index
    %c0_12 = arith.constant 0 : index
    %c0_13 = arith.constant 0 : index
    %19 = vector.load %arg7[%c0_11, %c0_12, %c0_13] : memref<1x8x128xf32, #tpu.memory_space<vmem>>, vector<1x8x128xf32>
    %20 = vector.shape_cast %19 : vector<1x8x128xf32> to vector<8x128xf32>
    %cst_14 = arith.constant dense<0.000000e+00> : vector<8x128xf32>
    %21 = vector.multi_reduction <add>, %18, %cst_14 [0] : vector<32x8x128xf32> to vector<8x128xf32>
    %22 = arith.addf %20, %21 : vector<8x128xf32>
    %c0_15 = arith.constant 0 : index
    %c0_16 = arith.constant 0 : index
    %c0_17 = arith.constant 0 : index
    %23 = vector.load %arg7[%c0_15, %c0_16, %c0_17] : memref<1x8x128xf32, #tpu.memory_space<vmem>>, vector<1x8x128xf32>
    %24 = vector.shape_cast %23 : vector<1x8x128xf32> to vector<8x128xf32>
    %25 = vector.shape_cast %22 : vector<8x128xf32> to vector<1x8x128xf32>
    tpu.vector_store %arg7[%c0_15, %c0_16, %c0_17], %25 {strides = array<i32>} : memref<1x8x128xf32, #tpu.memory_space<vmem>>, vector<1x8x128xf32>,
    %c0_18 = arith.constant 0 : index
    %c0_19 = arith.constant 0 : index
    %c0_20 = arith.constant 0 : index
    %26 = vector.load %arg8[%c0_18, %c0_19, %c0_20] : memref<1x8x128xf32, #tpu.memory_space<vmem>>, vector<1x8x128xf32>
    %27 = vector.shape_cast %26 : vector<1x8x128xf32> to vector<8x128xf32>
    %28 = arith.mulf %18, %18 : vector<32x8x128xf32>
    %cst_21 = arith.constant dense<0.000000e+00> : vector<8x128xf32>
    %29 = vector.multi_reduction <add>, %28, %cst_21 [0] : vector<32x8x128xf32> to vector<8x128xf32>
    %30 = arith.addf %27, %29 : vector<8x128xf32>
    %c0_22 = arith.constant 0 : index
    %c0_23 = arith.constant 0 : index
    %c0_24 = arith.constant 0 : index
    %31 = vector.load %arg8[%c0_22, %c0_23, %c0_24] : memref<1x8x128xf32, #tpu.memory_space<vmem>>, vector<1x8x128xf32>
    %32 = vector.shape_cast %31 : vector<1x8x128xf32> to vector<8x128xf32>
    %33 = vector.shape_cast %30 : vector<8x128xf32> to vector<1x8x128xf32>
    tpu.vector_store %arg8[%c0_22, %c0_23, %c0_24], %33 {strides = array<i32>} : memref<1x8x128xf32, #tpu.memory_space<vmem>>, vector<1x8x128xf32>,
    return
  }
  func.func @transform_0(%arg0: i32, %arg1: i32) -> (i32, i32) {
    %c1_i32 = arith.constant 1 : i32
    %0 = arith.muli %arg0, %c1_i32 : i32
    %1 = arith.addi %0, %arg1 : i32
    %c0_i32 = arith.constant 0 : i32
    %c0_i32_0 = arith.constant 0 : i32
    return %1, %c0_i32 : i32, i32
  }
  func.func @transform_1(%arg0: i32, %arg1: i32) -> (i32, i32) {
    %c0_i32 = arith.constant 0 : i32
    %c0_i32_0 = arith.constant 0 : i32
    %c0_i32_1 = arith.constant 0 : i32
    return %c0_i32, %c0_i32_0 : i32, i32
  }
  func.func @transform_2(%arg0: i32, %arg1: i32) -> (i32, i32) {
    %c0_i32 = arith.constant 0 : i32
    %c0_i32_0 = arith.constant 0 : i32
    %c0_i32_1 = arith.constant 0 : i32
    return %c0_i32, %c0_i32_0 : i32, i32
  }
  func.func @transform_3(%arg0: i32, %arg1: i32) -> (i32, i32) {
    %c0_i32 = arith.constant 0 : i32
    %c0_i32_0 = arith.constant 0 : i32
    %c0_i32_1 = arith.constant 0 : i32
    return %c0_i32, %c0_i32_0 : i32, i32
  }
  func.func @transform_4(%arg0: i32, %arg1: i32) -> (i32, i32) {
    %c1_i32 = arith.constant 1 : i32
    %0 = arith.muli %arg0, %c1_i32 : i32
    %1 = arith.addi %0, %arg1 : i32
    %c0_i32 = arith.constant 0 : i32
    %c0_i32_0 = arith.constant 0 : i32
    return %1, %c0_i32 : i32, i32
  }
  func.func @transform_5(%arg0: i32, %arg1: i32) -> (i32, i32, i32) {
    %c0_i32 = arith.constant 0 : i32
    %c0_i32_0 = arith.constant 0 : i32
    %c0_i32_1 = arith.constant 0 : i32
    return %arg0, %c0_i32, %c0_i32_0 : i32, i32, i32
  }
  func.func @transform_6(%arg0: i32, %arg1: i32) -> (i32, i32, i32) {
    %c0_i32 = arith.constant 0 : i32
    %c0_i32_0 = arith.constant 0 : i32
    %c0_i32_1 = arith.constant 0 : i32
    return %arg0, %c0_i32, %c0_i32_0 : i32, i32, i32
  }
}

module attributes {stable_mosaic.version = 11 : i64} {
  func.func @_norm_conv3x3_stats_kernel(%arg0: i32, %arg1: i32, %arg2: memref<1x16x16x128xbf16, #tpu.memory_space<vmem>>, %arg3: memref<1x128xf32, #tpu.memory_space<vmem>>, %arg4: memref<1x128xf32, #tpu.memory_space<vmem>>, %arg5: memref<1152x128xbf16, #tpu.memory_space<vmem>>, %arg6: memref<1x16x16x128xbf16, #tpu.memory_space<vmem>>, %arg7: memref<1x8x128xf32, #tpu.memory_space<vmem>>, %arg8: memref<1x8x128xf32, #tpu.memory_space<vmem>>, %arg9: memref<18x32x128xbf16, #tpu.memory_space<vmem>>, %arg10: memref<256x1152xbf16, #tpu.memory_space<vmem>>) attributes {dimension_semantics = [#tpu.dimension_semantics<parallel>, #tpu.dimension_semantics<arbitrary>], iteration_bounds = array<i64: 2, 1>, scalar_prefetch = 0 : i64, scratch_operands = 2 : i64, tpu.core_type = #tpu.core_type<tc>, window_params = [{transform_indices = @transform_0, window_bounds = array<i64: 1, 16, 16, 128>}, {pipeline_mode = #tpu.pipeline_mode<synchronous>, transform_indices = @transform_1, window_bounds = array<i64: 1, 128>}, {pipeline_mode = #tpu.pipeline_mode<synchronous>, transform_indices = @transform_2, window_bounds = array<i64: 1, 128>}, {pipeline_mode = #tpu.pipeline_mode<synchronous>, transform_indices = @transform_3, window_bounds = array<i64: 1152, 128>}, {transform_indices = @transform_4, window_bounds = array<i64: 1, 16, 16, 128>}, {transform_indices = @transform_5, window_bounds = array<i64: 1, 8, 128>}, {transform_indices = @transform_6, window_bounds = array<i64: 1, 8, 128>}]} {
    %c0 = arith.constant 0 : index
    %c0_0 = arith.constant 0 : index
    %c0_1 = arith.constant 0 : index
    %c0_2 = arith.constant 0 : index
    %0 = vector.load %arg2[%c0, %c0_0, %c0_1, %c0_2] : memref<1x16x16x128xbf16, #tpu.memory_space<vmem>>, vector<1x16x16x128xbf16>
    %1 = vector.shape_cast %0 : vector<1x16x16x128xbf16> to vector<16x16x128xbf16>
    %2 = arith.extf %1 : vector<16x16x128xbf16> to vector<16x16x128xf32>
    %c0_3 = arith.constant 0 : index
    %c0_4 = arith.constant 0 : index
    %3 = vector.load %arg3[%c0_3, %c0_4] : memref<1x128xf32, #tpu.memory_space<vmem>>, vector<1x128xf32>
    %4 = vector.shape_cast %3 : vector<1x128xf32> to vector<1x1x128xf32>
    %5 = vector.broadcast %4 : vector<1x1x128xf32> to vector<16x16x128xf32>
    %6 = arith.mulf %2, %5 : vector<16x16x128xf32>
    %c0_5 = arith.constant 0 : index
    %c0_6 = arith.constant 0 : index
    %7 = vector.load %arg4[%c0_5, %c0_6] : memref<1x128xf32, #tpu.memory_space<vmem>>, vector<1x128xf32>
    %8 = vector.shape_cast %7 : vector<1x128xf32> to vector<1x1x128xf32>
    %9 = vector.broadcast %8 : vector<1x1x128xf32> to vector<16x16x128xf32>
    %10 = arith.addf %6, %9 : vector<16x16x128xf32>
    %cst = arith.constant 0.000000e+00 : f32
    %11 = vector.broadcast %cst : f32 to vector<16x16x128xf32>
    %12 = arith.maximumf %10, %11 : vector<16x16x128xf32>
    %13 = arith.truncf %12 : vector<16x16x128xf32> to vector<16x16x128xbf16>
    %cst_7 = arith.constant 0.000000e+00 : bf16
    %14 = vector.broadcast %cst_7 : bf16 to vector<18x32x128xbf16>
    %c0_8 = arith.constant 0 : index
    %c0_9 = arith.constant 0 : index
    %c0_10 = arith.constant 0 : index
    %15 = vector.load %arg9[%c0_8, %c0_9, %c0_10] : memref<18x32x128xbf16, #tpu.memory_space<vmem>>, vector<18x32x128xbf16>
    tpu.vector_store %arg9[%c0_8, %c0_9, %c0_10], %14 {strides = array<i32>} : memref<18x32x128xbf16, #tpu.memory_space<vmem>>, vector<18x32x128xbf16>,
    %c1 = arith.constant 1 : index
    %c8 = arith.constant 8 : index
    %c0_11 = arith.constant 0 : index
    %16 = vector.load %arg9[%c1, %c8, %c0_11] : memref<18x32x128xbf16, #tpu.memory_space<vmem>>, vector<16x16x128xbf16>
    tpu.vector_store %arg9[%c1, %c8, %c0_11], %13 {strides = array<i32>} : memref<18x32x128xbf16, #tpu.memory_space<vmem>>, vector<16x16x128xbf16>,
    %c0_12 = arith.constant 0 : index
    %c7 = arith.constant 7 : index
    %c0_13 = arith.constant 0 : index
    %17 = vector.load %arg9[%c0_12, %c7, %c0_13] : memref<18x32x128xbf16, #tpu.memory_space<vmem>>, vector<16x16x128xbf16>
    %18 = vector.shape_cast %17 : vector<16x16x128xbf16> to vector<256x128xbf16>
    %c0_14 = arith.constant 0 : index
    %c0_15 = arith.constant 0 : index
    %19 = vector.load %arg10[%c0_14, %c0_15] : memref<256x1152xbf16, #tpu.memory_space<vmem>>, vector<256x128xbf16>
    tpu.vector_store %arg10[%c0_14, %c0_15], %18 {strides = array<i32>} : memref<256x1152xbf16, #tpu.memory_space<vmem>>, vector<256x128xbf16>,
    %c0_16 = arith.constant 0 : index
    %c8_17 = arith.constant 8 : index
    %c0_18 = arith.constant 0 : index
    %20 = vector.load %arg9[%c0_16, %c8_17, %c0_18] : memref<18x32x128xbf16, #tpu.memory_space<vmem>>, vector<16x16x128xbf16>
    %21 = vector.shape_cast %20 : vector<16x16x128xbf16> to vector<256x128xbf16>
    %c0_19 = arith.constant 0 : index
    %c128 = arith.constant 128 : index
    %22 = vector.load %arg10[%c0_19, %c128] : memref<256x1152xbf16, #tpu.memory_space<vmem>>, vector<256x128xbf16>
    tpu.vector_store %arg10[%c0_19, %c128], %21 {strides = array<i32>} : memref<256x1152xbf16, #tpu.memory_space<vmem>>, vector<256x128xbf16>,
    %c0_20 = arith.constant 0 : index
    %c9 = arith.constant 9 : index
    %c0_21 = arith.constant 0 : index
    %23 = vector.load %arg9[%c0_20, %c9, %c0_21] : memref<18x32x128xbf16, #tpu.memory_space<vmem>>, vector<16x16x128xbf16>
    %24 = vector.shape_cast %23 : vector<16x16x128xbf16> to vector<256x128xbf16>
    %c0_22 = arith.constant 0 : index
    %c256 = arith.constant 256 : index
    %25 = vector.load %arg10[%c0_22, %c256] : memref<256x1152xbf16, #tpu.memory_space<vmem>>, vector<256x128xbf16>
    tpu.vector_store %arg10[%c0_22, %c256], %24 {strides = array<i32>} : memref<256x1152xbf16, #tpu.memory_space<vmem>>, vector<256x128xbf16>,
    %c1_23 = arith.constant 1 : index
    %c7_24 = arith.constant 7 : index
    %c0_25 = arith.constant 0 : index
    %26 = vector.load %arg9[%c1_23, %c7_24, %c0_25] : memref<18x32x128xbf16, #tpu.memory_space<vmem>>, vector<16x16x128xbf16>
    %27 = vector.shape_cast %26 : vector<16x16x128xbf16> to vector<256x128xbf16>
    %c0_26 = arith.constant 0 : index
    %c384 = arith.constant 384 : index
    %28 = vector.load %arg10[%c0_26, %c384] : memref<256x1152xbf16, #tpu.memory_space<vmem>>, vector<256x128xbf16>
    tpu.vector_store %arg10[%c0_26, %c384], %27 {strides = array<i32>} : memref<256x1152xbf16, #tpu.memory_space<vmem>>, vector<256x128xbf16>,
    %c1_27 = arith.constant 1 : index
    %c8_28 = arith.constant 8 : index
    %c0_29 = arith.constant 0 : index
    %29 = vector.load %arg9[%c1_27, %c8_28, %c0_29] : memref<18x32x128xbf16, #tpu.memory_space<vmem>>, vector<16x16x128xbf16>
    %30 = vector.shape_cast %29 : vector<16x16x128xbf16> to vector<256x128xbf16>
    %c0_30 = arith.constant 0 : index
    %c512 = arith.constant 512 : index
    %31 = vector.load %arg10[%c0_30, %c512] : memref<256x1152xbf16, #tpu.memory_space<vmem>>, vector<256x128xbf16>
    tpu.vector_store %arg10[%c0_30, %c512], %30 {strides = array<i32>} : memref<256x1152xbf16, #tpu.memory_space<vmem>>, vector<256x128xbf16>,
    %c1_31 = arith.constant 1 : index
    %c9_32 = arith.constant 9 : index
    %c0_33 = arith.constant 0 : index
    %32 = vector.load %arg9[%c1_31, %c9_32, %c0_33] : memref<18x32x128xbf16, #tpu.memory_space<vmem>>, vector<16x16x128xbf16>
    %33 = vector.shape_cast %32 : vector<16x16x128xbf16> to vector<256x128xbf16>
    %c0_34 = arith.constant 0 : index
    %c640 = arith.constant 640 : index
    %34 = vector.load %arg10[%c0_34, %c640] : memref<256x1152xbf16, #tpu.memory_space<vmem>>, vector<256x128xbf16>
    tpu.vector_store %arg10[%c0_34, %c640], %33 {strides = array<i32>} : memref<256x1152xbf16, #tpu.memory_space<vmem>>, vector<256x128xbf16>,
    %c2 = arith.constant 2 : index
    %c7_35 = arith.constant 7 : index
    %c0_36 = arith.constant 0 : index
    %35 = vector.load %arg9[%c2, %c7_35, %c0_36] : memref<18x32x128xbf16, #tpu.memory_space<vmem>>, vector<16x16x128xbf16>
    %36 = vector.shape_cast %35 : vector<16x16x128xbf16> to vector<256x128xbf16>
    %c0_37 = arith.constant 0 : index
    %c768 = arith.constant 768 : index
    %37 = vector.load %arg10[%c0_37, %c768] : memref<256x1152xbf16, #tpu.memory_space<vmem>>, vector<256x128xbf16>
    tpu.vector_store %arg10[%c0_37, %c768], %36 {strides = array<i32>} : memref<256x1152xbf16, #tpu.memory_space<vmem>>, vector<256x128xbf16>,
    %c2_38 = arith.constant 2 : index
    %c8_39 = arith.constant 8 : index
    %c0_40 = arith.constant 0 : index
    %38 = vector.load %arg9[%c2_38, %c8_39, %c0_40] : memref<18x32x128xbf16, #tpu.memory_space<vmem>>, vector<16x16x128xbf16>
    %39 = vector.shape_cast %38 : vector<16x16x128xbf16> to vector<256x128xbf16>
    %c0_41 = arith.constant 0 : index
    %c896 = arith.constant 896 : index
    %40 = vector.load %arg10[%c0_41, %c896] : memref<256x1152xbf16, #tpu.memory_space<vmem>>, vector<256x128xbf16>
    tpu.vector_store %arg10[%c0_41, %c896], %39 {strides = array<i32>} : memref<256x1152xbf16, #tpu.memory_space<vmem>>, vector<256x128xbf16>,
    %c2_42 = arith.constant 2 : index
    %c9_43 = arith.constant 9 : index
    %c0_44 = arith.constant 0 : index
    %41 = vector.load %arg9[%c2_42, %c9_43, %c0_44] : memref<18x32x128xbf16, #tpu.memory_space<vmem>>, vector<16x16x128xbf16>
    %42 = vector.shape_cast %41 : vector<16x16x128xbf16> to vector<256x128xbf16>
    %c0_45 = arith.constant 0 : index
    %c1024 = arith.constant 1024 : index
    %43 = vector.load %arg10[%c0_45, %c1024] : memref<256x1152xbf16, #tpu.memory_space<vmem>>, vector<256x128xbf16>
    tpu.vector_store %arg10[%c0_45, %c1024], %42 {strides = array<i32>} : memref<256x1152xbf16, #tpu.memory_space<vmem>>, vector<256x128xbf16>,
    %c0_46 = arith.constant 0 : index
    %c0_47 = arith.constant 0 : index
    %44 = vector.load %arg10[%c0_46, %c0_47] : memref<256x1152xbf16, #tpu.memory_space<vmem>>, vector<256x1152xbf16>
    %c0_48 = arith.constant 0 : index
    %c0_49 = arith.constant 0 : index
    %45 = vector.load %arg5[%c0_48, %c0_49] : memref<1152x128xbf16, #tpu.memory_space<vmem>>, vector<1152x128xbf16>
    %cst_50 = arith.constant dense<0.000000e+00> : vector<256x128xf32>
    %46 = tpu.matmul %44, %45, %cst_50 {dimension_numbers = #tpu.dot_dimension_numbers<[1], [0], [0], [1], [0, 0, 1, 1], [], []>} : vector<256x1152xbf16>, vector<1152x128xbf16>, vector<256x128xf32> -> vector<256x128xf32>
    %47 = vector.shape_cast %46 : vector<256x128xf32> to vector<16x16x128xf32>
    %48 = arith.truncf %47 : vector<16x16x128xf32> to vector<16x16x128xbf16>
    %c0_51 = arith.constant 0 : index
    %c0_52 = arith.constant 0 : index
    %c0_53 = arith.constant 0 : index
    %c0_54 = arith.constant 0 : index
    %49 = vector.load %arg6[%c0_51, %c0_52, %c0_53, %c0_54] : memref<1x16x16x128xbf16, #tpu.memory_space<vmem>>, vector<1x16x16x128xbf16>
    %50 = vector.shape_cast %49 : vector<1x16x16x128xbf16> to vector<16x16x128xbf16>
    %51 = vector.shape_cast %48 : vector<16x16x128xbf16> to vector<1x16x16x128xbf16>
    tpu.vector_store %arg6[%c0_51, %c0_52, %c0_53, %c0_54], %51 {strides = array<i32>} : memref<1x16x16x128xbf16, #tpu.memory_space<vmem>>, vector<1x16x16x128xbf16>,
    %c0_i32 = arith.constant 0 : i32
    %52 = arith.cmpi eq, %arg1, %c0_i32 : i32
    %53 = arith.extui %52 : i1 to i32
    %c0_i32_55 = arith.constant 0 : i32
    %54 = arith.cmpi ne, %53, %c0_i32_55 : i32
    scf.if %54 {
      %cst_70 = arith.constant 0.000000e+00 : f32
      %71 = vector.broadcast %cst_70 : f32 to vector<8x128xf32>
      %c0_71 = arith.constant 0 : index
      %c0_72 = arith.constant 0 : index
      %c0_73 = arith.constant 0 : index
      %72 = vector.load %arg7[%c0_71, %c0_72, %c0_73] : memref<1x8x128xf32, #tpu.memory_space<vmem>>, vector<1x8x128xf32>
      %73 = vector.shape_cast %72 : vector<1x8x128xf32> to vector<8x128xf32>
      %74 = vector.shape_cast %71 : vector<8x128xf32> to vector<1x8x128xf32>
      tpu.vector_store %arg7[%c0_71, %c0_72, %c0_73], %74 {strides = array<i32>} : memref<1x8x128xf32, #tpu.memory_space<vmem>>, vector<1x8x128xf32>,
      %cst_74 = arith.constant 0.000000e+00 : f32
      %75 = vector.broadcast %cst_74 : f32 to vector<8x128xf32>
      %c0_75 = arith.constant 0 : index
      %c0_76 = arith.constant 0 : index
      %c0_77 = arith.constant 0 : index
      %76 = vector.load %arg8[%c0_75, %c0_76, %c0_77] : memref<1x8x128xf32, #tpu.memory_space<vmem>>, vector<1x8x128xf32>
      %77 = vector.shape_cast %76 : vector<1x8x128xf32> to vector<8x128xf32>
      %78 = vector.shape_cast %75 : vector<8x128xf32> to vector<1x8x128xf32>
      tpu.vector_store %arg8[%c0_75, %c0_76, %c0_77], %78 {strides = array<i32>} : memref<1x8x128xf32, #tpu.memory_space<vmem>>, vector<1x8x128xf32>,
    } else {
    }
    %55 = vector.shape_cast %46 : vector<256x128xf32> to vector<32x8x128xf32>
    %c0_56 = arith.constant 0 : index
    %c0_57 = arith.constant 0 : index
    %c0_58 = arith.constant 0 : index
    %56 = vector.load %arg7[%c0_56, %c0_57, %c0_58] : memref<1x8x128xf32, #tpu.memory_space<vmem>>, vector<1x8x128xf32>
    %57 = vector.shape_cast %56 : vector<1x8x128xf32> to vector<8x128xf32>
    %cst_59 = arith.constant dense<0.000000e+00> : vector<8x128xf32>
    %58 = vector.multi_reduction <add>, %55, %cst_59 [0] : vector<32x8x128xf32> to vector<8x128xf32>
    %59 = arith.addf %57, %58 : vector<8x128xf32>
    %c0_60 = arith.constant 0 : index
    %c0_61 = arith.constant 0 : index
    %c0_62 = arith.constant 0 : index
    %60 = vector.load %arg7[%c0_60, %c0_61, %c0_62] : memref<1x8x128xf32, #tpu.memory_space<vmem>>, vector<1x8x128xf32>
    %61 = vector.shape_cast %60 : vector<1x8x128xf32> to vector<8x128xf32>
    %62 = vector.shape_cast %59 : vector<8x128xf32> to vector<1x8x128xf32>
    tpu.vector_store %arg7[%c0_60, %c0_61, %c0_62], %62 {strides = array<i32>} : memref<1x8x128xf32, #tpu.memory_space<vmem>>, vector<1x8x128xf32>,
    %c0_63 = arith.constant 0 : index
    %c0_64 = arith.constant 0 : index
    %c0_65 = arith.constant 0 : index
    %63 = vector.load %arg8[%c0_63, %c0_64, %c0_65] : memref<1x8x128xf32, #tpu.memory_space<vmem>>, vector<1x8x128xf32>
    %64 = vector.shape_cast %63 : vector<1x8x128xf32> to vector<8x128xf32>
    %65 = arith.mulf %55, %55 : vector<32x8x128xf32>
    %cst_66 = arith.constant dense<0.000000e+00> : vector<8x128xf32>
    %66 = vector.multi_reduction <add>, %65, %cst_66 [0] : vector<32x8x128xf32> to vector<8x128xf32>
    %67 = arith.addf %64, %66 : vector<8x128xf32>
    %c0_67 = arith.constant 0 : index
    %c0_68 = arith.constant 0 : index
    %c0_69 = arith.constant 0 : index
    %68 = vector.load %arg8[%c0_67, %c0_68, %c0_69] : memref<1x8x128xf32, #tpu.memory_space<vmem>>, vector<1x8x128xf32>
    %69 = vector.shape_cast %68 : vector<1x8x128xf32> to vector<8x128xf32>
    %70 = vector.shape_cast %67 : vector<8x128xf32> to vector<1x8x128xf32>
    tpu.vector_store %arg8[%c0_67, %c0_68, %c0_69], %70 {strides = array<i32>} : memref<1x8x128xf32, #tpu.memory_space<vmem>>, vector<1x8x128xf32>,
    return
  }
  func.func @transform_0(%arg0: i32, %arg1: i32) -> (i32, i32, i32, i32) {
    %c1_i32 = arith.constant 1 : i32
    %0 = arith.muli %arg0, %c1_i32 : i32
    %1 = arith.addi %0, %arg1 : i32
    %c0_i32 = arith.constant 0 : i32
    %c0_i32_0 = arith.constant 0 : i32
    %c0_i32_1 = arith.constant 0 : i32
    %c0_i32_2 = arith.constant 0 : i32
    return %1, %c0_i32, %c0_i32_0, %c0_i32_1 : i32, i32, i32, i32
  }
  func.func @transform_1(%arg0: i32, %arg1: i32) -> (i32, i32) {
    %c0_i32 = arith.constant 0 : i32
    %c0_i32_0 = arith.constant 0 : i32
    %c0_i32_1 = arith.constant 0 : i32
    return %c0_i32, %c0_i32_0 : i32, i32
  }
  func.func @transform_2(%arg0: i32, %arg1: i32) -> (i32, i32) {
    %c0_i32 = arith.constant 0 : i32
    %c0_i32_0 = arith.constant 0 : i32
    %c0_i32_1 = arith.constant 0 : i32
    return %c0_i32, %c0_i32_0 : i32, i32
  }
  func.func @transform_3(%arg0: i32, %arg1: i32) -> (i32, i32) {
    %c0_i32 = arith.constant 0 : i32
    %c0_i32_0 = arith.constant 0 : i32
    %c0_i32_1 = arith.constant 0 : i32
    return %c0_i32, %c0_i32_0 : i32, i32
  }
  func.func @transform_4(%arg0: i32, %arg1: i32) -> (i32, i32, i32, i32) {
    %c1_i32 = arith.constant 1 : i32
    %0 = arith.muli %arg0, %c1_i32 : i32
    %1 = arith.addi %0, %arg1 : i32
    %c0_i32 = arith.constant 0 : i32
    %c0_i32_0 = arith.constant 0 : i32
    %c0_i32_1 = arith.constant 0 : i32
    %c0_i32_2 = arith.constant 0 : i32
    return %1, %c0_i32, %c0_i32_0, %c0_i32_1 : i32, i32, i32, i32
  }
  func.func @transform_5(%arg0: i32, %arg1: i32) -> (i32, i32, i32) {
    %c0_i32 = arith.constant 0 : i32
    %c0_i32_0 = arith.constant 0 : i32
    %c0_i32_1 = arith.constant 0 : i32
    return %arg0, %c0_i32, %c0_i32_0 : i32, i32, i32
  }
  func.func @transform_6(%arg0: i32, %arg1: i32) -> (i32, i32, i32) {
    %c0_i32 = arith.constant 0 : i32
    %c0_i32_0 = arith.constant 0 : i32
    %c0_i32_1 = arith.constant 0 : i32
    return %arg0, %c0_i32, %c0_i32_0 : i32, i32, i32
  }
}

module attributes {stable_mosaic.version = 11 : i64} {
  func.func @_norm_add_relu_kernel(%arg0: i32, %arg1: memref<256x128xbf16, #tpu.memory_space<vmem>>, %arg2: memref<256x128xbf16, #tpu.memory_space<vmem>>, %arg3: memref<1x128xf32, #tpu.memory_space<vmem>>, %arg4: memref<1x128xf32, #tpu.memory_space<vmem>>, %arg5: memref<256x128xf32, #tpu.memory_space<vmem>>) attributes {dimension_semantics = [#tpu.dimension_semantics<parallel>], iteration_bounds = array<i64: 2>, scalar_prefetch = 0 : i64, scratch_operands = 0 : i64, tpu.core_type = #tpu.core_type<tc>, window_params = [{transform_indices = @transform_0, window_bounds = array<i64: 256, 128>}, {transform_indices = @transform_1, window_bounds = array<i64: 256, 128>}, {pipeline_mode = #tpu.pipeline_mode<synchronous>, transform_indices = @transform_2, window_bounds = array<i64: 1, 128>}, {pipeline_mode = #tpu.pipeline_mode<synchronous>, transform_indices = @transform_3, window_bounds = array<i64: 1, 128>}, {transform_indices = @transform_4, window_bounds = array<i64: 256, 128>}]} {
    %c0 = arith.constant 0 : index
    %c0_0 = arith.constant 0 : index
    %0 = vector.load %arg1[%c0, %c0_0] : memref<256x128xbf16, #tpu.memory_space<vmem>>, vector<256x128xbf16>
    %1 = arith.extf %0 : vector<256x128xbf16> to vector<256x128xf32>
    %c0_1 = arith.constant 0 : index
    %c0_2 = arith.constant 0 : index
    %2 = vector.load %arg3[%c0_1, %c0_2] : memref<1x128xf32, #tpu.memory_space<vmem>>, vector<1x128xf32>
    %3 = vector.broadcast %2 : vector<1x128xf32> to vector<256x128xf32>
    %4 = arith.mulf %1, %3 : vector<256x128xf32>
    %c0_3 = arith.constant 0 : index
    %c0_4 = arith.constant 0 : index
    %5 = vector.load %arg4[%c0_3, %c0_4] : memref<1x128xf32, #tpu.memory_space<vmem>>, vector<1x128xf32>
    %6 = vector.broadcast %5 : vector<1x128xf32> to vector<256x128xf32>
    %7 = arith.addf %4, %6 : vector<256x128xf32>
    %c0_5 = arith.constant 0 : index
    %c0_6 = arith.constant 0 : index
    %8 = vector.load %arg2[%c0_5, %c0_6] : memref<256x128xbf16, #tpu.memory_space<vmem>>, vector<256x128xbf16>
    %9 = arith.extf %8 : vector<256x128xbf16> to vector<256x128xf32>
    %10 = arith.addf %7, %9 : vector<256x128xf32>
    %cst = arith.constant 0.000000e+00 : f32
    %11 = vector.broadcast %cst : f32 to vector<256x128xf32>
    %12 = arith.maximumf %10, %11 : vector<256x128xf32>
    %c0_7 = arith.constant 0 : index
    %c0_8 = arith.constant 0 : index
    %13 = vector.load %arg5[%c0_7, %c0_8] : memref<256x128xf32, #tpu.memory_space<vmem>>, vector<256x128xf32>
    tpu.vector_store %arg5[%c0_7, %c0_8], %12 {strides = array<i32>} : memref<256x128xf32, #tpu.memory_space<vmem>>, vector<256x128xf32>,
    return
  }
  func.func @transform_0(%arg0: i32) -> (i32, i32) {
    %c0_i32 = arith.constant 0 : i32
    %c0_i32_0 = arith.constant 0 : i32
    return %arg0, %c0_i32 : i32, i32
  }
  func.func @transform_1(%arg0: i32) -> (i32, i32) {
    %c0_i32 = arith.constant 0 : i32
    %c0_i32_0 = arith.constant 0 : i32
    return %arg0, %c0_i32 : i32, i32
  }
  func.func @transform_2(%arg0: i32) -> (i32, i32) {
    %c0_i32 = arith.constant 0 : i32
    %c0_i32_0 = arith.constant 0 : i32
    %c0_i32_1 = arith.constant 0 : i32
    return %c0_i32, %c0_i32_0 : i32, i32
  }
  func.func @transform_3(%arg0: i32) -> (i32, i32) {
    %c0_i32 = arith.constant 0 : i32
    %c0_i32_0 = arith.constant 0 : i32
    %c0_i32_1 = arith.constant 0 : i32
    return %c0_i32, %c0_i32_0 : i32, i32
  }
  func.func @transform_4(%arg0: i32) -> (i32, i32) {
    %c0_i32 = arith.constant 0 : i32
    %c0_i32_0 = arith.constant 0 : i32
    return %arg0, %c0_i32 : i32, i32
  }
}

</mosaic_0001>

<llo_original>
// kernel: block_forward.4
$region0: #{block_forward.4}
  #allocation0 [shape = 'u32[]', space=smem, size = 0x4, offset = 0x4, fixed_abs, tag = 'smem constant byte address 0x4 - core index']
  #allocation1 [shape = 'u32[144,128]{1,0:T(1,128)}', space=vmem, size = 0x12000, scoped, tag = 'internal scratch']
  %s0 = inlined_call_operand.vmem [shape: bf16[512,128], index: 0, kind: input, shape index: {}]
  %s1 = inlined_call_operand.vmem [shape: bf16[128,128], index: 1, kind: input, shape index: {}]
  %s2 = inlined_call_operand.vmem [shape: bf16[512,128], index: 2, kind: output, shape index: {0}]
  %s3 = inlined_call_operand.vmem [shape: f32[2,8,128], index: 3, kind: output, shape index: {1}]
  %s4 = inlined_call_operand.vmem [shape: f32[2,8,128], index: 4, kind: output, shape index: {2}]
  %5 = xla_tuple %s2, %s3, %s4
  %s6 = sld [smem:[#allocation0]]
  $region61: #{block_forward.4} parent=0
    _
  %s8 = ssub.s32 1, %s6
  %s9 = scalar_select 0, %s8, %s6
  loop: start=0, step=1, limit=4
  $region2: #{block_forward.4} parent=0 // loop_pre_header
    _
  $region3: #{block_forward.4} parent=0 // loop_header
    %s11 = sphi 0, %s15
    %p12 = scmp.ge.s32.totalorder %s11, 4
    %s18 = sphi 0, %s30
    %s19 = sphi 0, %s26
    %s20 = sphi 0, %s18
    %s21 = sphi 0, %s19
    %s22 = sphi 0, %s20
    %s23 = sphi 0, %s21
    %s35 = sphi 0, %s37
    %s38 = sphi 0, %s35
    %s39 = sphi 0, %s38
    %s55 = sphi 0, %s39
    %s59 = sphi 0, %s59
    %s61 = sphi 0, %s59
    %s62 = sphi 0, %s61
    %s76 = sphi 0, %s62
    %s84 = sphi 0, %s86
    %s87 = sphi 0, %s84
    %s88 = sphi 0, %s87
    %s104 = sphi 0, %s88
    %s110 = sphi 0, %s112
    %s113 = sphi 0, %s110
    %s114 = sphi 0, %s113
    %s130 = sphi 0, %s114
    %s136 = sphi 0, %s138
    %s139 = sphi 0, %s136
    %s140 = sphi 0, %s139
    %s156 = sphi 0, %s140
  $region4: #{block_forward.4} parent=0 // loop_header_branch
    %14 = sbr.rel (%p12) target = $region8
  $region5: #{block_forward.4} parent=0 // loop_body
    %s16 = ssub.s32 %s11, 1
    %s17 = ssub.s32 %s11, 2
    %s24 = sadd.s32 1, %s19
    %p25 = scmp.ge.s32.totalorder %s24, 1
    %s26 = scalar_select %p25, 0, %s24
    %s27 = sadd.s32 1, %s18
    %s28 = scalar_select %p25, %s27, %s18
    %p29 = scmp.ge.s32.totalorder %s28, 2
    %s30 = scalar_select %p29, 0, %s28
    %s31 = sadd.s32 %s18, %s19
    %s32 = sadd.s32 %s30, %s26
    %s33 = ssub.s32 %s31, %s32
    %p34 = scmp.eq.s32.totalorder %s33, 0
    %s36 = sadd.s32 %s35, 1
    %s37 = scalar_select %p34, %s35, %s36
    %p40 = pneg %p34
    %p41 = scmp.eq.s32.totalorder %s11, 1
    %p42 = por %p40, %p41
    %p43 = scmp.ne.s32.totalorder %s35, %s38
    %p44 = scmp.eq.s32.totalorder %s11, 0
    %p45 = por %p43, %p44
    %p46 = scmp.ne.s32.totalorder %s35, %s38
    %p47 = scmp.eq.s32.totalorder %s16, 1
    %p48 = por %p46, %p47
    %p49 = scmp.ne.s32.totalorder %s38, %s39
    %p50 = scmp.eq.s32.totalorder %s16, 0
    %p51 = por %p49, %p50
    %p52 = scmp.ne.s32.totalorder %s38, %s39
    %p53 = scmp.eq.s32.totalorder %s17, 1
    %p54 = por %p52, %p53
    %p56 = scmp.ne.s32.totalorder %s39, %s55
    %p57 = scmp.eq.s32.totalorder %s17, 0
    %p58 = por %p56, %p57
    %s60 = sadd.s32 %s59, 1
    %p63 = scmp.eq.s32.totalorder %s11, 1
    %p64 = scmp.ne.s32.totalorder %s59, %s61
    %p65 = scmp.eq.s32.totalorder %s11, 0
    %p66 = por %p64, %p65
    %p67 = scmp.ne.s32.totalorder %s59, %s61
    %p68 = scmp.eq.s32.totalorder %s16, 1
    %p69 = por %p67, %p68
    %p70 = scmp.ne.s32.totalorder %s61, %s62
    %p71 = scmp.eq.s32.totalorder %s16, 0
    %p72 = por %p70, %p71
    %p73 = scmp.ne.s32.totalorder %s61, %s62
    %p74 = scmp.eq.s32.totalorder %s17, 1
    %p75 = por %p73, %p74
    %p77 = scmp.ne.s32.totalorder %s62, %s76
    %p78 = scmp.eq.s32.totalorder %s17, 0
    %p79 = por %p77, %p78
    %s80 = sadd.s32 %s18, %s19
    %s81 = sadd.s32 %s30, %s26
    %s82 = ssub.s32 %s80, %s81
    %p83 = scmp.eq.s32.totalorder %s82, 0
    %s85 = sadd.s32 %s84, 1
    %s86 = scalar_select %p83, %s84, %s85
    %p89 = pneg %p83
    %p90 = scmp.eq.s32.totalorder %s11, 1
    %p91 = por %p89, %p90
    %p92 = scmp.ne.s32.totalorder %s84, %s87
    %p93 = scmp.eq.s32.totalorder %s11, 0
    %p94 = por %p92, %p93
    %p95 = scmp.ne.s32.totalorder %s84, %s87
    %p96 = scmp.eq.s32.totalorder %s16, 1
    %p97 = por %p95, %p96
    %p98 = scmp.ne.s32.totalorder %s87, %s88
    %p99 = scmp.eq.s32.totalorder %s16, 0
    %p100 = por %p98, %p99
    %p101 = scmp.ne.s32.totalorder %s87, %s88
    %p102 = scmp.eq.s32.totalorder %s17, 1
    %p103 = por %p101, %p102
    %p105 = scmp.ne.s32.totalorder %s88, %s104
    %p106 = scmp.eq.s32.totalorder %s17, 0
    %p107 = por %p105, %p106
    %s108 = ssub.s32 %s18, %s30
    %p109 = scmp.eq.s32.totalorder %s108, 0
    %s111 = sadd.s32 %s110, 1
    %s112 = scalar_select %p109, %s110, %s111
    %p115 = pneg %p109
    %p116 = scmp.eq.s32.totalorder %s11, 1
    %p117 = por %p115, %p116
    %p118 = scmp.ne.s32.totalorder %s110, %s113
    %p119 = scmp.eq.s32.totalorder %s11, 0
    %p120 = por %p118, %p119
    %p121 = scmp.ne.s32.totalorder %s110, %s113
    %p122 = scmp.eq.s32.totalorder %s16, 1
    %p123 = por %p121, %p122
    %p124 = scmp.ne.s32.totalorder %s113, %s114
    %p125 = scmp.eq.s32.totalorder %s16, 0
    %p126 = por %p124, %p125
    %p127 = scmp.ne.s32.totalorder %s113, %s114
    %p128 = scmp.eq.s32.totalorder %s17, 1
    %p129 = por %p127, %p128
    %p131 = scmp.ne.s32.totalorder %s114, %s130
    %p132 = scmp.eq.s32.totalorder %s17, 0
    %p133 = por %p131, %p132
    %s134 = ssub.s32 %s18, %s30
    %p135 = scmp.eq.s32.totalorder %s134, 0
    %s137 = sadd.s32 %s136, 1
    %s138 = scalar_select %p135, %s136, %s137
    %p141 = pneg %p135
    %p142 = scmp.eq.s32.totalorder %s11, 1
    %p143 = por %p141, %p142
    %p144 = scmp.ne.s32.totalorder %s136, %s139
    %p145 = scmp.eq.s32.totalorder %s11, 0
    %p146 = por %p144, %p145
    %p147 = scmp.ne.s32.totalorder %s136, %s139
    %p148 = scmp.eq.s32.totalorder %s16, 1
    %p149 = por %p147, %p148
    %p150 = scmp.ne.s32.totalorder %s139, %s140
    %p151 = scmp.eq.s32.totalorder %s16, 0
    %p152 = por %p150, %p151
    %p153 = scmp.ne.s32.totalorder %s139, %s140
    %p154 = scmp.eq.s32.totalorder %s17, 1
    %p155 = por %p153, %p154
    %p157 = scmp.ne.s32.totalorder %s140, %s156
    %p158 = scmp.eq.s32.totalorder %s17, 0
    %p159 = por %p157, %p158
    %p160 = scmp.le.s32.totalorder 1, %s11
    %p161 = scmp.lt.s32.totalorder %s11, 3
    %p162 = pnand %p160, %p161
    %p163 = pneg %p162
    // Predicated region
    $region9: #{block_forward.4} parent=5 // pred_check
      _
    $region10: #{block_forward.4} parent=5 // pred_check_branch
      %165 = sbr.rel (%p162) target = $region12
    $region11: #{block_forward.4} parent=5 // pred_region
      %s166 = ssub.s32 %s11, 1
      // Predicated region
      $region13: #{block_forward.4} parent=11 // pred_check
        %p167 = pneg %p72
      $region14: #{block_forward.4} parent=11 // pred_check_branch
        %169 = sbr.rel (%p167) target = $region16
      $region15: #{block_forward.4} parent=11 // pred_region
        _
      $region16: #{block_forward.4} parent=11 // pred_fallthru
        _
    $region12: #{block_forward.4} parent=5 // pred_fallthru
      _
    %p170 = scmp.lt.s32.totalorder %s11, 2
    // Predicated region
    $region17: #{block_forward.4} parent=5 // pred_check
      %p171 = pneg %p170
    $region18: #{block_forward.4} parent=5 // pred_check_branch
      %173 = sbr.rel (%p171) target = $region20
    $region19: #{block_forward.4} parent=5 // pred_region
      // Predicated region
      $region21: #{block_forward.4} parent=19 // pred_check
        %p174 = pneg %p45
      $region22: #{block_forward.4} parent=19 // pred_check_branch
        %176 = sbr.rel (%p174) target = $region24
      $region23: #{block_forward.4} parent=19 // pred_region
        %s177 = sadd.s32 %s18, %s19
        %s178 = smul.u32 32, %s177
        %p179 = scmp.lt.s32.totalorder %s178, 63
        %s180 = scalar_select %p179, %s178, 63
        %s181 = smul.addr %s180, 4
        %s182 = scalar_lea.vmem %s0, %s181
        %s183 = sadd.s32 %s18, %s19
        %s184 = smul.u32 32, %s183
      $region24: #{block_forward.4} parent=19 // pred_fallthru
        _
    $region20: #{block_forward.4} parent=5 // pred_fallthru
      _
    %p185 = scmp.le.s32.totalorder 1, %s11
    %p186 = scmp.lt.s32.totalorder %s11, 3
    %p187 = pnand %p185, %p186
    %p188 = pneg %p187
    // Predicated region
    $region25: #{block_forward.4} parent=5 // pred_check
      _
    $region26: #{block_forward.4} parent=5 // pred_check_branch
      %190 = sbr.rel (%p187) target = $region28
    $region27: #{block_forward.4} parent=5 // pred_region
      %s191 = ssub.s32 %s11, 1
      %s192 = sadd.s32 %s20, %s21
      %s193 = smul.u32 32, %s192
      %p194 = scmp.lt.s32.totalorder %s193, 63
      %s195 = scalar_select %p194, %s193, 63
      %s196 = smul.addr %s195, 4
      %s197 = scalar_lea.vmem %s0, %s196
      %p198 = pneg %p51
      %p199 = pneg %p48
      %p200 = pneg %p72
      %p201 = pneg %p69
      %p202 = pneg %p100
      %p203 = pneg %p97
      %s204 = sadd.s32 %s20, %s21
      %s205 = smul.u32 32, %s204
      %p206 = scmp.lt.s32.totalorder %s205, 63
      %s207 = scalar_select %p206, %s205, 63
      %s208 = smul.addr %s207, 4
      %s209 = scalar_lea.vmem %s2, %s208
      %p210 = pneg %p126
      %p211 = pneg %p123
      %p212 = scmp.lt.s32.totalorder %s20, 1
      %s213 = scalar_select %p212, %s20, 1
      %s214 = smul.addr %s213, 8
      %s215 = scalar_lea.vmem %s3, %s214
      %p216 = pneg %p152
      %p217 = pneg %p149
      %p218 = scmp.lt.s32.totalorder %s20, 1
      %s219 = scalar_select %p218, %s20, 1
      %s220 = smul.addr %s219, 8
      %s221 = scalar_lea.vmem %s4, %s220
      %s222 = sadd.s32 %s20, %s21
      %s223 = smul.u32 32, %s222
      %p224 = scmp.lt.s32.totalorder %s223, 63
      %s225 = scalar_select %p224, %s223, 63
      %s226 = smul.addr %s225, 4
      %s227 = scalar_lea.vmem %s0, %s226
      %s228 = sadd.s32 %s20, %s21
      %s229 = smul.u32 32, %s228
      %s230 = sadd.s32 %s20, %s21
      %s231 = smul.u32 32, %s230
      %p232 = scmp.lt.s32.totalorder %s231, 63
      %s233 = scalar_select %p232, %s231, 63
      %s234 = smul.addr %s233, 4
      %s235 = scalar_lea.vmem %s2, %s234
      %s236 = sadd.s32 %s20, %s21
      %s237 = smul.u32 32, %s236
      %p238 = scmp.lt.s32.totalorder %s20, 1
      %s239 = scalar_select %p238, %s20, 1
      %s240 = smul.addr %s239, 8
      %s241 = scalar_lea.vmem %s3, %s240
      %p242 = scmp.lt.s32.totalorder %s20, 1
      %s243 = scalar_select %p242, %s20, 1
      %s244 = smul.addr %s243, 8
      %s245 = scalar_lea.vmem %s4, %s244
      %v247 = vld [vmem:[%s227] sm:$0xf]
      %v248 = vld [vmem:[%s227 + $0x4] sm:$0xf]
      %v249 = vld [vmem:[%s227 + $0x8] sm:$0xf]
      %v250 = vld [vmem:[%s227 + $0xc] sm:$0xf]
      %v251 = vld [vmem:[%s227 + $0x10] sm:$0xf]
      %v252 = vld [vmem:[%s227 + $0x14] sm:$0xf]
      %v253 = vld [vmem:[%s227 + $0x18] sm:$0xf]
      %v254 = vld [vmem:[%s227 + $0x1c] sm:$0xf]
      %v255 = vld [vmem:[%s227 + $0x20] sm:$0xf]
      %v256 = vld [vmem:[%s227 + $0x24] sm:$0xf]
      %v257 = vld [vmem:[%s227 + $0x28] sm:$0xf]
      %v258 = vld [vmem:[%s227 + $0x2c] sm:$0xf]
      %v259 = vld [vmem:[%s227 + $0x30] sm:$0xf]
      %v260 = vld [vmem:[%s227 + $0x34] sm:$0xf]
      %v261 = vld [vmem:[%s227 + $0x38] sm:$0xf]
      %v262 = vld [vmem:[%s227 + $0x3c] sm:$0xf]
      %v263 = vld [vmem:[%s227 + $0x40] sm:$0xf]
      %v264 = vld [vmem:[%s227 + $0x44] sm:$0xf]
      %v265 = vld [vmem:[%s227 + $0x48] sm:$0xf]
      %v266 = vld [vmem:[%s227 + $0x4c] sm:$0xf]
      %v267 = vld [vmem:[%s227 + $0x50] sm:$0xf]
      %v268 = vld [vmem:[%s227 + $0x54] sm:$0xf]
      %v269 = vld [vmem:[%s227 + $0x58] sm:$0xf]
      %v270 = vld [vmem:[%s227 + $0x5c] sm:$0xf]
      %v271 = vld [vmem:[%s227 + $0x60] sm:$0xf]
      %v272 = vld [vmem:[%s227 + $0x64] sm:$0xf]
      %v273 = vld [vmem:[%s227 + $0x68] sm:$0xf]
      %v274 = vld [vmem:[%s227 + $0x6c] sm:$0xf]
      %v275 = vld [vmem:[%s227 + $0x70] sm:$0xf]
      %v276 = vld [vmem:[%s227 + $0x74] sm:$0xf]
      %v277 = vld [vmem:[%s227 + $0x78] sm:$0xf]
      %v278 = vld [vmem:[%s227 + $0x7c] sm:$0xf]
      %v279 = vld [vmem:[%s1] sm:$0xf]
      %v280 = vld [vmem:[%s1 + $0x4] sm:$0xf]
      %v281 = vld [vmem:[%s1 + $0x8] sm:$0xf]
      %v282 = vld [vmem:[%s1 + $0xc] sm:$0xf]
      %v283 = vld [vmem:[%s1 + $0x10] sm:$0xf]
      %v284 = vld [vmem:[%s1 + $0x14] sm:$0xf]
      %v285 = vld [vmem:[%s1 + $0x18] sm:$0xf]
      %v286 = vld [vmem:[%s1 + $0x1c] sm:$0xf]
      %v287 = vld [vmem:[%s1 + $0x20] sm:$0xf]
      %v288 = vld [vmem:[%s1 + $0x24] sm:$0xf]
      %v289 = vld [vmem:[%s1 + $0x28] sm:$0xf]
      %v290 = vld [vmem:[%s1 + $0x2c] sm:$0xf]
      %v291 = vld [vmem:[%s1 + $0x30] sm:$0xf]
      %v292 = vld [vmem:[%s1 + $0x34] sm:$0xf]
      %v293 = vld [vmem:[%s1 + $0x38] sm:$0xf]
      %v294 = vld [vmem:[%s1 + $0x3c] sm:$0xf]
      %v327 = vunpack.c.l.b16 %v247
      %v328 = vunpack.c.l.b16 %v248
      %v329 = vunpack.c.l.b16 %v249
      %v330 = vunpack.c.l.b16 %v250
      %v331 = vunpack.c.l.b16 %v251
      %v332 = vunpack.c.l.b16 %v252
      %v333 = vunpack.c.l.b16 %v253
      %v334 = vunpack.c.l.b16 %v254
      %v335 = vunpack.c.l.b16 %v255
      %v336 = vunpack.c.l.b16 %v256
      %v337 = vunpack.c.l.b16 %v257
      %v338 = vunpack.c.l.b16 %v258
      %v339 = vunpack.c.l.b16 %v259
      %v340 = vunpack.c.l.b16 %v260
      %v341 = vunpack.c.l.b16 %v261
      %v342 = vunpack.c.l.b16 %v262
      %v343 = vunpack.c.l.b16 %v263
      %v344 = vunpack.c.l.b16 %v264
      %v345 = vunpack.c.l.b16 %v265
      %v346 = vunpack.c.l.b16 %v266
      %v347 = vunpack.c.l.b16 %v267
      %v348 = vunpack.c.l.b16 %v268
      %v349 = vunpack.c.l.b16 %v269
      %v350 = vunpack.c.l.b16 %v270
      %v351 = vunpack.c.l.b16 %v271
      %v352 = vunpack.c.l.b16 %v272
      %v353 = vunpack.c.l.b16 %v273
      %v354 = vunpack.c.l.b16 %v274
      %v355 = vunpack.c.l.b16 %v275
      %v356 = vunpack.c.l.b16 %v276
      %v357 = vunpack.c.l.b16 %v277
      %v358 = vunpack.c.l.b16 %v278
      %v359 = vpack.c.b16 %v328, %v327
      %v360 = vpack.c.b16 %v330, %v329
      %v361 = vpack.c.b16 %v332, %v331
      %v362 = vpack.c.b16 %v334, %v333
      %v363 = vpack.c.b16 %v336, %v335
      %v364 = vpack.c.b16 %v338, %v337
      %v365 = vpack.c.b16 %v340, %v339
      %v366 = vpack.c.b16 %v342, %v341
      %v367 = vpack.c.b16 %v344, %v343
      %v368 = vpack.c.b16 %v346, %v345
      %v369 = vpack.c.b16 %v348, %v347
      %v370 = vpack.c.b16 %v350, %v349
      %v371 = vpack.c.b16 %v352, %v351
      %v372 = vpack.c.b16 %v354, %v353
      %v373 = vpack.c.b16 %v356, %v355
      %v374 = vpack.c.b16 %v358, %v357
      %v407 = vunpack.c.l.b16 %v279
      %v408 = vunpack.c.l.b16 %v280
      %v409 = vunpack.c.l.b16 %v281
      %v410 = vunpack.c.l.b16 %v282
      %v411 = vunpack.c.l.b16 %v283
      %v412 = vunpack.c.l.b16 %v284
      %v413 = vunpack.c.l.b16 %v285
      %v414 = vunpack.c.l.b16 %v286
      %v415 = vunpack.c.l.b16 %v287
      %v416 = vunpack.c.l.b16 %v288
      %v417 = vunpack.c.l.b16 %v289
      %v418 = vunpack.c.l.b16 %v290
      %v419 = vunpack.c.l.b16 %v291
      %v420 = vunpack.c.l.b16 %v292
      %v421 = vunpack.c.l.b16 %v293
      %v422 = vunpack.c.l.b16 %v294
      %v423 = vpack.c.b16 %v408, %v407
      %v424 = vpack.c.b16 %v410, %v409
      %v425 = vpack.c.b16 %v412, %v411
      %v426 = vpack.c.b16 %v414, %v413
      %v427 = vpack.c.b16 %v416, %v415
      %v428 = vpack.c.b16 %v418, %v417
      %v429 = vpack.c.b16 %v420, %v419
      %v430 = vpack.c.b16 %v422, %v421
      %439 = vmatprep.subr.bf16.mxu0 0
      %440 = vmatpush1.bf16.msra.mxu0 %v423
      %441 = vmatprep.subr.bf16.mxu0 0
      %442 = vmatpush1.bf16.msra.mxu0 %v424
      %443 = vmatprep.subr.bf16.mxu0 0
      %444 = vmatpush1.bf16.msra.mxu0 %v425
      %445 = vmatprep.subr.bf16.mxu0 0
      %446 = vmatpush1.bf16.msra.mxu0 %v426
      %447 = vmatprep.subr.bf16.mxu0 0
      %448 = vmatpush1.bf16.msra.mxu0 %v427
      %449 = vmatprep.subr.bf16.mxu0 0
      %450 = vmatpush1.bf16.msra.mxu0 %v428
      %451 = vmatprep.subr.bf16.mxu0 0
      %452 = vmatpush1.bf16.msra.mxu0 %v429
      %453 = vmatprep.subr.bf16.mxu0 0
      %454 = vmatpush1.bf16.msra.mxu0 %v430
      %455 = vmatprep.subr.bf16.mxu0 0
      %456 = vmatpush1.bf16.msra.mxu0 0
      %457 = vmatprep.subr.bf16.mxu0 0
      %458 = vmatpush1.bf16.msra.mxu0 0
      %459 = vmatprep.subr.bf16.mxu0 0
      %460 = vmatpush1.bf16.msra.mxu0 0
      %461 = vmatprep.subr.bf16.mxu0 0
      %462 = vmatpush1.bf16.msra.mxu0 0
      %463 = vmatprep.subr.bf16.mxu0 0
      %464 = vmatpush1.bf16.msra.mxu0 0
      %465 = vmatprep.subr.bf16.mxu0 0
      %466 = vmatpush1.bf16.msra.mxu0 0
      %467 = vmatprep.subr.bf16.mxu0 0
      %468 = vmatpush1.bf16.msra.mxu0 0
      %469 = vmatprep.subr.bf16.mxu0 0
      %470 = vmatpush1.bf16.msra.mxu0 0
      %471 = vmatprep.mubr.bf16.mxu0 0
      %472 = vmatmul.mubr.bf16.gmra.mrb[0].mxu0 %v359
      %v473 = vpop.f32.mrb[0].mxu0
      %v474 = vadd.f32 0.0, %v473
      %v475 = vpop.f32.mrb[0].mxu0
      %v476 = vpop.f32.mrb[0].mxu0
      %v477 = vadd.f32 0.0, %v476
      %v478 = vpop.f32.mrb[0].mxu0
      %479 = vmatprep.mubr.bf16.mxu0 0
      %480 = vmatmul.mubr.bf16.gmra.mrb[0].mxu0 %v360
      %v481 = vpop.f32.mrb[0].mxu0
      %v482 = vadd.f32 0.0, %v481
      %v483 = vpop.f32.mrb[0].mxu0
      %v484 = vpop.f32.mrb[0].mxu0
      %v485 = vadd.f32 0.0, %v484
      %v486 = vpop.f32.mrb[0].mxu0
      %487 = vmatprep.mubr.bf16.mxu0 0
      %488 = vmatmul.mubr.bf16.gmra.mrb[0].mxu0 %v361
      %v489 = vpop.f32.mrb[0].mxu0
      %v490 = vadd.f32 0.0, %v489
      %v491 = vpop.f32.mrb[0].mxu0
      %v492 = vpop.f32.mrb[0].mxu0
      %v493 = vadd.f32 0.0, %v492
      %v494 = vpop.f32.mrb[0].mxu0
      %495 = vmatprep.mubr.bf16.mxu0 0
      %496 = vmatmul.mubr.bf16.gmra.mrb[0].mxu0 %v362
      %v497 = vpop.f32.mrb[0].mxu0
      %v498 = vadd.f32 0.0, %v497
      %v499 = vpop.f32.mrb[0].mxu0
      %v500 = vpop.f32.mrb[0].mxu0
      %v501 = vadd.f32 0.0, %v500
      %v502 = vpop.f32.mrb[0].mxu0
      %503 = vmatprep.mubr.bf16.mxu0 0
      %504 = vmatmul.mubr.bf16.gmra.mrb[0].mxu0 %v363
      %v505 = vpop.f32.mrb[0].mxu0
      %v506 = vadd.f32 0.0, %v505
      %v507 = vpop.f32.mrb[0].mxu0
      %v508 = vpop.f32.mrb[0].mxu0
      %v509 = vadd.f32 0.0, %v508
      %v510 = vpop.f32.mrb[0].mxu0
      %511 = vmatprep.mubr.bf16.mxu0 0
      %512 = vmatmul.mubr.bf16.gmra.mrb[0].mxu0 %v364
      %v513 = vpop.f32.mrb[0].mxu0
      %v514 = vadd.f32 0.0, %v513
      %v515 = vpop.f32.mrb[0].mxu0
      %v516 = vpop.f32.mrb[0].mxu0
      %v517 = vadd.f32 0.0, %v516
      %v518 = vpop.f32.mrb[0].mxu0
      %519 = vmatprep.mubr.bf16.mxu0 0
      %520 = vmatmul.mubr.bf16.gmra.mrb[0].mxu0 %v365
      %v521 = vpop.f32.mrb[0].mxu0
      %v522 = vadd.f32 0.0, %v521
      %v523 = vpop.f32.mrb[0].mxu0
      %v524 = vpop.f32.mrb[0].mxu0
      %v525 = vadd.f32 0.0, %v524
      %v526 = vpop.f32.mrb[0].mxu0
      %527 = vmatprep.mubr.bf16.mxu0 0
      %528 = vmatmul.mubr.bf16.gmra.mrb[0].mxu0 %v366
      %v529 = vpop.f32.mrb[0].mxu0
      %v530 = vadd.f32 0.0, %v529
      %v531 = vpop.f32.mrb[0].mxu0
      %v532 = vpop.f32.mrb[0].mxu0
      %v533 = vadd.f32 0.0, %v532
      %v534 = vpop.f32.mrb[0].mxu0
      %535 = vmatprep.mubr.bf16.mxu0 0
      %536 = vmatmul.mubr.bf16.gmra.mrb[0].mxu0 %v367
      %v537 = vpop.f32.mrb[0].mxu0
      %v538 = vadd.f32 0.0, %v537
      %v539 = vpop.f32.mrb[0].mxu0
      %v540 = vpop.f32.mrb[0].mxu0
      %v541 = vadd.f32 0.0, %v540
      %v542 = vpop.f32.mrb[0].mxu0
      %543 = vmatprep.mubr.bf16.mxu0 0
      %544 = vmatmul.mubr.bf16.gmra.mrb[0].mxu0 %v368
      %v545 = vpop.f32.mrb[0].mxu0
      %v546 = vadd.f32 0.0, %v545
      %v547 = vpop.f32.mrb[0].mxu0
      %v548 = vpop.f32.mrb[0].mxu0
      %v549 = vadd.f32 0.0, %v548
      %v550 = vpop.f32.mrb[0].mxu0
      %551 = vmatprep.mubr.bf16.mxu0 0
      %552 = vmatmul.mubr.bf16.gmra.mrb[0].mxu0 %v369
      %v553 = vpop.f32.mrb[0].mxu0
      %v554 = vadd.f32 0.0, %v553
      %v555 = vpop.f32.mrb[0].mxu0
      %v556 = vpop.f32.mrb[0].mxu0
      %v557 = vadd.f32 0.0, %v556
      %v558 = vpop.f32.mrb[0].mxu0
      %559 = vmatprep.mubr.bf16.mxu0 0
      %560 = vmatmul.mubr.bf16.gmra.mrb[0].mxu0 %v370
      %v561 = vpop.f32.mrb[0].mxu0
      %v562 = vadd.f32 0.0, %v561
      %v563 = vpop.f32.mrb[0].mxu0
      %v564 = vpop.f32.mrb[0].mxu0
      %v565 = vadd.f32 0.0, %v564
      %v566 = vpop.f32.mrb[0].mxu0
      %567 = vmatprep.mubr.bf16.mxu0 0
      %568 = vmatmul.mubr.bf16.gmra.mrb[0].mxu0 %v371
      %v569 = vpop.f32.mrb[0].mxu0
      %v570 = vadd.f32 0.0, %v569
      %v571 = vpop.f32.mrb[0].mxu0
      %v572 = vpop.f32.mrb[0].mxu0
      %v573 = vadd.f32 0.0, %v572
      %v574 = vpop.f32.mrb[0].mxu0
      %575 = vmatprep.mubr.bf16.mxu0 0
      %576 = vmatmul.mubr.bf16.gmra.mrb[0].mxu0 %v372
      %v577 = vpop.f32.mrb[0].mxu0
      %v578 = vadd.f32 0.0, %v577
      %v579 = vpop.f32.mrb[0].mxu0
      %v580 = vpop.f32.mrb[0].mxu0
      %v581 = vadd.f32 0.0, %v580
      %v582 = vpop.f32.mrb[0].mxu0
      %583 = vmatprep.mubr.bf16.mxu0 0
      %584 = vmatmul.mubr.bf16.gmra.mrb[0].mxu0 %v373
      %v585 = vpop.f32.mrb[0].mxu0
      %v586 = vadd.f32 0.0, %v585
      %v587 = vpop.f32.mrb[0].mxu0
      %v588 = vpop.f32.mrb[0].mxu0
      %v589 = vadd.f32 0.0, %v588
      %v590 = vpop.f32.mrb[0].mxu0
      %591 = vmatprep.mubr.bf16.mxu0 0
      %592 = vmatmul.mubr.bf16.gmra.mrb[0].mxu0 %v374
      %v593 = vpop.f32.mrb[0].mxu0
      %v594 = vadd.f32 0.0, %v593
      %v595 = vpop.f32.mrb[0].mxu0
      %v596 = vpop.f32.mrb[0].mxu0
      %v597 = vadd.f32 0.0, %v596
      %v598 = vpop.f32.mrb[0].mxu0
      %599 = vdwg.mxu0
      %v600 = vpack.c.bf16 %v477, %v474
      %v601 = vpack.c.bf16 %v485, %v482
      %v602 = vpack.c.bf16 %v493, %v490
      %v603 = vpack.c.bf16 %v501, %v498
      %v604 = vpack.c.bf16 %v509, %v506
      %v605 = vpack.c.bf16 %v517, %v514
      %v606 = vpack.c.bf16 %v525, %v522
      %v607 = vpack.c.bf16 %v533, %v530
      %v608 = vpack.c.bf16 %v541, %v538
      %v609 = vpack.c.bf16 %v549, %v546
      %v610 = vpack.c.bf16 %v557, %v554
      %v611 = vpack.c.bf16 %v565, %v562
      %v612 = vpack.c.bf16 %v573, %v570
      %v613 = vpack.c.bf16 %v581, %v578
      %v614 = vpack.c.bf16 %v589, %v586
      %v615 = vpack.c.bf16 %v597, %v594
      %v632 = vunpack.c.l.b16 %v600
      %v633 = vunpack.c.h.b16 %v600
      %v634 = vunpack.c.l.b16 %v601
      %v635 = vunpack.c.h.b16 %v601
      %v636 = vunpack.c.l.b16 %v602
      %v637 = vunpack.c.h.b16 %v602
      %v638 = vunpack.c.l.b16 %v603
      %v639 = vunpack.c.h.b16 %v603
      %v640 = vunpack.c.l.b16 %v604
      %v641 = vunpack.c.h.b16 %v604
      %v642 = vunpack.c.l.b16 %v605
      %v643 = vunpack.c.h.b16 %v605
      %v644 = vunpack.c.l.b16 %v606
      %v645 = vunpack.c.h.b16 %v606
      %v646 = vunpack.c.l.b16 %v607
      %v647 = vunpack.c.h.b16 %v607
      %v648 = vunpack.c.l.b16 %v608
      %v649 = vunpack.c.h.b16 %v608
      %v650 = vunpack.c.l.b16 %v609
      %v651 = vunpack.c.h.b16 %v609
      %v652 = vunpack.c.l.b16 %v610
      %v653 = vunpack.c.h.b16 %v610
      %v654 = vunpack.c.l.b16 %v611
      %v655 = vunpack.c.h.b16 %v611
      %v656 = vunpack.c.l.b16 %v612
      %v657 = vunpack.c.h.b16 %v612
      %v658 = vunpack.c.l.b16 %v613
      %v659 = vunpack.c.h.b16 %v613
      %v660 = vunpack.c.l.b16 %v614
      %v661 = vunpack.c.h.b16 %v614
      %v662 = vunpack.c.l.b16 %v615
      %v663 = vunpack.c.h.b16 %v615
      %v664 = vpack.c.b16 %v632, %v632
      %v665 = vpack.c.b16 %v633, %v633
      %v666 = vpack.c.b16 %v634, %v634
      %v667 = vpack.c.b16 %v635, %v635
      %v668 = vpack.c.b16 %v636, %v636
      %v669 = vpack.c.b16 %v637, %v637
      %v670 = vpack.c.b16 %v638, %v638
      %v671 = vpack.c.b16 %v639, %v639
      %v672 = vpack.c.b16 %v640, %v640
      %v673 = vpack.c.b16 %v641, %v641
      %v674 = vpack.c.b16 %v642, %v642
      %v675 = vpack.c.b16 %v643, %v643
      %v676 = vpack.c.b16 %v644, %v644
      %v677 = vpack.c.b16 %v645, %v645
      %v678 = vpack.c.b16 %v646, %v646
      %v679 = vpack.c.b16 %v647, %v647
      %v680 = vpack.c.b16 %v648, %v648
      %v681 = vpack.c.b16 %v649, %v649
      %v682 = vpack.c.b16 %v650, %v650
      %v683 = vpack.c.b16 %v651, %v651
      %v684 = vpack.c.b16 %v652, %v652
      %v685 = vpack.c.b16 %v653, %v653
      %v686 = vpack.c.b16 %v654, %v654
      %v687 = vpack.c.b16 %v655, %v655
      %v688 = vpack.c.b16 %v656, %v656
      %v689 = vpack.c.b16 %v657, %v657
      %v690 = vpack.c.b16 %v658, %v658
      %v691 = vpack.c.b16 %v659, %v659
      %v692 = vpack.c.b16 %v660, %v660
      %v693 = vpack.c.b16 %v661, %v661
      %v694 = vpack.c.b16 %v662, %v662
      %v695 = vpack.c.b16 %v663, %v663
      %728 = vst [vmem:[%s235] sm:$0xf] %v664
      %729 = vst [vmem:[%s235 + $0x4] sm:$0xf] %v665
      %730 = vst [vmem:[%s235 + $0x8] sm:$0xf] %v666
      %731 = vst [vmem:[%s235 + $0xc] sm:$0xf] %v667
      %732 = vst [vmem:[%s235 + $0x10] sm:$0xf] %v668
      %733 = vst [vmem:[%s235 + $0x14] sm:$0xf] %v669
      %734 = vst [vmem:[%s235 + $0x18] sm:$0xf] %v670
      %735 = vst [vmem:[%s235 + $0x1c] sm:$0xf] %v671
      %736 = vst [vmem:[%s235 + $0x20] sm:$0xf] %v672
      %737 = vst [vmem:[%s235 + $0x24] sm:$0xf] %v673
      %738 = vst [vmem:[%s235 + $0x28] sm:$0xf] %v674
      %739 = vst [vmem:[%s235 + $0x2c] sm:$0xf] %v675
      %740 = vst [vmem:[%s235 + $0x30] sm:$0xf] %v676
      %741 = vst [vmem:[%s235 + $0x34] sm:$0xf] %v677
      %742 = vst [vmem:[%s235 + $0x38] sm:$0xf] %v678
      %743 = vst [vmem:[%s235 + $0x3c] sm:$0xf] %v679
      %744 = vst [vmem:[%s235 + $0x40] sm:$0xf] %v680
      %745 = vst [vmem:[%s235 + $0x44] sm:$0xf] %v681
      %746 = vst [vmem:[%s235 + $0x48] sm:$0xf] %v682
      %747 = vst [vmem:[%s235 + $0x4c] sm:$0xf] %v683
      %748 = vst [vmem:[%s235 + $0x50] sm:$0xf] %v684
      %749 = vst [vmem:[%s235 + $0x54] sm:$0xf] %v685
      %750 = vst [vmem:[%s235 + $0x58] sm:$0xf] %v686
      %751 = vst [vmem:[%s235 + $0x5c] sm:$0xf] %v687
      %752 = vst [vmem:[%s235 + $0x60] sm:$0xf] %v688
      %753 = vst [vmem:[%s235 + $0x64] sm:$0xf] %v689
      %754 = vst [vmem:[%s235 + $0x68] sm:$0xf] %v690
      %755 = vst [vmem:[%s235 + $0x6c] sm:$0xf] %v691
      %756 = vst [vmem:[%s235 + $0x70] sm:$0xf] %v692
      %757 = vst [vmem:[%s235 + $0x74] sm:$0xf] %v693
      %758 = vst [vmem:[%s235 + $0x78] sm:$0xf] %v694
      %759 = vst [vmem:[%s235 + $0x7c] sm:$0xf] %v695
      %p760 = scmp.eq.s32.totalorder %s21, 0
      // Predicated region
      $region29: #{block_forward.4} parent=27 // pred_check
        %p761 = pneg %p760
      $region30: #{block_forward.4} parent=27 // pred_check_branch
        %763 = sbr.rel (%p761) target = $region32
      $region31: #{block_forward.4} parent=27 // pred_region
        %764 = vst [vmem:[%s241] sm:$0xff] 0.0
        %765 = vst [vmem:[%s245] sm:$0xff] 0.0
      $region32: #{block_forward.4} parent=27 // pred_fallthru
        _
      %v766 = vld [vmem:[%s241] sm:$0xff]
      %v767 = vadd.f32 %v474, %v477
      %v768 = vadd.f32 %v767, %v482
      %v769 = vadd.f32 %v768, %v485
      %v770 = vadd.f32 %v769, %v490
      %v771 = vadd.f32 %v770, %v493
      %v772 = vadd.f32 %v771, %v498
      %v773 = vadd.f32 %v772, %v501
      %v774 = vadd.f32 %v773, %v506
      %v775 = vadd.f32 %v774, %v509
      %v776 = vadd.f32 %v775, %v514
      %v777 = vadd.f32 %v776, %v517
      %v778 = vadd.f32 %v777, %v522
      %v779 = vadd.f32 %v778, %v525
      %v780 = vadd.f32 %v779, %v530
      %v781 = vadd.f32 %v780, %v533
      %v782 = vadd.f32 %v781, %v538
      %v783 = vadd.f32 %v782, %v541
      %v784 = vadd.f32 %v783, %v546
      %v785 = vadd.f32 %v784, %v549
      %v786 = vadd.f32 %v785, %v554
      %v787 = vadd.f32 %v786, %v557
      %v788 = vadd.f32 %v787, %v562
      %v789 = vadd.f32 %v788, %v565
      %v790 = vadd.f32 %v789, %v570
      %v791 = vadd.f32 %v790, %v573
      %v792 = vadd.f32 %v791, %v578
      %v793 = vadd.f32 %v792, %v581
      %v794 = vadd.f32 %v793, %v586
      %v795 = vadd.f32 %v794, %v589
      %v796 = vadd.f32 %v795, %v594
      %v797 = vadd.f32 %v796, %v597
      %v798 = vadd.f32 %v766, %v797
      %799 = vst [vmem:[%s241] sm:$0xff] %v798
      %v800 = vld [vmem:[%s245] sm:$0xff]
      %v801 = vmul.f32 %v474, %v474
      %v802 = vmul.f32 %v477, %v477
      %v803 = vmul.f32 %v482, %v482
      %v804 = vmul.f32 %v485, %v485
      %v805 = vmul.f32 %v490, %v490
      %v806 = vmul.f32 %v493, %v493
      %v807 = vmul.f32 %v498, %v498
      %v808 = vmul.f32 %v501, %v501
      %v809 = vmul.f32 %v506, %v506
      %v810 = vmul.f32 %v509, %v509
      %v811 = vmul.f32 %v514, %v514
      %v812 = vmul.f32 %v517, %v517
      %v813 = vmul.f32 %v522, %v522
      %v814 = vmul.f32 %v525, %v525
      %v815 = vmul.f32 %v530, %v530
      %v816 = vmul.f32 %v533, %v533
      %v817 = vmul.f32 %v538, %v538
      %v818 = vmul.f32 %v541, %v541
      %v819 = vmul.f32 %v546, %v546
      %v820 = vmul.f32 %v549, %v549
      %v821 = vmul.f32 %v554, %v554
      %v822 = vmul.f32 %v557, %v557
      %v823 = vmul.f32 %v562, %v562
      %v824 = vmul.f32 %v565, %v565
      %v825 = vmul.f32 %v570, %v570
      %v826 = vmul.f32 %v573, %v573
      %v827 = vmul.f32 %v578, %v578
      %v828 = vmul.f32 %v581, %v581
      %v829 = vmul.f32 %v586, %v586
      %v830 = vmul.f32 %v589, %v589
      %v831 = vmul.f32 %v594, %v594
      %v832 = vmul.f32 %v597, %v597
      %v833 = vadd.f32 %v801, %v802
      %v834 = vadd.f32 %v833, %v803
      %v835 = vadd.f32 %v834, %v804
      %v836 = vadd.f32 %v835, %v805
      %v837 = vadd.f32 %v836, %v806
      %v838 = vadd.f32 %v837, %v807
      %v839 = vadd.f32 %v838, %v808
      %v840 = vadd.f32 %v839, %v809
      %v841 = vadd.f32 %v840, %v810
      %v842 = vadd.f32 %v841, %v811
      %v843 = vadd.f32 %v842, %v812
      %v844 = vadd.f32 %v843, %v813
      %v845 = vadd.f32 %v844, %v814
      %v846 = vadd.f32 %v845, %v815
      %v847 = vadd.f32 %v846, %v816
      %v848 = vadd.f32 %v847, %v817
      %v849 = vadd.f32 %v848, %v818
      %v850 = vadd.f32 %v849, %v819
      %v851 = vadd.f32 %v850, %v820
      %v852 = vadd.f32 %v851, %v821
      %v853 = vadd.f32 %v852, %v822
      %v854 = vadd.f32 %v853, %v823
      %v855 = vadd.f32 %v854, %v824
      %v856 = vadd.f32 %v855, %v825
      %v857 = vadd.f32 %v856, %v826
      %v858 = vadd.f32 %v857, %v827
      %v859 = vadd.f32 %v858, %v828
      %v860 = vadd.f32 %v859, %v829
      %v861 = vadd.f32 %v860, %v830
      %v862 = vadd.f32 %v861, %v831
      %v863 = vadd.f32 %v862, %v832
      %v864 = vadd.f32 %v800, %v863
      %865 = vst [vmem:[%s245] sm:$0xff] %v864
      %s866 = sadd.s32 %s20, %s21
      %s867 = smul.u32 32, %s866
      %p868 = scmp.lt.s32.totalorder %s867, 63
      %s869 = scalar_select %p868, %s867, 63
      %s870 = smul.addr %s869, 4
      %s871 = scalar_lea.vmem %s2, %s870
      %p872 = scmp.lt.s32.totalorder %s20, 1
      %s873 = scalar_select %p872, %s20, 1
      %s874 = smul.addr %s873, 8
      %s875 = scalar_lea.vmem %s3, %s874
      %p876 = scmp.lt.s32.totalorder %s20, 1
      %s877 = scalar_select %p876, %s20, 1
      %s878 = smul.addr %s877, 8
      %s879 = scalar_lea.vmem %s4, %s878
      // Predicated region
      $region33: #{block_forward.4} parent=27 // pred_check
        %p880 = pneg %p97
      $region34: #{block_forward.4} parent=27 // pred_check_branch
        %882 = sbr.rel (%p880) target = $region36
      $region35: #{block_forward.4} parent=27 // pred_region
        %s883 = sadd.s32 %s20, %s21
        %s884 = smul.u32 32, %s883
      $region36: #{block_forward.4} parent=27 // pred_fallthru
        _
      // Predicated region
      $region37: #{block_forward.4} parent=27 // pred_check
        %p885 = pneg %p123
      $region38: #{block_forward.4} parent=27 // pred_check_branch
        %887 = sbr.rel (%p885) target = $region40
      $region39: #{block_forward.4} parent=27 // pred_region
        _
      $region40: #{block_forward.4} parent=27 // pred_fallthru
        _
      // Predicated region
      $region41: #{block_forward.4} parent=27 // pred_check
        %p888 = pneg %p149
      $region42: #{block_forward.4} parent=27 // pred_check_branch
        %890 = sbr.rel (%p888) target = $region44
      $region43: #{block_forward.4} parent=27 // pred_region
        _
      $region44: #{block_forward.4} parent=27 // pred_fallthru
        _
    $region28: #{block_forward.4} parent=5 // pred_fallthru
      _
    %p891 = scmp.le.s32.totalorder 2, %s11
    // Predicated region
    $region45: #{block_forward.4} parent=5 // pred_check
      %p892 = pneg %p891
    $region46: #{block_forward.4} parent=5 // pred_check_branch
      %894 = sbr.rel (%p892) target = $region48
    $region47: #{block_forward.4} parent=5 // pred_region
      %s895 = ssub.s32 %s11, 2
      // Predicated region
      $region49: #{block_forward.4} parent=47 // pred_check
        %p896 = pneg %p103
      $region50: #{block_forward.4} parent=47 // pred_check_branch
        %898 = sbr.rel (%p896) target = $region52
      $region51: #{block_forward.4} parent=47 // pred_region
        %s899 = sadd.s32 %s22, %s23
        %s900 = smul.u32 32, %s899
        %p901 = scmp.lt.s32.totalorder %s900, 63
        %s902 = scalar_select %p901, %s900, 63
        %s903 = smul.addr %s902, 4
        %s904 = scalar_lea.vmem %s2, %s903
      $region52: #{block_forward.4} parent=47 // pred_fallthru
        _
      // Predicated region
      $region53: #{block_forward.4} parent=47 // pred_check
        %p905 = pneg %p129
      $region54: #{block_forward.4} parent=47 // pred_check_branch
        %907 = sbr.rel (%p905) target = $region56
      $region55: #{block_forward.4} parent=47 // pred_region
        %p908 = scmp.lt.s32.totalorder %s22, 1
        %s909 = scalar_select %p908, %s22, 1
        %s910 = smul.addr %s909, 8
        %s911 = scalar_lea.vmem %s3, %s910
      $region56: #{block_forward.4} parent=47 // pred_fallthru
        _
      // Predicated region
      $region57: #{block_forward.4} parent=47 // pred_check
        %p912 = pneg %p155
      $region58: #{block_forward.4} parent=47 // pred_check_branch
        %914 = sbr.rel (%p912) target = $region60
      $region59: #{block_forward.4} parent=47 // pred_region
        %p915 = scmp.lt.s32.totalorder %s22, 1
        %s916 = scalar_select %p915, %s22, 1
        %s917 = smul.addr %s916, 8
        %s918 = scalar_lea.vmem %s4, %s917
      $region60: #{block_forward.4} parent=47 // pred_fallthru
        _
    $region48: #{block_forward.4} parent=5 // pred_fallthru
      _
  $region6: #{block_forward.4} parent=0 // loop_footer
    %s15 = sadd.s32 1, %s11
  $region7: #{block_forward.4} parent=0 // loop_footer_branch
    %10 = sbr.rel target = $region3
  $region8: #{block_forward.4} parent=0 // loop_exit
    _

// kernel: block_forward.6
$region0: #{block_forward.6}
  #allocation0 [shape = 'u32[]', space=smem, size = 0x4, offset = 0x4, fixed_abs, tag = 'smem constant byte address 0x4 - core index']
  #allocation1 [shape = 'u32[144,128]{1,0:T(1,128)}', space=vmem, size = 0x12000, scoped, tag = 'internal scratch']
  %s0 = inlined_call_operand.vmem [shape: bf16[512,128], index: 0, kind: input, shape index: {}]
  %s1 = inlined_call_operand.vmem [shape: f32[1,128], index: 1, kind: input, shape index: {}]
  %s2 = inlined_call_operand.vmem [shape: f32[1,128], index: 2, kind: input, shape index: {}]
  %s3 = inlined_call_operand.vmem [shape: bf16[128,128], index: 3, kind: input, shape index: {}]
  %s4 = inlined_call_operand.vmem [shape: bf16[512,128], index: 4, kind: output, shape index: {0}]
  %s5 = inlined_call_operand.vmem [shape: f32[2,8,128], index: 5, kind: output, shape index: {1}]
  %s6 = inlined_call_operand.vmem [shape: f32[2,8,128], index: 6, kind: output, shape index: {2}]
  %7 = xla_tuple %s4, %s5, %s6
  %s8 = sld [smem:[#allocation0]]
  $region69: #{block_forward.6} parent=0
    _
  %s10 = ssub.s32 1, %s8
  %s11 = scalar_select 0, %s10, %s8
  loop: start=0, step=1, limit=4
  $region2: #{block_forward.6} parent=0 // loop_pre_header
    _
  $region3: #{block_forward.6} parent=0 // loop_header
    %s13 = sphi 0, %s17
    %p14 = scmp.ge.s32.totalorder %s13, 4
    %s20 = sphi 0, %s32
    %s21 = sphi 0, %s28
    %s22 = sphi 0, %s20
    %s23 = sphi 0, %s21
    %s24 = sphi 0, %s22
    %s25 = sphi 0, %s23
    %s37 = sphi 0, %s39
    %s40 = sphi 0, %s37
    %s41 = sphi 0, %s40
    %s57 = sphi 0, %s41
    %s61 = sphi 0, %s61
    %s63 = sphi 0, %s61
    %s64 = sphi 0, %s63
    %s78 = sphi 0, %s64
    %s82 = sphi 0, %s82
    %s84 = sphi 0, %s82
    %s85 = sphi 0, %s84
    %s99 = sphi 0, %s85
    %s103 = sphi 0, %s103
    %s105 = sphi 0, %s103
    %s106 = sphi 0, %s105
    %s120 = sphi 0, %s106
    %s128 = sphi 0, %s130
    %s131 = sphi 0, %s128
    %s132 = sphi 0, %s131
    %s148 = sphi 0, %s132
    %s154 = sphi 0, %s156
    %s157 = sphi 0, %s154
    %s158 = sphi 0, %s157
    %s174 = sphi 0, %s158
    %s180 = sphi 0, %s182
    %s183 = sphi 0, %s180
    %s184 = sphi 0, %s183
    %s200 = sphi 0, %s184
  $region4: #{block_forward.6} parent=0 // loop_header_branch
    %16 = sbr.rel (%p14) target = $region8
  $region5: #{block_forward.6} parent=0 // loop_body
    %s18 = ssub.s32 %s13, 1
    %s19 = ssub.s32 %s13, 2
    %s26 = sadd.s32 1, %s21
    %p27 = scmp.ge.s32.totalorder %s26, 1
    %s28 = scalar_select %p27, 0, %s26
    %s29 = sadd.s32 1, %s20
    %s30 = scalar_select %p27, %s29, %s20
    %p31 = scmp.ge.s32.totalorder %s30, 2
    %s32 = scalar_select %p31, 0, %s30
    %s33 = sadd.s32 %s20, %s21
    %s34 = sadd.s32 %s32, %s28
    %s35 = ssub.s32 %s33, %s34
    %p36 = scmp.eq.s32.totalorder %s35, 0
    %s38 = sadd.s32 %s37, 1
    %s39 = scalar_select %p36, %s37, %s38
    %p42 = pneg %p36
    %p43 = scmp.eq.s32.totalorder %s13, 1
    %p44 = por %p42, %p43
    %p45 = scmp.ne.s32.totalorder %s37, %s40
    %p46 = scmp.eq.s32.totalorder %s13, 0
    %p47 = por %p45, %p46
    %p48 = scmp.ne.s32.totalorder %s37, %s40
    %p49 = scmp.eq.s32.totalorder %s18, 1
    %p50 = por %p48, %p49
    %p51 = scmp.ne.s32.totalorder %s40, %s41
    %p52 = scmp.eq.s32.totalorder %s18, 0
    %p53 = por %p51, %p52
    %p54 = scmp.ne.s32.totalorder %s40, %s41
    %p55 = scmp.eq.s32.totalorder %s19, 1
    %p56 = por %p54, %p55
    %p58 = scmp.ne.s32.totalorder %s41, %s57
    %p59 = scmp.eq.s32.totalorder %s19, 0
    %p60 = por %p58, %p59
    %s62 = sadd.s32 %s61, 1
    %p65 = scmp.eq.s32.totalorder %s13, 1
    %p66 = scmp.ne.s32.totalorder %s61, %s63
    %p67 = scmp.eq.s32.totalorder %s13, 0
    %p68 = por %p66, %p67
    %p69 = scmp.ne.s32.totalorder %s61, %s63
    %p70 = scmp.eq.s32.totalorder %s18, 1
    %p71 = por %p69, %p70
    %p72 = scmp.ne.s32.totalorder %s63, %s64
    %p73 = scmp.eq.s32.totalorder %s18, 0
    %p74 = por %p72, %p73
    %p75 = scmp.ne.s32.totalorder %s63, %s64
    %p76 = scmp.eq.s32.totalorder %s19, 1
    %p77 = por %p75, %p76
    %p79 = scmp.ne.s32.totalorder %s64, %s78
    %p80 = scmp.eq.s32.totalorder %s19, 0
    %p81 = por %p79, %p80
    %s83 = sadd.s32 %s82, 1
    %p86 = scmp.eq.s32.totalorder %s13, 1
    %p87 = scmp.ne.s32.totalorder %s82, %s84
    %p88 = scmp.eq.s32.totalorder %s13, 0
    %p89 = por %p87, %p88
    %p90 = scmp.ne.s32.totalorder %s82, %s84
    %p91 = scmp.eq.s32.totalorder %s18, 1
    %p92 = por %p90, %p91
    %p93 = scmp.ne.s32.totalorder %s84, %s85
    %p94 = scmp.eq.s32.totalorder %s18, 0
    %p95 = por %p93, %p94
    %p96 = scmp.ne.s32.totalorder %s84, %s85
    %p97 = scmp.eq.s32.totalorder %s19, 1
    %p98 = por %p96, %p97
    %p100 = scmp.ne.s32.totalorder %s85, %s99
    %p101 = scmp.eq.s32.totalorder %s19, 0
    %p102 = por %p100, %p101
    %s104 = sadd.s32 %s103, 1
    %p107 = scmp.eq.s32.totalorder %s13, 1
    %p108 = scmp.ne.s32.totalorder %s103, %s105
    %p109 = scmp.eq.s32.totalorder %s13, 0
    %p110 = por %p108, %p109
    %p111 = scmp.ne.s32.totalorder %s103, %s105
    %p112 = scmp.eq.s32.totalorder %s18, 1
    %p113 = por %p111, %p112
    %p114 = scmp.ne.s32.totalorder %s105, %s106
    %p115 = scmp.eq.s32.totalorder %s18, 0
    %p116 = por %p114, %p115
    %p117 = scmp.ne.s32.totalorder %s105, %s106
    %p118 = scmp.eq.s32.totalorder %s19, 1
    %p119 = por %p117, %p118
    %p121 = scmp.ne.s32.totalorder %s106, %s120
    %p122 = scmp.eq.s32.totalorder %s19, 0
    %p123 = por %p121, %p122
    %s124 = sadd.s32 %s20, %s21
    %s125 = sadd.s32 %s32, %s28
    %s126 = ssub.s32 %s124, %s125
    %p127 = scmp.eq.s32.totalorder %s126, 0
    %s129 = sadd.s32 %s128, 1
    %s130 = scalar_select %p127, %s128, %s129
    %p133 = pneg %p127
    %p134 = scmp.eq.s32.totalorder %s13, 1
    %p135 = por %p133, %p134
    %p136 = scmp.ne.s32.totalorder %s128, %s131
    %p137 = scmp.eq.s32.totalorder %s13, 0
    %p138 = por %p136, %p137
    %p139 = scmp.ne.s32.totalorder %s128, %s131
    %p140 = scmp.eq.s32.totalorder %s18, 1
    %p141 = por %p139, %p140
    %p142 = scmp.ne.s32.totalorder %s131, %s132
    %p143 = scmp.eq.s32.totalorder %s18, 0
    %p144 = por %p142, %p143
    %p145 = scmp.ne.s32.totalorder %s131, %s132
    %p146 = scmp.eq.s32.totalorder %s19, 1
    %p147 = por %p145, %p146
    %p149 = scmp.ne.s32.totalorder %s132, %s148
    %p150 = scmp.eq.s32.totalorder %s19, 0
    %p151 = por %p149, %p150
    %s152 = ssub.s32 %s20, %s32
    %p153 = scmp.eq.s32.totalorder %s152, 0
    %s155 = sadd.s32 %s154, 1
    %s156 = scalar_select %p153, %s154, %s155
    %p159 = pneg %p153
    %p160 = scmp.eq.s32.totalorder %s13, 1
    %p161 = por %p159, %p160
    %p162 = scmp.ne.s32.totalorder %s154, %s157
    %p163 = scmp.eq.s32.totalorder %s13, 0
    %p164 = por %p162, %p163
    %p165 = scmp.ne.s32.totalorder %s154, %s157
    %p166 = scmp.eq.s32.totalorder %s18, 1
    %p167 = por %p165, %p166
    %p168 = scmp.ne.s32.totalorder %s157, %s158
    %p169 = scmp.eq.s32.totalorder %s18, 0
    %p170 = por %p168, %p169
    %p171 = scmp.ne.s32.totalorder %s157, %s158
    %p172 = scmp.eq.s32.totalorder %s19, 1
    %p173 = por %p171, %p172
    %p175 = scmp.ne.s32.totalorder %s158, %s174
    %p176 = scmp.eq.s32.totalorder %s19, 0
    %p177 = por %p175, %p176
    %s178 = ssub.s32 %s20, %s32
    %p179 = scmp.eq.s32.totalorder %s178, 0
    %s181 = sadd.s32 %s180, 1
    %s182 = scalar_select %p179, %s180, %s181
    %p185 = pneg %p179
    %p186 = scmp.eq.s32.totalorder %s13, 1
    %p187 = por %p185, %p186
    %p188 = scmp.ne.s32.totalorder %s180, %s183
    %p189 = scmp.eq.s32.totalorder %s13, 0
    %p190 = por %p188, %p189
    %p191 = scmp.ne.s32.totalorder %s180, %s183
    %p192 = scmp.eq.s32.totalorder %s18, 1
    %p193 = por %p191, %p192
    %p194 = scmp.ne.s32.totalorder %s183, %s184
    %p195 = scmp.eq.s32.totalorder %s18, 0
    %p196 = por %p194, %p195
    %p197 = scmp.ne.s32.totalorder %s183, %s184
    %p198 = scmp.eq.s32.totalorder %s19, 1
    %p199 = por %p197, %p198
    %p201 = scmp.ne.s32.totalorder %s184, %s200
    %p202 = scmp.eq.s32.totalorder %s19, 0
    %p203 = por %p201, %p202
    %p204 = scmp.le.s32.totalorder 1, %s13
    %p205 = scmp.lt.s32.totalorder %s13, 3
    %p206 = pnand %p204, %p205
    %p207 = pneg %p206
    // Predicated region
    $region9: #{block_forward.6} parent=5 // pred_check
      _
    $region10: #{block_forward.6} parent=5 // pred_check_branch
      %209 = sbr.rel (%p206) target = $region12
    $region11: #{block_forward.6} parent=5 // pred_region
      %s210 = ssub.s32 %s13, 1
      // Predicated region
      $region13: #{block_forward.6} parent=11 // pred_check
        %p211 = pneg %p74
      $region14: #{block_forward.6} parent=11 // pred_check_branch
        %213 = sbr.rel (%p211) target = $region16
      $region15: #{block_forward.6} parent=11 // pred_region
        _
      $region16: #{block_forward.6} parent=11 // pred_fallthru
        _
      // Predicated region
      $region17: #{block_forward.6} parent=11 // pred_check
        %p214 = pneg %p95
      $region18: #{block_forward.6} parent=11 // pred_check_branch
        %216 = sbr.rel (%p214) target = $region20
      $region19: #{block_forward.6} parent=11 // pred_region
        _
      $region20: #{block_forward.6} parent=11 // pred_fallthru
        _
      // Predicated region
      $region21: #{block_forward.6} parent=11 // pred_check
        %p217 = pneg %p116
      $region22: #{block_forward.6} parent=11 // pred_check_branch
        %219 = sbr.rel (%p217) target = $region24
      $region23: #{block_forward.6} parent=11 // pred_region
        _
      $region24: #{block_forward.6} parent=11 // pred_fallthru
        _
    $region12: #{block_forward.6} parent=5 // pred_fallthru
      _
    %p220 = scmp.lt.s32.totalorder %s13, 2
    // Predicated region
    $region25: #{block_forward.6} parent=5 // pred_check
      %p221 = pneg %p220
    $region26: #{block_forward.6} parent=5 // pred_check_branch
      %223 = sbr.rel (%p221) target = $region28
    $region27: #{block_forward.6} parent=5 // pred_region
      // Predicated region
      $region29: #{block_forward.6} parent=27 // pred_check
        %p224 = pneg %p47
      $region30: #{block_forward.6} parent=27 // pred_check_branch
        %226 = sbr.rel (%p224) target = $region32
      $region31: #{block_forward.6} parent=27 // pred_region
        %s227 = sadd.s32 %s20, %s21
        %s228 = smul.u32 32, %s227
        %p229 = scmp.lt.s32.totalorder %s228, 63
        %s230 = scalar_select %p229, %s228, 63
        %s231 = smul.addr %s230, 4
        %s232 = scalar_lea.vmem %s0, %s231
        %s233 = sadd.s32 %s20, %s21
        %s234 = smul.u32 32, %s233
      $region32: #{block_forward.6} parent=27 // pred_fallthru
        _
    $region28: #{block_forward.6} parent=5 // pred_fallthru
      _
    %p235 = scmp.le.s32.totalorder 1, %s13
    %p236 = scmp.lt.s32.totalorder %s13, 3
    %p237 = pnand %p235, %p236
    %p238 = pneg %p237
    // Predicated region
    $region33: #{block_forward.6} parent=5 // pred_check
      _
    $region34: #{block_forward.6} parent=5 // pred_check_branch
      %240 = sbr.rel (%p237) target = $region36
    $region35: #{block_forward.6} parent=5 // pred_region
      %s241 = ssub.s32 %s13, 1
      %s242 = sadd.s32 %s22, %s23
      %s243 = smul.u32 32, %s242
      %p244 = scmp.lt.s32.totalorder %s243, 63
      %s245 = scalar_select %p244, %s243, 63
      %s246 = smul.addr %s245, 4
      %s247 = scalar_lea.vmem %s0, %s246
      %p248 = pneg %p53
      %p249 = pneg %p50
      %p250 = pneg %p74
      %p251 = pneg %p71
      %p252 = pneg %p95
      %p253 = pneg %p92
      %p254 = pneg %p116
      %p255 = pneg %p113
      %p256 = pneg %p144
      %p257 = pneg %p141
      %s258 = sadd.s32 %s22, %s23
      %s259 = smul.u32 32, %s258
      %p260 = scmp.lt.s32.totalorder %s259, 63
      %s261 = scalar_select %p260, %s259, 63
      %s262 = smul.addr %s261, 4
      %s263 = scalar_lea.vmem %s4, %s262
      %p264 = pneg %p170
      %p265 = pneg %p167
      %p266 = scmp.lt.s32.totalorder %s22, 1
      %s267 = scalar_select %p266, %s22, 1
      %s268 = smul.addr %s267, 8
      %s269 = scalar_lea.vmem %s5, %s268
      %p270 = pneg %p196
      %p271 = pneg %p193
      %p272 = scmp.lt.s32.totalorder %s22, 1
      %s273 = scalar_select %p272, %s22, 1
      %s274 = smul.addr %s273, 8
      %s275 = scalar_lea.vmem %s6, %s274
      %s276 = sadd.s32 %s22, %s23
      %s277 = smul.u32 32, %s276
      %p278 = scmp.lt.s32.totalorder %s277, 63
      %s279 = scalar_select %p278, %s277, 63
      %s280 = smul.addr %s279, 4
      %s281 = scalar_lea.vmem %s0, %s280
      %s282 = sadd.s32 %s22, %s23
      %s283 = smul.u32 32, %s282
      %s284 = sadd.s32 %s22, %s23
      %s285 = smul.u32 32, %s284
      %p286 = scmp.lt.s32.totalorder %s285, 63
      %s287 = scalar_select %p286, %s285, 63
      %s288 = smul.addr %s287, 4
      %s289 = scalar_lea.vmem %s4, %s288
      %s290 = sadd.s32 %s22, %s23
      %s291 = smul.u32 32, %s290
      %p292 = scmp.lt.s32.totalorder %s22, 1
      %s293 = scalar_select %p292, %s22, 1
      %s294 = smul.addr %s293, 8
      %s295 = scalar_lea.vmem %s5, %s294
      %p296 = scmp.lt.s32.totalorder %s22, 1
      %s297 = scalar_select %p296, %s22, 1
      %s298 = smul.addr %s297, 8
      %s299 = scalar_lea.vmem %s6, %s298
      %v301 = vld [vmem:[%s281] sm:$0xf]
      %v302 = vld [vmem:[%s281 + $0x4] sm:$0xf]
      %v303 = vld [vmem:[%s281 + $0x8] sm:$0xf]
      %v304 = vld [vmem:[%s281 + $0xc] sm:$0xf]
      %v305 = vld [vmem:[%s281 + $0x10] sm:$0xf]
      %v306 = vld [vmem:[%s281 + $0x14] sm:$0xf]
      %v307 = vld [vmem:[%s281 + $0x18] sm:$0xf]
      %v308 = vld [vmem:[%s281 + $0x1c] sm:$0xf]
      %v309 = vld [vmem:[%s281 + $0x20] sm:$0xf]
      %v310 = vld [vmem:[%s281 + $0x24] sm:$0xf]
      %v311 = vld [vmem:[%s281 + $0x28] sm:$0xf]
      %v312 = vld [vmem:[%s281 + $0x2c] sm:$0xf]
      %v313 = vld [vmem:[%s281 + $0x30] sm:$0xf]
      %v314 = vld [vmem:[%s281 + $0x34] sm:$0xf]
      %v315 = vld [vmem:[%s281 + $0x38] sm:$0xf]
      %v316 = vld [vmem:[%s281 + $0x3c] sm:$0xf]
      %v317 = vld [vmem:[%s281 + $0x40] sm:$0xf]
      %v318 = vld [vmem:[%s281 + $0x44] sm:$0xf]
      %v319 = vld [vmem:[%s281 + $0x48] sm:$0xf]
      %v320 = vld [vmem:[%s281 + $0x4c] sm:$0xf]
      %v321 = vld [vmem:[%s281 + $0x50] sm:$0xf]
      %v322 = vld [vmem:[%s281 + $0x54] sm:$0xf]
      %v323 = vld [vmem:[%s281 + $0x58] sm:$0xf]
      %v324 = vld [vmem:[%s281 + $0x5c] sm:$0xf]
      %v325 = vld [vmem:[%s281 + $0x60] sm:$0xf]
      %v326 = vld [vmem:[%s281 + $0x64] sm:$0xf]
      %v327 = vld [vmem:[%s281 + $0x68] sm:$0xf]
      %v328 = vld [vmem:[%s281 + $0x6c] sm:$0xf]
      %v329 = vld [vmem:[%s281 + $0x70] sm:$0xf]
      %v330 = vld [vmem:[%s281 + $0x74] sm:$0xf]
      %v331 = vld [vmem:[%s281 + $0x78] sm:$0xf]
      %v332 = vld [vmem:[%s281 + $0x7c] sm:$0xf]
      %v333 = vunpack.c.l.bf16 %v301
      %v334 = vunpack.c.l.bf16 %v302
      %v335 = vunpack.c.l.bf16 %v303
      %v336 = vunpack.c.l.bf16 %v304
      %v337 = vunpack.c.l.bf16 %v305
      %v338 = vunpack.c.l.bf16 %v306
      %v339 = vunpack.c.l.bf16 %v307
      %v340 = vunpack.c.l.bf16 %v308
      %v341 = vunpack.c.l.bf16 %v309
      %v342 = vunpack.c.l.bf16 %v310
      %v343 = vunpack.c.l.bf16 %v311
      %v344 = vunpack.c.l.bf16 %v312
      %v345 = vunpack.c.l.bf16 %v313
      %v346 = vunpack.c.l.bf16 %v314
      %v347 = vunpack.c.l.bf16 %v315
      %v348 = vunpack.c.l.bf16 %v316
      %v349 = vunpack.c.l.bf16 %v317
      %v350 = vunpack.c.l.bf16 %v318
      %v351 = vunpack.c.l.bf16 %v319
      %v352 = vunpack.c.l.bf16 %v320
      %v353 = vunpack.c.l.bf16 %v321
      %v354 = vunpack.c.l.bf16 %v322
      %v355 = vunpack.c.l.bf16 %v323
      %v356 = vunpack.c.l.bf16 %v324
      %v357 = vunpack.c.l.bf16 %v325
      %v358 = vunpack.c.l.bf16 %v326
      %v359 = vunpack.c.l.bf16 %v327
      %v360 = vunpack.c.l.bf16 %v328
      %v361 = vunpack.c.l.bf16 %v329
      %v362 = vunpack.c.l.bf16 %v330
      %v363 = vunpack.c.l.bf16 %v331
      %v364 = vunpack.c.l.bf16 %v332
      %v365 = vld [vmem:[%s1] sm:$0x1]
      %v367 = vlaneseq
      %v368 = vshrl.u32 %v367, 7
      %v369 = vsub.s32 0, %v368
      %v370 = vrot.slane %v365, %v369
      %v372 = vmul.f32 %v333, %v370
      %v373 = vmul.f32 %v334, %v370
      %v374 = vmul.f32 %v335, %v370
      %v375 = vmul.f32 %v336, %v370
      %v376 = vmul.f32 %v337, %v370
      %v377 = vmul.f32 %v338, %v370
      %v378 = vmul.f32 %v339, %v370
      %v379 = vmul.f32 %v340, %v370
      %v380 = vmul.f32 %v341, %v370
      %v381 = vmul.f32 %v342, %v370
      %v382 = vmul.f32 %v343, %v370
      %v383 = vmul.f32 %v344, %v370
      %v384 = vmul.f32 %v345, %v370
      %v385 = vmul.f32 %v346, %v370
      %v386 = vmul.f32 %v347, %v370
      %v387 = vmul.f32 %v348, %v370
      %v388 = vmul.f32 %v349, %v370
      %v389 = vmul.f32 %v350, %v370
      %v390 = vmul.f32 %v351, %v370
      %v391 = vmul.f32 %v352, %v370
      %v392 = vmul.f32 %v353, %v370
      %v393 = vmul.f32 %v354, %v370
      %v394 = vmul.f32 %v355, %v370
      %v395 = vmul.f32 %v356, %v370
      %v396 = vmul.f32 %v357, %v370
      %v397 = vmul.f32 %v358, %v370
      %v398 = vmul.f32 %v359, %v370
      %v399 = vmul.f32 %v360, %v370
      %v400 = vmul.f32 %v361, %v370
      %v401 = vmul.f32 %v362, %v370
      %v402 = vmul.f32 %v363, %v370
      %v403 = vmul.f32 %v364, %v370
      %v404 = vld [vmem:[%s2] sm:$0x1]
      %v406 = vlaneseq
      %v407 = vshrl.u32 %v406, 7
      %v408 = vsub.s32 0, %v407
      %v409 = vrot.slane %v404, %v408
      %v411 = vadd.f32 %v372, %v409
      %v412 = vadd.f32 %v373, %v409
      %v413 = vadd.f32 %v374, %v409
      %v414 = vadd.f32 %v375, %v409
      %v415 = vadd.f32 %v376, %v409
      %v416 = vadd.f32 %v377, %v409
      %v417 = vadd.f32 %v378, %v409
      %v418 = vadd.f32 %v379, %v409
      %v419 = vadd.f32 %v380, %v409
      %v420 = vadd.f32 %v381, %v409
      %v421 = vadd.f32 %v382, %v409
      %v422 = vadd.f32 %v383, %v409
      %v423 = vadd.f32 %v384, %v409
      %v424 = vadd.f32 %v385, %v409
      %v425 = vadd.f32 %v386, %v409
      %v426 = vadd.f32 %v387, %v409
      %v427 = vadd.f32 %v388, %v409
      %v428 = vadd.f32 %v389, %v409
      %v429 = vadd.f32 %v390, %v409
      %v430 = vadd.f32 %v391, %v409
      %v431 = vadd.f32 %v392, %v409
      %v432 = vadd.f32 %v393, %v409
      %v433 = vadd.f32 %v394, %v409
      %v434 = vadd.f32 %v395, %v409
      %v435 = vadd.f32 %v396, %v409
      %v436 = vadd.f32 %v397, %v409
      %v437 = vadd.f32 %v398, %v409
      %v438 = vadd.f32 %v399, %v409
      %v439 = vadd.f32 %v400, %v409
      %v440 = vadd.f32 %v401, %v409
      %v441 = vadd.f32 %v402, %v409
      %v442 = vadd.f32 %v403, %v409
      %v443 = vmax.f32 %v411, 0.0
      %v444 = vmax.f32 %v412, 0.0
      %v445 = vmax.f32 %v413, 0.0
      %v446 = vmax.f32 %v414, 0.0
      %v447 = vmax.f32 %v415, 0.0
      %v448 = vmax.f32 %v416, 0.0
      %v449 = vmax.f32 %v417, 0.0
      %v450 = vmax.f32 %v418, 0.0
      %v451 = vmax.f32 %v419, 0.0
      %v452 = vmax.f32 %v420, 0.0
      %v453 = vmax.f32 %v421, 0.0
      %v454 = vmax.f32 %v422, 0.0
      %v455 = vmax.f32 %v423, 0.0
      %v456 = vmax.f32 %v424, 0.0
      %v457 = vmax.f32 %v425, 0.0
      %v458 = vmax.f32 %v426, 0.0
      %v459 = vmax.f32 %v427, 0.0
      %v460 = vmax.f32 %v428, 0.0
      %v461 = vmax.f32 %v429, 0.0
      %v462 = vmax.f32 %v430, 0.0
      %v463 = vmax.f32 %v431, 0.0
      %v464 = vmax.f32 %v432, 0.0
      %v465 = vmax.f32 %v433, 0.0
      %v466 = vmax.f32 %v434, 0.0
      %v467 = vmax.f32 %v435, 0.0
      %v468 = vmax.f32 %v436, 0.0
      %v469 = vmax.f32 %v437, 0.0
      %v470 = vmax.f32 %v438, 0.0
      %v471 = vmax.f32 %v439, 0.0
      %v472 = vmax.f32 %v440, 0.0
      %v473 = vmax.f32 %v441, 0.0
      %v474 = vmax.f32 %v442, 0.0
      %v475 = vpack.c.bf16 %v444, %v443
      %v476 = vpack.c.bf16 %v446, %v445
      %v477 = vpack.c.bf16 %v448, %v447
      %v478 = vpack.c.bf16 %v450, %v449
      %v479 = vpack.c.bf16 %v452, %v451
      %v480 = vpack.c.bf16 %v454, %v453
      %v481 = vpack.c.bf16 %v456, %v455
      %v482 = vpack.c.bf16 %v458, %v457
      %v483 = vpack.c.bf16 %v460, %v459
      %v484 = vpack.c.bf16 %v462, %v461
      %v485 = vpack.c.bf16 %v464, %v463
      %v486 = vpack.c.bf16 %v466, %v465
      %v487 = vpack.c.bf16 %v468, %v467
      %v488 = vpack.c.bf16 %v470, %v469
      %v489 = vpack.c.bf16 %v472, %v471
      %v490 = vpack.c.bf16 %v474, %v473
      %v491 = vld [vmem:[%s3] sm:$0xf]
      %v492 = vld [vmem:[%s3 + $0x4] sm:$0xf]
      %v493 = vld [vmem:[%s3 + $0x8] sm:$0xf]
      %v494 = vld [vmem:[%s3 + $0xc] sm:$0xf]
      %v495 = vld [vmem:[%s3 + $0x10] sm:$0xf]
      %v496 = vld [vmem:[%s3 + $0x14] sm:$0xf]
      %v497 = vld [vmem:[%s3 + $0x18] sm:$0xf]
      %v498 = vld [vmem:[%s3 + $0x1c] sm:$0xf]
      %v499 = vld [vmem:[%s3 + $0x20] sm:$0xf]
      %v500 = vld [vmem:[%s3 + $0x24] sm:$0xf]
      %v501 = vld [vmem:[%s3 + $0x28] sm:$0xf]
      %v502 = vld [vmem:[%s3 + $0x2c] sm:$0xf]
      %v503 = vld [vmem:[%s3 + $0x30] sm:$0xf]
      %v504 = vld [vmem:[%s3 + $0x34] sm:$0xf]
      %v505 = vld [vmem:[%s3 + $0x38] sm:$0xf]
      %v506 = vld [vmem:[%s3 + $0x3c] sm:$0xf]
      %v523 = vunpack.c.l.b16 %v491
      %v524 = vunpack.c.l.b16 %v492
      %v525 = vunpack.c.l.b16 %v493
      %v526 = vunpack.c.l.b16 %v494
      %v527 = vunpack.c.l.b16 %v495
      %v528 = vunpack.c.l.b16 %v496
      %v529 = vunpack.c.l.b16 %v497
      %v530 = vunpack.c.l.b16 %v498
      %v531 = vunpack.c.l.b16 %v499
      %v532 = vunpack.c.l.b16 %v500
      %v533 = vunpack.c.l.b16 %v501
      %v534 = vunpack.c.l.b16 %v502
      %v535 = vunpack.c.l.b16 %v503
      %v536 = vunpack.c.l.b16 %v504
      %v537 = vunpack.c.l.b16 %v505
      %v538 = vunpack.c.l.b16 %v506
      %v539 = vpack.c.b16 %v524, %v523
      %v540 = vpack.c.b16 %v526, %v525
      %v541 = vpack.c.b16 %v528, %v527
      %v542 = vpack.c.b16 %v530, %v529
      %v543 = vpack.c.b16 %v532, %v531
      %v544 = vpack.c.b16 %v534, %v533
      %v545 = vpack.c.b16 %v536, %v535
      %v546 = vpack.c.b16 %v538, %v537
      %555 = vmatprep.subr.bf16.mxu0 0
      %556 = vmatpush1.bf16.msra.mxu0 %v539
      %557 = vmatprep.subr.bf16.mxu0 0
      %558 = vmatpush1.bf16.msra.mxu0 %v540
      %559 = vmatprep.subr.bf16.mxu0 0
      %560 = vmatpush1.bf16.msra.mxu0 %v541
      %561 = vmatprep.subr.bf16.mxu0 0
      %562 = vmatpush1.bf16.msra.mxu0 %v542
      %563 = vmatprep.subr.bf16.mxu0 0
      %564 = vmatpush1.bf16.msra.mxu0 %v543
      %565 = vmatprep.subr.bf16.mxu0 0
      %566 = vmatpush1.bf16.msra.mxu0 %v544
      %567 = vmatprep.subr.bf16.mxu0 0
      %568 = vmatpush1.bf16.msra.mxu0 %v545
      %569 = vmatprep.subr.bf16.mxu0 0
      %570 = vmatpush1.bf16.msra.mxu0 %v546
      %571 = vmatprep.subr.bf16.mxu0 0
      %572 = vmatpush1.bf16.msra.mxu0 0
      %573 = vmatprep.subr.bf16.mxu0 0
      %574 = vmatpush1.bf16.msra.mxu0 0
      %575 = vmatprep.subr.bf16.mxu0 0
      %576 = vmatpush1.bf16.msra.mxu0 0
      %577 = vmatprep.subr.bf16.mxu0 0
      %578 = vmatpush1.bf16.msra.mxu0 0
      %579 = vmatprep.subr.bf16.mxu0 0
      %580 = vmatpush1.bf16.msra.mxu0 0
      %581 = vmatprep.subr.bf16.mxu0 0
      %582 = vmatpush1.bf16.msra.mxu0 0
      %583 = vmatprep.subr.bf16.mxu0 0
      %584 = vmatpush1.bf16.msra.mxu0 0
      %585 = vmatprep.subr.bf16.mxu0 0
      %586 = vmatpush1.bf16.msra.mxu0 0
      %587 = vmatprep.mubr.bf16.mxu0 0
      %588 = vmatmul.mubr.bf16.gmra.mrb[0].mxu0 %v475
      %v589 = vpop.f32.mrb[0].mxu0
      %v590 = vadd.f32 0.0, %v589
      %v591 = vpop.f32.mrb[0].mxu0
      %v592 = vpop.f32.mrb[0].mxu0
      %v593 = vadd.f32 0.0, %v592
      %v594 = vpop.f32.mrb[0].mxu0
      %595 = vmatprep.mubr.bf16.mxu0 0
      %596 = vmatmul.mubr.bf16.gmra.mrb[0].mxu0 %v476
      %v597 = vpop.f32.mrb[0].mxu0
      %v598 = vadd.f32 0.0, %v597
      %v599 = vpop.f32.mrb[0].mxu0
      %v600 = vpop.f32.mrb[0].mxu0
      %v601 = vadd.f32 0.0, %v600
      %v602 = vpop.f32.mrb[0].mxu0
      %603 = vmatprep.mubr.bf16.mxu0 0
      %604 = vmatmul.mubr.bf16.gmra.mrb[0].mxu0 %v477
      %v605 = vpop.f32.mrb[0].mxu0
      %v606 = vadd.f32 0.0, %v605
      %v607 = vpop.f32.mrb[0].mxu0
      %v608 = vpop.f32.mrb[0].mxu0
      %v609 = vadd.f32 0.0, %v608
      %v610 = vpop.f32.mrb[0].mxu0
      %611 = vmatprep.mubr.bf16.mxu0 0
      %612 = vmatmul.mubr.bf16.gmra.mrb[0].mxu0 %v478
      %v613 = vpop.f32.mrb[0].mxu0
      %v614 = vadd.f32 0.0, %v613
      %v615 = vpop.f32.mrb[0].mxu0
      %v616 = vpop.f32.mrb[0].mxu0
      %v617 = vadd.f32 0.0, %v616
      %v618 = vpop.f32.mrb[0].mxu0
      %619 = vmatprep.mubr.bf16.mxu0 0
      %620 = vmatmul.mubr.bf16.gmra.mrb[0].mxu0 %v479
      %v621 = vpop.f32.mrb[0].mxu0
      %v622 = vadd.f32 0.0, %v621
      %v623 = vpop.f32.mrb[0].mxu0
      %v624 = vpop.f32.mrb[0].mxu0
      %v625 = vadd.f32 0.0, %v624
      %v626 = vpop.f32.mrb[0].mxu0
      %627 = vmatprep.mubr.bf16.mxu0 0
      %628 = vmatmul.mubr.bf16.gmra.mrb[0].mxu0 %v480
      %v629 = vpop.f32.mrb[0].mxu0
      %v630 = vadd.f32 0.0, %v629
      %v631 = vpop.f32.mrb[0].mxu0
      %v632 = vpop.f32.mrb[0].mxu0
      %v633 = vadd.f32 0.0, %v632
      %v634 = vpop.f32.mrb[0].mxu0
      %635 = vmatprep.mubr.bf16.mxu0 0
      %636 = vmatmul.mubr.bf16.gmra.mrb[0].mxu0 %v481
      %v637 = vpop.f32.mrb[0].mxu0
      %v638 = vadd.f32 0.0, %v637
      %v639 = vpop.f32.mrb[0].mxu0
      %v640 = vpop.f32.mrb[0].mxu0
      %v641 = vadd.f32 0.0, %v640
      %v642 = vpop.f32.mrb[0].mxu0
      %643 = vmatprep.mubr.bf16.mxu0 0
      %644 = vmatmul.mubr.bf16.gmra.mrb[0].mxu0 %v482
      %v645 = vpop.f32.mrb[0].mxu0
      %v646 = vadd.f32 0.0, %v645
      %v647 = vpop.f32.mrb[0].mxu0
      %v648 = vpop.f32.mrb[0].mxu0
      %v649 = vadd.f32 0.0, %v648
      %v650 = vpop.f32.mrb[0].mxu0
      %651 = vmatprep.mubr.bf16.mxu0 0
      %652 = vmatmul.mubr.bf16.gmra.mrb[0].mxu0 %v483
      %v653 = vpop.f32.mrb[0].mxu0
      %v654 = vadd.f32 0.0, %v653
      %v655 = vpop.f32.mrb[0].mxu0
      %v656 = vpop.f32.mrb[0].mxu0
      %v657 = vadd.f32 0.0, %v656
      %v658 = vpop.f32.mrb[0].mxu0
      %659 = vmatprep.mubr.bf16.mxu0 0
      %660 = vmatmul.mubr.bf16.gmra.mrb[0].mxu0 %v484
      %v661 = vpop.f32.mrb[0].mxu0
      %v662 = vadd.f32 0.0, %v661
      %v663 = vpop.f32.mrb[0].mxu0
      %v664 = vpop.f32.mrb[0].mxu0
      %v665 = vadd.f32 0.0, %v664
      %v666 = vpop.f32.mrb[0].mxu0
      %667 = vmatprep.mubr.bf16.mxu0 0
      %668 = vmatmul.mubr.bf16.gmra.mrb[0].mxu0 %v485
      %v669 = vpop.f32.mrb[0].mxu0
      %v670 = vadd.f32 0.0, %v669
      %v671 = vpop.f32.mrb[0].mxu0
      %v672 = vpop.f32.mrb[0].mxu0
      %v673 = vadd.f32 0.0, %v672
      %v674 = vpop.f32.mrb[0].mxu0
      %675 = vmatprep.mubr.bf16.mxu0 0
      %676 = vmatmul.mubr.bf16.gmra.mrb[0].mxu0 %v486
      %v677 = vpop.f32.mrb[0].mxu0
      %v678 = vadd.f32 0.0, %v677
      %v679 = vpop.f32.mrb[0].mxu0
      %v680 = vpop.f32.mrb[0].mxu0
      %v681 = vadd.f32 0.0, %v680
      %v682 = vpop.f32.mrb[0].mxu0
      %683 = vmatprep.mubr.bf16.mxu0 0
      %684 = vmatmul.mubr.bf16.gmra.mrb[0].mxu0 %v487
      %v685 = vpop.f32.mrb[0].mxu0
      %v686 = vadd.f32 0.0, %v685
      %v687 = vpop.f32.mrb[0].mxu0
      %v688 = vpop.f32.mrb[0].mxu0
      %v689 = vadd.f32 0.0, %v688
      %v690 = vpop.f32.mrb[0].mxu0
      %691 = vmatprep.mubr.bf16.mxu0 0
      %692 = vmatmul.mubr.bf16.gmra.mrb[0].mxu0 %v488
      %v693 = vpop.f32.mrb[0].mxu0
      %v694 = vadd.f32 0.0, %v693
      %v695 = vpop.f32.mrb[0].mxu0
      %v696 = vpop.f32.mrb[0].mxu0
      %v697 = vadd.f32 0.0, %v696
      %v698 = vpop.f32.mrb[0].mxu0
      %699 = vmatprep.mubr.bf16.mxu0 0
      %700 = vmatmul.mubr.bf16.gmra.mrb[0].mxu0 %v489
      %v701 = vpop.f32.mrb[0].mxu0
      %v702 = vadd.f32 0.0, %v701
      %v703 = vpop.f32.mrb[0].mxu0
      %v704 = vpop.f32.mrb[0].mxu0
      %v705 = vadd.f32 0.0, %v704
      %v706 = vpop.f32.mrb[0].mxu0
      %707 = vmatprep.mubr.bf16.mxu0 0
      %708 = vmatmul.mubr.bf16.gmra.mrb[0].mxu0 %v490
      %v709 = vpop.f32.mrb[0].mxu0
      %v710 = vadd.f32 0.0, %v709
      %v711 = vpop.f32.mrb[0].mxu0
      %v712 = vpop.f32.mrb[0].mxu0
      %v713 = vadd.f32 0.0, %v712
      %v714 = vpop.f32.mrb[0].mxu0
      %715 = vdwg.mxu0
      %v716 = vpack.c.bf16 %v593, %v590
      %v717 = vpack.c.bf16 %v601, %v598
      %v718 = vpack.c.bf16 %v609, %v606
      %v719 = vpack.c.bf16 %v617, %v614
      %v720 = vpack.c.bf16 %v625, %v622
      %v721 = vpack.c.bf16 %v633, %v630
      %v722 = vpack.c.bf16 %v641, %v638
      %v723 = vpack.c.bf16 %v649, %v646
      %v724 = vpack.c.bf16 %v657, %v654
      %v725 = vpack.c.bf16 %v665, %v662
      %v726 = vpack.c.bf16 %v673, %v670
      %v727 = vpack.c.bf16 %v681, %v678
      %v728 = vpack.c.bf16 %v689, %v686
      %v729 = vpack.c.bf16 %v697, %v694
      %v730 = vpack.c.bf16 %v705, %v702
      %v731 = vpack.c.bf16 %v713, %v710
      %v748 = vunpack.c.l.b16 %v716
      %v749 = vunpack.c.h.b16 %v716
      %v750 = vunpack.c.l.b16 %v717
      %v751 = vunpack.c.h.b16 %v717
      %v752 = vunpack.c.l.b16 %v718
      %v753 = vunpack.c.h.b16 %v718
      %v754 = vunpack.c.l.b16 %v719
      %v755 = vunpack.c.h.b16 %v719
      %v756 = vunpack.c.l.b16 %v720
      %v757 = vunpack.c.h.b16 %v720
      %v758 = vunpack.c.l.b16 %v721
      %v759 = vunpack.c.h.b16 %v721
      %v760 = vunpack.c.l.b16 %v722
      %v761 = vunpack.c.h.b16 %v722
      %v762 = vunpack.c.l.b16 %v723
      %v763 = vunpack.c.h.b16 %v723
      %v764 = vunpack.c.l.b16 %v724
      %v765 = vunpack.c.h.b16 %v724
      %v766 = vunpack.c.l.b16 %v725
      %v767 = vunpack.c.h.b16 %v725
      %v768 = vunpack.c.l.b16 %v726
      %v769 = vunpack.c.h.b16 %v726
      %v770 = vunpack.c.l.b16 %v727
      %v771 = vunpack.c.h.b16 %v727
      %v772 = vunpack.c.l.b16 %v728
      %v773 = vunpack.c.h.b16 %v728
      %v774 = vunpack.c.l.b16 %v729
      %v775 = vunpack.c.h.b16 %v729
      %v776 = vunpack.c.l.b16 %v730
      %v777 = vunpack.c.h.b16 %v730
      %v778 = vunpack.c.l.b16 %v731
      %v779 = vunpack.c.h.b16 %v731
      %v780 = vpack.c.b16 %v748, %v748
      %v781 = vpack.c.b16 %v749, %v749
      %v782 = vpack.c.b16 %v750, %v750
      %v783 = vpack.c.b16 %v751, %v751
      %v784 = vpack.c.b16 %v752, %v752
      %v785 = vpack.c.b16 %v753, %v753
      %v786 = vpack.c.b16 %v754, %v754
      %v787 = vpack.c.b16 %v755, %v755
      %v788 = vpack.c.b16 %v756, %v756
      %v789 = vpack.c.b16 %v757, %v757
      %v790 = vpack.c.b16 %v758, %v758
      %v791 = vpack.c.b16 %v759, %v759
      %v792 = vpack.c.b16 %v760, %v760
      %v793 = vpack.c.b16 %v761, %v761
      %v794 = vpack.c.b16 %v762, %v762
      %v795 = vpack.c.b16 %v763, %v763
      %v796 = vpack.c.b16 %v764, %v764
      %v797 = vpack.c.b16 %v765, %v765
      %v798 = vpack.c.b16 %v766, %v766
      %v799 = vpack.c.b16 %v767, %v767
      %v800 = vpack.c.b16 %v768, %v768
      %v801 = vpack.c.b16 %v769, %v769
      %v802 = vpack.c.b16 %v770, %v770
      %v803 = vpack.c.b16 %v771, %v771
      %v804 = vpack.c.b16 %v772, %v772
      %v805 = vpack.c.b16 %v773, %v773
      %v806 = vpack.c.b16 %v774, %v774
      %v807 = vpack.c.b16 %v775, %v775
      %v808 = vpack.c.b16 %v776, %v776
      %v809 = vpack.c.b16 %v777, %v777
      %v810 = vpack.c.b16 %v778, %v778
      %v811 = vpack.c.b16 %v779, %v779
      %844 = vst [vmem:[%s289] sm:$0xf] %v780
      %845 = vst [vmem:[%s289 + $0x4] sm:$0xf] %v781
      %846 = vst [vmem:[%s289 + $0x8] sm:$0xf] %v782
      %847 = vst [vmem:[%s289 + $0xc] sm:$0xf] %v783
      %848 = vst [vmem:[%s289 + $0x10] sm:$0xf] %v784
      %849 = vst [vmem:[%s289 + $0x14] sm:$0xf] %v785
      %850 = vst [vmem:[%s289 + $0x18] sm:$0xf] %v786
      %851 = vst [vmem:[%s289 + $0x1c] sm:$0xf] %v787
      %852 = vst [vmem:[%s289 + $0x20] sm:$0xf] %v788
      %853 = vst [vmem:[%s289 + $0x24] sm:$0xf] %v789
      %854 = vst [vmem:[%s289 + $0x28] sm:$0xf] %v790
      %855 = vst [vmem:[%s289 + $0x2c] sm:$0xf] %v791
      %856 = vst [vmem:[%s289 + $0x30] sm:$0xf] %v792
      %857 = vst [vmem:[%s289 + $0x34] sm:$0xf] %v793
      %858 = vst [vmem:[%s289 + $0x38] sm:$0xf] %v794
      %859 = vst [vmem:[%s289 + $0x3c] sm:$0xf] %v795
      %860 = vst [vmem:[%s289 + $0x40] sm:$0xf] %v796
      %861 = vst [vmem:[%s289 + $0x44] sm:$0xf] %v797
      %862 = vst [vmem:[%s289 + $0x48] sm:$0xf] %v798
      %863 = vst [vmem:[%s289 + $0x4c] sm:$0xf] %v799
      %864 = vst [vmem:[%s289 + $0x50] sm:$0xf] %v800
      %865 = vst [vmem:[%s289 + $0x54] sm:$0xf] %v801
      %866 = vst [vmem:[%s289 + $0x58] sm:$0xf] %v802
      %867 = vst [vmem:[%s289 + $0x5c] sm:$0xf] %v803
      %868 = vst [vmem:[%s289 + $0x60] sm:$0xf] %v804
      %869 = vst [vmem:[%s289 + $0x64] sm:$0xf] %v805
      %870 = vst [vmem:[%s289 + $0x68] sm:$0xf] %v806
      %871 = vst [vmem:[%s289 + $0x6c] sm:$0xf] %v807
      %872 = vst [vmem:[%s289 + $0x70] sm:$0xf] %v808
      %873 = vst [vmem:[%s289 + $0x74] sm:$0xf] %v809
      %874 = vst [vmem:[%s289 + $0x78] sm:$0xf] %v810
      %875 = vst [vmem:[%s289 + $0x7c] sm:$0xf] %v811
      %p876 = scmp.eq.s32.totalorder %s23, 0
      // Predicated region
      $region37: #{block_forward.6} parent=35 // pred_check
        %p877 = pneg %p876
      $region38: #{block_forward.6} parent=35 // pred_check_branch
        %879 = sbr.rel (%p877) target = $region40
      $region39: #{block_forward.6} parent=35 // pred_region
        %880 = vst [vmem:[%s295] sm:$0xff] 0.0
        %881 = vst [vmem:[%s299] sm:$0xff] 0.0
      $region40: #{block_forward.6} parent=35 // pred_fallthru
        _
      %v882 = vld [vmem:[%s295] sm:$0xff]
      %v883 = vadd.f32 %v590, %v593
      %v884 = vadd.f32 %v883, %v598
      %v885 = vadd.f32 %v884, %v601
      %v886 = vadd.f32 %v885, %v606
      %v887 = vadd.f32 %v886, %v609
      %v888 = vadd.f32 %v887, %v614
      %v889 = vadd.f32 %v888, %v617
      %v890 = vadd.f32 %v889, %v622
      %v891 = vadd.f32 %v890, %v625
      %v892 = vadd.f32 %v891, %v630
      %v893 = vadd.f32 %v892, %v633
      %v894 = vadd.f32 %v893, %v638
      %v895 = vadd.f32 %v894, %v641
      %v896 = vadd.f32 %v895, %v646
      %v897 = vadd.f32 %v896, %v649
      %v898 = vadd.f32 %v897, %v654
      %v899 = vadd.f32 %v898, %v657
      %v900 = vadd.f32 %v899, %v662
      %v901 = vadd.f32 %v900, %v665
      %v902 = vadd.f32 %v901, %v670
      %v903 = vadd.f32 %v902, %v673
      %v904 = vadd.f32 %v903, %v678
      %v905 = vadd.f32 %v904, %v681
      %v906 = vadd.f32 %v905, %v686
      %v907 = vadd.f32 %v906, %v689
      %v908 = vadd.f32 %v907, %v694
      %v909 = vadd.f32 %v908, %v697
      %v910 = vadd.f32 %v909, %v702
      %v911 = vadd.f32 %v910, %v705
      %v912 = vadd.f32 %v911, %v710
      %v913 = vadd.f32 %v912, %v713
      %v914 = vadd.f32 %v882, %v913
      %915 = vst [vmem:[%s295] sm:$0xff] %v914
      %v916 = vld [vmem:[%s299] sm:$0xff]
      %v917 = vmul.f32 %v590, %v590
      %v918 = vmul.f32 %v593, %v593
      %v919 = vmul.f32 %v598, %v598
      %v920 = vmul.f32 %v601, %v601
      %v921 = vmul.f32 %v606, %v606
      %v922 = vmul.f32 %v609, %v609
      %v923 = vmul.f32 %v614, %v614
      %v924 = vmul.f32 %v617, %v617
      %v925 = vmul.f32 %v622, %v622
      %v926 = vmul.f32 %v625, %v625
      %v927 = vmul.f32 %v630, %v630
      %v928 = vmul.f32 %v633, %v633
      %v929 = vmul.f32 %v638, %v638
      %v930 = vmul.f32 %v641, %v641
      %v931 = vmul.f32 %v646, %v646
      %v932 = vmul.f32 %v649, %v649
      %v933 = vmul.f32 %v654, %v654
      %v934 = vmul.f32 %v657, %v657
      %v935 = vmul.f32 %v662, %v662
      %v936 = vmul.f32 %v665, %v665
      %v937 = vmul.f32 %v670, %v670
      %v938 = vmul.f32 %v673, %v673
      %v939 = vmul.f32 %v678, %v678
      %v940 = vmul.f32 %v681, %v681
      %v941 = vmul.f32 %v686, %v686
      %v942 = vmul.f32 %v689, %v689
      %v943 = vmul.f32 %v694, %v694
      %v944 = vmul.f32 %v697, %v697
      %v945 = vmul.f32 %v702, %v702
      %v946 = vmul.f32 %v705, %v705
      %v947 = vmul.f32 %v710, %v710
      %v948 = vmul.f32 %v713, %v713
      %v949 = vadd.f32 %v917, %v918
      %v950 = vadd.f32 %v949, %v919
      %v951 = vadd.f32 %v950, %v920
      %v952 = vadd.f32 %v951, %v921
      %v953 = vadd.f32 %v952, %v922
      %v954 = vadd.f32 %v953, %v923
      %v955 = vadd.f32 %v954, %v924
      %v956 = vadd.f32 %v955, %v925
      %v957 = vadd.f32 %v956, %v926
      %v958 = vadd.f32 %v957, %v927
      %v959 = vadd.f32 %v958, %v928
      %v960 = vadd.f32 %v959, %v929
      %v961 = vadd.f32 %v960, %v930
      %v962 = vadd.f32 %v961, %v931
      %v963 = vadd.f32 %v962, %v932
      %v964 = vadd.f32 %v963, %v933
      %v965 = vadd.f32 %v964, %v934
      %v966 = vadd.f32 %v965, %v935
      %v967 = vadd.f32 %v966, %v936
      %v968 = vadd.f32 %v967, %v937
      %v969 = vadd.f32 %v968, %v938
      %v970 = vadd.f32 %v969, %v939
      %v971 = vadd.f32 %v970, %v940
      %v972 = vadd.f32 %v971, %v941
      %v973 = vadd.f32 %v972, %v942
      %v974 = vadd.f32 %v973, %v943
      %v975 = vadd.f32 %v974, %v944
      %v976 = vadd.f32 %v975, %v945
      %v977 = vadd.f32 %v976, %v946
      %v978 = vadd.f32 %v977, %v947
      %v979 = vadd.f32 %v978, %v948
      %v980 = vadd.f32 %v916, %v979
      %981 = vst [vmem:[%s299] sm:$0xff] %v980
      %s982 = sadd.s32 %s22, %s23
      %s983 = smul.u32 32, %s982
      %p984 = scmp.lt.s32.totalorder %s983, 63
      %s985 = scalar_select %p984, %s983, 63
      %s986 = smul.addr %s985, 4
      %s987 = scalar_lea.vmem %s4, %s986
      %p988 = scmp.lt.s32.totalorder %s22, 1
      %s989 = scalar_select %p988, %s22, 1
      %s990 = smul.addr %s989, 8
      %s991 = scalar_lea.vmem %s5, %s990
      %p992 = scmp.lt.s32.totalorder %s22, 1
      %s993 = scalar_select %p992, %s22, 1
      %s994 = smul.addr %s993, 8
      %s995 = scalar_lea.vmem %s6, %s994
      // Predicated region
      $region41: #{block_forward.6} parent=35 // pred_check
        %p996 = pneg %p141
      $region42: #{block_forward.6} parent=35 // pred_check_branch
        %998 = sbr.rel (%p996) target = $region44
      $region43: #{block_forward.6} parent=35 // pred_region
        %s999 = sadd.s32 %s22, %s23
        %s1000 = smul.u32 32, %s999
      $region44: #{block_forward.6} parent=35 // pred_fallthru
        _
      // Predicated region
      $region45: #{block_forward.6} parent=35 // pred_check
        %p1001 = pneg %p167
      $region46: #{block_forward.6} parent=35 // pred_check_branch
        %1003 = sbr.rel (%p1001) target = $region48
      $region47: #{block_forward.6} parent=35 // pred_region
        _
      $region48: #{block_forward.6} parent=35 // pred_fallthru
        _
      // Predicated region
      $region49: #{block_forward.6} parent=35 // pred_check
        %p1004 = pneg %p193
      $region50: #{block_forward.6} parent=35 // pred_check_branch
        %1006 = sbr.rel (%p1004) target = $region52
      $region51: #{block_forward.6} parent=35 // pred_region
        _
      $region52: #{block_forward.6} parent=35 // pred_fallthru
        _
    $region36: #{block_forward.6} parent=5 // pred_fallthru
      _
    %p1007 = scmp.le.s32.totalorder 2, %s13
    // Predicated region
    $region53: #{block_forward.6} parent=5 // pred_check
      %p1008 = pneg %p1007
    $region54: #{block_forward.6} parent=5 // pred_check_branch
      %1010 = sbr.rel (%p1008) target = $region56
    $region55: #{block_forward.6} parent=5 // pred_region
      %s1011 = ssub.s32 %s13, 2
      // Predicated region
      $region57: #{block_forward.6} parent=55 // pred_check
        %p1012 = pneg %p147
      $region58: #{block_forward.6} parent=55 // pred_check_branch
        %1014 = sbr.rel (%p1012) target = $region60
      $region59: #{block_forward.6} parent=55 // pred_region
        %s1015 = sadd.s32 %s24, %s25
        %s1016 = smul.u32 32, %s1015
        %p1017 = scmp.lt.s32.totalorder %s1016, 63
        %s1018 = scalar_select %p1017, %s1016, 63
        %s1019 = smul.addr %s1018, 4
        %s1020 = scalar_lea.vmem %s4, %s1019
      $region60: #{block_forward.6} parent=55 // pred_fallthru
        _
      // Predicated region
      $region61: #{block_forward.6} parent=55 // pred_check
        %p1021 = pneg %p173
      $region62: #{block_forward.6} parent=55 // pred_check_branch
        %1023 = sbr.rel (%p1021) target = $region64
      $region63: #{block_forward.6} parent=55 // pred_region
        %p1024 = scmp.lt.s32.totalorder %s24, 1
        %s1025 = scalar_select %p1024, %s24, 1
        %s1026 = smul.addr %s1025, 8
        %s1027 = scalar_lea.vmem %s5, %s1026
      $region64: #{block_forward.6} parent=55 // pred_fallthru
        _
      // Predicated region
      $region65: #{block_forward.6} parent=55 // pred_check
        %p1028 = pneg %p199
      $region66: #{block_forward.6} parent=55 // pred_check_branch
        %1030 = sbr.rel (%p1028) target = $region68
      $region67: #{block_forward.6} parent=55 // pred_region
        %p1031 = scmp.lt.s32.totalorder %s24, 1
        %s1032 = scalar_select %p1031, %s24, 1
        %s1033 = smul.addr %s1032, 8
        %s1034 = scalar_lea.vmem %s6, %s1033
      $region68: #{block_forward.6} parent=55 // pred_fallthru
        _
    $region56: #{block_forward.6} parent=5 // pred_fallthru
      _
  $region6: #{block_forward.6} parent=0 // loop_footer
    %s17 = sadd.s32 1, %s13
  $region7: #{block_forward.6} parent=0 // loop_footer_branch
    %12 = sbr.rel target = $region3
  $region8: #{block_forward.6} parent=0 // loop_exit
    _

// kernel: block_forward.7
$region0: #{block_forward.7}
  #allocation0 [shape = 'u32[]', space=smem, size = 0x4, offset = 0x4, fixed_abs, tag = 'smem constant byte address 0x4 - core index']
  #allocation1 [shape = 'u32[144,128]{1,0:T(1,128)}', space=vmem, size = 0x12000, scoped, tag = 'internal scratch']
  %s0 = inlined_call_operand.vmem [shape: bf16[512,128], index: 0, kind: input, shape index: {}]
  %s1 = inlined_call_operand.vmem [shape: bf16[512,128], index: 1, kind: input, shape index: {}]
  %s2 = inlined_call_operand.vmem [shape: f32[1,128], index: 2, kind: input, shape index: {}]
  %s3 = inlined_call_operand.vmem [shape: f32[1,128], index: 3, kind: input, shape index: {}]
  %s4 = inlined_call_operand.vmem [shape: f32[512,128], index: 4, kind: output, shape index: {}]
  %s5 = sld [smem:[#allocation0]]
  $region49: #{block_forward.7} parent=0
    _
  %s7 = ssub.s32 1, %s5
  %s8 = scalar_select 0, %s7, %s5
  loop: start=0, step=1, limit=4
  $region2: #{block_forward.7} parent=0 // loop_pre_header
    _
  $region3: #{block_forward.7} parent=0 // loop_header
    %s10 = sphi 0, %s14
    %p11 = scmp.ge.s32.totalorder %s10, 4
    %s20 = sphi 0, %s22
    %s23 = sphi 0, %s20
    %s24 = sphi 0, %s23
    %s40 = sphi 0, %s24
    %s46 = sphi 0, %s48
    %s49 = sphi 0, %s46
    %s50 = sphi 0, %s49
    %s66 = sphi 0, %s50
    %s70 = sphi 0, %s70
    %s72 = sphi 0, %s70
    %s73 = sphi 0, %s72
    %s87 = sphi 0, %s73
    %s91 = sphi 0, %s91
    %s93 = sphi 0, %s91
    %s94 = sphi 0, %s93
    %s108 = sphi 0, %s94
    %s114 = sphi 0, %s116
    %s117 = sphi 0, %s114
    %s118 = sphi 0, %s117
    %s134 = sphi 0, %s118
  $region4: #{block_forward.7} parent=0 // loop_header_branch
    %13 = sbr.rel (%p11) target = $region8
  $region5: #{block_forward.7} parent=0 // loop_body
    %s15 = ssub.s32 %s10, 1
    %s16 = ssub.s32 %s10, 2
    %s17 = sadd.s32 %s10, 1
    %s18 = ssub.s32 %s10, %s17
    %p19 = scmp.eq.s32.totalorder %s18, 0
    %s21 = sadd.s32 %s20, 1
    %s22 = scalar_select %p19, %s20, %s21
    %p25 = pneg %p19
    %p26 = scmp.eq.s32.totalorder %s10, 1
    %p27 = por %p25, %p26
    %p28 = scmp.ne.s32.totalorder %s20, %s23
    %p29 = scmp.eq.s32.totalorder %s10, 0
    %p30 = por %p28, %p29
    %p31 = scmp.ne.s32.totalorder %s20, %s23
    %p32 = scmp.eq.s32.totalorder %s15, 1
    %p33 = por %p31, %p32
    %p34 = scmp.ne.s32.totalorder %s23, %s24
    %p35 = scmp.eq.s32.totalorder %s15, 0
    %p36 = por %p34, %p35
    %p37 = scmp.ne.s32.totalorder %s23, %s24
    %p38 = scmp.eq.s32.totalorder %s16, 1
    %p39 = por %p37, %p38
    %p41 = scmp.ne.s32.totalorder %s24, %s40
    %p42 = scmp.eq.s32.totalorder %s16, 0
    %p43 = por %p41, %p42
    %s44 = ssub.s32 %s10, %s17
    %p45 = scmp.eq.s32.totalorder %s44, 0
    %s47 = sadd.s32 %s46, 1
    %s48 = scalar_select %p45, %s46, %s47
    %p51 = pneg %p45
    %p52 = scmp.eq.s32.totalorder %s10, 1
    %p53 = por %p51, %p52
    %p54 = scmp.ne.s32.totalorder %s46, %s49
    %p55 = scmp.eq.s32.totalorder %s10, 0
    %p56 = por %p54, %p55
    %p57 = scmp.ne.s32.totalorder %s46, %s49
    %p58 = scmp.eq.s32.totalorder %s15, 1
    %p59 = por %p57, %p58
    %p60 = scmp.ne.s32.totalorder %s49, %s50
    %p61 = scmp.eq.s32.totalorder %s15, 0
    %p62 = por %p60, %p61
    %p63 = scmp.ne.s32.totalorder %s49, %s50
    %p64 = scmp.eq.s32.totalorder %s16, 1
    %p65 = por %p63, %p64
    %p67 = scmp.ne.s32.totalorder %s50, %s66
    %p68 = scmp.eq.s32.totalorder %s16, 0
    %p69 = por %p67, %p68
    %s71 = sadd.s32 %s70, 1
    %p74 = scmp.eq.s32.totalorder %s10, 1
    %p75 = scmp.ne.s32.totalorder %s70, %s72
    %p76 = scmp.eq.s32.totalorder %s10, 0
    %p77 = por %p75, %p76
    %p78 = scmp.ne.s32.totalorder %s70, %s72
    %p79 = scmp.eq.s32.totalorder %s15, 1
    %p80 = por %p78, %p79
    %p81 = scmp.ne.s32.totalorder %s72, %s73
    %p82 = scmp.eq.s32.totalorder %s15, 0
    %p83 = por %p81, %p82
    %p84 = scmp.ne.s32.totalorder %s72, %s73
    %p85 = scmp.eq.s32.totalorder %s16, 1
    %p86 = por %p84, %p85
    %p88 = scmp.ne.s32.totalorder %s73, %s87
    %p89 = scmp.eq.s32.totalorder %s16, 0
    %p90 = por %p88, %p89
    %s92 = sadd.s32 %s91, 1
    %p95 = scmp.eq.s32.totalorder %s10, 1
    %p96 = scmp.ne.s32.totalorder %s91, %s93
    %p97 = scmp.eq.s32.totalorder %s10, 0
    %p98 = por %p96, %p97
    %p99 = scmp.ne.s32.totalorder %s91, %s93
    %p100 = scmp.eq.s32.totalorder %s15, 1
    %p101 = por %p99, %p100
    %p102 = scmp.ne.s32.totalorder %s93, %s94
    %p103 = scmp.eq.s32.totalorder %s15, 0
    %p104 = por %p102, %p103
    %p105 = scmp.ne.s32.totalorder %s93, %s94
    %p106 = scmp.eq.s32.totalorder %s16, 1
    %p107 = por %p105, %p106
    %p109 = scmp.ne.s32.totalorder %s94, %s108
    %p110 = scmp.eq.s32.totalorder %s16, 0
    %p111 = por %p109, %p110
    %s112 = ssub.s32 %s10, %s17
    %p113 = scmp.eq.s32.totalorder %s112, 0
    %s115 = sadd.s32 %s114, 1
    %s116 = scalar_select %p113, %s114, %s115
    %p119 = pneg %p113
    %p120 = scmp.eq.s32.totalorder %s10, 1
    %p121 = por %p119, %p120
    %p122 = scmp.ne.s32.totalorder %s114, %s117
    %p123 = scmp.eq.s32.totalorder %s10, 0
    %p124 = por %p122, %p123
    %p125 = scmp.ne.s32.totalorder %s114, %s117
    %p126 = scmp.eq.s32.totalorder %s15, 1
    %p127 = por %p125, %p126
    %p128 = scmp.ne.s32.totalorder %s117, %s118
    %p129 = scmp.eq.s32.totalorder %s15, 0
    %p130 = por %p128, %p129
    %p131 = scmp.ne.s32.totalorder %s117, %s118
    %p132 = scmp.eq.s32.totalorder %s16, 1
    %p133 = por %p131, %p132
    %p135 = scmp.ne.s32.totalorder %s118, %s134
    %p136 = scmp.eq.s32.totalorder %s16, 0
    %p137 = por %p135, %p136
    %p138 = scmp.le.s32.totalorder 1, %s10
    %p139 = scmp.lt.s32.totalorder %s10, 3
    %p140 = pnand %p138, %p139
    %p141 = pneg %p140
    // Predicated region
    $region9: #{block_forward.7} parent=5 // pred_check
      _
    $region10: #{block_forward.7} parent=5 // pred_check_branch
      %143 = sbr.rel (%p140) target = $region12
    $region11: #{block_forward.7} parent=5 // pred_region
      %s144 = ssub.s32 %s10, 1
      // Predicated region
      $region13: #{block_forward.7} parent=11 // pred_check
        %p145 = pneg %p83
      $region14: #{block_forward.7} parent=11 // pred_check_branch
        %147 = sbr.rel (%p145) target = $region16
      $region15: #{block_forward.7} parent=11 // pred_region
        _
      $region16: #{block_forward.7} parent=11 // pred_fallthru
        _
      // Predicated region
      $region17: #{block_forward.7} parent=11 // pred_check
        %p148 = pneg %p104
      $region18: #{block_forward.7} parent=11 // pred_check_branch
        %150 = sbr.rel (%p148) target = $region20
      $region19: #{block_forward.7} parent=11 // pred_region
        _
      $region20: #{block_forward.7} parent=11 // pred_fallthru
        _
    $region12: #{block_forward.7} parent=5 // pred_fallthru
      _
    %p151 = scmp.lt.s32.totalorder %s10, 2
    // Predicated region
    $region21: #{block_forward.7} parent=5 // pred_check
      %p152 = pneg %p151
    $region22: #{block_forward.7} parent=5 // pred_check_branch
      %154 = sbr.rel (%p152) target = $region24
    $region23: #{block_forward.7} parent=5 // pred_region
      // Predicated region
      $region25: #{block_forward.7} parent=23 // pred_check
        %p155 = pneg %p30
      $region26: #{block_forward.7} parent=23 // pred_check_branch
        %157 = sbr.rel (%p155) target = $region28
      $region27: #{block_forward.7} parent=23 // pred_region
        %s158 = smul.u32 32, %s10
        %p159 = scmp.lt.s32.totalorder %s158, 63
        %s160 = scalar_select %p159, %s158, 63
        %s161 = smul.addr %s160, 4
        %s162 = scalar_lea.vmem %s0, %s161
        %s163 = smul.u32 32, %s10
      $region28: #{block_forward.7} parent=23 // pred_fallthru
        _
      // Predicated region
      $region29: #{block_forward.7} parent=23 // pred_check
        %p164 = pneg %p56
      $region30: #{block_forward.7} parent=23 // pred_check_branch
        %166 = sbr.rel (%p164) target = $region32
      $region31: #{block_forward.7} parent=23 // pred_region
        %s167 = smul.u32 32, %s10
        %p168 = scmp.lt.s32.totalorder %s167, 63
        %s169 = scalar_select %p168, %s167, 63
        %s170 = smul.addr %s169, 4
        %s171 = scalar_lea.vmem %s1, %s170
        %s172 = smul.u32 32, %s10
      $region32: #{block_forward.7} parent=23 // pred_fallthru
        _
    $region24: #{block_forward.7} parent=5 // pred_fallthru
      _
    %p173 = scmp.le.s32.totalorder 1, %s10
    %p174 = scmp.lt.s32.totalorder %s10, 3
    %p175 = pnand %p173, %p174
    %p176 = pneg %p175
    // Predicated region
    $region33: #{block_forward.7} parent=5 // pred_check
      _
    $region34: #{block_forward.7} parent=5 // pred_check_branch
      %178 = sbr.rel (%p175) target = $region36
    $region35: #{block_forward.7} parent=5 // pred_region
      %s179 = ssub.s32 %s10, 1
      %s180 = smul.u32 32, %s15
      %p181 = scmp.lt.s32.totalorder %s180, 63
      %s182 = scalar_select %p181, %s180, 63
      %s183 = smul.addr %s182, 4
      %s184 = scalar_lea.vmem %s0, %s183
      %p185 = pneg %p36
      %p186 = pneg %p33
      %s187 = smul.u32 32, %s15
      %p188 = scmp.lt.s32.totalorder %s187, 63
      %s189 = scalar_select %p188, %s187, 63
      %s190 = smul.addr %s189, 4
      %s191 = scalar_lea.vmem %s1, %s190
      %p192 = pneg %p62
      %p193 = pneg %p59
      %p194 = pneg %p83
      %p195 = pneg %p80
      %p196 = pneg %p104
      %p197 = pneg %p101
      %p198 = pneg %p130
      %p199 = pneg %p127
      %s200 = smul.u32 32, %s15
      %p201 = scmp.lt.s32.totalorder %s200, 63
      %s202 = scalar_select %p201, %s200, 63
      %s203 = smul.addr %s202, 8
      %s204 = scalar_lea.vmem %s4, %s203
      %s205 = smul.u32 32, %s15
      %p206 = scmp.lt.s32.totalorder %s205, 63
      %s207 = scalar_select %p206, %s205, 63
      %s208 = smul.addr %s207, 4
      %s209 = scalar_lea.vmem %s0, %s208
      %s210 = smul.u32 32, %s15
      %s211 = smul.u32 32, %s15
      %p212 = scmp.lt.s32.totalorder %s211, 63
      %s213 = scalar_select %p212, %s211, 63
      %s214 = smul.addr %s213, 4
      %s215 = scalar_lea.vmem %s1, %s214
      %s216 = smul.u32 32, %s15
      %s217 = smul.u32 32, %s15
      %p218 = scmp.lt.s32.totalorder %s217, 63
      %s219 = scalar_select %p218, %s217, 63
      %s220 = smul.addr %s219, 8
      %s221 = scalar_lea.vmem %s4, %s220
      %s222 = smul.u32 32, %s15
      %v223 = vld [vmem:[%s209] sm:$0xf]
      %v224 = vld [vmem:[%s209 + $0x4] sm:$0xf]
      %v225 = vld [vmem:[%s209 + $0x8] sm:$0xf]
      %v226 = vld [vmem:[%s209 + $0xc] sm:$0xf]
      %v227 = vld [vmem:[%s209 + $0x10] sm:$0xf]
      %v228 = vld [vmem:[%s209 + $0x14] sm:$0xf]
      %v229 = vld [vmem:[%s209 + $0x18] sm:$0xf]
      %v230 = vld [vmem:[%s209 + $0x1c] sm:$0xf]
      %v231 = vld [vmem:[%s209 + $0x20] sm:$0xf]
      %v232 = vld [vmem:[%s209 + $0x24] sm:$0xf]
      %v233 = vld [vmem:[%s209 + $0x28] sm:$0xf]
      %v234 = vld [vmem:[%s209 + $0x2c] sm:$0xf]
      %v235 = vld [vmem:[%s209 + $0x30] sm:$0xf]
      %v236 = vld [vmem:[%s209 + $0x34] sm:$0xf]
      %v237 = vld [vmem:[%s209 + $0x38] sm:$0xf]
      %v238 = vld [vmem:[%s209 + $0x3c] sm:$0xf]
      %v239 = vld [vmem:[%s209 + $0x40] sm:$0xf]
      %v240 = vld [vmem:[%s209 + $0x44] sm:$0xf]
      %v241 = vld [vmem:[%s209 + $0x48] sm:$0xf]
      %v242 = vld [vmem:[%s209 + $0x4c] sm:$0xf]
      %v243 = vld [vmem:[%s209 + $0x50] sm:$0xf]
      %v244 = vld [vmem:[%s209 + $0x54] sm:$0xf]
      %v245 = vld [vmem:[%s209 + $0x58] sm:$0xf]
      %v246 = vld [vmem:[%s209 + $0x5c] sm:$0xf]
      %v247 = vld [vmem:[%s209 + $0x60] sm:$0xf]
      %v248 = vld [vmem:[%s209 + $0x64] sm:$0xf]
      %v249 = vld [vmem:[%s209 + $0x68] sm:$0xf]
      %v250 = vld [vmem:[%s209 + $0x6c] sm:$0xf]
      %v251 = vld [vmem:[%s209 + $0x70] sm:$0xf]
      %v252 = vld [vmem:[%s209 + $0x74] sm:$0xf]
      %v253 = vld [vmem:[%s209 + $0x78] sm:$0xf]
      %v254 = vld [vmem:[%s209 + $0x7c] sm:$0xf]
      %v255 = vunpack.c.l.bf16 %v223
      %v256 = vunpack.c.l.bf16 %v224
      %v257 = vunpack.c.l.bf16 %v225
      %v258 = vunpack.c.l.bf16 %v226
      %v259 = vunpack.c.l.bf16 %v227
      %v260 = vunpack.c.l.bf16 %v228
      %v261 = vunpack.c.l.bf16 %v229
      %v262 = vunpack.c.l.bf16 %v230
      %v263 = vunpack.c.l.bf16 %v231
      %v264 = vunpack.c.l.bf16 %v232
      %v265 = vunpack.c.l.bf16 %v233
      %v266 = vunpack.c.l.bf16 %v234
      %v267 = vunpack.c.l.bf16 %v235
      %v268 = vunpack.c.l.bf16 %v236
      %v269 = vunpack.c.l.bf16 %v237
      %v270 = vunpack.c.l.bf16 %v238
      %v271 = vunpack.c.l.bf16 %v239
      %v272 = vunpack.c.l.bf16 %v240
      %v273 = vunpack.c.l.bf16 %v241
      %v274 = vunpack.c.l.bf16 %v242
      %v275 = vunpack.c.l.bf16 %v243
      %v276 = vunpack.c.l.bf16 %v244
      %v277 = vunpack.c.l.bf16 %v245
      %v278 = vunpack.c.l.bf16 %v246
      %v279 = vunpack.c.l.bf16 %v247
      %v280 = vunpack.c.l.bf16 %v248
      %v281 = vunpack.c.l.bf16 %v249
      %v282 = vunpack.c.l.bf16 %v250
      %v283 = vunpack.c.l.bf16 %v251
      %v284 = vunpack.c.l.bf16 %v252
      %v285 = vunpack.c.l.bf16 %v253
      %v286 = vunpack.c.l.bf16 %v254
      %v287 = vld [vmem:[%s2] sm:$0x1]
      %v289 = vlaneseq
      %v290 = vshrl.u32 %v289, 7
      %v291 = vsub.s32 0, %v290
      %v292 = vrot.slane %v287, %v291
      %v294 = vmul.f32 %v255, %v292
      %v295 = vmul.f32 %v256, %v292
      %v296 = vmul.f32 %v257, %v292
      %v297 = vmul.f32 %v258, %v292
      %v298 = vmul.f32 %v259, %v292
      %v299 = vmul.f32 %v260, %v292
      %v300 = vmul.f32 %v261, %v292
      %v301 = vmul.f32 %v262, %v292
      %v302 = vmul.f32 %v263, %v292
      %v303 = vmul.f32 %v264, %v292
      %v304 = vmul.f32 %v265, %v292
      %v305 = vmul.f32 %v266, %v292
      %v306 = vmul.f32 %v267, %v292
      %v307 = vmul.f32 %v268, %v292
      %v308 = vmul.f32 %v269, %v292
      %v309 = vmul.f32 %v270, %v292
      %v310 = vmul.f32 %v271, %v292
      %v311 = vmul.f32 %v272, %v292
      %v312 = vmul.f32 %v273, %v292
      %v313 = vmul.f32 %v274, %v292
      %v314 = vmul.f32 %v275, %v292
      %v315 = vmul.f32 %v276, %v292
      %v316 = vmul.f32 %v277, %v292
      %v317 = vmul.f32 %v278, %v292
      %v318 = vmul.f32 %v279, %v292
      %v319 = vmul.f32 %v280, %v292
      %v320 = vmul.f32 %v281, %v292
      %v321 = vmul.f32 %v282, %v292
      %v322 = vmul.f32 %v283, %v292
      %v323 = vmul.f32 %v284, %v292
      %v324 = vmul.f32 %v285, %v292
      %v325 = vmul.f32 %v286, %v292
      %v326 = vld [vmem:[%s3] sm:$0x1]
      %v328 = vlaneseq
      %v329 = vshrl.u32 %v328, 7
      %v330 = vsub.s32 0, %v329
      %v331 = vrot.slane %v326, %v330
      %v333 = vadd.f32 %v294, %v331
      %v334 = vadd.f32 %v295, %v331
      %v335 = vadd.f32 %v296, %v331
      %v336 = vadd.f32 %v297, %v331
      %v337 = vadd.f32 %v298, %v331
      %v338 = vadd.f32 %v299, %v331
      %v339 = vadd.f32 %v300, %v331
      %v340 = vadd.f32 %v301, %v331
      %v341 = vadd.f32 %v302, %v331
      %v342 = vadd.f32 %v303, %v331
      %v343 = vadd.f32 %v304, %v331
      %v344 = vadd.f32 %v305, %v331
      %v345 = vadd.f32 %v306, %v331
      %v346 = vadd.f32 %v307, %v331
      %v347 = vadd.f32 %v308, %v331
      %v348 = vadd.f32 %v309, %v331
      %v349 = vadd.f32 %v310, %v331
      %v350 = vadd.f32 %v311, %v331
      %v351 = vadd.f32 %v312, %v331
      %v352 = vadd.f32 %v313, %v331
      %v353 = vadd.f32 %v314, %v331
      %v354 = vadd.f32 %v315, %v331
      %v355 = vadd.f32 %v316, %v331
      %v356 = vadd.f32 %v317, %v331
      %v357 = vadd.f32 %v318, %v331
      %v358 = vadd.f32 %v319, %v331
      %v359 = vadd.f32 %v320, %v331
      %v360 = vadd.f32 %v321, %v331
      %v361 = vadd.f32 %v322, %v331
      %v362 = vadd.f32 %v323, %v331
      %v363 = vadd.f32 %v324, %v331
      %v364 = vadd.f32 %v325, %v331
      %v365 = vld [vmem:[%s215] sm:$0xf]
      %v366 = vld [vmem:[%s215 + $0x4] sm:$0xf]
      %v367 = vld [vmem:[%s215 + $0x8] sm:$0xf]
      %v368 = vld [vmem:[%s215 + $0xc] sm:$0xf]
      %v369 = vld [vmem:[%s215 + $0x10] sm:$0xf]
      %v370 = vld [vmem:[%s215 + $0x14] sm:$0xf]
      %v371 = vld [vmem:[%s215 + $0x18] sm:$0xf]
      %v372 = vld [vmem:[%s215 + $0x1c] sm:$0xf]
      %v373 = vld [vmem:[%s215 + $0x20] sm:$0xf]
      %v374 = vld [vmem:[%s215 + $0x24] sm:$0xf]
      %v375 = vld [vmem:[%s215 + $0x28] sm:$0xf]
      %v376 = vld [vmem:[%s215 + $0x2c] sm:$0xf]
      %v377 = vld [vmem:[%s215 + $0x30] sm:$0xf]
      %v378 = vld [vmem:[%s215 + $0x34] sm:$0xf]
      %v379 = vld [vmem:[%s215 + $0x38] sm:$0xf]
      %v380 = vld [vmem:[%s215 + $0x3c] sm:$0xf]
      %v381 = vld [vmem:[%s215 + $0x40] sm:$0xf]
      %v382 = vld [vmem:[%s215 + $0x44] sm:$0xf]
      %v383 = vld [vmem:[%s215 + $0x48] sm:$0xf]
      %v384 = vld [vmem:[%s215 + $0x4c] sm:$0xf]
      %v385 = vld [vmem:[%s215 + $0x50] sm:$0xf]
      %v386 = vld [vmem:[%s215 + $0x54] sm:$0xf]
      %v387 = vld [vmem:[%s215 + $0x58] sm:$0xf]
      %v388 = vld [vmem:[%s215 + $0x5c] sm:$0xf]
      %v389 = vld [vmem:[%s215 + $0x60] sm:$0xf]
      %v390 = vld [vmem:[%s215 + $0x64] sm:$0xf]
      %v391 = vld [vmem:[%s215 + $0x68] sm:$0xf]
      %v392 = vld [vmem:[%s215 + $0x6c] sm:$0xf]
      %v393 = vld [vmem:[%s215 + $0x70] sm:$0xf]
      %v394 = vld [vmem:[%s215 + $0x74] sm:$0xf]
      %v395 = vld [vmem:[%s215 + $0x78] sm:$0xf]
      %v396 = vld [vmem:[%s215 + $0x7c] sm:$0xf]
      %v397 = vunpack.c.l.bf16 %v365
      %v398 = vunpack.c.l.bf16 %v366
      %v399 = vunpack.c.l.bf16 %v367
      %v400 = vunpack.c.l.bf16 %v368
      %v401 = vunpack.c.l.bf16 %v369
      %v402 = vunpack.c.l.bf16 %v370
      %v403 = vunpack.c.l.bf16 %v371
      %v404 = vunpack.c.l.bf16 %v372
      %v405 = vunpack.c.l.bf16 %v373
      %v406 = vunpack.c.l.bf16 %v374
      %v407 = vunpack.c.l.bf16 %v375
      %v408 = vunpack.c.l.bf16 %v376
      %v409 = vunpack.c.l.bf16 %v377
      %v410 = vunpack.c.l.bf16 %v378
      %v411 = vunpack.c.l.bf16 %v379
      %v412 = vunpack.c.l.bf16 %v380
      %v413 = vunpack.c.l.bf16 %v381
      %v414 = vunpack.c.l.bf16 %v382
      %v415 = vunpack.c.l.bf16 %v383
      %v416 = vunpack.c.l.bf16 %v384
      %v417 = vunpack.c.l.bf16 %v385
      %v418 = vunpack.c.l.bf16 %v386
      %v419 = vunpack.c.l.bf16 %v387
      %v420 = vunpack.c.l.bf16 %v388
      %v421 = vunpack.c.l.bf16 %v389
      %v422 = vunpack.c.l.bf16 %v390
      %v423 = vunpack.c.l.bf16 %v391
      %v424 = vunpack.c.l.bf16 %v392
      %v425 = vunpack.c.l.bf16 %v393
      %v426 = vunpack.c.l.bf16 %v394
      %v427 = vunpack.c.l.bf16 %v395
      %v428 = vunpack.c.l.bf16 %v396
      %v429 = vadd.f32 %v333, %v397
      %v430 = vadd.f32 %v334, %v398
      %v431 = vadd.f32 %v335, %v399
      %v432 = vadd.f32 %v336, %v400
      %v433 = vadd.f32 %v337, %v401
      %v434 = vadd.f32 %v338, %v402
      %v435 = vadd.f32 %v339, %v403
      %v436 = vadd.f32 %v340, %v404
      %v437 = vadd.f32 %v341, %v405
      %v438 = vadd.f32 %v342, %v406
      %v439 = vadd.f32 %v343, %v407
      %v440 = vadd.f32 %v344, %v408
      %v441 = vadd.f32 %v345, %v409
      %v442 = vadd.f32 %v346, %v410
      %v443 = vadd.f32 %v347, %v411
      %v444 = vadd.f32 %v348, %v412
      %v445 = vadd.f32 %v349, %v413
      %v446 = vadd.f32 %v350, %v414
      %v447 = vadd.f32 %v351, %v415
      %v448 = vadd.f32 %v352, %v416
      %v449 = vadd.f32 %v353, %v417
      %v450 = vadd.f32 %v354, %v418
      %v451 = vadd.f32 %v355, %v419
      %v452 = vadd.f32 %v356, %v420
      %v453 = vadd.f32 %v357, %v421
      %v454 = vadd.f32 %v358, %v422
      %v455 = vadd.f32 %v359, %v423
      %v456 = vadd.f32 %v360, %v424
      %v457 = vadd.f32 %v361, %v425
      %v458 = vadd.f32 %v362, %v426
      %v459 = vadd.f32 %v363, %v427
      %v460 = vadd.f32 %v364, %v428
      %v461 = vmax.f32 %v429, 0.0
      %v462 = vmax.f32 %v430, 0.0
      %v463 = vmax.f32 %v431, 0.0
      %v464 = vmax.f32 %v432, 0.0
      %v465 = vmax.f32 %v433, 0.0
      %v466 = vmax.f32 %v434, 0.0
      %v467 = vmax.f32 %v435, 0.0
      %v468 = vmax.f32 %v436, 0.0
      %v469 = vmax.f32 %v437, 0.0
      %v470 = vmax.f32 %v438, 0.0
      %v471 = vmax.f32 %v439, 0.0
      %v472 = vmax.f32 %v440, 0.0
      %v473 = vmax.f32 %v441, 0.0
      %v474 = vmax.f32 %v442, 0.0
      %v475 = vmax.f32 %v443, 0.0
      %v476 = vmax.f32 %v444, 0.0
      %v477 = vmax.f32 %v445, 0.0
      %v478 = vmax.f32 %v446, 0.0
      %v479 = vmax.f32 %v447, 0.0
      %v480 = vmax.f32 %v448, 0.0
      %v481 = vmax.f32 %v449, 0.0
      %v482 = vmax.f32 %v450, 0.0
      %v483 = vmax.f32 %v451, 0.0
      %v484 = vmax.f32 %v452, 0.0
      %v485 = vmax.f32 %v453, 0.0
      %v486 = vmax.f32 %v454, 0.0
      %v487 = vmax.f32 %v455, 0.0
      %v488 = vmax.f32 %v456, 0.0
      %v489 = vmax.f32 %v457, 0.0
      %v490 = vmax.f32 %v458, 0.0
      %v491 = vmax.f32 %v459, 0.0
      %v492 = vmax.f32 %v460, 0.0
      %493 = vst [vmem:[%s221] sm:$0xff] %v461
      %494 = vst [vmem:[%s221 + $0x8] sm:$0xff] %v462
      %495 = vst [vmem:[%s221 + $0x10] sm:$0xff] %v463
      %496 = vst [vmem:[%s221 + $0x18] sm:$0xff] %v464
      %497 = vst [vmem:[%s221 + $0x20] sm:$0xff] %v465
      %498 = vst [vmem:[%s221 + $0x28] sm:$0xff] %v466
      %499 = vst [vmem:[%s221 + $0x30] sm:$0xff] %v467
      %500 = vst [vmem:[%s221 + $0x38] sm:$0xff] %v468
      %501 = vst [vmem:[%s221 + $0x40] sm:$0xff] %v469
      %502 = vst [vmem:[%s221 + $0x48] sm:$0xff] %v470
      %503 = vst [vmem:[%s221 + $0x50] sm:$0xff] %v471
      %504 = vst [vmem:[%s221 + $0x58] sm:$0xff] %v472
      %505 = vst [vmem:[%s221 + $0x60] sm:$0xff] %v473
      %506 = vst [vmem:[%s221 + $0x68] sm:$0xff] %v474
      %507 = vst [vmem:[%s221 + $0x70] sm:$0xff] %v475
      %508 = vst [vmem:[%s221 + $0x78] sm:$0xff] %v476
      %509 = vst [vmem:[%s221 + $0x80] sm:$0xff] %v477
      %510 = vst [vmem:[%s221 + $0x88] sm:$0xff] %v478
      %511 = vst [vmem:[%s221 + $0x90] sm:$0xff] %v479
      %512 = vst [vmem:[%s221 + $0x98] sm:$0xff] %v480
      %513 = vst [vmem:[%s221 + $0xa0] sm:$0xff] %v481
      %514 = vst [vmem:[%s221 + $0xa8] sm:$0xff] %v482
      %515 = vst [vmem:[%s221 + $0xb0] sm:$0xff] %v483
      %516 = vst [vmem:[%s221 + $0xb8] sm:$0xff] %v484
      %517 = vst [vmem:[%s221 + $0xc0] sm:$0xff] %v485
      %518 = vst [vmem:[%s221 + $0xc8] sm:$0xff] %v486
      %519 = vst [vmem:[%s221 + $0xd0] sm:$0xff] %v487
      %520 = vst [vmem:[%s221 + $0xd8] sm:$0xff] %v488
      %521 = vst [vmem:[%s221 + $0xe0] sm:$0xff] %v489
      %522 = vst [vmem:[%s221 + $0xe8] sm:$0xff] %v490
      %523 = vst [vmem:[%s221 + $0xf0] sm:$0xff] %v491
      %524 = vst [vmem:[%s221 + $0xf8] sm:$0xff] %v492
      %s525 = smul.u32 32, %s15
      %p526 = scmp.lt.s32.totalorder %s525, 63
      %s527 = scalar_select %p526, %s525, 63
      %s528 = smul.addr %s527, 8
      %s529 = scalar_lea.vmem %s4, %s528
      // Predicated region
      $region37: #{block_forward.7} parent=35 // pred_check
        %p530 = pneg %p127
      $region38: #{block_forward.7} parent=35 // pred_check_branch
        %532 = sbr.rel (%p530) target = $region40
      $region39: #{block_forward.7} parent=35 // pred_region
        %s533 = smul.u32 32, %s15
      $region40: #{block_forward.7} parent=35 // pred_fallthru
        _
    $region36: #{block_forward.7} parent=5 // pred_fallthru
      _
    %p534 = scmp.le.s32.totalorder 2, %s10
    // Predicated region
    $region41: #{block_forward.7} parent=5 // pred_check
      %p535 = pneg %p534
    $region42: #{block_forward.7} parent=5 // pred_check_branch
      %537 = sbr.rel (%p535) target = $region44
    $region43: #{block_forward.7} parent=5 // pred_region
      %s538 = ssub.s32 %s10, 2
      // Predicated region
      $region45: #{block_forward.7} parent=43 // pred_check
        %p539 = pneg %p133
      $region46: #{block_forward.7} parent=43 // pred_check_branch
        %541 = sbr.rel (%p539) target = $region48
      $region47: #{block_forward.7} parent=43 // pred_region
        %s542 = smul.u32 32, %s16
        %p543 = scmp.lt.s32.totalorder %s542, 63
        %s544 = scalar_select %p543, %s542, 63
        %s545 = smul.addr %s544, 8
        %s546 = scalar_lea.vmem %s4, %s545
      $region48: #{block_forward.7} parent=43 // pred_fallthru
        _
    $region44: #{block_forward.7} parent=5 // pred_fallthru
      _
  $region6: #{block_forward.7} parent=0 // loop_footer
    %s14 = sadd.s32 1, %s10
  $region7: #{block_forward.7} parent=0 // loop_footer_branch
    %9 = sbr.rel target = $region3
  $region8: #{block_forward.7} parent=0 // loop_exit
    _

// kernel: block_forward.5
$region0: #{block_forward.5}
  #allocation0 [shape = 'u32[]', space=smem, size = 0x4, offset = 0x4, fixed_abs, tag = 'smem constant byte address 0x4 - core index']
  #allocation1 [shape = 'u32[144,128]{1,0:T(1,128)}', space=vmem, size = 0x12000, scoped, tag = 'internal scratch']
  #allocation2 [shape = 'bf16[18,32,128]{2,1,0:T(16,128)(2,1)}', space=vmem, size = 0x24000, scoped, tag = 'scratch operand']
  #allocation3 [shape = 'bf16[256,1152]{1,0:T(16,128)(2,1)}', space=vmem, size = 0x90000, scoped, tag = 'scratch operand']
  %s0 = inlined_call_operand.vmem [shape: bf16[2,16,16,128], index: 0, kind: input, shape index: {}]
  %s1 = inlined_call_operand.vmem [shape: f32[1,128], index: 1, kind: input, shape index: {}]
  %s2 = inlined_call_operand.vmem [shape: f32[1,128], index: 2, kind: input, shape index: {}]
  %s3 = inlined_call_operand.vmem [shape: bf16[1152,128], index: 3, kind: input, shape index: {}]
  %s4 = inlined_call_operand.vmem [shape: bf16[2,16,16,128], index: 4, kind: output, shape index: {0}]
  %s5 = inlined_call_operand.vmem [shape: f32[2,8,128], index: 5, kind: output, shape index: {1}]
  %s6 = inlined_call_operand.vmem [shape: f32[2,8,128], index: 6, kind: output, shape index: {2}]
  %7 = xla_tuple %s4, %s5, %s6
  %s8 = sld [smem:[#allocation0]]
  $region69: #{block_forward.5} parent=0
    _
  %s10 = ssub.s32 1, %s8
  %s11 = scalar_select 0, %s10, %s8
  loop: start=0, step=1, limit=4
  $region2: #{block_forward.5} parent=0 // loop_pre_header
    _
  $region3: #{block_forward.5} parent=0 // loop_header
    %s13 = sphi 0, %s17
    %p14 = scmp.ge.s32.totalorder %s13, 4
    %s20 = sphi 0, %s32
    %s21 = sphi 0, %s28
    %s22 = sphi 0, %s20
    %s23 = sphi 0, %s21
    %s24 = sphi 0, %s22
    %s25 = sphi 0, %s23
    %s37 = sphi 0, %s39
    %s40 = sphi 0, %s37
    %s41 = sphi 0, %s40
    %s57 = sphi 0, %s41
    %s61 = sphi 0, %s61
    %s63 = sphi 0, %s61
    %s64 = sphi 0, %s63
    %s78 = sphi 0, %s64
    %s82 = sphi 0, %s82
    %s84 = sphi 0, %s82
    %s85 = sphi 0, %s84
    %s99 = sphi 0, %s85
    %s103 = sphi 0, %s103
    %s105 = sphi 0, %s103
    %s106 = sphi 0, %s105
    %s120 = sphi 0, %s106
    %s128 = sphi 0, %s130
    %s131 = sphi 0, %s128
    %s132 = sphi 0, %s131
    %s148 = sphi 0, %s132
    %s154 = sphi 0, %s156
    %s157 = sphi 0, %s154
    %s158 = sphi 0, %s157
    %s174 = sphi 0, %s158
    %s180 = sphi 0, %s182
    %s183 = sphi 0, %s180
    %s184 = sphi 0, %s183
    %s200 = sphi 0, %s184
  $region4: #{block_forward.5} parent=0 // loop_header_branch
    %16 = sbr.rel (%p14) target = $region8
  $region5: #{block_forward.5} parent=0 // loop_body
    %s18 = ssub.s32 %s13, 1
    %s19 = ssub.s32 %s13, 2
    %s26 = sadd.s32 1, %s21
    %p27 = scmp.ge.s32.totalorder %s26, 1
    %s28 = scalar_select %p27, 0, %s26
    %s29 = sadd.s32 1, %s20
    %s30 = scalar_select %p27, %s29, %s20
    %p31 = scmp.ge.s32.totalorder %s30, 2
    %s32 = scalar_select %p31, 0, %s30
    %s33 = sadd.s32 %s20, %s21
    %s34 = sadd.s32 %s32, %s28
    %s35 = ssub.s32 %s33, %s34
    %p36 = scmp.eq.s32.totalorder %s35, 0
    %s38 = sadd.s32 %s37, 1
    %s39 = scalar_select %p36, %s37, %s38
    %p42 = pneg %p36
    %p43 = scmp.eq.s32.totalorder %s13, 1
    %p44 = por %p42, %p43
    %p45 = scmp.ne.s32.totalorder %s37, %s40
    %p46 = scmp.eq.s32.totalorder %s13, 0
    %p47 = por %p45, %p46
    %p48 = scmp.ne.s32.totalorder %s37, %s40
    %p49 = scmp.eq.s32.totalorder %s18, 1
    %p50 = por %p48, %p49
    %p51 = scmp.ne.s32.totalorder %s40, %s41
    %p52 = scmp.eq.s32.totalorder %s18, 0
    %p53 = por %p51, %p52
    %p54 = scmp.ne.s32.totalorder %s40, %s41
    %p55 = scmp.eq.s32.totalorder %s19, 1
    %p56 = por %p54, %p55
    %p58 = scmp.ne.s32.totalorder %s41, %s57
    %p59 = scmp.eq.s32.totalorder %s19, 0
    %p60 = por %p58, %p59
    %s62 = sadd.s32 %s61, 1
    %p65 = scmp.eq.s32.totalorder %s13, 1
    %p66 = scmp.ne.s32.totalorder %s61, %s63
    %p67 = scmp.eq.s32.totalorder %s13, 0
    %p68 = por %p66, %p67
    %p69 = scmp.ne.s32.totalorder %s61, %s63
    %p70 = scmp.eq.s32.totalorder %s18, 1
    %p71 = por %p69, %p70
    %p72 = scmp.ne.s32.totalorder %s63, %s64
    %p73 = scmp.eq.s32.totalorder %s18, 0
    %p74 = por %p72, %p73
    %p75 = scmp.ne.s32.totalorder %s63, %s64
    %p76 = scmp.eq.s32.totalorder %s19, 1
    %p77 = por %p75, %p76
    %p79 = scmp.ne.s32.totalorder %s64, %s78
    %p80 = scmp.eq.s32.totalorder %s19, 0
    %p81 = por %p79, %p80
    %s83 = sadd.s32 %s82, 1
    %p86 = scmp.eq.s32.totalorder %s13, 1
    %p87 = scmp.ne.s32.totalorder %s82, %s84
    %p88 = scmp.eq.s32.totalorder %s13, 0
    %p89 = por %p87, %p88
    %p90 = scmp.ne.s32.totalorder %s82, %s84
    %p91 = scmp.eq.s32.totalorder %s18, 1
    %p92 = por %p90, %p91
    %p93 = scmp.ne.s32.totalorder %s84, %s85
    %p94 = scmp.eq.s32.totalorder %s18, 0
    %p95 = por %p93, %p94
    %p96 = scmp.ne.s32.totalorder %s84, %s85
    %p97 = scmp.eq.s32.totalorder %s19, 1
    %p98 = por %p96, %p97
    %p100 = scmp.ne.s32.totalorder %s85, %s99
    %p101 = scmp.eq.s32.totalorder %s19, 0
    %p102 = por %p100, %p101
    %s104 = sadd.s32 %s103, 1
    %p107 = scmp.eq.s32.totalorder %s13, 1
    %p108 = scmp.ne.s32.totalorder %s103, %s105
    %p109 = scmp.eq.s32.totalorder %s13, 0
    %p110 = por %p108, %p109
    %p111 = scmp.ne.s32.totalorder %s103, %s105
    %p112 = scmp.eq.s32.totalorder %s18, 1
    %p113 = por %p111, %p112
    %p114 = scmp.ne.s32.totalorder %s105, %s106
    %p115 = scmp.eq.s32.totalorder %s18, 0
    %p116 = por %p114, %p115
    %p117 = scmp.ne.s32.totalorder %s105, %s106
    %p118 = scmp.eq.s32.totalorder %s19, 1
    %p119 = por %p117, %p118
    %p121 = scmp.ne.s32.totalorder %s106, %s120
    %p122 = scmp.eq.s32.totalorder %s19, 0
    %p123 = por %p121, %p122
    %s124 = sadd.s32 %s20, %s21
    %s125 = sadd.s32 %s32, %s28
    %s126 = ssub.s32 %s124, %s125
    %p127 = scmp.eq.s32.totalorder %s126, 0
    %s129 = sadd.s32 %s128, 1
    %s130 = scalar_select %p127, %s128, %s129
    %p133 = pneg %p127
    %p134 = scmp.eq.s32.totalorder %s13, 1
    %p135 = por %p133, %p134
    %p136 = scmp.ne.s32.totalorder %s128, %s131
    %p137 = scmp.eq.s32.totalorder %s13, 0
    %p138 = por %p136, %p137
    %p139 = scmp.ne.s32.totalorder %s128, %s131
    %p140 = scmp.eq.s32.totalorder %s18, 1
    %p141 = por %p139, %p140
    %p142 = scmp.ne.s32.totalorder %s131, %s132
    %p143 = scmp.eq.s32.totalorder %s18, 0
    %p144 = por %p142, %p143
    %p145 = scmp.ne.s32.totalorder %s131, %s132
    %p146 = scmp.eq.s32.totalorder %s19, 1
    %p147 = por %p145, %p146
    %p149 = scmp.ne.s32.totalorder %s132, %s148
    %p150 = scmp.eq.s32.totalorder %s19, 0
    %p151 = por %p149, %p150
    %s152 = ssub.s32 %s20, %s32
    %p153 = scmp.eq.s32.totalorder %s152, 0
    %s155 = sadd.s32 %s154, 1
    %s156 = scalar_select %p153, %s154, %s155
    %p159 = pneg %p153
    %p160 = scmp.eq.s32.totalorder %s13, 1
    %p161 = por %p159, %p160
    %p162 = scmp.ne.s32.totalorder %s154, %s157
    %p163 = scmp.eq.s32.totalorder %s13, 0
    %p164 = por %p162, %p163
    %p165 = scmp.ne.s32.totalorder %s154, %s157
    %p166 = scmp.eq.s32.totalorder %s18, 1
    %p167 = por %p165, %p166
    %p168 = scmp.ne.s32.totalorder %s157, %s158
    %p169 = scmp.eq.s32.totalorder %s18, 0
    %p170 = por %p168, %p169
    %p171 = scmp.ne.s32.totalorder %s157, %s158
    %p172 = scmp.eq.s32.totalorder %s19, 1
    %p173 = por %p171, %p172
    %p175 = scmp.ne.s32.totalorder %s158, %s174
    %p176 = scmp.eq.s32.totalorder %s19, 0
    %p177 = por %p175, %p176
    %s178 = ssub.s32 %s20, %s32
    %p179 = scmp.eq.s32.totalorder %s178, 0
    %s181 = sadd.s32 %s180, 1
    %s182 = scalar_select %p179, %s180, %s181
    %p185 = pneg %p179
    %p186 = scmp.eq.s32.totalorder %s13, 1
    %p187 = por %p185, %p186
    %p188 = scmp.ne.s32.totalorder %s180, %s183
    %p189 = scmp.eq.s32.totalorder %s13, 0
    %p190 = por %p188, %p189
    %p191 = scmp.ne.s32.totalorder %s180, %s183
    %p192 = scmp.eq.s32.totalorder %s18, 1
    %p193 = por %p191, %p192
    %p194 = scmp.ne.s32.totalorder %s183, %s184
    %p195 = scmp.eq.s32.totalorder %s18, 0
    %p196 = por %p194, %p195
    %p197 = scmp.ne.s32.totalorder %s183, %s184
    %p198 = scmp.eq.s32.totalorder %s19, 1
    %p199 = por %p197, %p198
    %p201 = scmp.ne.s32.totalorder %s184, %s200
    %p202 = scmp.eq.s32.totalorder %s19, 0
    %p203 = por %p201, %p202
    %p204 = scmp.le.s32.totalorder 1, %s13
    %p205 = scmp.lt.s32.totalorder %s13, 3
    %p206 = pnand %p204, %p205
    %p207 = pneg %p206
    // Predicated region
    $region9: #{block_forward.5} parent=5 // pred_check
      _
    $region10: #{block_forward.5} parent=5 // pred_check_branch
      %209 = sbr.rel (%p206) target = $region12
    $region11: #{block_forward.5} parent=5 // pred_region
      %s210 = ssub.s32 %s13, 1
      // Predicated region
      $region13: #{block_forward.5} parent=11 // pred_check
        %p211 = pneg %p74
      $region14: #{block_forward.5} parent=11 // pred_check_branch
        %213 = sbr.rel (%p211) target = $region16
      $region15: #{block_forward.5} parent=11 // pred_region
        _
      $region16: #{block_forward.5} parent=11 // pred_fallthru
        _
      // Predicated region
      $region17: #{block_forward.5} parent=11 // pred_check
        %p214 = pneg %p95
      $region18: #{block_forward.5} parent=11 // pred_check_branch
        %216 = sbr.rel (%p214) target = $region20
      $region19: #{block_forward.5} parent=11 // pred_region
        _
      $region20: #{block_forward.5} parent=11 // pred_fallthru
        _
      // Predicated region
      $region21: #{block_forward.5} parent=11 // pred_check
        %p217 = pneg %p116
      $region22: #{block_forward.5} parent=11 // pred_check_branch
        %219 = sbr.rel (%p217) target = $region24
      $region23: #{block_forward.5} parent=11 // pred_region
        _
      $region24: #{block_forward.5} parent=11 // pred_fallthru
        _
    $region12: #{block_forward.5} parent=5 // pred_fallthru
      _
    %p220 = scmp.lt.s32.totalorder %s13, 2
    // Predicated region
    $region25: #{block_forward.5} parent=5 // pred_check
      %p221 = pneg %p220
    $region26: #{block_forward.5} parent=5 // pred_check_branch
      %223 = sbr.rel (%p221) target = $region28
    $region27: #{block_forward.5} parent=5 // pred_region
      // Predicated region
      $region29: #{block_forward.5} parent=27 // pred_check
        %p224 = pneg %p47
      $region30: #{block_forward.5} parent=27 // pred_check_branch
        %226 = sbr.rel (%p224) target = $region32
      $region31: #{block_forward.5} parent=27 // pred_region
        %s227 = sadd.s32 %s20, %s21
        %p228 = scmp.lt.s32.totalorder %s227, 1
        %s229 = scalar_select %p228, %s227, 1
        %s230 = smul.addr %s229, 32
        %s231 = smul.addr %s230, 4
        %s232 = scalar_lea.vmem %s0, %s231
        %s233 = sadd.s32 %s20, %s21
      $region32: #{block_forward.5} parent=27 // pred_fallthru
        _
    $region28: #{block_forward.5} parent=5 // pred_fallthru
      _
    %p234 = scmp.le.s32.totalorder 1, %s13
    %p235 = scmp.lt.s32.totalorder %s13, 3
    %p236 = pnand %p234, %p235
    %p237 = pneg %p236
    // Predicated region
    $region33: #{block_forward.5} parent=5 // pred_check
      _
    $region34: #{block_forward.5} parent=5 // pred_check_branch
      %239 = sbr.rel (%p236) target = $region36
    $region35: #{block_forward.5} parent=5 // pred_region
      %s240 = ssub.s32 %s13, 1
      %s241 = sadd.s32 %s22, %s23
      %p242 = scmp.lt.s32.totalorder %s241, 1
      %s243 = scalar_select %p242, %s241, 1
      %s244 = smul.addr %s243, 32
      %s245 = smul.addr %s244, 4
      %s246 = scalar_lea.vmem %s0, %s245
      %p247 = pneg %p53
      %p248 = pneg %p50
      %p249 = pneg %p74
      %p250 = pneg %p71
      %p251 = pneg %p95
      %p252 = pneg %p92
      %p253 = pneg %p116
      %p254 = pneg %p113
      %p255 = pneg %p144
      %p256 = pneg %p141
      %s257 = sadd.s32 %s22, %s23
      %p258 = scmp.lt.s32.totalorder %s257, 1
      %s259 = scalar_select %p258, %s257, 1
      %s260 = smul.addr %s259, 32
      %s261 = smul.addr %s260, 4
      %s262 = scalar_lea.vmem %s4, %s261
      %p263 = pneg %p170
      %p264 = pneg %p167
      %p265 = scmp.lt.s32.totalorder %s22, 1
      %s266 = scalar_select %p265, %s22, 1
      %s267 = smul.addr %s266, 8
      %s268 = scalar_lea.vmem %s5, %s267
      %p269 = pneg %p196
      %p270 = pneg %p193
      %p271 = scmp.lt.s32.totalorder %s22, 1
      %s272 = scalar_select %p271, %s22, 1
      %s273 = smul.addr %s272, 8
      %s274 = scalar_lea.vmem %s6, %s273
      %s275 = sadd.s32 %s22, %s23
      %p276 = scmp.lt.s32.totalorder %s275, 1
      %s277 = scalar_select %p276, %s275, 1
      %s278 = smul.addr %s277, 32
      %s279 = smul.addr %s278, 4
      %s280 = scalar_lea.vmem %s0, %s279
      %s281 = sadd.s32 %s22, %s23
      %s282 = sadd.s32 %s22, %s23
      %p283 = scmp.lt.s32.totalorder %s282, 1
      %s284 = scalar_select %p283, %s282, 1
      %s285 = smul.addr %s284, 32
      %s286 = smul.addr %s285, 4
      %s287 = scalar_lea.vmem %s4, %s286
      %s288 = sadd.s32 %s22, %s23
      %p289 = scmp.lt.s32.totalorder %s22, 1
      %s290 = scalar_select %p289, %s22, 1
      %s291 = smul.addr %s290, 8
      %s292 = scalar_lea.vmem %s5, %s291
      %p293 = scmp.lt.s32.totalorder %s22, 1
      %s294 = scalar_select %p293, %s22, 1
      %s295 = smul.addr %s294, 8
      %s296 = scalar_lea.vmem %s6, %s295
      %v298 = vld [vmem:[%s280] sm:$0xf]
      %v299 = vld [vmem:[%s280 + $0x4] sm:$0xf]
      %v300 = vld [vmem:[%s280 + $0x8] sm:$0xf]
      %v301 = vld [vmem:[%s280 + $0xc] sm:$0xf]
      %v302 = vld [vmem:[%s280 + $0x10] sm:$0xf]
      %v303 = vld [vmem:[%s280 + $0x14] sm:$0xf]
      %v304 = vld [vmem:[%s280 + $0x18] sm:$0xf]
      %v305 = vld [vmem:[%s280 + $0x1c] sm:$0xf]
      %v306 = vld [vmem:[%s280 + $0x20] sm:$0xf]
      %v307 = vld [vmem:[%s280 + $0x24] sm:$0xf]
      %v308 = vld [vmem:[%s280 + $0x28] sm:$0xf]
      %v309 = vld [vmem:[%s280 + $0x2c] sm:$0xf]
      %v310 = vld [vmem:[%s280 + $0x30] sm:$0xf]
      %v311 = vld [vmem:[%s280 + $0x34] sm:$0xf]
      %v312 = vld [vmem:[%s280 + $0x38] sm:$0xf]
      %v313 = vld [vmem:[%s280 + $0x3c] sm:$0xf]
      %v314 = vld [vmem:[%s280 + $0x40] sm:$0xf]
      %v315 = vld [vmem:[%s280 + $0x44] sm:$0xf]
      %v316 = vld [vmem:[%s280 + $0x48] sm:$0xf]
      %v317 = vld [vmem:[%s280 + $0x4c] sm:$0xf]
      %v318 = vld [vmem:[%s280 + $0x50] sm:$0xf]
      %v319 = vld [vmem:[%s280 + $0x54] sm:$0xf]
      %v320 = vld [vmem:[%s280 + $0x58] sm:$0xf]
      %v321 = vld [vmem:[%s280 + $0x5c] sm:$0xf]
      %v322 = vld [vmem:[%s280 + $0x60] sm:$0xf]
      %v323 = vld [vmem:[%s280 + $0x64] sm:$0xf]
      %v324 = vld [vmem:[%s280 + $0x68] sm:$0xf]
      %v325 = vld [vmem:[%s280 + $0x6c] sm:$0xf]
      %v326 = vld [vmem:[%s280 + $0x70] sm:$0xf]
      %v327 = vld [vmem:[%s280 + $0x74] sm:$0xf]
      %v328 = vld [vmem:[%s280 + $0x78] sm:$0xf]
      %v329 = vld [vmem:[%s280 + $0x7c] sm:$0xf]
      %v330 = vunpack.c.l.bf16 %v298
      %v331 = vunpack.c.l.bf16 %v299
      %v332 = vunpack.c.l.bf16 %v300
      %v333 = vunpack.c.l.bf16 %v301
      %v334 = vunpack.c.l.bf16 %v302
      %v335 = vunpack.c.l.bf16 %v303
      %v336 = vunpack.c.l.bf16 %v304
      %v337 = vunpack.c.l.bf16 %v305
      %v338 = vunpack.c.l.bf16 %v306
      %v339 = vunpack.c.l.bf16 %v307
      %v340 = vunpack.c.l.bf16 %v308
      %v341 = vunpack.c.l.bf16 %v309
      %v342 = vunpack.c.l.bf16 %v310
      %v343 = vunpack.c.l.bf16 %v311
      %v344 = vunpack.c.l.bf16 %v312
      %v345 = vunpack.c.l.bf16 %v313
      %v346 = vunpack.c.l.bf16 %v314
      %v347 = vunpack.c.l.bf16 %v315
      %v348 = vunpack.c.l.bf16 %v316
      %v349 = vunpack.c.l.bf16 %v317
      %v350 = vunpack.c.l.bf16 %v318
      %v351 = vunpack.c.l.bf16 %v319
      %v352 = vunpack.c.l.bf16 %v320
      %v353 = vunpack.c.l.bf16 %v321
      %v354 = vunpack.c.l.bf16 %v322
      %v355 = vunpack.c.l.bf16 %v323
      %v356 = vunpack.c.l.bf16 %v324
      %v357 = vunpack.c.l.bf16 %v325
      %v358 = vunpack.c.l.bf16 %v326
      %v359 = vunpack.c.l.bf16 %v327
      %v360 = vunpack.c.l.bf16 %v328
      %v361 = vunpack.c.l.bf16 %v329
      %v362 = vld [vmem:[%s1] sm:$0x1]
      %v364 = vlaneseq
      %v365 = vshrl.u32 %v364, 7
      %v366 = vsub.s32 0, %v365
      %v367 = vrot.slane %v362, %v366
      %v369 = vmul.f32 %v330, %v367
      %v370 = vmul.f32 %v331, %v367
      %v371 = vmul.f32 %v332, %v367
      %v372 = vmul.f32 %v333, %v367
      %v373 = vmul.f32 %v334, %v367
      %v374 = vmul.f32 %v335, %v367
      %v375 = vmul.f32 %v336, %v367
      %v376 = vmul.f32 %v337, %v367
      %v377 = vmul.f32 %v338, %v367
      %v378 = vmul.f32 %v339, %v367
      %v379 = vmul.f32 %v340, %v367
      %v380 = vmul.f32 %v341, %v367
      %v381 = vmul.f32 %v342, %v367
      %v382 = vmul.f32 %v343, %v367
      %v383 = vmul.f32 %v344, %v367
      %v384 = vmul.f32 %v345, %v367
      %v385 = vmul.f32 %v346, %v367
      %v386 = vmul.f32 %v347, %v367
      %v387 = vmul.f32 %v348, %v367
      %v388 = vmul.f32 %v349, %v367
      %v389 = vmul.f32 %v350, %v367
      %v390 = vmul.f32 %v351, %v367
      %v391 = vmul.f32 %v352, %v367
      %v392 = vmul.f32 %v353, %v367
      %v393 = vmul.f32 %v354, %v367
      %v394 = vmul.f32 %v355, %v367
      %v395 = vmul.f32 %v356, %v367
      %v396 = vmul.f32 %v357, %v367
      %v397 = vmul.f32 %v358, %v367
      %v398 = vmul.f32 %v359, %v367
      %v399 = vmul.f32 %v360, %v367
      %v400 = vmul.f32 %v361, %v367
      %v401 = vld [vmem:[%s2] sm:$0x1]
      %v403 = vlaneseq
      %v404 = vshrl.u32 %v403, 7
      %v405 = vsub.s32 0, %v404
      %v406 = vrot.slane %v401, %v405
      %v408 = vadd.f32 %v369, %v406
      %v409 = vadd.f32 %v370, %v406
      %v410 = vadd.f32 %v371, %v406
      %v411 = vadd.f32 %v372, %v406
      %v412 = vadd.f32 %v373, %v406
      %v413 = vadd.f32 %v374, %v406
      %v414 = vadd.f32 %v375, %v406
      %v415 = vadd.f32 %v376, %v406
      %v416 = vadd.f32 %v377, %v406
      %v417 = vadd.f32 %v378, %v406
      %v418 = vadd.f32 %v379, %v406
      %v419 = vadd.f32 %v380, %v406
      %v420 = vadd.f32 %v381, %v406
      %v421 = vadd.f32 %v382, %v406
      %v422 = vadd.f32 %v383, %v406
      %v423 = vadd.f32 %v384, %v406
      %v424 = vadd.f32 %v385, %v406
      %v425 = vadd.f32 %v386, %v406
      %v426 = vadd.f32 %v387, %v406
      %v427 = vadd.f32 %v388, %v406
      %v428 = vadd.f32 %v389, %v406
      %v429 = vadd.f32 %v390, %v406
      %v430 = vadd.f32 %v391, %v406
      %v431 = vadd.f32 %v392, %v406
      %v432 = vadd.f32 %v393, %v406
      %v433 = vadd.f32 %v394, %v406
      %v434 = vadd.f32 %v395, %v406
      %v435 = vadd.f32 %v396, %v406
      %v436 = vadd.f32 %v397, %v406
      %v437 = vadd.f32 %v398, %v406
      %v438 = vadd.f32 %v399, %v406
      %v439 = vadd.f32 %v400, %v406
      %v440 = vmax.f32 %v408, 0.0
      %v441 = vmax.f32 %v409, 0.0
      %v442 = vmax.f32 %v410, 0.0
      %v443 = vmax.f32 %v411, 0.0
      %v444 = vmax.f32 %v412, 0.0
      %v445 = vmax.f32 %v413, 0.0
      %v446 = vmax.f32 %v414, 0.0
      %v447 = vmax.f32 %v415, 0.0
      %v448 = vmax.f32 %v416, 0.0
      %v449 = vmax.f32 %v417, 0.0
      %v450 = vmax.f32 %v418, 0.0
      %v451 = vmax.f32 %v419, 0.0
      %v452 = vmax.f32 %v420, 0.0
      %v453 = vmax.f32 %v421, 0.0
      %v454 = vmax.f32 %v422, 0.0
      %v455 = vmax.f32 %v423, 0.0
      %v456 = vmax.f32 %v424, 0.0
      %v457 = vmax.f32 %v425, 0.0
      %v458 = vmax.f32 %v426, 0.0
      %v459 = vmax.f32 %v427, 0.0
      %v460 = vmax.f32 %v428, 0.0
      %v461 = vmax.f32 %v429, 0.0
      %v462 = vmax.f32 %v430, 0.0
      %v463 = vmax.f32 %v431, 0.0
      %v464 = vmax.f32 %v432, 0.0
      %v465 = vmax.f32 %v433, 0.0
      %v466 = vmax.f32 %v434, 0.0
      %v467 = vmax.f32 %v435, 0.0
      %v468 = vmax.f32 %v436, 0.0
      %v469 = vmax.f32 %v437, 0.0
      %v470 = vmax.f32 %v438, 0.0
      %v471 = vmax.f32 %v439, 0.0
      %v472 = vpack.c.bf16 %v441, %v440
      %v473 = vpack.c.bf16 %v443, %v442
      %v474 = vpack.c.bf16 %v445, %v444
      %v475 = vpack.c.bf16 %v447, %v446
      %v476 = vpack.c.bf16 %v449, %v448
      %v477 = vpack.c.bf16 %v451, %v450
      %v478 = vpack.c.bf16 %v453, %v452
      %v479 = vpack.c.bf16 %v455, %v454
      %v480 = vpack.c.bf16 %v457, %v456
      %v481 = vpack.c.bf16 %v459, %v458
      %v482 = vpack.c.bf16 %v461, %v460
      %v483 = vpack.c.bf16 %v463, %v462
      %v484 = vpack.c.bf16 %v465, %v464
      %v485 = vpack.c.bf16 %v467, %v466
      %v486 = vpack.c.bf16 %v469, %v468
      %v487 = vpack.c.bf16 %v471, %v470
      %488 = vst [vmem:[#allocation2] sm:$0xff] 0
      %489 = vst [vmem:[#allocation2 + $0x8] sm:$0xff] 0
      %490 = vst [vmem:[#allocation2 + $0x10] sm:$0xff] 0
      %491 = vst [vmem:[#allocation2 + $0x18] sm:$0xff] 0
      %492 = vst [vmem:[#allocation2 + $0x20] sm:$0xff] 0
      %493 = vst [vmem:[#allocation2 + $0x28] sm:$0xff] 0
      %494 = vst [vmem:[#allocation2 + $0x30] sm:$0xff] 0
      %495 = vst [vmem:[#allocation2 + $0x38] sm:$0xff] 0
      %496 = vst [vmem:[#allocation2 + $0x40] sm:$0xff] 0
      %497 = vst [vmem:[#allocation2 + $0x48] sm:$0xff] 0
      %498 = vst [vmem:[#allocation2 + $0x50] sm:$0xff] 0
      %499 = vst [vmem:[#allocation2 + $0x58] sm:$0xff] 0
      %500 = vst [vmem:[#allocation2 + $0x60] sm:$0xff] 0
      %501 = vst [vmem:[#allocation2 + $0x68] sm:$0xff] 0
      %502 = vst [vmem:[#allocation2 + $0x70] sm:$0xff] 0
      %503 = vst [vmem:[#allocation2 + $0x78] sm:$0xff] 0
      %504 = vst [vmem:[#allocation2 + $0x80] sm:$0xff] 0
      %505 = vst [vmem:[#allocation2 + $0x88] sm:$0xff] 0
      %506 = vst [vmem:[#allocation2 + $0x90] sm:$0xff] 0
      %507 = vst [vmem:[#allocation2 + $0x98] sm:$0xff] 0
      %508 = vst [vmem:[#allocation2 + $0xa0] sm:$0xff] 0
      %509 = vst [vmem:[#allocation2 + $0xa8] sm:$0xff] 0
      %510 = vst [vmem:[#allocation2 + $0xb0] sm:$0xff] 0
      %511 = vst [vmem:[#allocation2 + $0xb8] sm:$0xff] 0
      %512 = vst [vmem:[#allocation2 + $0xc0] sm:$0xff] 0
      %513 = vst [vmem:[#allocation2 + $0xc8] sm:$0xff] 0
      %514 = vst [vmem:[#allocation2 + $0xd0] sm:$0xff] 0
      %515 = vst [vmem:[#allocation2 + $0xd8] sm:$0xff] 0
      %516 = vst [vmem:[#allocation2 + $0xe0] sm:$0xff] 0
      %517 = vst [vmem:[#allocation2 + $0xe8] sm:$0xff] 0
      %518 = vst [vmem:[#allocation2 + $0xf0] sm:$0xff] 0
      %519 = vst [vmem:[#allocation2 + $0xf8] sm:$0xff] 0
      %520 = vst [vmem:[#allocation2 + $0x100] sm:$0xff] 0
      %521 = vst [vmem:[#allocation2 + $0x108] sm:$0xff] 0
      %522 = vst [vmem:[#allocation2 + $0x110] sm:$0xff] 0
      %523 = vst [vmem:[#allocation2 + $0x118] sm:$0xff] 0
      %v540 = vrot.slane %v472, 4
      %v541 = vrot.slane %v473, 4
      %v542 = vrot.slane %v474, 4
      %v543 = vrot.slane %v475, 4
      %v544 = vrot.slane %v476, 4
      %v545 = vrot.slane %v477, 4
      %v546 = vrot.slane %v478, 4
      %v547 = vrot.slane %v479, 4
      %v548 = vrot.slane %v480, 4
      %v549 = vrot.slane %v481, 4
      %v550 = vrot.slane %v482, 4
      %v551 = vrot.slane %v483, 4
      %v552 = vrot.slane %v484, 4
      %v553 = vrot.slane %v485, 4
      %v554 = vrot.slane %v486, 4
      %v555 = vrot.slane %v487, 4
      %s572 = scalar_lea.vmem [#allocation2], 16
      %573 = vst [vmem:[%s572] sm:$0xf0] %v540
      %574 = vst [vmem:[%s572 + $0x8] sm:$0xf] %v540
      %575 = vst [vmem:[%s572 + $0x10] sm:$0xf0] %v541
      %576 = vst [vmem:[%s572 + $0x18] sm:$0xf] %v541
      %577 = vst [vmem:[%s572 + $0x20] sm:$0xf0] %v542
      %578 = vst [vmem:[%s572 + $0x28] sm:$0xf] %v542
      %579 = vst [vmem:[%s572 + $0x30] sm:$0xf0] %v543
      %580 = vst [vmem:[%s572 + $0x38] sm:$0xf] %v543
      %581 = vst [vmem:[%s572 + $0x40] sm:$0xf0] %v544
      %582 = vst [vmem:[%s572 + $0x48] sm:$0xf] %v544
      %583 = vst [vmem:[%s572 + $0x50] sm:$0xf0] %v545
      %584 = vst [vmem:[%s572 + $0x58] sm:$0xf] %v545
      %585 = vst [vmem:[%s572 + $0x60] sm:$0xf0] %v546
      %586 = vst [vmem:[%s572 + $0x68] sm:$0xf] %v546
      %587 = vst [vmem:[%s572 + $0x70] sm:$0xf0] %v547
      %588 = vst [vmem:[%s572 + $0x78] sm:$0xf] %v547
      %589 = vst [vmem:[%s572 + $0x80] sm:$0xf0] %v548
      %590 = vst [vmem:[%s572 + $0x88] sm:$0xf] %v548
      %591 = vst [vmem:[%s572 + $0x90] sm:$0xf0] %v549
      %592 = vst [vmem:[%s572 + $0x98] sm:$0xf] %v549
      %593 = vst [vmem:[%s572 + $0xa0] sm:$0xf0] %v550
      %594 = vst [vmem:[%s572 + $0xa8] sm:$0xf] %v550
      %595 = vst [vmem:[%s572 + $0xb0] sm:$0xf0] %v551
      %596 = vst [vmem:[%s572 + $0xb8] sm:$0xf] %v551
      %597 = vst [vmem:[%s572 + $0xc0] sm:$0xf0] %v552
      %598 = vst [vmem:[%s572 + $0xc8] sm:$0xf] %v552
      %599 = vst [vmem:[%s572 + $0xd0] sm:$0xf0] %v553
      %600 = vst [vmem:[%s572 + $0xd8] sm:$0xf] %v553
      %601 = vst [vmem:[%s572 + $0xe0] sm:$0xf0] %v554
      %602 = vst [vmem:[%s572 + $0xe8] sm:$0xf] %v554
      %603 = vst [vmem:[%s572 + $0xf0] sm:$0xf0] %v555
      %604 = vst [vmem:[%s572 + $0xf8] sm:$0xf] %v555
      %v605 = vld [vmem:[#allocation2] sm:$0xf8]
      %v606 = vld [vmem:[#allocation2 + $0x8] sm:$0xf]
      %v607 = vld [vmem:[#allocation2 + $0x10] sm:$0xf8]
      %v608 = vld [vmem:[#allocation2 + $0x18] sm:$0xf]
      %v609 = vld [vmem:[#allocation2 + $0x20] sm:$0xf8]
      %v610 = vld [vmem:[#allocation2 + $0x28] sm:$0xf]
      %v611 = vld [vmem:[#allocation2 + $0x30] sm:$0xf8]
      %v612 = vld [vmem:[#allocation2 + $0x38] sm:$0xf]
      %v613 = vld [vmem:[#allocation2 + $0x40] sm:$0xf8]
      %v614 = vld [vmem:[#allocation2 + $0x48] sm:$0xf]
      %v615 = vld [vmem:[#allocation2 + $0x50] sm:$0xf8]
      %v616 = vld [vmem:[#allocation2 + $0x58] sm:$0xf]
      %v617 = vld [vmem:[#allocation2 + $0x60] sm:$0xf8]
      %v618 = vld [vmem:[#allocation2 + $0x68] sm:$0xf]
      %v619 = vld [vmem:[#allocation2 + $0x70] sm:$0xf8]
      %v620 = vld [vmem:[#allocation2 + $0x78] sm:$0xf]
      %v621 = vld [vmem:[#allocation2 + $0x80] sm:$0xf8]
      %v622 = vld [vmem:[#allocation2 + $0x88] sm:$0xf]
      %v623 = vld [vmem:[#allocation2 + $0x90] sm:$0xf8]
      %v624 = vld [vmem:[#allocation2 + $0x98] sm:$0xf]
      %v625 = vld [vmem:[#allocation2 + $0xa0] sm:$0xf8]
      %v626 = vld [vmem:[#allocation2 + $0xa8] sm:$0xf]
      %v627 = vld [vmem:[#allocation2 + $0xb0] sm:$0xf8]
      %v628 = vld [vmem:[#allocation2 + $0xb8] sm:$0xf]
      %v629 = vld [vmem:[#allocation2 + $0xc0] sm:$0xf8]
      %v630 = vld [vmem:[#allocation2 + $0xc8] sm:$0xf]
      %v631 = vld [vmem:[#allocation2 + $0xd0] sm:$0xf8]
      %v632 = vld [vmem:[#allocation2 + $0xd8] sm:$0xf]
      %v633 = vld [vmem:[#allocation2 + $0xe0] sm:$0xf8]
      %v634 = vld [vmem:[#allocation2 + $0xe8] sm:$0xf]
      %v635 = vld [vmem:[#allocation2 + $0xf0] sm:$0xf8]
      %v636 = vld [vmem:[#allocation2 + $0xf8] sm:$0xf]
      %vm637 = vsmask.f32 4352
      %v639 = vshrl.u32 %v605, 16
      %v641 = vrot.slane %v639, 3
      %v642 = vshll.u32 %v605, 16
      %v644 = vrot.slane %v642, 4
      %v645 = vor.u32 %v641, %v644
      %v647 = vshrl.u32 %v606, 16
      %v649 = vrot.slane %v647, 3
      %v650 = vshll.u32 %v606, 16
      %v652 = vrot.slane %v650, 4
      %v653 = vor.u32 %v649, %v652
      %v654 = vsel %vm637, %v645, %v653
      %v656 = vshrl.u32 %v607, 16
      %v658 = vrot.slane %v656, 3
      %v659 = vshll.u32 %v607, 16
      %v661 = vrot.slane %v659, 4
      %v662 = vor.u32 %v658, %v661
      %v664 = vshrl.u32 %v608, 16
      %v666 = vrot.slane %v664, 3
      %v667 = vshll.u32 %v608, 16
      %v669 = vrot.slane %v667, 4
      %v670 = vor.u32 %v666, %v669
      %v671 = vsel %vm637, %v662, %v670
      %v673 = vshrl.u32 %v609, 16
      %v675 = vrot.slane %v673, 3
      %v676 = vshll.u32 %v609, 16
      %v678 = vrot.slane %v676, 4
      %v679 = vor.u32 %v675, %v678
      %v681 = vshrl.u32 %v610, 16
      %v683 = vrot.slane %v681, 3
      %v684 = vshll.u32 %v610, 16
      %v686 = vrot.slane %v684, 4
      %v687 = vor.u32 %v683, %v686
      %v688 = vsel %vm637, %v679, %v687
      %v690 = vshrl.u32 %v611, 16
      %v692 = vrot.slane %v690, 3
      %v693 = vshll.u32 %v611, 16
      %v695 = vrot.slane %v693, 4
      %v696 = vor.u32 %v692, %v695
      %v698 = vshrl.u32 %v612, 16
      %v700 = vrot.slane %v698, 3
      %v701 = vshll.u32 %v612, 16
      %v703 = vrot.slane %v701, 4
      %v704 = vor.u32 %v700, %v703
      %v705 = vsel %vm637, %v696, %v704
      %v707 = vshrl.u32 %v613, 16
      %v709 = vrot.slane %v707, 3
      %v710 = vshll.u32 %v613, 16
      %v712 = vrot.slane %v710, 4
      %v713 = vor.u32 %v709, %v712
      %v715 = vshrl.u32 %v614, 16
      %v717 = vrot.slane %v715, 3
      %v718 = vshll.u32 %v614, 16
      %v720 = vrot.slane %v718, 4
      %v721 = vor.u32 %v717, %v720
      %v722 = vsel %vm637, %v713, %v721
      %v724 = vshrl.u32 %v615, 16
      %v726 = vrot.slane %v724, 3
      %v727 = vshll.u32 %v615, 16
      %v729 = vrot.slane %v727, 4
      %v730 = vor.u32 %v726, %v729
      %v732 = vshrl.u32 %v616, 16
      %v734 = vrot.slane %v732, 3
      %v735 = vshll.u32 %v616, 16
      %v737 = vrot.slane %v735, 4
      %v738 = vor.u32 %v734, %v737
      %v739 = vsel %vm637, %v730, %v738
      %v741 = vshrl.u32 %v617, 16
      %v743 = vrot.slane %v741, 3
      %v744 = vshll.u32 %v617, 16
      %v746 = vrot.slane %v744, 4
      %v747 = vor.u32 %v743, %v746
      %v749 = vshrl.u32 %v618, 16
      %v751 = vrot.slane %v749, 3
      %v752 = vshll.u32 %v618, 16
      %v754 = vrot.slane %v752, 4
      %v755 = vor.u32 %v751, %v754
      %v756 = vsel %vm637, %v747, %v755
      %v758 = vshrl.u32 %v619, 16
      %v760 = vrot.slane %v758, 3
      %v761 = vshll.u32 %v619, 16
      %v763 = vrot.slane %v761, 4
      %v764 = vor.u32 %v760, %v763
      %v766 = vshrl.u32 %v620, 16
      %v768 = vrot.slane %v766, 3
      %v769 = vshll.u32 %v620, 16
      %v771 = vrot.slane %v769, 4
      %v772 = vor.u32 %v768, %v771
      %v773 = vsel %vm637, %v764, %v772
      %v775 = vshrl.u32 %v621, 16
      %v777 = vrot.slane %v775, 3
      %v778 = vshll.u32 %v621, 16
      %v780 = vrot.slane %v778, 4
      %v781 = vor.u32 %v777, %v780
      %v783 = vshrl.u32 %v622, 16
      %v785 = vrot.slane %v783, 3
      %v786 = vshll.u32 %v622, 16
      %v788 = vrot.slane %v786, 4
      %v789 = vor.u32 %v785, %v788
      %v790 = vsel %vm637, %v781, %v789
      %v792 = vshrl.u32 %v623, 16
      %v794 = vrot.slane %v792, 3
      %v795 = vshll.u32 %v623, 16
      %v797 = vrot.slane %v795, 4
      %v798 = vor.u32 %v794, %v797
      %v800 = vshrl.u32 %v624, 16
      %v802 = vrot.slane %v800, 3
      %v803 = vshll.u32 %v624, 16
      %v805 = vrot.slane %v803, 4
      %v806 = vor.u32 %v802, %v805
      %v807 = vsel %vm637, %v798, %v806
      %v809 = vshrl.u32 %v625, 16
      %v811 = vrot.slane %v809, 3
      %v812 = vshll.u32 %v625, 16
      %v814 = vrot.slane %v812, 4
      %v815 = vor.u32 %v811, %v814
      %v817 = vshrl.u32 %v626, 16
      %v819 = vrot.slane %v817, 3
      %v820 = vshll.u32 %v626, 16
      %v822 = vrot.slane %v820, 4
      %v823 = vor.u32 %v819, %v822
      %v824 = vsel %vm637, %v815, %v823
      %v826 = vshrl.u32 %v627, 16
      %v828 = vrot.slane %v826, 3
      %v829 = vshll.u32 %v627, 16
      %v831 = vrot.slane %v829, 4
      %v832 = vor.u32 %v828, %v831
      %v834 = vshrl.u32 %v628, 16
      %v836 = vrot.slane %v834, 3
      %v837 = vshll.u32 %v628, 16
      %v839 = vrot.slane %v837, 4
      %v840 = vor.u32 %v836, %v839
      %v841 = vsel %vm637, %v832, %v840
      %v843 = vshrl.u32 %v629, 16
      %v845 = vrot.slane %v843, 3
      %v846 = vshll.u32 %v629, 16
      %v848 = vrot.slane %v846, 4
      %v849 = vor.u32 %v845, %v848
      %v851 = vshrl.u32 %v630, 16
      %v853 = vrot.slane %v851, 3
      %v854 = vshll.u32 %v630, 16
      %v856 = vrot.slane %v854, 4
      %v857 = vor.u32 %v853, %v856
      %v858 = vsel %vm637, %v849, %v857
      %v860 = vshrl.u32 %v631, 16
      %v862 = vrot.slane %v860, 3
      %v863 = vshll.u32 %v631, 16
      %v865 = vrot.slane %v863, 4
      %v866 = vor.u32 %v862, %v865
      %v868 = vshrl.u32 %v632, 16
      %v870 = vrot.slane %v868, 3
      %v871 = vshll.u32 %v632, 16
      %v873 = vrot.slane %v871, 4
      %v874 = vor.u32 %v870, %v873
      %v875 = vsel %vm637, %v866, %v874
      %v877 = vshrl.u32 %v633, 16
      %v879 = vrot.slane %v877, 3
      %v880 = vshll.u32 %v633, 16
      %v882 = vrot.slane %v880, 4
      %v883 = vor.u32 %v879, %v882
      %v885 = vshrl.u32 %v634, 16
      %v887 = vrot.slane %v885, 3
      %v888 = vshll.u32 %v634, 16
      %v890 = vrot.slane %v888, 4
      %v891 = vor.u32 %v887, %v890
      %v892 = vsel %vm637, %v883, %v891
      %v894 = vshrl.u32 %v635, 16
      %v896 = vrot.slane %v894, 3
      %v897 = vshll.u32 %v635, 16
      %v899 = vrot.slane %v897, 4
      %v900 = vor.u32 %v896, %v899
      %v902 = vshrl.u32 %v636, 16
      %v904 = vrot.slane %v902, 3
      %v905 = vshll.u32 %v636, 16
      %v907 = vrot.slane %v905, 4
      %v908 = vor.u32 %v904, %v907
      %v909 = vsel %vm637, %v900, %v908
      %926 = vst [vmem:[#allocation3] sm:$0xff] %v654
      %927 = vst [vmem:[#allocation3 + $0x48] sm:$0xff] %v671
      %928 = vst [vmem:[#allocation3 + $0x90] sm:$0xff] %v688
      %929 = vst [vmem:[#allocation3 + $0xd8] sm:$0xff] %v705
      %930 = vst [vmem:[#allocation3 + $0x120] sm:$0xff] %v722
      %931 = vst [vmem:[#allocation3 + $0x168] sm:$0xff] %v739
      %932 = vst [vmem:[#allocation3 + $0x1b0] sm:$0xff] %v756
      %933 = vst [vmem:[#allocation3 + $0x1f8] sm:$0xff] %v773
      %934 = vst [vmem:[#allocation3 + $0x240] sm:$0xff] %v790
      %935 = vst [vmem:[#allocation3 + $0x288] sm:$0xff] %v807
      %936 = vst [vmem:[#allocation3 + $0x2d0] sm:$0xff] %v824
      %937 = vst [vmem:[#allocation3 + $0x318] sm:$0xff] %v841
      %938 = vst [vmem:[#allocation3 + $0x360] sm:$0xff] %v858
      %939 = vst [vmem:[#allocation3 + $0x3a8] sm:$0xff] %v875
      %940 = vst [vmem:[#allocation3 + $0x3f0] sm:$0xff] %v892
      %941 = vst [vmem:[#allocation3 + $0x438] sm:$0xff] %v909
      %v942 = vld [vmem:[#allocation2] sm:$0xf0]
      %v943 = vld [vmem:[#allocation2 + $0x8] sm:$0xf]
      %v944 = vld [vmem:[#allocation2 + $0x10] sm:$0xf0]
      %v945 = vld [vmem:[#allocation2 + $0x18] sm:$0xf]
      %v946 = vld [vmem:[#allocation2 + $0x20] sm:$0xf0]
      %v947 = vld [vmem:[#allocation2 + $0x28] sm:$0xf]
      %v948 = vld [vmem:[#allocation2 + $0x30] sm:$0xf0]
      %v949 = vld [vmem:[#allocation2 + $0x38] sm:$0xf]
      %v950 = vld [vmem:[#allocation2 + $0x40] sm:$0xf0]
      %v951 = vld [vmem:[#allocation2 + $0x48] sm:$0xf]
      %v952 = vld [vmem:[#allocation2 + $0x50] sm:$0xf0]
      %v953 = vld [vmem:[#allocation2 + $0x58] sm:$0xf]
      %v954 = vld [vmem:[#allocation2 + $0x60] sm:$0xf0]
      %v955 = vld [vmem:[#allocation2 + $0x68] sm:$0xf]
      %v956 = vld [vmem:[#allocation2 + $0x70] sm:$0xf0]
      %v957 = vld [vmem:[#allocation2 + $0x78] sm:$0xf]
      %v958 = vld [vmem:[#allocation2 + $0x80] sm:$0xf0]
      %v959 = vld [vmem:[#allocation2 + $0x88] sm:$0xf]
      %v960 = vld [vmem:[#allocation2 + $0x90] sm:$0xf0]
      %v961 = vld [vmem:[#allocation2 + $0x98] sm:$0xf]
      %v962 = vld [vmem:[#allocation2 + $0xa0] sm:$0xf0]
      %v963 = vld [vmem:[#allocation2 + $0xa8] sm:$0xf]
      %v964 = vld [vmem:[#allocation2 + $0xb0] sm:$0xf0]
      %v965 = vld [vmem:[#allocation2 + $0xb8] sm:$0xf]
      %v966 = vld [vmem:[#allocation2 + $0xc0] sm:$0xf0]
      %v967 = vld [vmem:[#allocation2 + $0xc8] sm:$0xf]
      %v968 = vld [vmem:[#allocation2 + $0xd0] sm:$0xf0]
      %v969 = vld [vmem:[#allocation2 + $0xd8] sm:$0xf]
      %v970 = vld [vmem:[#allocation2 + $0xe0] sm:$0xf0]
      %v971 = vld [vmem:[#allocation2 + $0xe8] sm:$0xf]
      %v972 = vld [vmem:[#allocation2 + $0xf0] sm:$0xf0]
      %v973 = vld [vmem:[#allocation2 + $0xf8] sm:$0xf]
      %vm1006 = vcmask 1043456
      %v1007 = vrot.slane %v942, 4
      %v1008 = vrot.slane %v943, 4
      %v1009 = vsel %vm1006, %v1007, %v1008
      %v1010 = vrot.slane %v944, 4
      %v1011 = vrot.slane %v945, 4
      %v1012 = vsel %vm1006, %v1010, %v1011
      %v1013 = vrot.slane %v946, 4
      %v1014 = vrot.slane %v947, 4
      %v1015 = vsel %vm1006, %v1013, %v1014
      %v1016 = vrot.slane %v948, 4
      %v1017 = vrot.slane %v949, 4
      %v1018 = vsel %vm1006, %v1016, %v1017
      %v1019 = vrot.slane %v950, 4
      %v1020 = vrot.slane %v951, 4
      %v1021 = vsel %vm1006, %v1019, %v1020
      %v1022 = vrot.slane %v952, 4
      %v1023 = vrot.slane %v953, 4
      %v1024 = vsel %vm1006, %v1022, %v1023
      %v1025 = vrot.slane %v954, 4
      %v1026 = vrot.slane %v955, 4
      %v1027 = vsel %vm1006, %v1025, %v1026
      %v1028 = vrot.slane %v956, 4
      %v1029 = vrot.slane %v957, 4
      %v1030 = vsel %vm1006, %v1028, %v1029
      %v1031 = vrot.slane %v958, 4
      %v1032 = vrot.slane %v959, 4
      %v1033 = vsel %vm1006, %v1031, %v1032
      %v1034 = vrot.slane %v960, 4
      %v1035 = vrot.slane %v961, 4
      %v1036 = vsel %vm1006, %v1034, %v1035
      %v1037 = vrot.slane %v962, 4
      %v1038 = vrot.slane %v963, 4
      %v1039 = vsel %vm1006, %v1037, %v1038
      %v1040 = vrot.slane %v964, 4
      %v1041 = vrot.slane %v965, 4
      %v1042 = vsel %vm1006, %v1040, %v1041
      %v1043 = vrot.slane %v966, 4
      %v1044 = vrot.slane %v967, 4
      %v1045 = vsel %vm1006, %v1043, %v1044
      %v1046 = vrot.slane %v968, 4
      %v1047 = vrot.slane %v969, 4
      %v1048 = vsel %vm1006, %v1046, %v1047
      %v1049 = vrot.slane %v970, 4
      %v1050 = vrot.slane %v971, 4
      %v1051 = vsel %vm1006, %v1049, %v1050
      %v1052 = vrot.slane %v972, 4
      %v1053 = vrot.slane %v973, 4
      %v1054 = vsel %vm1006, %v1052, %v1053
      %1071 = vst [vmem:[#allocation3 + $0x8] sm:$0xff] %v1009
      %1072 = vst [vmem:[#allocation3 + $0x50] sm:$0xff] %v1012
      %1073 = vst [vmem:[#allocation3 + $0x98] sm:$0xff] %v1015
      %1074 = vst [vmem:[#allocation3 + $0xe0] sm:$0xff] %v1018
      %1075 = vst [vmem:[#allocation3 + $0x128] sm:$0xff] %v1021
      %1076 = vst [vmem:[#allocation3 + $0x170] sm:$0xff] %v1024
      %1077 = vst [vmem:[#allocation3 + $0x1b8] sm:$0xff] %v1027
      %1078 = vst [vmem:[#allocation3 + $0x200] sm:$0xff] %v1030
      %1079 = vst [vmem:[#allocation3 + $0x248] sm:$0xff] %v1033
      %1080 = vst [vmem:[#allocation3 + $0x290] sm:$0xff] %v1036
      %1081 = vst [vmem:[#allocation3 + $0x2d8] sm:$0xff] %v1039
      %1082 = vst [vmem:[#allocation3 + $0x320] sm:$0xff] %v1042
      %1083 = vst [vmem:[#allocation3 + $0x368] sm:$0xff] %v1045
      %1084 = vst [vmem:[#allocation3 + $0x3b0] sm:$0xff] %v1048
      %1085 = vst [vmem:[#allocation3 + $0x3f8] sm:$0xff] %v1051
      %1086 = vst [vmem:[#allocation3 + $0x440] sm:$0xff] %v1054
      %v1087 = vld [vmem:[#allocation2] sm:$0xf0]
      %v1088 = vld [vmem:[#allocation2 + $0x8] sm:$0x1f]
      %v1089 = vld [vmem:[#allocation2 + $0x10] sm:$0xf0]
      %v1090 = vld [vmem:[#allocation2 + $0x18] sm:$0x1f]
      %v1091 = vld [vmem:[#allocation2 + $0x20] sm:$0xf0]
      %v1092 = vld [vmem:[#allocation2 + $0x28] sm:$0x1f]
      %v1093 = vld [vmem:[#allocation2 + $0x30] sm:$0xf0]
      %v1094 = vld [vmem:[#allocation2 + $0x38] sm:$0x1f]
      %v1095 = vld [vmem:[#allocation2 + $0x40] sm:$0xf0]
      %v1096 = vld [vmem:[#allocation2 + $0x48] sm:$0x1f]
      %v1097 = vld [vmem:[#allocation2 + $0x50] sm:$0xf0]
      %v1098 = vld [vmem:[#allocation2 + $0x58] sm:$0x1f]
      %v1099 = vld [vmem:[#allocation2 + $0x60] sm:$0xf0]
      %v1100 = vld [vmem:[#allocation2 + $0x68] sm:$0x1f]
      %v1101 = vld [vmem:[#allocation2 + $0x70] sm:$0xf0]
      %v1102 = vld [vmem:[#allocation2 + $0x78] sm:$0x1f]
      %v1103 = vld [vmem:[#allocation2 + $0x80] sm:$0xf0]
      %v1104 = vld [vmem:[#allocation2 + $0x88] sm:$0x1f]
      %v1105 = vld [vmem:[#allocation2 + $0x90] sm:$0xf0]
      %v1106 = vld [vmem:[#allocation2 + $0x98] sm:$0x1f]
      %v1107 = vld [vmem:[#allocation2 + $0xa0] sm:$0xf0]
      %v1108 = vld [vmem:[#allocation2 + $0xa8] sm:$0x1f]
      %v1109 = vld [vmem:[#allocation2 + $0xb0] sm:$0xf0]
      %v1110 = vld [vmem:[#allocation2 + $0xb8] sm:$0x1f]
      %v1111 = vld [vmem:[#allocation2 + $0xc0] sm:$0xf0]
      %v1112 = vld [vmem:[#allocation2 + $0xc8] sm:$0x1f]
      %v1113 = vld [vmem:[#allocation2 + $0xd0] sm:$0xf0]
      %v1114 = vld [vmem:[#allocation2 + $0xd8] sm:$0x1f]
      %v1115 = vld [vmem:[#allocation2 + $0xe0] sm:$0xf0]
      %v1116 = vld [vmem:[#allocation2 + $0xe8] sm:$0x1f]
      %v1117 = vld [vmem:[#allocation2 + $0xf0] sm:$0xf0]
      %v1118 = vld [vmem:[#allocation2 + $0xf8] sm:$0x1f]
      %vm1119 = vsmask.f32 3328
      %v1121 = vshrl.u32 %v1087, 16
      %v1123 = vrot.slane %v1121, 4
      %v1124 = vshll.u32 %v1087, 16
      %v1126 = vrot.slane %v1124, 5
      %v1127 = vor.u32 %v1123, %v1126
      %v1129 = vshrl.u32 %v1088, 16
      %v1131 = vrot.slane %v1129, 4
      %v1132 = vshll.u32 %v1088, 16
      %v1134 = vrot.slane %v1132, 5
      %v1135 = vor.u32 %v1131, %v1134
      %v1136 = vsel %vm1119, %v1127, %v1135
      %v1138 = vshrl.u32 %v1089, 16
      %v1140 = vrot.slane %v1138, 4
      %v1141 = vshll.u32 %v1089, 16
      %v1143 = vrot.slane %v1141, 5
      %v1144 = vor.u32 %v1140, %v1143
      %v1146 = vshrl.u32 %v1090, 16
      %v1148 = vrot.slane %v1146, 4
      %v1149 = vshll.u32 %v1090, 16
      %v1151 = vrot.slane %v1149, 5
      %v1152 = vor.u32 %v1148, %v1151
      %v1153 = vsel %vm1119, %v1144, %v1152
      %v1155 = vshrl.u32 %v1091, 16
      %v1157 = vrot.slane %v1155, 4
      %v1158 = vshll.u32 %v1091, 16
      %v1160 = vrot.slane %v1158, 5
      %v1161 = vor.u32 %v1157, %v1160
      %v1163 = vshrl.u32 %v1092, 16
      %v1165 = vrot.slane %v1163, 4
      %v1166 = vshll.u32 %v1092, 16
      %v1168 = vrot.slane %v1166, 5
      %v1169 = vor.u32 %v1165, %v1168
      %v1170 = vsel %vm1119, %v1161, %v1169
      %v1172 = vshrl.u32 %v1093, 16
      %v1174 = vrot.slane %v1172, 4
      %v1175 = vshll.u32 %v1093, 16
      %v1177 = vrot.slane %v1175, 5
      %v1178 = vor.u32 %v1174, %v1177
      %v1180 = vshrl.u32 %v1094, 16
      %v1182 = vrot.slane %v1180, 4
      %v1183 = vshll.u32 %v1094, 16
      %v1185 = vrot.slane %v1183, 5
      %v1186 = vor.u32 %v1182, %v1185
      %v1187 = vsel %vm1119, %v1178, %v1186
      %v1189 = vshrl.u32 %v1095, 16
      %v1191 = vrot.slane %v1189, 4
      %v1192 = vshll.u32 %v1095, 16
      %v1194 = vrot.slane %v1192, 5
      %v1195 = vor.u32 %v1191, %v1194
      %v1197 = vshrl.u32 %v1096, 16
      %v1199 = vrot.slane %v1197, 4
      %v1200 = vshll.u32 %v1096, 16
      %v1202 = vrot.slane %v1200, 5
      %v1203 = vor.u32 %v1199, %v1202
      %v1204 = vsel %vm1119, %v1195, %v1203
      %v1206 = vshrl.u32 %v1097, 16
      %v1208 = vrot.slane %v1206, 4
      %v1209 = vshll.u32 %v1097, 16
      %v1211 = vrot.slane %v1209, 5
      %v1212 = vor.u32 %v1208, %v1211
      %v1214 = vshrl.u32 %v1098, 16
      %v1216 = vrot.slane %v1214, 4
      %v1217 = vshll.u32 %v1098, 16
      %v1219 = vrot.slane %v1217, 5
      %v1220 = vor.u32 %v1216, %v1219
      %v1221 = vsel %vm1119, %v1212, %v1220
      %v1223 = vshrl.u32 %v1099, 16
      %v1225 = vrot.slane %v1223, 4
      %v1226 = vshll.u32 %v1099, 16
      %v1228 = vrot.slane %v1226, 5
      %v1229 = vor.u32 %v1225, %v1228
      %v1231 = vshrl.u32 %v1100, 16
      %v1233 = vrot.slane %v1231, 4
      %v1234 = vshll.u32 %v1100, 16
      %v1236 = vrot.slane %v1234, 5
      %v1237 = vor.u32 %v1233, %v1236
      %v1238 = vsel %vm1119, %v1229, %v1237
      %v1240 = vshrl.u32 %v1101, 16
      %v1242 = vrot.slane %v1240, 4
      %v1243 = vshll.u32 %v1101, 16
      %v1245 = vrot.slane %v1243, 5
      %v1246 = vor.u32 %v1242, %v1245
      %v1248 = vshrl.u32 %v1102, 16
      %v1250 = vrot.slane %v1248, 4
      %v1251 = vshll.u32 %v1102, 16
      %v1253 = vrot.slane %v1251, 5
      %v1254 = vor.u32 %v1250, %v1253
      %v1255 = vsel %vm1119, %v1246, %v1254
      %v1257 = vshrl.u32 %v1103, 16
      %v1259 = vrot.slane %v1257, 4
      %v1260 = vshll.u32 %v1103, 16
      %v1262 = vrot.slane %v1260, 5
      %v1263 = vor.u32 %v1259, %v1262
      %v1265 = vshrl.u32 %v1104, 16
      %v1267 = vrot.slane %v1265, 4
      %v1268 = vshll.u32 %v1104, 16
      %v1270 = vrot.slane %v1268, 5
      %v1271 = vor.u32 %v1267, %v1270
      %v1272 = vsel %vm1119, %v1263, %v1271
      %v1274 = vshrl.u32 %v1105, 16
      %v1276 = vrot.slane %v1274, 4
      %v1277 = vshll.u32 %v1105, 16
      %v1279 = vrot.slane %v1277, 5
      %v1280 = vor.u32 %v1276, %v1279
      %v1282 = vshrl.u32 %v1106, 16
      %v1284 = vrot.slane %v1282, 4
      %v1285 = vshll.u32 %v1106, 16
      %v1287 = vrot.slane %v1285, 5
      %v1288 = vor.u32 %v1284, %v1287
      %v1289 = vsel %vm1119, %v1280, %v1288
      %v1291 = vshrl.u32 %v1107, 16
      %v1293 = vrot.slane %v1291, 4
      %v1294 = vshll.u32 %v1107, 16
      %v1296 = vrot.slane %v1294, 5
      %v1297 = vor.u32 %v1293, %v1296
      %v1299 = vshrl.u32 %v1108, 16
      %v1301 = vrot.slane %v1299, 4
      %v1302 = vshll.u32 %v1108, 16
      %v1304 = vrot.slane %v1302, 5
      %v1305 = vor.u32 %v1301, %v1304
      %v1306 = vsel %vm1119, %v1297, %v1305
      %v1308 = vshrl.u32 %v1109, 16
      %v1310 = vrot.slane %v1308, 4
      %v1311 = vshll.u32 %v1109, 16
      %v1313 = vrot.slane %v1311, 5
      %v1314 = vor.u32 %v1310, %v1313
      %v1316 = vshrl.u32 %v1110, 16
      %v1318 = vrot.slane %v1316, 4
      %v1319 = vshll.u32 %v1110, 16
      %v1321 = vrot.slane %v1319, 5
      %v1322 = vor.u32 %v1318, %v1321
      %v1323 = vsel %vm1119, %v1314, %v1322
      %v1325 = vshrl.u32 %v1111, 16
      %v1327 = vrot.slane %v1325, 4
      %v1328 = vshll.u32 %v1111, 16
      %v1330 = vrot.slane %v1328, 5
      %v1331 = vor.u32 %v1327, %v1330
      %v1333 = vshrl.u32 %v1112, 16
      %v1335 = vrot.slane %v1333, 4
      %v1336 = vshll.u32 %v1112, 16
      %v1338 = vrot.slane %v1336, 5
      %v1339 = vor.u32 %v1335, %v1338
      %v1340 = vsel %vm1119, %v1331, %v1339
      %v1342 = vshrl.u32 %v1113, 16
      %v1344 = vrot.slane %v1342, 4
      %v1345 = vshll.u32 %v1113, 16
      %v1347 = vrot.slane %v1345, 5
      %v1348 = vor.u32 %v1344, %v1347
      %v1350 = vshrl.u32 %v1114, 16
      %v1352 = vrot.slane %v1350, 4
      %v1353 = vshll.u32 %v1114, 16
      %v1355 = vrot.slane %v1353, 5
      %v1356 = vor.u32 %v1352, %v1355
      %v1357 = vsel %vm1119, %v1348, %v1356
      %v1359 = vshrl.u32 %v1115, 16
      %v1361 = vrot.slane %v1359, 4
      %v1362 = vshll.u32 %v1115, 16
      %v1364 = vrot.slane %v1362, 5
      %v1365 = vor.u32 %v1361, %v1364
      %v1367 = vshrl.u32 %v1116, 16
      %v1369 = vrot.slane %v1367, 4
      %v1370 = vshll.u32 %v1116, 16
      %v1372 = vrot.slane %v1370, 5
      %v1373 = vor.u32 %v1369, %v1372
      %v1374 = vsel %vm1119, %v1365, %v1373
      %v1376 = vshrl.u32 %v1117, 16
      %v1378 = vrot.slane %v1376, 4
      %v1379 = vshll.u32 %v1117, 16
      %v1381 = vrot.slane %v1379, 5
      %v1382 = vor.u32 %v1378, %v1381
      %v1384 = vshrl.u32 %v1118, 16
      %v1386 = vrot.slane %v1384, 4
      %v1387 = vshll.u32 %v1118, 16
      %v1389 = vrot.slane %v1387, 5
      %v1390 = vor.u32 %v1386, %v1389
      %v1391 = vsel %vm1119, %v1382, %v1390
      %1408 = vst [vmem:[#allocation3 + $0x10] sm:$0xff] %v1136
      %1409 = vst [vmem:[#allocation3 + $0x58] sm:$0xff] %v1153
      %1410 = vst [vmem:[#allocation3 + $0xa0] sm:$0xff] %v1170
      %1411 = vst [vmem:[#allocation3 + $0xe8] sm:$0xff] %v1187
      %1412 = vst [vmem:[#allocation3 + $0x130] sm:$0xff] %v1204
      %1413 = vst [vmem:[#allocation3 + $0x178] sm:$0xff] %v1221
      %1414 = vst [vmem:[#allocation3 + $0x1c0] sm:$0xff] %v1238
      %1415 = vst [vmem:[#allocation3 + $0x208] sm:$0xff] %v1255
      %1416 = vst [vmem:[#allocation3 + $0x250] sm:$0xff] %v1272
      %1417 = vst [vmem:[#allocation3 + $0x298] sm:$0xff] %v1289
      %1418 = vst [vmem:[#allocation3 + $0x2e0] sm:$0xff] %v1306
      %1419 = vst [vmem:[#allocation3 + $0x328] sm:$0xff] %v1323
      %1420 = vst [vmem:[#allocation3 + $0x370] sm:$0xff] %v1340
      %1421 = vst [vmem:[#allocation3 + $0x3b8] sm:$0xff] %v1357
      %1422 = vst [vmem:[#allocation3 + $0x400] sm:$0xff] %v1374
      %1423 = vst [vmem:[#allocation3 + $0x448] sm:$0xff] %v1391
      %v1424 = vld [vmem:[%s572] sm:$0xf8]
      %v1425 = vld [vmem:[%s572 + $0x8] sm:$0xf]
      %v1426 = vld [vmem:[%s572 + $0x10] sm:$0xf8]
      %v1427 = vld [vmem:[%s572 + $0x18] sm:$0xf]
      %v1428 = vld [vmem:[%s572 + $0x20] sm:$0xf8]
      %v1429 = vld [vmem:[%s572 + $0x28] sm:$0xf]
      %v1430 = vld [vmem:[%s572 + $0x30] sm:$0xf8]
      %v1431 = vld [vmem:[%s572 + $0x38] sm:$0xf]
      %v1432 = vld [vmem:[%s572 + $0x40] sm:$0xf8]
      %v1433 = vld [vmem:[%s572 + $0x48] sm:$0xf]
      %v1434 = vld [vmem:[%s572 + $0x50] sm:$0xf8]
      %v1435 = vld [vmem:[%s572 + $0x58] sm:$0xf]
      %v1436 = vld [vmem:[%s572 + $0x60] sm:$0xf8]
      %v1437 = vld [vmem:[%s572 + $0x68] sm:$0xf]
      %v1438 = vld [vmem:[%s572 + $0x70] sm:$0xf8]
      %v1439 = vld [vmem:[%s572 + $0x78] sm:$0xf]
      %v1440 = vld [vmem:[%s572 + $0x80] sm:$0xf8]
      %v1441 = vld [vmem:[%s572 + $0x88] sm:$0xf]
      %v1442 = vld [vmem:[%s572 + $0x90] sm:$0xf8]
      %v1443 = vld [vmem:[%s572 + $0x98] sm:$0xf]
      %v1444 = vld [vmem:[%s572 + $0xa0] sm:$0xf8]
      %v1445 = vld [vmem:[%s572 + $0xa8] sm:$0xf]
      %v1446 = vld [vmem:[%s572 + $0xb0] sm:$0xf8]
      %v1447 = vld [vmem:[%s572 + $0xb8] sm:$0xf]
      %v1448 = vld [vmem:[%s572 + $0xc0] sm:$0xf8]
      %v1449 = vld [vmem:[%s572 + $0xc8] sm:$0xf]
      %v1450 = vld [vmem:[%s572 + $0xd0] sm:$0xf8]
      %v1451 = vld [vmem:[%s572 + $0xd8] sm:$0xf]
      %v1452 = vld [vmem:[%s572 + $0xe0] sm:$0xf8]
      %v1453 = vld [vmem:[%s572 + $0xe8] sm:$0xf]
      %v1454 = vld [vmem:[%s572 + $0xf0] sm:$0xf8]
      %v1455 = vld [vmem:[%s572 + $0xf8] sm:$0xf]
      %v1457 = vshrl.u32 %v1424, 16
      %v1459 = vrot.slane %v1457, 3
      %v1460 = vshll.u32 %v1424, 16
      %v1462 = vrot.slane %v1460, 4
      %v1463 = vor.u32 %v1459, %v1462
      %v1465 = vshrl.u32 %v1425, 16
      %v1467 = vrot.slane %v1465, 3
      %v1468 = vshll.u32 %v1425, 16
      %v1470 = vrot.slane %v1468, 4
      %v1471 = vor.u32 %v1467, %v1470
      %v1472 = vsel %vm637, %v1463, %v1471
      %v1474 = vshrl.u32 %v1426, 16
      %v1476 = vrot.slane %v1474, 3
      %v1477 = vshll.u32 %v1426, 16
      %v1479 = vrot.slane %v1477, 4
      %v1480 = vor.u32 %v1476, %v1479
      %v1482 = vshrl.u32 %v1427, 16
      %v1484 = vrot.slane %v1482, 3
      %v1485 = vshll.u32 %v1427, 16
      %v1487 = vrot.slane %v1485, 4
      %v1488 = vor.u32 %v1484, %v1487
      %v1489 = vsel %vm637, %v1480, %v1488
      %v1491 = vshrl.u32 %v1428, 16
      %v1493 = vrot.slane %v1491, 3
      %v1494 = vshll.u32 %v1428, 16
      %v1496 = vrot.slane %v1494, 4
      %v1497 = vor.u32 %v1493, %v1496
      %v1499 = vshrl.u32 %v1429, 16
      %v1501 = vrot.slane %v1499, 3
      %v1502 = vshll.u32 %v1429, 16
      %v1504 = vrot.slane %v1502, 4
      %v1505 = vor.u32 %v1501, %v1504
      %v1506 = vsel %vm637, %v1497, %v1505
      %v1508 = vshrl.u32 %v1430, 16
      %v1510 = vrot.slane %v1508, 3
      %v1511 = vshll.u32 %v1430, 16
      %v1513 = vrot.slane %v1511, 4
      %v1514 = vor.u32 %v1510, %v1513
      %v1516 = vshrl.u32 %v1431, 16
      %v1518 = vrot.slane %v1516, 3
      %v1519 = vshll.u32 %v1431, 16
      %v1521 = vrot.slane %v1519, 4
      %v1522 = vor.u32 %v1518, %v1521
      %v1523 = vsel %vm637, %v1514, %v1522
      %v1525 = vshrl.u32 %v1432, 16
      %v1527 = vrot.slane %v1525, 3
      %v1528 = vshll.u32 %v1432, 16
      %v1530 = vrot.slane %v1528, 4
      %v1531 = vor.u32 %v1527, %v1530
      %v1533 = vshrl.u32 %v1433, 16
      %v1535 = vrot.slane %v1533, 3
      %v1536 = vshll.u32 %v1433, 16
      %v1538 = vrot.slane %v1536, 4
      %v1539 = vor.u32 %v1535, %v1538
      %v1540 = vsel %vm637, %v1531, %v1539
      %v1542 = vshrl.u32 %v1434, 16
      %v1544 = vrot.slane %v1542, 3
      %v1545 = vshll.u32 %v1434, 16
      %v1547 = vrot.slane %v1545, 4
      %v1548 = vor.u32 %v1544, %v1547
      %v1550 = vshrl.u32 %v1435, 16
      %v1552 = vrot.slane %v1550, 3
      %v1553 = vshll.u32 %v1435, 16
      %v1555 = vrot.slane %v1553, 4
      %v1556 = vor.u32 %v1552, %v1555
      %v1557 = vsel %vm637, %v1548, %v1556
      %v1559 = vshrl.u32 %v1436, 16
      %v1561 = vrot.slane %v1559, 3
      %v1562 = vshll.u32 %v1436, 16
      %v1564 = vrot.slane %v1562, 4
      %v1565 = vor.u32 %v1561, %v1564
      %v1567 = vshrl.u32 %v1437, 16
      %v1569 = vrot.slane %v1567, 3
      %v1570 = vshll.u32 %v1437, 16
      %v1572 = vrot.slane %v1570, 4
      %v1573 = vor.u32 %v1569, %v1572
      %v1574 = vsel %vm637, %v1565, %v1573
      %v1576 = vshrl.u32 %v1438, 16
      %v1578 = vrot.slane %v1576, 3
      %v1579 = vshll.u32 %v1438, 16
      %v1581 = vrot.slane %v1579, 4
      %v1582 = vor.u32 %v1578, %v1581
      %v1584 = vshrl.u32 %v1439, 16
      %v1586 = vrot.slane %v1584, 3
      %v1587 = vshll.u32 %v1439, 16
      %v1589 = vrot.slane %v1587, 4
      %v1590 = vor.u32 %v1586, %v1589
      %v1591 = vsel %vm637, %v1582, %v1590
      %v1593 = vshrl.u32 %v1440, 16
      %v1595 = vrot.slane %v1593, 3
      %v1596 = vshll.u32 %v1440, 16
      %v1598 = vrot.slane %v1596, 4
      %v1599 = vor.u32 %v1595, %v1598
      %v1601 = vshrl.u32 %v1441, 16
      %v1603 = vrot.slane %v1601, 3
      %v1604 = vshll.u32 %v1441, 16
      %v1606 = vrot.slane %v1604, 4
      %v1607 = vor.u32 %v1603, %v1606
      %v1608 = vsel %vm637, %v1599, %v1607
      %v1610 = vshrl.u32 %v1442, 16
      %v1612 = vrot.slane %v1610, 3
      %v1613 = vshll.u32 %v1442, 16
      %v1615 = vrot.slane %v1613, 4
      %v1616 = vor.u32 %v1612, %v1615
      %v1618 = vshrl.u32 %v1443, 16
      %v1620 = vrot.slane %v1618, 3
      %v1621 = vshll.u32 %v1443, 16
      %v1623 = vrot.slane %v1621, 4
      %v1624 = vor.u32 %v1620, %v1623
      %v1625 = vsel %vm637, %v1616, %v1624
      %v1627 = vshrl.u32 %v1444, 16
      %v1629 = vrot.slane %v1627, 3
      %v1630 = vshll.u32 %v1444, 16
      %v1632 = vrot.slane %v1630, 4
      %v1633 = vor.u32 %v1629, %v1632
      %v1635 = vshrl.u32 %v1445, 16
      %v1637 = vrot.slane %v1635, 3
      %v1638 = vshll.u32 %v1445, 16
      %v1640 = vrot.slane %v1638, 4
      %v1641 = vor.u32 %v1637, %v1640
      %v1642 = vsel %vm637, %v1633, %v1641
      %v1644 = vshrl.u32 %v1446, 16
      %v1646 = vrot.slane %v1644, 3
      %v1647 = vshll.u32 %v1446, 16
      %v1649 = vrot.slane %v1647, 4
      %v1650 = vor.u32 %v1646, %v1649
      %v1652 = vshrl.u32 %v1447, 16
      %v1654 = vrot.slane %v1652, 3
      %v1655 = vshll.u32 %v1447, 16
      %v1657 = vrot.slane %v1655, 4
      %v1658 = vor.u32 %v1654, %v1657
      %v1659 = vsel %vm637, %v1650, %v1658
      %v1661 = vshrl.u32 %v1448, 16
      %v1663 = vrot.slane %v1661, 3
      %v1664 = vshll.u32 %v1448, 16
      %v1666 = vrot.slane %v1664, 4
      %v1667 = vor.u32 %v1663, %v1666
      %v1669 = vshrl.u32 %v1449, 16
      %v1671 = vrot.slane %v1669, 3
      %v1672 = vshll.u32 %v1449, 16
      %v1674 = vrot.slane %v1672, 4
      %v1675 = vor.u32 %v1671, %v1674
      %v1676 = vsel %vm637, %v1667, %v1675
      %v1678 = vshrl.u32 %v1450, 16
      %v1680 = vrot.slane %v1678, 3
      %v1681 = vshll.u32 %v1450, 16
      %v1683 = vrot.slane %v1681, 4
      %v1684 = vor.u32 %v1680, %v1683
      %v1686 = vshrl.u32 %v1451, 16
      %v1688 = vrot.slane %v1686, 3
      %v1689 = vshll.u32 %v1451, 16
      %v1691 = vrot.slane %v1689, 4
      %v1692 = vor.u32 %v1688, %v1691
      %v1693 = vsel %vm637, %v1684, %v1692
      %v1695 = vshrl.u32 %v1452, 16
      %v1697 = vrot.slane %v1695, 3
      %v1698 = vshll.u32 %v1452, 16
      %v1700 = vrot.slane %v1698, 4
      %v1701 = vor.u32 %v1697, %v1700
      %v1703 = vshrl.u32 %v1453, 16
      %v1705 = vrot.slane %v1703, 3
      %v1706 = vshll.u32 %v1453, 16
      %v1708 = vrot.slane %v1706, 4
      %v1709 = vor.u32 %v1705, %v1708
      %v1710 = vsel %vm637, %v1701, %v1709
      %v1712 = vshrl.u32 %v1454, 16
      %v1714 = vrot.slane %v1712, 3
      %v1715 = vshll.u32 %v1454, 16
      %v1717 = vrot.slane %v1715, 4
      %v1718 = vor.u32 %v1714, %v1717
      %v1720 = vshrl.u32 %v1455, 16
      %v1722 = vrot.slane %v1720, 3
      %v1723 = vshll.u32 %v1455, 16
      %v1725 = vrot.slane %v1723, 4
      %v1726 = vor.u32 %v1722, %v1725
      %v1727 = vsel %vm637, %v1718, %v1726
      %1744 = vst [vmem:[#allocation3 + $0x18] sm:$0xff] %v1472
      %1745 = vst [vmem:[#allocation3 + $0x60] sm:$0xff] %v1489
      %1746 = vst [vmem:[#allocation3 + $0xa8] sm:$0xff] %v1506
      %1747 = vst [vmem:[#allocation3 + $0xf0] sm:$0xff] %v1523
      %1748 = vst [vmem:[#allocation3 + $0x138] sm:$0xff] %v1540
      %1749 = vst [vmem:[#allocation3 + $0x180] sm:$0xff] %v1557
      %1750 = vst [vmem:[#allocation3 + $0x1c8] sm:$0xff] %v1574
      %1751 = vst [vmem:[#allocation3 + $0x210] sm:$0xff] %v1591
      %1752 = vst [vmem:[#allocation3 + $0x258] sm:$0xff] %v1608
      %1753 = vst [vmem:[#allocation3 + $0x2a0] sm:$0xff] %v1625
      %1754 = vst [vmem:[#allocation3 + $0x2e8] sm:$0xff] %v1642
      %1755 = vst [vmem:[#allocation3 + $0x330] sm:$0xff] %v1659
      %1756 = vst [vmem:[#allocation3 + $0x378] sm:$0xff] %v1676
      %1757 = vst [vmem:[#allocation3 + $0x3c0] sm:$0xff] %v1693
      %1758 = vst [vmem:[#allocation3 + $0x408] sm:$0xff] %v1710
      %1759 = vst [vmem:[#allocation3 + $0x450] sm:$0xff] %v1727
      %v1760 = vld [vmem:[%s572] sm:$0xf0]
      %v1761 = vld [vmem:[%s572 + $0x8] sm:$0xf]
      %v1762 = vld [vmem:[%s572 + $0x10] sm:$0xf0]
      %v1763 = vld [vmem:[%s572 + $0x18] sm:$0xf]
      %v1764 = vld [vmem:[%s572 + $0x20] sm:$0xf0]
      %v1765 = vld [vmem:[%s572 + $0x28] sm:$0xf]
      %v1766 = vld [vmem:[%s572 + $0x30] sm:$0xf0]
      %v1767 = vld [vmem:[%s572 + $0x38] sm:$0xf]
      %v1768 = vld [vmem:[%s572 + $0x40] sm:$0xf0]
      %v1769 = vld [vmem:[%s572 + $0x48] sm:$0xf]
      %v1770 = vld [vmem:[%s572 + $0x50] sm:$0xf0]
      %v1771 = vld [vmem:[%s572 + $0x58] sm:$0xf]
      %v1772 = vld [vmem:[%s572 + $0x60] sm:$0xf0]
      %v1773 = vld [vmem:[%s572 + $0x68] sm:$0xf]
      %v1774 = vld [vmem:[%s572 + $0x70] sm:$0xf0]
      %v1775 = vld [vmem:[%s572 + $0x78] sm:$0xf]
      %v1776 = vld [vmem:[%s572 + $0x80] sm:$0xf0]
      %v1777 = vld [vmem:[%s572 + $0x88] sm:$0xf]
      %v1778 = vld [vmem:[%s572 + $0x90] sm:$0xf0]
      %v1779 = vld [vmem:[%s572 + $0x98] sm:$0xf]
      %v1780 = vld [vmem:[%s572 + $0xa0] sm:$0xf0]
      %v1781 = vld [vmem:[%s572 + $0xa8] sm:$0xf]
      %v1782 = vld [vmem:[%s572 + $0xb0] sm:$0xf0]
      %v1783 = vld [vmem:[%s572 + $0xb8] sm:$0xf]
      %v1784 = vld [vmem:[%s572 + $0xc0] sm:$0xf0]
      %v1785 = vld [vmem:[%s572 + $0xc8] sm:$0xf]
      %v1786 = vld [vmem:[%s572 + $0xd0] sm:$0xf0]
      %v1787 = vld [vmem:[%s572 + $0xd8] sm:$0xf]
      %v1788 = vld [vmem:[%s572 + $0xe0] sm:$0xf0]
      %v1789 = vld [vmem:[%s572 + $0xe8] sm:$0xf]
      %v1790 = vld [vmem:[%s572 + $0xf0] sm:$0xf0]
      %v1791 = vld [vmem:[%s572 + $0xf8] sm:$0xf]
      %v1824 = vrot.slane %v1760, 4
      %v1825 = vrot.slane %v1761, 4
      %v1826 = vsel %vm1006, %v1824, %v1825
      %v1827 = vrot.slane %v1762, 4
      %v1828 = vrot.slane %v1763, 4
      %v1829 = vsel %vm1006, %v1827, %v1828
      %v1830 = vrot.slane %v1764, 4
      %v1831 = vrot.slane %v1765, 4
      %v1832 = vsel %vm1006, %v1830, %v1831
      %v1833 = vrot.slane %v1766, 4
      %v1834 = vrot.slane %v1767, 4
      %v1835 = vsel %vm1006, %v1833, %v1834
      %v1836 = vrot.slane %v1768, 4
      %v1837 = vrot.slane %v1769, 4
      %v1838 = vsel %vm1006, %v1836, %v1837
      %v1839 = vrot.slane %v1770, 4
      %v1840 = vrot.slane %v1771, 4
      %v1841 = vsel %vm1006, %v1839, %v1840
      %v1842 = vrot.slane %v1772, 4
      %v1843 = vrot.slane %v1773, 4
      %v1844 = vsel %vm1006, %v1842, %v1843
      %v1845 = vrot.slane %v1774, 4
      %v1846 = vrot.slane %v1775, 4
      %v1847 = vsel %vm1006, %v1845, %v1846
      %v1848 = vrot.slane %v1776, 4
      %v1849 = vrot.slane %v1777, 4
      %v1850 = vsel %vm1006, %v1848, %v1849
      %v1851 = vrot.slane %v1778, 4
      %v1852 = vrot.slane %v1779, 4
      %v1853 = vsel %vm1006, %v1851, %v1852
      %v1854 = vrot.slane %v1780, 4
      %v1855 = vrot.slane %v1781, 4
      %v1856 = vsel %vm1006, %v1854, %v1855
      %v1857 = vrot.slane %v1782, 4
      %v1858 = vrot.slane %v1783, 4
      %v1859 = vsel %vm1006, %v1857, %v1858
      %v1860 = vrot.slane %v1784, 4
      %v1861 = vrot.slane %v1785, 4
      %v1862 = vsel %vm1006, %v1860, %v1861
      %v1863 = vrot.slane %v1786, 4
      %v1864 = vrot.slane %v1787, 4
      %v1865 = vsel %vm1006, %v1863, %v1864
      %v1866 = vrot.slane %v1788, 4
      %v1867 = vrot.slane %v1789, 4
      %v1868 = vsel %vm1006, %v1866, %v1867
      %v1869 = vrot.slane %v1790, 4
      %v1870 = vrot.slane %v1791, 4
      %v1871 = vsel %vm1006, %v1869, %v1870
      %1888 = vst [vmem:[#allocation3 + $0x20] sm:$0xff] %v1826
      %1889 = vst [vmem:[#allocation3 + $0x68] sm:$0xff] %v1829
      %1890 = vst [vmem:[#allocation3 + $0xb0] sm:$0xff] %v1832
      %1891 = vst [vmem:[#allocation3 + $0xf8] sm:$0xff] %v1835
      %1892 = vst [vmem:[#allocation3 + $0x140] sm:$0xff] %v1838
      %1893 = vst [vmem:[#allocation3 + $0x188] sm:$0xff] %v1841
      %1894 = vst [vmem:[#allocation3 + $0x1d0] sm:$0xff] %v1844
      %1895 = vst [vmem:[#allocation3 + $0x218] sm:$0xff] %v1847
      %1896 = vst [vmem:[#allocation3 + $0x260] sm:$0xff] %v1850
      %1897 = vst [vmem:[#allocation3 + $0x2a8] sm:$0xff] %v1853
      %1898 = vst [vmem:[#allocation3 + $0x2f0] sm:$0xff] %v1856
      %1899 = vst [vmem:[#allocation3 + $0x338] sm:$0xff] %v1859
      %1900 = vst [vmem:[#allocation3 + $0x380] sm:$0xff] %v1862
      %1901 = vst [vmem:[#allocation3 + $0x3c8] sm:$0xff] %v1865
      %1902 = vst [vmem:[#allocation3 + $0x410] sm:$0xff] %v1868
      %1903 = vst [vmem:[#allocation3 + $0x458] sm:$0xff] %v1871
      %v1904 = vld [vmem:[%s572] sm:$0xf0]
      %v1905 = vld [vmem:[%s572 + $0x8] sm:$0x1f]
      %v1906 = vld [vmem:[%s572 + $0x10] sm:$0xf0]
      %v1907 = vld [vmem:[%s572 + $0x18] sm:$0x1f]
      %v1908 = vld [vmem:[%s572 + $0x20] sm:$0xf0]
      %v1909 = vld [vmem:[%s572 + $0x28] sm:$0x1f]
      %v1910 = vld [vmem:[%s572 + $0x30] sm:$0xf0]
      %v1911 = vld [vmem:[%s572 + $0x38] sm:$0x1f]
      %v1912 = vld [vmem:[%s572 + $0x40] sm:$0xf0]
      %v1913 = vld [vmem:[%s572 + $0x48] sm:$0x1f]
      %v1914 = vld [vmem:[%s572 + $0x50] sm:$0xf0]
      %v1915 = vld [vmem:[%s572 + $0x58] sm:$0x1f]
      %v1916 = vld [vmem:[%s572 + $0x60] sm:$0xf0]
      %v1917 = vld [vmem:[%s572 + $0x68] sm:$0x1f]
      %v1918 = vld [vmem:[%s572 + $0x70] sm:$0xf0]
      %v1919 = vld [vmem:[%s572 + $0x78] sm:$0x1f]
      %v1920 = vld [vmem:[%s572 + $0x80] sm:$0xf0]
      %v1921 = vld [vmem:[%s572 + $0x88] sm:$0x1f]
      %v1922 = vld [vmem:[%s572 + $0x90] sm:$0xf0]
      %v1923 = vld [vmem:[%s572 + $0x98] sm:$0x1f]
      %v1924 = vld [vmem:[%s572 + $0xa0] sm:$0xf0]
      %v1925 = vld [vmem:[%s572 + $0xa8] sm:$0x1f]
      %v1926 = vld [vmem:[%s572 + $0xb0] sm:$0xf0]
      %v1927 = vld [vmem:[%s572 + $0xb8] sm:$0x1f]
      %v1928 = vld [vmem:[%s572 + $0xc0] sm:$0xf0]
      %v1929 = vld [vmem:[%s572 + $0xc8] sm:$0x1f]
      %v1930 = vld [vmem:[%s572 + $0xd0] sm:$0xf0]
      %v1931 = vld [vmem:[%s572 + $0xd8] sm:$0x1f]
      %v1932 = vld [vmem:[%s572 + $0xe0] sm:$0xf0]
      %v1933 = vld [vmem:[%s572 + $0xe8] sm:$0x1f]
      %v1934 = vld [vmem:[%s572 + $0xf0] sm:$0xf0]
      %v1935 = vld [vmem:[%s572 + $0xf8] sm:$0x1f]
      %v1937 = vshrl.u32 %v1904, 16
      %v1939 = vrot.slane %v1937, 4
      %v1940 = vshll.u32 %v1904, 16
      %v1942 = vrot.slane %v1940, 5
      %v1943 = vor.u32 %v1939, %v1942
      %v1945 = vshrl.u32 %v1905, 16
      %v1947 = vrot.slane %v1945, 4
      %v1948 = vshll.u32 %v1905, 16
      %v1950 = vrot.slane %v1948, 5
      %v1951 = vor.u32 %v1947, %v1950
      %v1952 = vsel %vm1119, %v1943, %v1951
      %v1954 = vshrl.u32 %v1906, 16
      %v1956 = vrot.slane %v1954, 4
      %v1957 = vshll.u32 %v1906, 16
      %v1959 = vrot.slane %v1957, 5
      %v1960 = vor.u32 %v1956, %v1959
      %v1962 = vshrl.u32 %v1907, 16
      %v1964 = vrot.slane %v1962, 4
      %v1965 = vshll.u32 %v1907, 16
      %v1967 = vrot.slane %v1965, 5
      %v1968 = vor.u32 %v1964, %v1967
      %v1969 = vsel %vm1119, %v1960, %v1968
      %v1971 = vshrl.u32 %v1908, 16
      %v1973 = vrot.slane %v1971, 4
      %v1974 = vshll.u32 %v1908, 16
      %v1976 = vrot.slane %v1974, 5
      %v1977 = vor.u32 %v1973, %v1976
      %v1979 = vshrl.u32 %v1909, 16
      %v1981 = vrot.slane %v1979, 4
      %v1982 = vshll.u32 %v1909, 16
      %v1984 = vrot.slane %v1982, 5
      %v1985 = vor.u32 %v1981, %v1984
      %v1986 = vsel %vm1119, %v1977, %v1985
      %v1988 = vshrl.u32 %v1910, 16
      %v1990 = vrot.slane %v1988, 4
      %v1991 = vshll.u32 %v1910, 16
      %v1993 = vrot.slane %v1991, 5
      %v1994 = vor.u32 %v1990, %v1993
      %v1996 = vshrl.u32 %v1911, 16
      %v1998 = vrot.slane %v1996, 4
      %v1999 = vshll.u32 %v1911, 16
      %v2001 = vrot.slane %v1999, 5
      %v2002 = vor.u32 %v1998, %v2001
      %v2003 = vsel %vm1119, %v1994, %v2002
      %v2005 = vshrl.u32 %v1912, 16
      %v2007 = vrot.slane %v2005, 4
      %v2008 = vshll.u32 %v1912, 16
      %v2010 = vrot.slane %v2008, 5
      %v2011 = vor.u32 %v2007, %v2010
      %v2013 = vshrl.u32 %v1913, 16
      %v2015 = vrot.slane %v2013, 4
      %v2016 = vshll.u32 %v1913, 16
      %v2018 = vrot.slane %v2016, 5
      %v2019 = vor.u32 %v2015, %v2018
      %v2020 = vsel %vm1119, %v2011, %v2019
      %v2022 = vshrl.u32 %v1914, 16
      %v2024 = vrot.slane %v2022, 4
      %v2025 = vshll.u32 %v1914, 16
      %v2027 = vrot.slane %v2025, 5
      %v2028 = vor.u32 %v2024, %v2027
      %v2030 = vshrl.u32 %v1915, 16
      %v2032 = vrot.slane %v2030, 4
      %v2033 = vshll.u32 %v1915, 16
      %v2035 = vrot.slane %v2033, 5
      %v2036 = vor.u32 %v2032, %v2035
      %v2037 = vsel %vm1119, %v2028, %v2036
      %v2039 = vshrl.u32 %v1916, 16
      %v2041 = vrot.slane %v2039, 4
      %v2042 = vshll.u32 %v1916, 16
      %v2044 = vrot.slane %v2042, 5
      %v2045 = vor.u32 %v2041, %v2044
      %v2047 = vshrl.u32 %v1917, 16
      %v2049 = vrot.slane %v2047, 4
      %v2050 = vshll.u32 %v1917, 16
      %v2052 = vrot.slane %v2050, 5
      %v2053 = vor.u32 %v2049, %v2052
      %v2054 = vsel %vm1119, %v2045, %v2053
      %v2056 = vshrl.u32 %v1918, 16
      %v2058 = vrot.slane %v2056, 4
      %v2059 = vshll.u32 %v1918, 16
      %v2061 = vrot.slane %v2059, 5
      %v2062 = vor.u32 %v2058, %v2061
      %v2064 = vshrl.u32 %v1919, 16
      %v2066 = vrot.slane %v2064, 4
      %v2067 = vshll.u32 %v1919, 16
      %v2069 = vrot.slane %v2067, 5
      %v2070 = vor.u32 %v2066, %v2069
      %v2071 = vsel %vm1119, %v2062, %v2070
      %v2073 = vshrl.u32 %v1920, 16
      %v2075 = vrot.slane %v2073, 4
      %v2076 = vshll.u32 %v1920, 16
      %v2078 = vrot.slane %v2076, 5
      %v2079 = vor.u32 %v2075, %v2078
      %v2081 = vshrl.u32 %v1921, 16
      %v2083 = vrot.slane %v2081, 4
      %v2084 = vshll.u32 %v1921, 16
      %v2086 = vrot.slane %v2084, 5
      %v2087 = vor.u32 %v2083, %v2086
      %v2088 = vsel %vm1119, %v2079, %v2087
      %v2090 = vshrl.u32 %v1922, 16
      %v2092 = vrot.slane %v2090, 4
      %v2093 = vshll.u32 %v1922, 16
      %v2095 = vrot.slane %v2093, 5
      %v2096 = vor.u32 %v2092, %v2095
      %v2098 = vshrl.u32 %v1923, 16
      %v2100 = vrot.slane %v2098, 4
      %v2101 = vshll.u32 %v1923, 16
      %v2103 = vrot.slane %v2101, 5
      %v2104 = vor.u32 %v2100, %v2103
      %v2105 = vsel %vm1119, %v2096, %v2104
      %v2107 = vshrl.u32 %v1924, 16
      %v2109 = vrot.slane %v2107, 4
      %v2110 = vshll.u32 %v1924, 16
      %v2112 = vrot.slane %v2110, 5
      %v2113 = vor.u32 %v2109, %v2112
      %v2115 = vshrl.u32 %v1925, 16
      %v2117 = vrot.slane %v2115, 4
      %v2118 = vshll.u32 %v1925, 16
      %v2120 = vrot.slane %v2118, 5
      %v2121 = vor.u32 %v2117, %v2120
      %v2122 = vsel %vm1119, %v2113, %v2121
      %v2124 = vshrl.u32 %v1926, 16
      %v2126 = vrot.slane %v2124, 4
      %v2127 = vshll.u32 %v1926, 16
      %v2129 = vrot.slane %v2127, 5
      %v2130 = vor.u32 %v2126, %v2129
      %v2132 = vshrl.u32 %v1927, 16
      %v2134 = vrot.slane %v2132, 4
      %v2135 = vshll.u32 %v1927, 16
      %v2137 = vrot.slane %v2135, 5
      %v2138 = vor.u32 %v2134, %v2137
      %v2139 = vsel %vm1119, %v2130, %v2138
      %v2141 = vshrl.u32 %v1928, 16
      %v2143 = vrot.slane %v2141, 4
      %v2144 = vshll.u32 %v1928, 16
      %v2146 = vrot.slane %v2144, 5
      %v2147 = vor.u32 %v2143, %v2146
      %v2149 = vshrl.u32 %v1929, 16
      %v2151 = vrot.slane %v2149, 4
      %v2152 = vshll.u32 %v1929, 16
      %v2154 = vrot.slane %v2152, 5
      %v2155 = vor.u32 %v2151, %v2154
      %v2156 = vsel %vm1119, %v2147, %v2155
      %v2158 = vshrl.u32 %v1930, 16
      %v2160 = vrot.slane %v2158, 4
      %v2161 = vshll.u32 %v1930, 16
      %v2163 = vrot.slane %v2161, 5
      %v2164 = vor.u32 %v2160, %v2163
      %v2166 = vshrl.u32 %v1931, 16
      %v2168 = vrot.slane %v2166, 4
      %v2169 = vshll.u32 %v1931, 16
      %v2171 = vrot.slane %v2169, 5
      %v2172 = vor.u32 %v2168, %v2171
      %v2173 = vsel %vm1119, %v2164, %v2172
      %v2175 = vshrl.u32 %v1932, 16
      %v2177 = vrot.slane %v2175, 4
      %v2178 = vshll.u32 %v1932, 16
      %v2180 = vrot.slane %v2178, 5
      %v2181 = vor.u32 %v2177, %v2180
      %v2183 = vshrl.u32 %v1933, 16
      %v2185 = vrot.slane %v2183, 4
      %v2186 = vshll.u32 %v1933, 16
      %v2188 = vrot.slane %v2186, 5
      %v2189 = vor.u32 %v2185, %v2188
      %v2190 = vsel %vm1119, %v2181, %v2189
      %v2192 = vshrl.u32 %v1934, 16
      %v2194 = vrot.slane %v2192, 4
      %v2195 = vshll.u32 %v1934, 16
      %v2197 = vrot.slane %v2195, 5
      %v2198 = vor.u32 %v2194, %v2197
      %v2200 = vshrl.u32 %v1935, 16
      %v2202 = vrot.slane %v2200, 4
      %v2203 = vshll.u32 %v1935, 16
      %v2205 = vrot.slane %v2203, 5
      %v2206 = vor.u32 %v2202, %v2205
      %v2207 = vsel %vm1119, %v2198, %v2206
      %2224 = vst [vmem:[#allocation3 + $0x28] sm:$0xff] %v1952
      %2225 = vst [vmem:[#allocation3 + $0x70] sm:$0xff] %v1969
      %2226 = vst [vmem:[#allocation3 + $0xb8] sm:$0xff] %v1986
      %2227 = vst [vmem:[#allocation3 + $0x100] sm:$0xff] %v2003
      %2228 = vst [vmem:[#allocation3 + $0x148] sm:$0xff] %v2020
      %2229 = vst [vmem:[#allocation3 + $0x190] sm:$0xff] %v2037
      %2230 = vst [vmem:[#allocation3 + $0x1d8] sm:$0xff] %v2054
      %2231 = vst [vmem:[#allocation3 + $0x220] sm:$0xff] %v2071
      %2232 = vst [vmem:[#allocation3 + $0x268] sm:$0xff] %v2088
      %2233 = vst [vmem:[#allocation3 + $0x2b0] sm:$0xff] %v2105
      %2234 = vst [vmem:[#allocation3 + $0x2f8] sm:$0xff] %v2122
      %2235 = vst [vmem:[#allocation3 + $0x340] sm:$0xff] %v2139
      %2236 = vst [vmem:[#allocation3 + $0x388] sm:$0xff] %v2156
      %2237 = vst [vmem:[#allocation3 + $0x3d0] sm:$0xff] %v2173
      %2238 = vst [vmem:[#allocation3 + $0x418] sm:$0xff] %v2190
      %2239 = vst [vmem:[#allocation3 + $0x460] sm:$0xff] %v2207
      %s2240 = scalar_lea.vmem [#allocation2], 32
      %v2241 = vld [vmem:[%s2240] sm:$0xf8]
      %v2242 = vld [vmem:[%s2240 + $0x8] sm:$0xf]
      %v2243 = vld [vmem:[%s2240 + $0x10] sm:$0xf8]
      %v2244 = vld [vmem:[%s2240 + $0x18] sm:$0xf]
      %v2245 = vld [vmem:[%s2240 + $0x20] sm:$0xf8]
      %v2246 = vld [vmem:[%s2240 + $0x28] sm:$0xf]
      %v2247 = vld [vmem:[%s2240 + $0x30] sm:$0xf8]
      %v2248 = vld [vmem:[%s2240 + $0x38] sm:$0xf]
      %v2249 = vld [vmem:[%s2240 + $0x40] sm:$0xf8]
      %v2250 = vld [vmem:[%s2240 + $0x48] sm:$0xf]
      %v2251 = vld [vmem:[%s2240 + $0x50] sm:$0xf8]
      %v2252 = vld [vmem:[%s2240 + $0x58] sm:$0xf]
      %v2253 = vld [vmem:[%s2240 + $0x60] sm:$0xf8]
      %v2254 = vld [vmem:[%s2240 + $0x68] sm:$0xf]
      %v2255 = vld [vmem:[%s2240 + $0x70] sm:$0xf8]
      %v2256 = vld [vmem:[%s2240 + $0x78] sm:$0xf]
      %v2257 = vld [vmem:[%s2240 + $0x80] sm:$0xf8]
      %v2258 = vld [vmem:[%s2240 + $0x88] sm:$0xf]
      %v2259 = vld [vmem:[%s2240 + $0x90] sm:$0xf8]
      %v2260 = vld [vmem:[%s2240 + $0x98] sm:$0xf]
      %v2261 = vld [vmem:[%s2240 + $0xa0] sm:$0xf8]
      %v2262 = vld [vmem:[%s2240 + $0xa8] sm:$0xf]
      %v2263 = vld [vmem:[%s2240 + $0xb0] sm:$0xf8]
      %v2264 = vld [vmem:[%s2240 + $0xb8] sm:$0xf]
      %v2265 = vld [vmem:[%s2240 + $0xc0] sm:$0xf8]
      %v2266 = vld [vmem:[%s2240 + $0xc8] sm:$0xf]
      %v2267 = vld [vmem:[%s2240 + $0xd0] sm:$0xf8]
      %v2268 = vld [vmem:[%s2240 + $0xd8] sm:$0xf]
      %v2269 = vld [vmem:[%s2240 + $0xe0] sm:$0xf8]
      %v2270 = vld [vmem:[%s2240 + $0xe8] sm:$0xf]
      %v2271 = vld [vmem:[%s2240 + $0xf0] sm:$0xf8]
      %v2272 = vld [vmem:[%s2240 + $0xf8] sm:$0xf]
      %v2274 = vshrl.u32 %v2241, 16
      %v2276 = vrot.slane %v2274, 3
      %v2277 = vshll.u32 %v2241, 16
      %v2279 = vrot.slane %v2277, 4
      %v2280 = vor.u32 %v2276, %v2279
      %v2282 = vshrl.u32 %v2242, 16
      %v2284 = vrot.slane %v2282, 3
      %v2285 = vshll.u32 %v2242, 16
      %v2287 = vrot.slane %v2285, 4
      %v2288 = vor.u32 %v2284, %v2287
      %v2289 = vsel %vm637, %v2280, %v2288
      %v2291 = vshrl.u32 %v2243, 16
      %v2293 = vrot.slane %v2291, 3
      %v2294 = vshll.u32 %v2243, 16
      %v2296 = vrot.slane %v2294, 4
      %v2297 = vor.u32 %v2293, %v2296
      %v2299 = vshrl.u32 %v2244, 16
      %v2301 = vrot.slane %v2299, 3
      %v2302 = vshll.u32 %v2244, 16
      %v2304 = vrot.slane %v2302, 4
      %v2305 = vor.u32 %v2301, %v2304
      %v2306 = vsel %vm637, %v2297, %v2305
      %v2308 = vshrl.u32 %v2245, 16
      %v2310 = vrot.slane %v2308, 3
      %v2311 = vshll.u32 %v2245, 16
      %v2313 = vrot.slane %v2311, 4
      %v2314 = vor.u32 %v2310, %v2313
      %v2316 = vshrl.u32 %v2246, 16
      %v2318 = vrot.slane %v2316, 3
      %v2319 = vshll.u32 %v2246, 16
      %v2321 = vrot.slane %v2319, 4
      %v2322 = vor.u32 %v2318, %v2321
      %v2323 = vsel %vm637, %v2314, %v2322
      %v2325 = vshrl.u32 %v2247, 16
      %v2327 = vrot.slane %v2325, 3
      %v2328 = vshll.u32 %v2247, 16
      %v2330 = vrot.slane %v2328, 4
      %v2331 = vor.u32 %v2327, %v2330
      %v2333 = vshrl.u32 %v2248, 16
      %v2335 = vrot.slane %v2333, 3
      %v2336 = vshll.u32 %v2248, 16
      %v2338 = vrot.slane %v2336, 4
      %v2339 = vor.u32 %v2335, %v2338
      %v2340 = vsel %vm637, %v2331, %v2339
      %v2342 = vshrl.u32 %v2249, 16
      %v2344 = vrot.slane %v2342, 3
      %v2345 = vshll.u32 %v2249, 16
      %v2347 = vrot.slane %v2345, 4
      %v2348 = vor.u32 %v2344, %v2347
      %v2350 = vshrl.u32 %v2250, 16
      %v2352 = vrot.slane %v2350, 3
      %v2353 = vshll.u32 %v2250, 16
      %v2355 = vrot.slane %v2353, 4
      %v2356 = vor.u32 %v2352, %v2355
      %v2357 = vsel %vm637, %v2348, %v2356
      %v2359 = vshrl.u32 %v2251, 16
      %v2361 = vrot.slane %v2359, 3
      %v2362 = vshll.u32 %v2251, 16
      %v2364 = vrot.slane %v2362, 4
      %v2365 = vor.u32 %v2361, %v2364
      %v2367 = vshrl.u32 %v2252, 16
      %v2369 = vrot.slane %v2367, 3
      %v2370 = vshll.u32 %v2252, 16
      %v2372 = vrot.slane %v2370, 4
      %v2373 = vor.u32 %v2369, %v2372
      %v2374 = vsel %vm637, %v2365, %v2373
      %v2376 = vshrl.u32 %v2253, 16
      %v2378 = vrot.slane %v2376, 3
      %v2379 = vshll.u32 %v2253, 16
      %v2381 = vrot.slane %v2379, 4
      %v2382 = vor.u32 %v2378, %v2381
      %v2384 = vshrl.u32 %v2254, 16
      %v2386 = vrot.slane %v2384, 3
      %v2387 = vshll.u32 %v2254, 16
      %v2389 = vrot.slane %v2387, 4
      %v2390 = vor.u32 %v2386, %v2389
      %v2391 = vsel %vm637, %v2382, %v2390
      %v2393 = vshrl.u32 %v2255, 16
      %v2395 = vrot.slane %v2393, 3
      %v2396 = vshll.u32 %v2255, 16
      %v2398 = vrot.slane %v2396, 4
      %v2399 = vor.u32 %v2395, %v2398
      %v2401 = vshrl.u32 %v2256, 16
      %v2403 = vrot.slane %v2401, 3
      %v2404 = vshll.u32 %v2256, 16
      %v2406 = vrot.slane %v2404, 4
      %v2407 = vor.u32 %v2403, %v2406
      %v2408 = vsel %vm637, %v2399, %v2407
      %v2410 = vshrl.u32 %v2257, 16
      %v2412 = vrot.slane %v2410, 3
      %v2413 = vshll.u32 %v2257, 16
      %v2415 = vrot.slane %v2413, 4
      %v2416 = vor.u32 %v2412, %v2415
      %v2418 = vshrl.u32 %v2258, 16
      %v2420 = vrot.slane %v2418, 3
      %v2421 = vshll.u32 %v2258, 16
      %v2423 = vrot.slane %v2421, 4
      %v2424 = vor.u32 %v2420, %v2423
      %v2425 = vsel %vm637, %v2416, %v2424
      %v2427 = vshrl.u32 %v2259, 16
      %v2429 = vrot.slane %v2427, 3
      %v2430 = vshll.u32 %v2259, 16
      %v2432 = vrot.slane %v2430, 4
      %v2433 = vor.u32 %v2429, %v2432
      %v2435 = vshrl.u32 %v2260, 16
      %v2437 = vrot.slane %v2435, 3
      %v2438 = vshll.u32 %v2260, 16
      %v2440 = vrot.slane %v2438, 4
      %v2441 = vor.u32 %v2437, %v2440
      %v2442 = vsel %vm637, %v2433, %v2441
      %v2444 = vshrl.u32 %v2261, 16
      %v2446 = vrot.slane %v2444, 3
      %v2447 = vshll.u32 %v2261, 16
      %v2449 = vrot.slane %v2447, 4
      %v2450 = vor.u32 %v2446, %v2449
      %v2452 = vshrl.u32 %v2262, 16
      %v2454 = vrot.slane %v2452, 3
      %v2455 = vshll.u32 %v2262, 16
      %v2457 = vrot.slane %v2455, 4
      %v2458 = vor.u32 %v2454, %v2457
      %v2459 = vsel %vm637, %v2450, %v2458
      %v2461 = vshrl.u32 %v2263, 16
      %v2463 = vrot.slane %v2461, 3
      %v2464 = vshll.u32 %v2263, 16
      %v2466 = vrot.slane %v2464, 4
      %v2467 = vor.u32 %v2463, %v2466
      %v2469 = vshrl.u32 %v2264, 16
      %v2471 = vrot.slane %v2469, 3
      %v2472 = vshll.u32 %v2264, 16
      %v2474 = vrot.slane %v2472, 4
      %v2475 = vor.u32 %v2471, %v2474
      %v2476 = vsel %vm637, %v2467, %v2475
      %v2478 = vshrl.u32 %v2265, 16
      %v2480 = vrot.slane %v2478, 3
      %v2481 = vshll.u32 %v2265, 16
      %v2483 = vrot.slane %v2481, 4
      %v2484 = vor.u32 %v2480, %v2483
      %v2486 = vshrl.u32 %v2266, 16
      %v2488 = vrot.slane %v2486, 3
      %v2489 = vshll.u32 %v2266, 16
      %v2491 = vrot.slane %v2489, 4
      %v2492 = vor.u32 %v2488, %v2491
      %v2493 = vsel %vm637, %v2484, %v2492
      %v2495 = vshrl.u32 %v2267, 16
      %v2497 = vrot.slane %v2495, 3
      %v2498 = vshll.u32 %v2267, 16
      %v2500 = vrot.slane %v2498, 4
      %v2501 = vor.u32 %v2497, %v2500
      %v2503 = vshrl.u32 %v2268, 16
      %v2505 = vrot.slane %v2503, 3
      %v2506 = vshll.u32 %v2268, 16
      %v2508 = vrot.slane %v2506, 4
      %v2509 = vor.u32 %v2505, %v2508
      %v2510 = vsel %vm637, %v2501, %v2509
      %v2512 = vshrl.u32 %v2269, 16
      %v2514 = vrot.slane %v2512, 3
      %v2515 = vshll.u32 %v2269, 16
      %v2517 = vrot.slane %v2515, 4
      %v2518 = vor.u32 %v2514, %v2517
      %v2520 = vshrl.u32 %v2270, 16
      %v2522 = vrot.slane %v2520, 3
      %v2523 = vshll.u32 %v2270, 16
      %v2525 = vrot.slane %v2523, 4
      %v2526 = vor.u32 %v2522, %v2525
      %v2527 = vsel %vm637, %v2518, %v2526
      %v2529 = vshrl.u32 %v2271, 16
      %v2531 = vrot.slane %v2529, 3
      %v2532 = vshll.u32 %v2271, 16
      %v2534 = vrot.slane %v2532, 4
      %v2535 = vor.u32 %v2531, %v2534
      %v2537 = vshrl.u32 %v2272, 16
      %v2539 = vrot.slane %v2537, 3
      %v2540 = vshll.u32 %v2272, 16
      %v2542 = vrot.slane %v2540, 4
      %v2543 = vor.u32 %v2539, %v2542
      %v2544 = vsel %vm637, %v2535, %v2543
      %2561 = vst [vmem:[#allocation3 + $0x30] sm:$0xff] %v2289
      %2562 = vst [vmem:[#allocation3 + $0x78] sm:$0xff] %v2306
      %2563 = vst [vmem:[#allocation3 + $0xc0] sm:$0xff] %v2323
      %2564 = vst [vmem:[#allocation3 + $0x108] sm:$0xff] %v2340
      %2565 = vst [vmem:[#allocation3 + $0x150] sm:$0xff] %v2357
      %2566 = vst [vmem:[#allocation3 + $0x198] sm:$0xff] %v2374
      %2567 = vst [vmem:[#allocation3 + $0x1e0] sm:$0xff] %v2391
      %2568 = vst [vmem:[#allocation3 + $0x228] sm:$0xff] %v2408
      %2569 = vst [vmem:[#allocation3 + $0x270] sm:$0xff] %v2425
      %2570 = vst [vmem:[#allocation3 + $0x2b8] sm:$0xff] %v2442
      %2571 = vst [vmem:[#allocation3 + $0x300] sm:$0xff] %v2459
      %2572 = vst [vmem:[#allocation3 + $0x348] sm:$0xff] %v2476
      %2573 = vst [vmem:[#allocation3 + $0x390] sm:$0xff] %v2493
      %2574 = vst [vmem:[#allocation3 + $0x3d8] sm:$0xff] %v2510
      %2575 = vst [vmem:[#allocation3 + $0x420] sm:$0xff] %v2527
      %2576 = vst [vmem:[#allocation3 + $0x468] sm:$0xff] %v2544
      %v2577 = vld [vmem:[%s2240] sm:$0xf0]
      %v2578 = vld [vmem:[%s2240 + $0x8] sm:$0xf]
      %v2579 = vld [vmem:[%s2240 + $0x10] sm:$0xf0]
      %v2580 = vld [vmem:[%s2240 + $0x18] sm:$0xf]
      %v2581 = vld [vmem:[%s2240 + $0x20] sm:$0xf0]
      %v2582 = vld [vmem:[%s2240 + $0x28] sm:$0xf]
      %v2583 = vld [vmem:[%s2240 + $0x30] sm:$0xf0]
      %v2584 = vld [vmem:[%s2240 + $0x38] sm:$0xf]
      %v2585 = vld [vmem:[%s2240 + $0x40] sm:$0xf0]
      %v2586 = vld [vmem:[%s2240 + $0x48] sm:$0xf]
      %v2587 = vld [vmem:[%s2240 + $0x50] sm:$0xf0]
      %v2588 = vld [vmem:[%s2240 + $0x58] sm:$0xf]
      %v2589 = vld [vmem:[%s2240 + $0x60] sm:$0xf0]
      %v2590 = vld [vmem:[%s2240 + $0x68] sm:$0xf]
      %v2591 = vld [vmem:[%s2240 + $0x70] sm:$0xf0]
      %v2592 = vld [vmem:[%s2240 + $0x78] sm:$0xf]
      %v2593 = vld [vmem:[%s2240 + $0x80] sm:$0xf0]
      %v2594 = vld [vmem:[%s2240 + $0x88] sm:$0xf]
      %v2595 = vld [vmem:[%s2240 + $0x90] sm:$0xf0]
      %v2596 = vld [vmem:[%s2240 + $0x98] sm:$0xf]
      %v2597 = vld [vmem:[%s2240 + $0xa0] sm:$0xf0]
      %v2598 = vld [vmem:[%s2240 + $0xa8] sm:$0xf]
      %v2599 = vld [vmem:[%s2240 + $0xb0] sm:$0xf0]
      %v2600 = vld [vmem:[%s2240 + $0xb8] sm:$0xf]
      %v2601 = vld [vmem:[%s2240 + $0xc0] sm:$0xf0]
      %v2602 = vld [vmem:[%s2240 + $0xc8] sm:$0xf]
      %v2603 = vld [vmem:[%s2240 + $0xd0] sm:$0xf0]
      %v2604 = vld [vmem:[%s2240 + $0xd8] sm:$0xf]
      %v2605 = vld [vmem:[%s2240 + $0xe0] sm:$0xf0]
      %v2606 = vld [vmem:[%s2240 + $0xe8] sm:$0xf]
      %v2607 = vld [vmem:[%s2240 + $0xf0] sm:$0xf0]
      %v2608 = vld [vmem:[%s2240 + $0xf8] sm:$0xf]
      %v2641 = vrot.slane %v2577, 4
      %v2642 = vrot.slane %v2578, 4
      %v2643 = vsel %vm1006, %v2641, %v2642
      %v2644 = vrot.slane %v2579, 4
      %v2645 = vrot.slane %v2580, 4
      %v2646 = vsel %vm1006, %v2644, %v2645
      %v2647 = vrot.slane %v2581, 4
      %v2648 = vrot.slane %v2582, 4
      %v2649 = vsel %vm1006, %v2647, %v2648
      %v2650 = vrot.slane %v2583, 4
      %v2651 = vrot.slane %v2584, 4
      %v2652 = vsel %vm1006, %v2650, %v2651
      %v2653 = vrot.slane %v2585, 4
      %v2654 = vrot.slane %v2586, 4
      %v2655 = vsel %vm1006, %v2653, %v2654
      %v2656 = vrot.slane %v2587, 4
      %v2657 = vrot.slane %v2588, 4
      %v2658 = vsel %vm1006, %v2656, %v2657
      %v2659 = vrot.slane %v2589, 4
      %v2660 = vrot.slane %v2590, 4
      %v2661 = vsel %vm1006, %v2659, %v2660
      %v2662 = vrot.slane %v2591, 4
      %v2663 = vrot.slane %v2592, 4
      %v2664 = vsel %vm1006, %v2662, %v2663
      %v2665 = vrot.slane %v2593, 4
      %v2666 = vrot.slane %v2594, 4
      %v2667 = vsel %vm1006, %v2665, %v2666
      %v2668 = vrot.slane %v2595, 4
      %v2669 = vrot.slane %v2596, 4
      %v2670 = vsel %vm1006, %v2668, %v2669
      %v2671 = vrot.slane %v2597, 4
      %v2672 = vrot.slane %v2598, 4
      %v2673 = vsel %vm1006, %v2671, %v2672
      %v2674 = vrot.slane %v2599, 4
      %v2675 = vrot.slane %v2600, 4
      %v2676 = vsel %vm1006, %v2674, %v2675
      %v2677 = vrot.slane %v2601, 4
      %v2678 = vrot.slane %v2602, 4
      %v2679 = vsel %vm1006, %v2677, %v2678
      %v2680 = vrot.slane %v2603, 4
      %v2681 = vrot.slane %v2604, 4
      %v2682 = vsel %vm1006, %v2680, %v2681
      %v2683 = vrot.slane %v2605, 4
      %v2684 = vrot.slane %v2606, 4
      %v2685 = vsel %vm1006, %v2683, %v2684
      %v2686 = vrot.slane %v2607, 4
      %v2687 = vrot.slane %v2608, 4
      %v2688 = vsel %vm1006, %v2686, %v2687
      %2705 = vst [vmem:[#allocation3 + $0x38] sm:$0xff] %v2643
      %2706 = vst [vmem:[#allocation3 + $0x80] sm:$0xff] %v2646
      %2707 = vst [vmem:[#allocation3 + $0xc8] sm:$0xff] %v2649
      %2708 = vst [vmem:[#allocation3 + $0x110] sm:$0xff] %v2652
      %2709 = vst [vmem:[#allocation3 + $0x158] sm:$0xff] %v2655
      %2710 = vst [vmem:[#allocation3 + $0x1a0] sm:$0xff] %v2658
      %2711 = vst [vmem:[#allocation3 + $0x1e8] sm:$0xff] %v2661
      %2712 = vst [vmem:[#allocation3 + $0x230] sm:$0xff] %v2664
      %2713 = vst [vmem:[#allocation3 + $0x278] sm:$0xff] %v2667
      %2714 = vst [vmem:[#allocation3 + $0x2c0] sm:$0xff] %v2670
      %2715 = vst [vmem:[#allocation3 + $0x308] sm:$0xff] %v2673
      %2716 = vst [vmem:[#allocation3 + $0x350] sm:$0xff] %v2676
      %2717 = vst [vmem:[#allocation3 + $0x398] sm:$0xff] %v2679
      %2718 = vst [vmem:[#allocation3 + $0x3e0] sm:$0xff] %v2682
      %2719 = vst [vmem:[#allocation3 + $0x428] sm:$0xff] %v2685
      %2720 = vst [vmem:[#allocation3 + $0x470] sm:$0xff] %v2688
      %v2721 = vld [vmem:[%s2240] sm:$0xf0]
      %v2722 = vld [vmem:[%s2240 + $0x8] sm:$0x1f]
      %v2723 = vld [vmem:[%s2240 + $0x10] sm:$0xf0]
      %v2724 = vld [vmem:[%s2240 + $0x18] sm:$0x1f]
      %v2725 = vld [vmem:[%s2240 + $0x20] sm:$0xf0]
      %v2726 = vld [vmem:[%s2240 + $0x28] sm:$0x1f]
      %v2727 = vld [vmem:[%s2240 + $0x30] sm:$0xf0]
      %v2728 = vld [vmem:[%s2240 + $0x38] sm:$0x1f]
      %v2729 = vld [vmem:[%s2240 + $0x40] sm:$0xf0]
      %v2730 = vld [vmem:[%s2240 + $0x48] sm:$0x1f]
      %v2731 = vld [vmem:[%s2240 + $0x50] sm:$0xf0]
      %v2732 = vld [vmem:[%s2240 + $0x58] sm:$0x1f]
      %v2733 = vld [vmem:[%s2240 + $0x60] sm:$0xf0]
      %v2734 = vld [vmem:[%s2240 + $0x68] sm:$0x1f]
      %v2735 = vld [vmem:[%s2240 + $0x70] sm:$0xf0]
      %v2736 = vld [vmem:[%s2240 + $0x78] sm:$0x1f]
      %v2737 = vld [vmem:[%s2240 + $0x80] sm:$0xf0]
      %v2738 = vld [vmem:[%s2240 + $0x88] sm:$0x1f]
      %v2739 = vld [vmem:[%s2240 + $0x90] sm:$0xf0]
      %v2740 = vld [vmem:[%s2240 + $0x98] sm:$0x1f]
      %v2741 = vld [vmem:[%s2240 + $0xa0] sm:$0xf0]
      %v2742 = vld [vmem:[%s2240 + $0xa8] sm:$0x1f]
      %v2743 = vld [vmem:[%s2240 + $0xb0] sm:$0xf0]
      %v2744 = vld [vmem:[%s2240 + $0xb8] sm:$0x1f]
      %v2745 = vld [vmem:[%s2240 + $0xc0] sm:$0xf0]
      %v2746 = vld [vmem:[%s2240 + $0xc8] sm:$0x1f]
      %v2747 = vld [vmem:[%s2240 + $0xd0] sm:$0xf0]
      %v2748 = vld [vmem:[%s2240 + $0xd8] sm:$0x1f]
      %v2749 = vld [vmem:[%s2240 + $0xe0] sm:$0xf0]
      %v2750 = vld [vmem:[%s2240 + $0xe8] sm:$0x1f]
      %v2751 = vld [vmem:[%s2240 + $0xf0] sm:$0xf0]
      %v2752 = vld [vmem:[%s2240 + $0xf8] sm:$0x1f]
      %v2754 = vshrl.u32 %v2721, 16
      %v2756 = vrot.slane %v2754, 4
      %v2757 = vshll.u32 %v2721, 16
      %v2759 = vrot.slane %v2757, 5
      %v2760 = vor.u32 %v2756, %v2759
      %v2762 = vshrl.u32 %v2722, 16
      %v2764 = vrot.slane %v2762, 4
      %v2765 = vshll.u32 %v2722, 16
      %v2767 = vrot.slane %v2765, 5
      %v2768 = vor.u32 %v2764, %v2767
      %v2769 = vsel %vm1119, %v2760, %v2768
      %v2771 = vshrl.u32 %v2723, 16
      %v2773 = vrot.slane %v2771, 4
      %v2774 = vshll.u32 %v2723, 16
      %v2776 = vrot.slane %v2774, 5
      %v2777 = vor.u32 %v2773, %v2776
      %v2779 = vshrl.u32 %v2724, 16
      %v2781 = vrot.slane %v2779, 4
      %v2782 = vshll.u32 %v2724, 16
      %v2784 = vrot.slane %v2782, 5
      %v2785 = vor.u32 %v2781, %v2784
      %v2786 = vsel %vm1119, %v2777, %v2785
      %v2788 = vshrl.u32 %v2725, 16
      %v2790 = vrot.slane %v2788, 4
      %v2791 = vshll.u32 %v2725, 16
      %v2793 = vrot.slane %v2791, 5
      %v2794 = vor.u32 %v2790, %v2793
      %v2796 = vshrl.u32 %v2726, 16
      %v2798 = vrot.slane %v2796, 4
      %v2799 = vshll.u32 %v2726, 16
      %v2801 = vrot.slane %v2799, 5
      %v2802 = vor.u32 %v2798, %v2801
      %v2803 = vsel %vm1119, %v2794, %v2802
      %v2805 = vshrl.u32 %v2727, 16
      %v2807 = vrot.slane %v2805, 4
      %v2808 = vshll.u32 %v2727, 16
      %v2810 = vrot.slane %v2808, 5
      %v2811 = vor.u32 %v2807, %v2810
      %v2813 = vshrl.u32 %v2728, 16
      %v2815 = vrot.slane %v2813, 4
      %v2816 = vshll.u32 %v2728, 16
      %v2818 = vrot.slane %v2816, 5
      %v2819 = vor.u32 %v2815, %v2818
      %v2820 = vsel %vm1119, %v2811, %v2819
      %v2822 = vshrl.u32 %v2729, 16
      %v2824 = vrot.slane %v2822, 4
      %v2825 = vshll.u32 %v2729, 16
      %v2827 = vrot.slane %v2825, 5
      %v2828 = vor.u32 %v2824, %v2827
      %v2830 = vshrl.u32 %v2730, 16
      %v2832 = vrot.slane %v2830, 4
      %v2833 = vshll.u32 %v2730, 16
      %v2835 = vrot.slane %v2833, 5
      %v2836 = vor.u32 %v2832, %v2835
      %v2837 = vsel %vm1119, %v2828, %v2836
      %v2839 = vshrl.u32 %v2731, 16
      %v2841 = vrot.slane %v2839, 4
      %v2842 = vshll.u32 %v2731, 16
      %v2844 = vrot.slane %v2842, 5
      %v2845 = vor.u32 %v2841, %v2844
      %v2847 = vshrl.u32 %v2732, 16
      %v2849 = vrot.slane %v2847, 4
      %v2850 = vshll.u32 %v2732, 16
      %v2852 = vrot.slane %v2850, 5
      %v2853 = vor.u32 %v2849, %v2852
      %v2854 = vsel %vm1119, %v2845, %v2853
      %v2856 = vshrl.u32 %v2733, 16
      %v2858 = vrot.slane %v2856, 4
      %v2859 = vshll.u32 %v2733, 16
      %v2861 = vrot.slane %v2859, 5
      %v2862 = vor.u32 %v2858, %v2861
      %v2864 = vshrl.u32 %v2734, 16
      %v2866 = vrot.slane %v2864, 4
      %v2867 = vshll.u32 %v2734, 16
      %v2869 = vrot.slane %v2867, 5
      %v2870 = vor.u32 %v2866, %v2869
      %v2871 = vsel %vm1119, %v2862, %v2870
      %v2873 = vshrl.u32 %v2735, 16
      %v2875 = vrot.slane %v2873, 4
      %v2876 = vshll.u32 %v2735, 16
      %v2878 = vrot.slane %v2876, 5
      %v2879 = vor.u32 %v2875, %v2878
      %v2881 = vshrl.u32 %v2736, 16
      %v2883 = vrot.slane %v2881, 4
      %v2884 = vshll.u32 %v2736, 16
      %v2886 = vrot.slane %v2884, 5
      %v2887 = vor.u32 %v2883, %v2886
      %v2888 = vsel %vm1119, %v2879, %v2887
      %v2890 = vshrl.u32 %v2737, 16
      %v2892 = vrot.slane %v2890, 4
      %v2893 = vshll.u32 %v2737, 16
      %v2895 = vrot.slane %v2893, 5
      %v2896 = vor.u32 %v2892, %v2895
      %v2898 = vshrl.u32 %v2738, 16
      %v2900 = vrot.slane %v2898, 4
      %v2901 = vshll.u32 %v2738, 16
      %v2903 = vrot.slane %v2901, 5
      %v2904 = vor.u32 %v2900, %v2903
      %v2905 = vsel %vm1119, %v2896, %v2904
      %v2907 = vshrl.u32 %v2739, 16
      %v2909 = vrot.slane %v2907, 4
      %v2910 = vshll.u32 %v2739, 16
      %v2912 = vrot.slane %v2910, 5
      %v2913 = vor.u32 %v2909, %v2912
      %v2915 = vshrl.u32 %v2740, 16
      %v2917 = vrot.slane %v2915, 4
      %v2918 = vshll.u32 %v2740, 16
      %v2920 = vrot.slane %v2918, 5
      %v2921 = vor.u32 %v2917, %v2920
      %v2922 = vsel %vm1119, %v2913, %v2921
      %v2924 = vshrl.u32 %v2741, 16
      %v2926 = vrot.slane %v2924, 4
      %v2927 = vshll.u32 %v2741, 16
      %v2929 = vrot.slane %v2927, 5
      %v2930 = vor.u32 %v2926, %v2929
      %v2932 = vshrl.u32 %v2742, 16
      %v2934 = vrot.slane %v2932, 4
      %v2935 = vshll.u32 %v2742, 16
      %v2937 = vrot.slane %v2935, 5
      %v2938 = vor.u32 %v2934, %v2937
      %v2939 = vsel %vm1119, %v2930, %v2938
      %v2941 = vshrl.u32 %v2743, 16
      %v2943 = vrot.slane %v2941, 4
      %v2944 = vshll.u32 %v2743, 16
      %v2946 = vrot.slane %v2944, 5
      %v2947 = vor.u32 %v2943, %v2946
      %v2949 = vshrl.u32 %v2744, 16
      %v2951 = vrot.slane %v2949, 4
      %v2952 = vshll.u32 %v2744, 16
      %v2954 = vrot.slane %v2952, 5
      %v2955 = vor.u32 %v2951, %v2954
      %v2956 = vsel %vm1119, %v2947, %v2955
      %v2958 = vshrl.u32 %v2745, 16
      %v2960 = vrot.slane %v2958, 4
      %v2961 = vshll.u32 %v2745, 16
      %v2963 = vrot.slane %v2961, 5
      %v2964 = vor.u32 %v2960, %v2963
      %v2966 = vshrl.u32 %v2746, 16
      %v2968 = vrot.slane %v2966, 4
      %v2969 = vshll.u32 %v2746, 16
      %v2971 = vrot.slane %v2969, 5
      %v2972 = vor.u32 %v2968, %v2971
      %v2973 = vsel %vm1119, %v2964, %v2972
      %v2975 = vshrl.u32 %v2747, 16
      %v2977 = vrot.slane %v2975, 4
      %v2978 = vshll.u32 %v2747, 16
      %v2980 = vrot.slane %v2978, 5
      %v2981 = vor.u32 %v2977, %v2980
      %v2983 = vshrl.u32 %v2748, 16
      %v2985 = vrot.slane %v2983, 4
      %v2986 = vshll.u32 %v2748, 16
      %v2988 = vrot.slane %v2986, 5
      %v2989 = vor.u32 %v2985, %v2988
      %v2990 = vsel %vm1119, %v2981, %v2989
      %v2992 = vshrl.u32 %v2749, 16
      %v2994 = vrot.slane %v2992, 4
      %v2995 = vshll.u32 %v2749, 16
      %v2997 = vrot.slane %v2995, 5
      %v2998 = vor.u32 %v2994, %v2997
      %v3000 = vshrl.u32 %v2750, 16
      %v3002 = vrot.slane %v3000, 4
      %v3003 = vshll.u32 %v2750, 16
      %v3005 = vrot.slane %v3003, 5
      %v3006 = vor.u32 %v3002, %v3005
      %v3007 = vsel %vm1119, %v2998, %v3006
      %v3009 = vshrl.u32 %v2751, 16
      %v3011 = vrot.slane %v3009, 4
      %v3012 = vshll.u32 %v2751, 16
      %v3014 = vrot.slane %v3012, 5
      %v3015 = vor.u32 %v3011, %v3014
      %v3017 = vshrl.u32 %v2752, 16
      %v3019 = vrot.slane %v3017, 4
      %v3020 = vshll.u32 %v2752, 16
      %v3022 = vrot.slane %v3020, 5
      %v3023 = vor.u32 %v3019, %v3022
      %v3024 = vsel %vm1119, %v3015, %v3023
      %3041 = vst [vmem:[#allocation3 + $0x40] sm:$0xff] %v2769
      %3042 = vst [vmem:[#allocation3 + $0x88] sm:$0xff] %v2786
      %3043 = vst [vmem:[#allocation3 + $0xd0] sm:$0xff] %v2803
      %3044 = vst [vmem:[#allocation3 + $0x118] sm:$0xff] %v2820
      %3045 = vst [vmem:[#allocation3 + $0x160] sm:$0xff] %v2837
      %3046 = vst [vmem:[#allocation3 + $0x1a8] sm:$0xff] %v2854
      %3047 = vst [vmem:[#allocation3 + $0x1f0] sm:$0xff] %v2871
      %3048 = vst [vmem:[#allocation3 + $0x238] sm:$0xff] %v2888
      %3049 = vst [vmem:[#allocation3 + $0x280] sm:$0xff] %v2905
      %3050 = vst [vmem:[#allocation3 + $0x2c8] sm:$0xff] %v2922
      %3051 = vst [vmem:[#allocation3 + $0x310] sm:$0xff] %v2939
      %3052 = vst [vmem:[#allocation3 + $0x358] sm:$0xff] %v2956
      %3053 = vst [vmem:[#allocation3 + $0x3a0] sm:$0xff] %v2973
      %3054 = vst [vmem:[#allocation3 + $0x3e8] sm:$0xff] %v2990
      %3055 = vst [vmem:[#allocation3 + $0x430] sm:$0xff] %v3007
      %3056 = vst [vmem:[#allocation3 + $0x478] sm:$0xff] %v3024
      %v3057 = vld [vmem:[#allocation3] sm:$0xff]
      %v3058 = vld [vmem:[#allocation3 + $0x8] sm:$0xff]
      %v3059 = vld [vmem:[#allocation3 + $0x10] sm:$0xff]
      %v3060 = vld [vmem:[#allocation3 + $0x18] sm:$0xff]
      %v3061 = vld [vmem:[#allocation3 + $0x20] sm:$0xff]
      %v3062 = vld [vmem:[#allocation3 + $0x28] sm:$0xff]
      %v3063 = vld [vmem:[#allocation3 + $0x30] sm:$0xff]
      %v3064 = vld [vmem:[#allocation3 + $0x38] sm:$0xff]
      %v3065 = vld [vmem:[#allocation3 + $0x40] sm:$0xff]
      %v3066 = vld [vmem:[#allocation3 + $0x48] sm:$0xff]
      %v3067 = vld [vmem:[#allocation3 + $0x50] sm:$0xff]
      %v3068 = vld [vmem:[#allocation3 + $0x58] sm:$0xff]
      %v3069 = vld [vmem:[#allocation3 + $0x60] sm:$0xff]
      %v3070 = vld [vmem:[#allocation3 + $0x68] sm:$0xff]
      %v3071 = vld [vmem:[#allocation3 + $0x70] sm:$0xff]
      %v3072 = vld [vmem:[#allocation3 + $0x78] sm:$0xff]
      %v3073 = vld [vmem:[#allocation3 + $0x80] sm:$0xff]
      %v3074 = vld [vmem:[#allocation3 + $0x88] sm:$0xff]
      %v3075 = vld [vmem:[#allocation3 + $0x90] sm:$0xff]
      %v3076 = vld [vmem:[#allocation3 + $0x98] sm:$0xff]
      %v3077 = vld [vmem:[#allocation3 + $0xa0] sm:$0xff]
      %v3078 = vld [vmem:[#allocation3 + $0xa8] sm:$0xff]
      %v3079 = vld [vmem:[#allocation3 + $0xb0] sm:$0xff]
      %v3080 = vld [vmem:[#allocation3 + $0xb8] sm:$0xff]
      %v3081 = vld [vmem:[#allocation3 + $0xc0] sm:$0xff]
      %v3082 = vld [vmem:[#allocation3 + $0xc8] sm:$0xff]
      %v3083 = vld [vmem:[#allocation3 + $0xd0] sm:$0xff]
      %v3084 = vld [vmem:[#allocation3 + $0xd8] sm:$0xff]
      %v3085 = vld [vmem:[#allocation3 + $0xe0] sm:$0xff]
      %v3086 = vld [vmem:[#allocation3 + $0xe8] sm:$0xff]
      %v3087 = vld [vmem:[#allocation3 + $0xf0] sm:$0xff]
      %v3088 = vld [vmem:[#allocation3 + $0xf8] sm:$0xff]
      %v3089 = vld [vmem:[#allocation3 + $0x100] sm:$0xff]
      %v3090 = vld [vmem:[#allocation3 + $0x108] sm:$0xff]
      %v3091 = vld [vmem:[#allocation3 + $0x110] sm:$0xff]
      %v3092 = vld [vmem:[#allocation3 + $0x118] sm:$0xff]
      %v3093 = vld [vmem:[#allocation3 + $0x120] sm:$0xff]
      %v3094 = vld [vmem:[#allocation3 + $0x128] sm:$0xff]
      %v3095 = vld [vmem:[#allocation3 + $0x130] sm:$0xff]
      %v3096 = vld [vmem:[#allocation3 + $0x138] sm:$0xff]
      %v3097 = vld [vmem:[#allocation3 + $0x140] sm:$0xff]
      %v3098 = vld [vmem:[#allocation3 + $0x148] sm:$0xff]
      %v3099 = vld [vmem:[#allocation3 + $0x150] sm:$0xff]
      %v3100 = vld [vmem:[#allocation3 + $0x158] sm:$0xff]
      %v3101 = vld [vmem:[#allocation3 + $0x160] sm:$0xff]
      %v3102 = vld [vmem:[#allocation3 + $0x168] sm:$0xff]
      %v3103 = vld [vmem:[#allocation3 + $0x170] sm:$0xff]
      %v3104 = vld [vmem:[#allocation3 + $0x178] sm:$0xff]
      %v3105 = vld [vmem:[#allocation3 + $0x180] sm:$0xff]
      %v3106 = vld [vmem:[#allocation3 + $0x188] sm:$0xff]
      %v3107 = vld [vmem:[#allocation3 + $0x190] sm:$0xff]
      %v3108 = vld [vmem:[#allocation3 + $0x198] sm:$0xff]
      %v3109 = vld [vmem:[#allocation3 + $0x1a0] sm:$0xff]
      %v3110 = vld [vmem:[#allocation3 + $0x1a8] sm:$0xff]
      %v3111 = vld [vmem:[#allocation3 + $0x1b0] sm:$0xff]
      %v3112 = vld [vmem:[#allocation3 + $0x1b8] sm:$0xff]
      %v3113 = vld [vmem:[#allocation3 + $0x1c0] sm:$0xff]
      %v3114 = vld [vmem:[#allocation3 + $0x1c8] sm:$0xff]
      %v3115 = vld [vmem:[#allocation3 + $0x1d0] sm:$0xff]
      %v3116 = vld [vmem:[#allocation3 + $0x1d8] sm:$0xff]
      %v3117 = vld [vmem:[#allocation3 + $0x1e0] sm:$0xff]
      %v3118 = vld [vmem:[#allocation3 + $0x1e8] sm:$0xff]
      %v3119 = vld [vmem:[#allocation3 + $0x1f0] sm:$0xff]
      %v3120 = vld [vmem:[#allocation3 + $0x1f8] sm:$0xff]
      %v3121 = vld [vmem:[#allocation3 + $0x200] sm:$0xff]
      %v3122 = vld [vmem:[#allocation3 + $0x208] sm:$0xff]
      %v3123 = vld [vmem:[#allocation3 + $0x210] sm:$0xff]
      %v3124 = vld [vmem:[#allocation3 + $0x218] sm:$0xff]
      %v3125 = vld [vmem:[#allocation3 + $0x220] sm:$0xff]
      %v3126 = vld [vmem:[#allocation3 + $0x228] sm:$0xff]
      %v3127 = vld [vmem:[#allocation3 + $0x230] sm:$0xff]
      %v3128 = vld [vmem:[#allocation3 + $0x238] sm:$0xff]
      %v3129 = vld [vmem:[#allocation3 + $0x240] sm:$0xff]
      %v3130 = vld [vmem:[#allocation3 + $0x248] sm:$0xff]
      %v3131 = vld [vmem:[#allocation3 + $0x250] sm:$0xff]
      %v3132 = vld [vmem:[#allocation3 + $0x258] sm:$0xff]
      %v3133 = vld [vmem:[#allocation3 + $0x260] sm:$0xff]
      %v3134 = vld [vmem:[#allocation3 + $0x268] sm:$0xff]
      %v3135 = vld [vmem:[#allocation3 + $0x270] sm:$0xff]
      %v3136 = vld [vmem:[#allocation3 + $0x278] sm:$0xff]
      %v3137 = vld [vmem:[#allocation3 + $0x280] sm:$0xff]
      %v3138 = vld [vmem:[#allocation3 + $0x288] sm:$0xff]
      %v3139 = vld [vmem:[#allocation3 + $0x290] sm:$0xff]
      %v3140 = vld [vmem:[#allocation3 + $0x298] sm:$0xff]
      %v3141 = vld [vmem:[#allocation3 + $0x2a0] sm:$0xff]
      %v3142 = vld [vmem:[#allocation3 + $0x2a8] sm:$0xff]
      %v3143 = vld [vmem:[#allocation3 + $0x2b0] sm:$0xff]
      %v3144 = vld [vmem:[#allocation3 + $0x2b8] sm:$0xff]
      %v3145 = vld [vmem:[#allocation3 + $0x2c0] sm:$0xff]
      %v3146 = vld [vmem:[#allocation3 + $0x2c8] sm:$0xff]
      %v3147 = vld [vmem:[#allocation3 + $0x2d0] sm:$0xff]
      %v3148 = vld [vmem:[#allocation3 + $0x2d8] sm:$0xff]
      %v3149 = vld [vmem:[#allocation3 + $0x2e0] sm:$0xff]
      %v3150 = vld [vmem:[#allocation3 + $0x2e8] sm:$0xff]
      %v3151 = vld [vmem:[#allocation3 + $0x2f0] sm:$0xff]
      %v3152 = vld [vmem:[#allocation3 + $0x2f8] sm:$0xff]
      %v3153 = vld [vmem:[#allocation3 + $0x300] sm:$0xff]
      %v3154 = vld [vmem:[#allocation3 + $0x308] sm:$0xff]
      %v3155 = vld [vmem:[#allocation3 + $0x310] sm:$0xff]
      %v3156 = vld [vmem:[#allocation3 + $0x318] sm:$0xff]
      %v3157 = vld [vmem:[#allocation3 + $0x320] sm:$0xff]
      %v3158 = vld [vmem:[#allocation3 + $0x328] sm:$0xff]
      %v3159 = vld [vmem:[#allocation3 + $0x330] sm:$0xff]
      %v3160 = vld [vmem:[#allocation3 + $0x338] sm:$0xff]
      %v3161 = vld [vmem:[#allocation3 + $0x340] sm:$0xff]
      %v3162 = vld [vmem:[#allocation3 + $0x348] sm:$0xff]
      %v3163 = vld [vmem:[#allocation3 + $0x350] sm:$0xff]
      %v3164 = vld [vmem:[#allocation3 + $0x358] sm:$0xff]
      %v3165 = vld [vmem:[#allocation3 + $0x360] sm:$0xff]
      %v3166 = vld [vmem:[#allocation3 + $0x368] sm:$0xff]
      %v3167 = vld [vmem:[#allocation3 + $0x370] sm:$0xff]
      %v3168 = vld [vmem:[#allocation3 + $0x378] sm:$0xff]
      %v3169 = vld [vmem:[#allocation3 + $0x380] sm:$0xff]
      %v3170 = vld [vmem:[#allocation3 + $0x388] sm:$0xff]
      %v3171 = vld [vmem:[#allocation3 + $0x390] sm:$0xff]
      %v3172 = vld [vmem:[#allocation3 + $0x398] sm:$0xff]
      %v3173 = vld [vmem:[#allocation3 + $0x3a0] sm:$0xff]
      %v3174 = vld [vmem:[#allocation3 + $0x3a8] sm:$0xff]
      %v3175 = vld [vmem:[#allocation3 + $0x3b0] sm:$0xff]
      %v3176 = vld [vmem:[#allocation3 + $0x3b8] sm:$0xff]
      %v3177 = vld [vmem:[#allocation3 + $0x3c0] sm:$0xff]
      %v3178 = vld [vmem:[#allocation3 + $0x3c8] sm:$0xff]
      %v3179 = vld [vmem:[#allocation3 + $0x3d0] sm:$0xff]
      %v3180 = vld [vmem:[#allocation3 + $0x3d8] sm:$0xff]
      %v3181 = vld [vmem:[#allocation3 + $0x3e0] sm:$0xff]
      %v3182 = vld [vmem:[#allocation3 + $0x3e8] sm:$0xff]
      %v3183 = vld [vmem:[#allocation3 + $0x3f0] sm:$0xff]
      %v3184 = vld [vmem:[#allocation3 + $0x3f8] sm:$0xff]
      %v3185 = vld [vmem:[#allocation3 + $0x400] sm:$0xff]
      %v3186 = vld [vmem:[#allocation3 + $0x408] sm:$0xff]
      %v3187 = vld [vmem:[#allocation3 + $0x410] sm:$0xff]
      %v3188 = vld [vmem:[#allocation3 + $0x418] sm:$0xff]
      %v3189 = vld [vmem:[#allocation3 + $0x420] sm:$0xff]
      %v3190 = vld [vmem:[#allocation3 + $0x428] sm:$0xff]
      %v3191 = vld [vmem:[#allocation3 + $0x430] sm:$0xff]
      %v3192 = vld [vmem:[#allocation3 + $0x438] sm:$0xff]
      %v3193 = vld [vmem:[#allocation3 + $0x440] sm:$0xff]
      %v3194 = vld [vmem:[#allocation3 + $0x448] sm:$0xff]
      %v3195 = vld [vmem:[#allocation3 + $0x450] sm:$0xff]
      %v3196 = vld [vmem:[#allocation3 + $0x458] sm:$0xff]
      %v3197 = vld [vmem:[#allocation3 + $0x460] sm:$0xff]
      %v3198 = vld [vmem:[#allocation3 + $0x468] sm:$0xff]
      %v3199 = vld [vmem:[#allocation3 + $0x470] sm:$0xff]
      %v3200 = vld [vmem:[#allocation3 + $0x478] sm:$0xff]
      %v3201 = vld [vmem:[%s3] sm:$0xf]
      %v3202 = vld [vmem:[%s3 + $0x4] sm:$0xf]
      %v3203 = vld [vmem:[%s3 + $0x8] sm:$0xf]
      %v3204 = vld [vmem:[%s3 + $0xc] sm:$0xf]
      %v3205 = vld [vmem:[%s3 + $0x10] sm:$0xf]
      %v3206 = vld [vmem:[%s3 + $0x14] sm:$0xf]
      %v3207 = vld [vmem:[%s3 + $0x18] sm:$0xf]
      %v3208 = vld [vmem:[%s3 + $0x1c] sm:$0xf]
      %v3209 = vld [vmem:[%s3 + $0x20] sm:$0xf]
      %v3210 = vld [vmem:[%s3 + $0x24] sm:$0xf]
      %v3211 = vld [vmem:[%s3 + $0x28] sm:$0xf]
      %v3212 = vld [vmem:[%s3 + $0x2c] sm:$0xf]
      %v3213 = vld [vmem:[%s3 + $0x30] sm:$0xf]
      %v3214 = vld [vmem:[%s3 + $0x34] sm:$0xf]
      %v3215 = vld [vmem:[%s3 + $0x38] sm:$0xf]
      %v3216 = vld [vmem:[%s3 + $0x3c] sm:$0xf]
      %v3217 = vld [vmem:[%s3 + $0x40] sm:$0xf]
      %v3218 = vld [vmem:[%s3 + $0x44] sm:$0xf]
      %v3219 = vld [vmem:[%s3 + $0x48] sm:$0xf]
      %v3220 = vld [vmem:[%s3 + $0x4c] sm:$0xf]
      %v3221 = vld [vmem:[%s3 + $0x50] sm:$0xf]
      %v3222 = vld [vmem:[%s3 + $0x54] sm:$0xf]
      %v3223 = vld [vmem:[%s3 + $0x58] sm:$0xf]
      %v3224 = vld [vmem:[%s3 + $0x5c] sm:$0xf]
      %v3225 = vld [vmem:[%s3 + $0x60] sm:$0xf]
      %v3226 = vld [vmem:[%s3 + $0x64] sm:$0xf]
      %v3227 = vld [vmem:[%s3 + $0x68] sm:$0xf]
      %v3228 = vld [vmem:[%s3 + $0x6c] sm:$0xf]
      %v3229 = vld [vmem:[%s3 + $0x70] sm:$0xf]
      %v3230 = vld [vmem:[%s3 + $0x74] sm:$0xf]
      %v3231 = vld [vmem:[%s3 + $0x78] sm:$0xf]
      %v3232 = vld [vmem:[%s3 + $0x7c] sm:$0xf]
      %v3233 = vld [vmem:[%s3 + $0x80] sm:$0xf]
      %v3234 = vld [vmem:[%s3 + $0x84] sm:$0xf]
      %v3235 = vld [vmem:[%s3 + $0x88] sm:$0xf]
      %v3236 = vld [vmem:[%s3 + $0x8c] sm:$0xf]
      %v3237 = vld [vmem:[%s3 + $0x90] sm:$0xf]
      %v3238 = vld [vmem:[%s3 + $0x94] sm:$0xf]
      %v3239 = vld [vmem:[%s3 + $0x98] sm:$0xf]
      %v3240 = vld [vmem:[%s3 + $0x9c] sm:$0xf]
      %v3241 = vld [vmem:[%s3 + $0xa0] sm:$0xf]
      %v3242 = vld [vmem:[%s3 + $0xa4] sm:$0xf]
      %v3243 = vld [vmem:[%s3 + $0xa8] sm:$0xf]
      %v3244 = vld [vmem:[%s3 + $0xac] sm:$0xf]
      %v3245 = vld [vmem:[%s3 + $0xb0] sm:$0xf]
      %v3246 = vld [vmem:[%s3 + $0xb4] sm:$0xf]
      %v3247 = vld [vmem:[%s3 + $0xb8] sm:$0xf]
      %v3248 = vld [vmem:[%s3 + $0xbc] sm:$0xf]
      %v3249 = vld [vmem:[%s3 + $0xc0] sm:$0xf]
      %v3250 = vld [vmem:[%s3 + $0xc4] sm:$0xf]
      %v3251 = vld [vmem:[%s3 + $0xc8] sm:$0xf]
      %v3252 = vld [vmem:[%s3 + $0xcc] sm:$0xf]
      %v3253 = vld [vmem:[%s3 + $0xd0] sm:$0xf]
      %v3254 = vld [vmem:[%s3 + $0xd4] sm:$0xf]
      %v3255 = vld [vmem:[%s3 + $0xd8] sm:$0xf]
      %v3256 = vld [vmem:[%s3 + $0xdc] sm:$0xf]
      %v3257 = vld [vmem:[%s3 + $0xe0] sm:$0xf]
      %v3258 = vld [vmem:[%s3 + $0xe4] sm:$0xf]
      %v3259 = vld [vmem:[%s3 + $0xe8] sm:$0xf]
      %v3260 = vld [vmem:[%s3 + $0xec] sm:$0xf]
      %v3261 = vld [vmem:[%s3 + $0xf0] sm:$0xf]
      %v3262 = vld [vmem:[%s3 + $0xf4] sm:$0xf]
      %v3263 = vld [vmem:[%s3 + $0xf8] sm:$0xf]
      %v3264 = vld [vmem:[%s3 + $0xfc] sm:$0xf]
      %v3265 = vld [vmem:[%s3 + $0x100] sm:$0xf]
      %v3266 = vld [vmem:[%s3 + $0x104] sm:$0xf]
      %v3267 = vld [vmem:[%s3 + $0x108] sm:$0xf]
      %v3268 = vld [vmem:[%s3 + $0x10c] sm:$0xf]
      %v3269 = vld [vmem:[%s3 + $0x110] sm:$0xf]
      %v3270 = vld [vmem:[%s3 + $0x114] sm:$0xf]
      %v3271 = vld [vmem:[%s3 + $0x118] sm:$0xf]
      %v3272 = vld [vmem:[%s3 + $0x11c] sm:$0xf]
      %v3273 = vld [vmem:[%s3 + $0x120] sm:$0xf]
      %v3274 = vld [vmem:[%s3 + $0x124] sm:$0xf]
      %v3275 = vld [vmem:[%s3 + $0x128] sm:$0xf]
      %v3276 = vld [vmem:[%s3 + $0x12c] sm:$0xf]
      %v3277 = vld [vmem:[%s3 + $0x130] sm:$0xf]
      %v3278 = vld [vmem:[%s3 + $0x134] sm:$0xf]
      %v3279 = vld [vmem:[%s3 + $0x138] sm:$0xf]
      %v3280 = vld [vmem:[%s3 + $0x13c] sm:$0xf]
      %v3281 = vld [vmem:[%s3 + $0x140] sm:$0xf]
      %v3282 = vld [vmem:[%s3 + $0x144] sm:$0xf]
      %v3283 = vld [vmem:[%s3 + $0x148] sm:$0xf]
      %v3284 = vld [vmem:[%s3 + $0x14c] sm:$0xf]
      %v3285 = vld [vmem:[%s3 + $0x150] sm:$0xf]
      %v3286 = vld [vmem:[%s3 + $0x154] sm:$0xf]
      %v3287 = vld [vmem:[%s3 + $0x158] sm:$0xf]
      %v3288 = vld [vmem:[%s3 + $0x15c] sm:$0xf]
      %v3289 = vld [vmem:[%s3 + $0x160] sm:$0xf]
      %v3290 = vld [vmem:[%s3 + $0x164] sm:$0xf]
      %v3291 = vld [vmem:[%s3 + $0x168] sm:$0xf]
      %v3292 = vld [vmem:[%s3 + $0x16c] sm:$0xf]
      %v3293 = vld [vmem:[%s3 + $0x170] sm:$0xf]
      %v3294 = vld [vmem:[%s3 + $0x174] sm:$0xf]
      %v3295 = vld [vmem:[%s3 + $0x178] sm:$0xf]
      %v3296 = vld [vmem:[%s3 + $0x17c] sm:$0xf]
      %v3297 = vld [vmem:[%s3 + $0x180] sm:$0xf]
      %v3298 = vld [vmem:[%s3 + $0x184] sm:$0xf]
      %v3299 = vld [vmem:[%s3 + $0x188] sm:$0xf]
      %v3300 = vld [vmem:[%s3 + $0x18c] sm:$0xf]
      %v3301 = vld [vmem:[%s3 + $0x190] sm:$0xf]
      %v3302 = vld [vmem:[%s3 + $0x194] sm:$0xf]
      %v3303 = vld [vmem:[%s3 + $0x198] sm:$0xf]
      %v3304 = vld [vmem:[%s3 + $0x19c] sm:$0xf]
      %v3305 = vld [vmem:[%s3 + $0x1a0] sm:$0xf]
      %v3306 = vld [vmem:[%s3 + $0x1a4] sm:$0xf]
      %v3307 = vld [vmem:[%s3 + $0x1a8] sm:$0xf]
      %v3308 = vld [vmem:[%s3 + $0x1ac] sm:$0xf]
      %v3309 = vld [vmem:[%s3 + $0x1b0] sm:$0xf]
      %v3310 = vld [vmem:[%s3 + $0x1b4] sm:$0xf]
      %v3311 = vld [vmem:[%s3 + $0x1b8] sm:$0xf]
      %v3312 = vld [vmem:[%s3 + $0x1bc] sm:$0xf]
      %v3313 = vld [vmem:[%s3 + $0x1c0] sm:$0xf]
      %v3314 = vld [vmem:[%s3 + $0x1c4] sm:$0xf]
      %v3315 = vld [vmem:[%s3 + $0x1c8] sm:$0xf]
      %v3316 = vld [vmem:[%s3 + $0x1cc] sm:$0xf]
      %v3317 = vld [vmem:[%s3 + $0x1d0] sm:$0xf]
      %v3318 = vld [vmem:[%s3 + $0x1d4] sm:$0xf]
      %v3319 = vld [vmem:[%s3 + $0x1d8] sm:$0xf]
      %v3320 = vld [vmem:[%s3 + $0x1dc] sm:$0xf]
      %v3321 = vld [vmem:[%s3 + $0x1e0] sm:$0xf]
      %v3322 = vld [vmem:[%s3 + $0x1e4] sm:$0xf]
      %v3323 = vld [vmem:[%s3 + $0x1e8] sm:$0xf]
      %v3324 = vld [vmem:[%s3 + $0x1ec] sm:$0xf]
      %v3325 = vld [vmem:[%s3 + $0x1f0] sm:$0xf]
      %v3326 = vld [vmem:[%s3 + $0x1f4] sm:$0xf]
      %v3327 = vld [vmem:[%s3 + $0x1f8] sm:$0xf]
      %v3328 = vld [vmem:[%s3 + $0x1fc] sm:$0xf]
      %v3329 = vld [vmem:[%s3 + $0x200] sm:$0xf]
      %v3330 = vld [vmem:[%s3 + $0x204] sm:$0xf]
      %v3331 = vld [vmem:[%s3 + $0x208] sm:$0xf]
      %v3332 = vld [vmem:[%s3 + $0x20c] sm:$0xf]
      %v3333 = vld [vmem:[%s3 + $0x210] sm:$0xf]
      %v3334 = vld [vmem:[%s3 + $0x214] sm:$0xf]
      %v3335 = vld [vmem:[%s3 + $0x218] sm:$0xf]
      %v3336 = vld [vmem:[%s3 + $0x21c] sm:$0xf]
      %v3337 = vld [vmem:[%s3 + $0x220] sm:$0xf]
      %v3338 = vld [vmem:[%s3 + $0x224] sm:$0xf]
      %v3339 = vld [vmem:[%s3 + $0x228] sm:$0xf]
      %v3340 = vld [vmem:[%s3 + $0x22c] sm:$0xf]
      %v3341 = vld [vmem:[%s3 + $0x230] sm:$0xf]
      %v3342 = vld [vmem:[%s3 + $0x234] sm:$0xf]
      %v3343 = vld [vmem:[%s3 + $0x238] sm:$0xf]
      %v3344 = vld [vmem:[%s3 + $0x23c] sm:$0xf]
      %v3489 = vunpack.c.l.b16 %v3201
      %v3490 = vunpack.c.l.b16 %v3202
      %v3491 = vunpack.c.l.b16 %v3203
      %v3492 = vunpack.c.l.b16 %v3204
      %v3493 = vunpack.c.l.b16 %v3205
      %v3494 = vunpack.c.l.b16 %v3206
      %v3495 = vunpack.c.l.b16 %v3207
      %v3496 = vunpack.c.l.b16 %v3208
      %v3497 = vunpack.c.l.b16 %v3209
      %v3498 = vunpack.c.l.b16 %v3210
      %v3499 = vunpack.c.l.b16 %v3211
      %v3500 = vunpack.c.l.b16 %v3212
      %v3501 = vunpack.c.l.b16 %v3213
      %v3502 = vunpack.c.l.b16 %v3214
      %v3503 = vunpack.c.l.b16 %v3215
      %v3504 = vunpack.c.l.b16 %v3216
      %v3505 = vunpack.c.l.b16 %v3217
      %v3506 = vunpack.c.l.b16 %v3218
      %v3507 = vunpack.c.l.b16 %v3219
      %v3508 = vunpack.c.l.b16 %v3220
      %v3509 = vunpack.c.l.b16 %v3221
      %v3510 = vunpack.c.l.b16 %v3222
      %v3511 = vunpack.c.l.b16 %v3223
      %v3512 = vunpack.c.l.b16 %v3224
      %v3513 = vunpack.c.l.b16 %v3225
      %v3514 = vunpack.c.l.b16 %v3226
      %v3515 = vunpack.c.l.b16 %v3227
      %v3516 = vunpack.c.l.b16 %v3228
      %v3517 = vunpack.c.l.b16 %v3229
      %v3518 = vunpack.c.l.b16 %v3230
      %v3519 = vunpack.c.l.b16 %v3231
      %v3520 = vunpack.c.l.b16 %v3232
      %v3521 = vunpack.c.l.b16 %v3233
      %v3522 = vunpack.c.l.b16 %v3234
      %v3523 = vunpack.c.l.b16 %v3235
      %v3524 = vunpack.c.l.b16 %v3236
      %v3525 = vunpack.c.l.b16 %v3237
      %v3526 = vunpack.c.l.b16 %v3238
      %v3527 = vunpack.c.l.b16 %v3239
      %v3528 = vunpack.c.l.b16 %v3240
      %v3529 = vunpack.c.l.b16 %v3241
      %v3530 = vunpack.c.l.b16 %v3242
      %v3531 = vunpack.c.l.b16 %v3243
      %v3532 = vunpack.c.l.b16 %v3244
      %v3533 = vunpack.c.l.b16 %v3245
      %v3534 = vunpack.c.l.b16 %v3246
      %v3535 = vunpack.c.l.b16 %v3247
      %v3536 = vunpack.c.l.b16 %v3248
      %v3537 = vunpack.c.l.b16 %v3249
      %v3538 = vunpack.c.l.b16 %v3250
      %v3539 = vunpack.c.l.b16 %v3251
      %v3540 = vunpack.c.l.b16 %v3252
      %v3541 = vunpack.c.l.b16 %v3253
      %v3542 = vunpack.c.l.b16 %v3254
      %v3543 = vunpack.c.l.b16 %v3255
      %v3544 = vunpack.c.l.b16 %v3256
      %v3545 = vunpack.c.l.b16 %v3257
      %v3546 = vunpack.c.l.b16 %v3258
      %v3547 = vunpack.c.l.b16 %v3259
      %v3548 = vunpack.c.l.b16 %v3260
      %v3549 = vunpack.c.l.b16 %v3261
      %v3550 = vunpack.c.l.b16 %v3262
      %v3551 = vunpack.c.l.b16 %v3263
      %v3552 = vunpack.c.l.b16 %v3264
      %v3553 = vunpack.c.l.b16 %v3265
      %v3554 = vunpack.c.l.b16 %v3266
      %v3555 = vunpack.c.l.b16 %v3267
      %v3556 = vunpack.c.l.b16 %v3268
      %v3557 = vunpack.c.l.b16 %v3269
      %v3558 = vunpack.c.l.b16 %v3270
      %v3559 = vunpack.c.l.b16 %v3271
      %v3560 = vunpack.c.l.b16 %v3272
      %v3561 = vunpack.c.l.b16 %v3273
      %v3562 = vunpack.c.l.b16 %v3274
      %v3563 = vunpack.c.l.b16 %v3275
      %v3564 = vunpack.c.l.b16 %v3276
      %v3565 = vunpack.c.l.b16 %v3277
      %v3566 = vunpack.c.l.b16 %v3278
      %v3567 = vunpack.c.l.b16 %v3279
      %v3568 = vunpack.c.l.b16 %v3280
      %v3569 = vunpack.c.l.b16 %v3281
      %v3570 = vunpack.c.l.b16 %v3282
      %v3571 = vunpack.c.l.b16 %v3283
      %v3572 = vunpack.c.l.b16 %v3284
      %v3573 = vunpack.c.l.b16 %v3285
      %v3574 = vunpack.c.l.b16 %v3286
      %v3575 = vunpack.c.l.b16 %v3287
      %v3576 = vunpack.c.l.b16 %v3288
      %v3577 = vunpack.c.l.b16 %v3289
      %v3578 = vunpack.c.l.b16 %v3290
      %v3579 = vunpack.c.l.b16 %v3291
      %v3580 = vunpack.c.l.b16 %v3292
      %v3581 = vunpack.c.l.b16 %v3293
      %v3582 = vunpack.c.l.b16 %v3294
      %v3583 = vunpack.c.l.b16 %v3295
      %v3584 = vunpack.c.l.b16 %v3296
      %v3585 = vunpack.c.l.b16 %v3297
      %v3586 = vunpack.c.l.b16 %v3298
      %v3587 = vunpack.c.l.b16 %v3299
      %v3588 = vunpack.c.l.b16 %v3300
      %v3589 = vunpack.c.l.b16 %v3301
      %v3590 = vunpack.c.l.b16 %v3302
      %v3591 = vunpack.c.l.b16 %v3303
      %v3592 = vunpack.c.l.b16 %v3304
      %v3593 = vunpack.c.l.b16 %v3305
      %v3594 = vunpack.c.l.b16 %v3306
      %v3595 = vunpack.c.l.b16 %v3307
      %v3596 = vunpack.c.l.b16 %v3308
      %v3597 = vunpack.c.l.b16 %v3309
      %v3598 = vunpack.c.l.b16 %v3310
      %v3599 = vunpack.c.l.b16 %v3311
      %v3600 = vunpack.c.l.b16 %v3312
      %v3601 = vunpack.c.l.b16 %v3313
      %v3602 = vunpack.c.l.b16 %v3314
      %v3603 = vunpack.c.l.b16 %v3315
      %v3604 = vunpack.c.l.b16 %v3316
      %v3605 = vunpack.c.l.b16 %v3317
      %v3606 = vunpack.c.l.b16 %v3318
      %v3607 = vunpack.c.l.b16 %v3319
      %v3608 = vunpack.c.l.b16 %v3320
      %v3609 = vunpack.c.l.b16 %v3321
      %v3610 = vunpack.c.l.b16 %v3322
      %v3611 = vunpack.c.l.b16 %v3323
      %v3612 = vunpack.c.l.b16 %v3324
      %v3613 = vunpack.c.l.b16 %v3325
      %v3614 = vunpack.c.l.b16 %v3326
      %v3615 = vunpack.c.l.b16 %v3327
      %v3616 = vunpack.c.l.b16 %v3328
      %v3617 = vunpack.c.l.b16 %v3329
      %v3618 = vunpack.c.l.b16 %v3330
      %v3619 = vunpack.c.l.b16 %v3331
      %v3620 = vunpack.c.l.b16 %v3332
      %v3621 = vunpack.c.l.b16 %v3333
      %v3622 = vunpack.c.l.b16 %v3334
      %v3623 = vunpack.c.l.b16 %v3335
      %v3624 = vunpack.c.l.b16 %v3336
      %v3625 = vunpack.c.l.b16 %v3337
      %v3626 = vunpack.c.l.b16 %v3338
      %v3627 = vunpack.c.l.b16 %v3339
      %v3628 = vunpack.c.l.b16 %v3340
      %v3629 = vunpack.c.l.b16 %v3341
      %v3630 = vunpack.c.l.b16 %v3342
      %v3631 = vunpack.c.l.b16 %v3343
      %v3632 = vunpack.c.l.b16 %v3344
      %v3633 = vpack.c.b16 %v3490, %v3489
      %v3634 = vpack.c.b16 %v3492, %v3491
      %v3635 = vpack.c.b16 %v3494, %v3493
      %v3636 = vpack.c.b16 %v3496, %v3495
      %v3637 = vpack.c.b16 %v3498, %v3497
      %v3638 = vpack.c.b16 %v3500, %v3499
      %v3639 = vpack.c.b16 %v3502, %v3501
      %v3640 = vpack.c.b16 %v3504, %v3503
      %v3641 = vpack.c.b16 %v3506, %v3505
      %v3642 = vpack.c.b16 %v3508, %v3507
      %v3643 = vpack.c.b16 %v3510, %v3509
      %v3644 = vpack.c.b16 %v3512, %v3511
      %v3645 = vpack.c.b16 %v3514, %v3513
      %v3646 = vpack.c.b16 %v3516, %v3515
      %v3647 = vpack.c.b16 %v3518, %v3517
      %v3648 = vpack.c.b16 %v3520, %v3519
      %v3649 = vpack.c.b16 %v3522, %v3521
      %v3650 = vpack.c.b16 %v3524, %v3523
      %v3651 = vpack.c.b16 %v3526, %v3525
      %v3652 = vpack.c.b16 %v3528, %v3527
      %v3653 = vpack.c.b16 %v3530, %v3529
      %v3654 = vpack.c.b16 %v3532, %v3531
      %v3655 = vpack.c.b16 %v3534, %v3533
      %v3656 = vpack.c.b16 %v3536, %v3535
      %v3657 = vpack.c.b16 %v3538, %v3537
      %v3658 = vpack.c.b16 %v3540, %v3539
      %v3659 = vpack.c.b16 %v3542, %v3541
      %v3660 = vpack.c.b16 %v3544, %v3543
      %v3661 = vpack.c.b16 %v3546, %v3545
      %v3662 = vpack.c.b16 %v3548, %v3547
      %v3663 = vpack.c.b16 %v3550, %v3549
      %v3664 = vpack.c.b16 %v3552, %v3551
      %v3665 = vpack.c.b16 %v3554, %v3553
      %v3666 = vpack.c.b16 %v3556, %v3555
      %v3667 = vpack.c.b16 %v3558, %v3557
      %v3668 = vpack.c.b16 %v3560, %v3559
      %v3669 = vpack.c.b16 %v3562, %v3561
      %v3670 = vpack.c.b16 %v3564, %v3563
      %v3671 = vpack.c.b16 %v3566, %v3565
      %v3672 = vpack.c.b16 %v3568, %v3567
      %v3673 = vpack.c.b16 %v3570, %v3569
      %v3674 = vpack.c.b16 %v3572, %v3571
      %v3675 = vpack.c.b16 %v3574, %v3573
      %v3676 = vpack.c.b16 %v3576, %v3575
      %v3677 = vpack.c.b16 %v3578, %v3577
      %v3678 = vpack.c.b16 %v3580, %v3579
      %v3679 = vpack.c.b16 %v3582, %v3581
      %v3680 = vpack.c.b16 %v3584, %v3583
      %v3681 = vpack.c.b16 %v3586, %v3585
      %v3682 = vpack.c.b16 %v3588, %v3587
      %v3683 = vpack.c.b16 %v3590, %v3589
      %v3684 = vpack.c.b16 %v3592, %v3591
      %v3685 = vpack.c.b16 %v3594, %v3593
      %v3686 = vpack.c.b16 %v3596, %v3595
      %v3687 = vpack.c.b16 %v3598, %v3597
      %v3688 = vpack.c.b16 %v3600, %v3599
      %v3689 = vpack.c.b16 %v3602, %v3601
      %v3690 = vpack.c.b16 %v3604, %v3603
      %v3691 = vpack.c.b16 %v3606, %v3605
      %v3692 = vpack.c.b16 %v3608, %v3607
      %v3693 = vpack.c.b16 %v3610, %v3609
      %v3694 = vpack.c.b16 %v3612, %v3611
      %v3695 = vpack.c.b16 %v3614, %v3613
      %v3696 = vpack.c.b16 %v3616, %v3615
      %v3697 = vpack.c.b16 %v3618, %v3617
      %v3698 = vpack.c.b16 %v3620, %v3619
      %v3699 = vpack.c.b16 %v3622, %v3621
      %v3700 = vpack.c.b16 %v3624, %v3623
      %v3701 = vpack.c.b16 %v3626, %v3625
      %v3702 = vpack.c.b16 %v3628, %v3627
      %v3703 = vpack.c.b16 %v3630, %v3629
      %v3704 = vpack.c.b16 %v3632, %v3631
      %3777 = vmatprep.subr.bf16.mxu0 0
      %3778 = vmatpush1.bf16.msra.mxu0 %v3633
      %3779 = vmatprep.subr.bf16.mxu0 0
      %3780 = vmatpush1.bf16.msra.mxu0 %v3634
      %3781 = vmatprep.subr.bf16.mxu0 0
      %3782 = vmatpush1.bf16.msra.mxu0 %v3635
      %3783 = vmatprep.subr.bf16.mxu0 0
      %3784 = vmatpush1.bf16.msra.mxu0 %v3636
      %3785 = vmatprep.subr.bf16.mxu0 0
      %3786 = vmatpush1.bf16.msra.mxu0 %v3637
      %3787 = vmatprep.subr.bf16.mxu0 0
      %3788 = vmatpush1.bf16.msra.mxu0 %v3638
      %3789 = vmatprep.subr.bf16.mxu0 0
      %3790 = vmatpush1.bf16.msra.mxu0 %v3639
      %3791 = vmatprep.subr.bf16.mxu0 0
      %3792 = vmatpush1.bf16.msra.mxu0 %v3640
      %3793 = vmatprep.subr.bf16.mxu0 0
      %3794 = vmatpush1.bf16.msra.mxu0 %v3641
      %3795 = vmatprep.subr.bf16.mxu0 0
      %3796 = vmatpush1.bf16.msra.mxu0 %v3642
      %3797 = vmatprep.subr.bf16.mxu0 0
      %3798 = vmatpush1.bf16.msra.mxu0 %v3643
      %3799 = vmatprep.subr.bf16.mxu0 0
      %3800 = vmatpush1.bf16.msra.mxu0 %v3644
      %3801 = vmatprep.subr.bf16.mxu0 0
      %3802 = vmatpush1.bf16.msra.mxu0 %v3645
      %3803 = vmatprep.subr.bf16.mxu0 0
      %3804 = vmatpush1.bf16.msra.mxu0 %v3646
      %3805 = vmatprep.subr.bf16.mxu0 0
      %3806 = vmatpush1.bf16.msra.mxu0 %v3647
      %3807 = vmatprep.subr.bf16.mxu0 0
      %3808 = vmatpush1.bf16.msra.mxu0 %v3648
      %3809 = vmatprep.mubr.bf16.mxu0 %v3058
      %3810 = vmatmul.mubr.bf16.gmra.mrb[0].mxu0 %v3057
      %v3811 = vpop.f32.mrb[0].mxu0
      %v3812 = vadd.f32 0.0, %v3811
      %v3813 = vpop.f32.mrb[0].mxu0
      %v3814 = vpop.f32.mrb[0].mxu0
      %v3815 = vadd.f32 0.0, %v3814
      %v3816 = vpop.f32.mrb[0].mxu0
      %3817 = vmatprep.mubr.bf16.mxu0 %v3067
      %3818 = vmatmul.mubr.bf16.gmra.mrb[0].mxu0 %v3066
      %v3819 = vpop.f32.mrb[0].mxu0
      %v3820 = vadd.f32 0.0, %v3819
      %v3821 = vpop.f32.mrb[0].mxu0
      %v3822 = vpop.f32.mrb[0].mxu0
      %v3823 = vadd.f32 0.0, %v3822
      %v3824 = vpop.f32.mrb[0].mxu0
      %3825 = vmatprep.mubr.bf16.mxu0 %v3076
      %3826 = vmatmul.mubr.bf16.gmra.mrb[0].mxu0 %v3075
      %v3827 = vpop.f32.mrb[0].mxu0
      %v3828 = vadd.f32 0.0, %v3827
      %v3829 = vpop.f32.mrb[0].mxu0
      %v3830 = vpop.f32.mrb[0].mxu0
      %v3831 = vadd.f32 0.0, %v3830
      %v3832 = vpop.f32.mrb[0].mxu0
      %3833 = vmatprep.mubr.bf16.mxu0 %v3085
      %3834 = vmatmul.mubr.bf16.gmra.mrb[0].mxu0 %v3084
      %v3835 = vpop.f32.mrb[0].mxu0
      %v3836 = vadd.f32 0.0, %v3835
      %v3837 = vpop.f32.mrb[0].mxu0
      %v3838 = vpop.f32.mrb[0].mxu0
      %v3839 = vadd.f32 0.0, %v3838
      %v3840 = vpop.f32.mrb[0].mxu0
      %3841 = vmatprep.mubr.bf16.mxu0 %v3094
      %3842 = vmatmul.mubr.bf16.gmra.mrb[0].mxu0 %v3093
      %v3843 = vpop.f32.mrb[0].mxu0
      %v3844 = vadd.f32 0.0, %v3843
      %v3845 = vpop.f32.mrb[0].mxu0
      %v3846 = vpop.f32.mrb[0].mxu0
      %v3847 = vadd.f32 0.0, %v3846
      %v3848 = vpop.f32.mrb[0].mxu0
      %3849 = vmatprep.mubr.bf16.mxu0 %v3103
      %3850 = vmatmul.mubr.bf16.gmra.mrb[0].mxu0 %v3102
      %v3851 = vpop.f32.mrb[0].mxu0
      %v3852 = vadd.f32 0.0, %v3851
      %v3853 = vpop.f32.mrb[0].mxu0
      %v3854 = vpop.f32.mrb[0].mxu0
      %v3855 = vadd.f32 0.0, %v3854
      %v3856 = vpop.f32.mrb[0].mxu0
      %3857 = vmatprep.mubr.bf16.mxu0 %v3112
      %3858 = vmatmul.mubr.bf16.gmra.mrb[0].mxu0 %v3111
      %v3859 = vpop.f32.mrb[0].mxu0
      %v3860 = vadd.f32 0.0, %v3859
      %v3861 = vpop.f32.mrb[0].mxu0
      %v3862 = vpop.f32.mrb[0].mxu0
      %v3863 = vadd.f32 0.0, %v3862
      %v3864 = vpop.f32.mrb[0].mxu0
      %3865 = vmatprep.mubr.bf16.mxu0 %v3121
      %3866 = vmatmul.mubr.bf16.gmra.mrb[0].mxu0 %v3120
      %v3867 = vpop.f32.mrb[0].mxu0
      %v3868 = vadd.f32 0.0, %v3867
      %v3869 = vpop.f32.mrb[0].mxu0
      %v3870 = vpop.f32.mrb[0].mxu0
      %v3871 = vadd.f32 0.0, %v3870
      %v3872 = vpop.f32.mrb[0].mxu0
      %3873 = vmatprep.mubr.bf16.mxu0 %v3130
      %3874 = vmatmul.mubr.bf16.gmra.mrb[0].mxu0 %v3129
      %v3875 = vpop.f32.mrb[0].mxu0
      %v3876 = vadd.f32 0.0, %v3875
      %v3877 = vpop.f32.mrb[0].mxu0
      %v3878 = vpop.f32.mrb[0].mxu0
      %v3879 = vadd.f32 0.0, %v3878
      %v3880 = vpop.f32.mrb[0].mxu0
      %3881 = vmatprep.mubr.bf16.mxu0 %v3139
      %3882 = vmatmul.mubr.bf16.gmra.mrb[0].mxu0 %v3138
      %v3883 = vpop.f32.mrb[0].mxu0
      %v3884 = vadd.f32 0.0, %v3883
      %v3885 = vpop.f32.mrb[0].mxu0
      %v3886 = vpop.f32.mrb[0].mxu0
      %v3887 = vadd.f32 0.0, %v3886
      %v3888 = vpop.f32.mrb[0].mxu0
      %3889 = vmatprep.mubr.bf16.mxu0 %v3148
      %3890 = vmatmul.mubr.bf16.gmra.mrb[0].mxu0 %v3147
      %v3891 = vpop.f32.mrb[0].mxu0
      %v3892 = vadd.f32 0.0, %v3891
      %v3893 = vpop.f32.mrb[0].mxu0
      %v3894 = vpop.f32.mrb[0].mxu0
      %v3895 = vadd.f32 0.0, %v3894
      %v3896 = vpop.f32.mrb[0].mxu0
      %3897 = vmatprep.mubr.bf16.mxu0 %v3157
      %3898 = vmatmul.mubr.bf16.gmra.mrb[0].mxu0 %v3156
      %v3899 = vpop.f32.mrb[0].mxu0
      %v3900 = vadd.f32 0.0, %v3899
      %v3901 = vpop.f32.mrb[0].mxu0
      %v3902 = vpop.f32.mrb[0].mxu0
      %v3903 = vadd.f32 0.0, %v3902
      %v3904 = vpop.f32.mrb[0].mxu0
      %3905 = vmatprep.mubr.bf16.mxu0 %v3166
      %3906 = vmatmul.mubr.bf16.gmra.mrb[0].mxu0 %v3165
      %v3907 = vpop.f32.mrb[0].mxu0
      %v3908 = vadd.f32 0.0, %v3907
      %v3909 = vpop.f32.mrb[0].mxu0
      %v3910 = vpop.f32.mrb[0].mxu0
      %v3911 = vadd.f32 0.0, %v3910
      %v3912 = vpop.f32.mrb[0].mxu0
      %3913 = vmatprep.mubr.bf16.mxu0 %v3175
      %3914 = vmatmul.mubr.bf16.gmra.mrb[0].mxu0 %v3174
      %v3915 = vpop.f32.mrb[0].mxu0
      %v3916 = vadd.f32 0.0, %v3915
      %v3917 = vpop.f32.mrb[0].mxu0
      %v3918 = vpop.f32.mrb[0].mxu0
      %v3919 = vadd.f32 0.0, %v3918
      %v3920 = vpop.f32.mrb[0].mxu0
      %3921 = vmatprep.mubr.bf16.mxu0 %v3184
      %3922 = vmatmul.mubr.bf16.gmra.mrb[0].mxu0 %v3183
      %v3923 = vpop.f32.mrb[0].mxu0
      %v3924 = vadd.f32 0.0, %v3923
      %v3925 = vpop.f32.mrb[0].mxu0
      %v3926 = vpop.f32.mrb[0].mxu0
      %v3927 = vadd.f32 0.0, %v3926
      %v3928 = vpop.f32.mrb[0].mxu0
      %3929 = vmatprep.mubr.bf16.mxu0 %v3193
      %3930 = vmatmul.mubr.bf16.gmra.mrb[0].mxu0 %v3192
      %v3931 = vpop.f32.mrb[0].mxu0
      %v3932 = vadd.f32 0.0, %v3931
      %v3933 = vpop.f32.mrb[0].mxu0
      %v3934 = vpop.f32.mrb[0].mxu0
      %v3935 = vadd.f32 0.0, %v3934
      %v3936 = vpop.f32.mrb[0].mxu0
      %3937 = vdwg.mxu0
      %3938 = vmatprep.subr.bf16.mxu0 0
      %3939 = vmatpush1.bf16.msra.mxu0 %v3649
      %3940 = vmatprep.subr.bf16.mxu0 0
      %3941 = vmatpush1.bf16.msra.mxu0 %v3650
      %3942 = vmatprep.subr.bf16.mxu0 0
      %3943 = vmatpush1.bf16.msra.mxu0 %v3651
      %3944 = vmatprep.subr.bf16.mxu0 0
      %3945 = vmatpush1.bf16.msra.mxu0 %v3652
      %3946 = vmatprep.subr.bf16.mxu0 0
      %3947 = vmatpush1.bf16.msra.mxu0 %v3653
      %3948 = vmatprep.subr.bf16.mxu0 0
      %3949 = vmatpush1.bf16.msra.mxu0 %v3654
      %3950 = vmatprep.subr.bf16.mxu0 0
      %3951 = vmatpush1.bf16.msra.mxu0 %v3655
      %3952 = vmatprep.subr.bf16.mxu0 0
      %3953 = vmatpush1.bf16.msra.mxu0 %v3656
      %3954 = vmatprep.subr.bf16.mxu0 0
      %3955 = vmatpush1.bf16.msra.mxu0 %v3657
      %3956 = vmatprep.subr.bf16.mxu0 0
      %3957 = vmatpush1.bf16.msra.mxu0 %v3658
      %3958 = vmatprep.subr.bf16.mxu0 0
      %3959 = vmatpush1.bf16.msra.mxu0 %v3659
      %3960 = vmatprep.subr.bf16.mxu0 0
      %3961 = vmatpush1.bf16.msra.mxu0 %v3660
      %3962 = vmatprep.subr.bf16.mxu0 0
      %3963 = vmatpush1.bf16.msra.mxu0 %v3661
      %3964 = vmatprep.subr.bf16.mxu0 0
      %3965 = vmatpush1.bf16.msra.mxu0 %v3662
      %3966 = vmatprep.subr.bf16.mxu0 0
      %3967 = vmatpush1.bf16.msra.mxu0 %v3663
      %3968 = vmatprep.subr.bf16.mxu0 0
      %3969 = vmatpush1.bf16.msra.mxu0 %v3664
      %3970 = vmatprep.mubr.bf16.mxu0 %v3060
      %3971 = vmatmul.mubr.bf16.gmra.mrb[0].mxu0 %v3059
      %v3972 = vpop.f32.mrb[0].mxu0
      %v3973 = vadd.f32 %v3812, %v3972
      %v3974 = vpop.f32.mrb[0].mxu0
      %v3975 = vpop.f32.mrb[0].mxu0
      %v3976 = vadd.f32 %v3815, %v3975
      %v3977 = vpop.f32.mrb[0].mxu0
      %3978 = vmatprep.mubr.bf16.mxu0 %v3069
      %3979 = vmatmul.mubr.bf16.gmra.mrb[0].mxu0 %v3068
      %v3980 = vpop.f32.mrb[0].mxu0
      %v3981 = vadd.f32 %v3820, %v3980
      %v3982 = vpop.f32.mrb[0].mxu0
      %v3983 = vpop.f32.mrb[0].mxu0
      %v3984 = vadd.f32 %v3823, %v3983
      %v3985 = vpop.f32.mrb[0].mxu0
      %3986 = vmatprep.mubr.bf16.mxu0 %v3078
      %3987 = vmatmul.mubr.bf16.gmra.mrb[0].mxu0 %v3077
      %v3988 = vpop.f32.mrb[0].mxu0
      %v3989 = vadd.f32 %v3828, %v3988
      %v3990 = vpop.f32.mrb[0].mxu0
      %v3991 = vpop.f32.mrb[0].mxu0
      %v3992 = vadd.f32 %v3831, %v3991
      %v3993 = vpop.f32.mrb[0].mxu0
      %3994 = vmatprep.mubr.bf16.mxu0 %v3087
      %3995 = vmatmul.mubr.bf16.gmra.mrb[0].mxu0 %v3086
      %v3996 = vpop.f32.mrb[0].mxu0
      %v3997 = vadd.f32 %v3836, %v3996
      %v3998 = vpop.f32.mrb[0].mxu0
      %v3999 = vpop.f32.mrb[0].mxu0
      %v4000 = vadd.f32 %v3839, %v3999
      %v4001 = vpop.f32.mrb[0].mxu0
      %4002 = vmatprep.mubr.bf16.mxu0 %v3096
      %4003 = vmatmul.mubr.bf16.gmra.mrb[0].mxu0 %v3095
      %v4004 = vpop.f32.mrb[0].mxu0
      %v4005 = vadd.f32 %v3844, %v4004
      %v4006 = vpop.f32.mrb[0].mxu0
      %v4007 = vpop.f32.mrb[0].mxu0
      %v4008 = vadd.f32 %v3847, %v4007
      %v4009 = vpop.f32.mrb[0].mxu0
      %4010 = vmatprep.mubr.bf16.mxu0 %v3105
      %4011 = vmatmul.mubr.bf16.gmra.mrb[0].mxu0 %v3104
      %v4012 = vpop.f32.mrb[0].mxu0
      %v4013 = vadd.f32 %v3852, %v4012
      %v4014 = vpop.f32.mrb[0].mxu0
      %v4015 = vpop.f32.mrb[0].mxu0
      %v4016 = vadd.f32 %v3855, %v4015
      %v4017 = vpop.f32.mrb[0].mxu0
      %4018 = vmatprep.mubr.bf16.mxu0 %v3114
      %4019 = vmatmul.mubr.bf16.gmra.mrb[0].mxu0 %v3113
      %v4020 = vpop.f32.mrb[0].mxu0
      %v4021 = vadd.f32 %v3860, %v4020
      %v4022 = vpop.f32.mrb[0].mxu0
      %v4023 = vpop.f32.mrb[0].mxu0
      %v4024 = vadd.f32 %v3863, %v4023
      %v4025 = vpop.f32.mrb[0].mxu0
      %4026 = vmatprep.mubr.bf16.mxu0 %v3123
      %4027 = vmatmul.mubr.bf16.gmra.mrb[0].mxu0 %v3122
      %v4028 = vpop.f32.mrb[0].mxu0
      %v4029 = vadd.f32 %v3868, %v4028
      %v4030 = vpop.f32.mrb[0].mxu0
      %v4031 = vpop.f32.mrb[0].mxu0
      %v4032 = vadd.f32 %v3871, %v4031
      %v4033 = vpop.f32.mrb[0].mxu0
      %4034 = vmatprep.mubr.bf16.mxu0 %v3132
      %4035 = vmatmul.mubr.bf16.gmra.mrb[0].mxu0 %v3131
      %v4036 = vpop.f32.mrb[0].mxu0
      %v4037 = vadd.f32 %v3876, %v4036
      %v4038 = vpop.f32.mrb[0].mxu0
      %v4039 = vpop.f32.mrb[0].mxu0
      %v4040 = vadd.f32 %v3879, %v4039
      %v4041 = vpop.f32.mrb[0].mxu0
      %4042 = vmatprep.mubr.bf16.mxu0 %v3141
      %4043 = vmatmul.mubr.bf16.gmra.mrb[0].mxu0 %v3140
      %v4044 = vpop.f32.mrb[0].mxu0
      %v4045 = vadd.f32 %v3884, %v4044
      %v4046 = vpop.f32.mrb[0].mxu0
      %v4047 = vpop.f32.mrb[0].mxu0
      %v4048 = vadd.f32 %v3887, %v4047
      %v4049 = vpop.f32.mrb[0].mxu0
      %4050 = vmatprep.mubr.bf16.mxu0 %v3150
      %4051 = vmatmul.mubr.bf16.gmra.mrb[0].mxu0 %v3149
      %v4052 = vpop.f32.mrb[0].mxu0
      %v4053 = vadd.f32 %v3892, %v4052
      %v4054 = vpop.f32.mrb[0].mxu0
      %v4055 = vpop.f32.mrb[0].mxu0
      %v4056 = vadd.f32 %v3895, %v4055
      %v4057 = vpop.f32.mrb[0].mxu0
      %4058 = vmatprep.mubr.bf16.mxu0 %v3159
      %4059 = vmatmul.mubr.bf16.gmra.mrb[0].mxu0 %v3158
      %v4060 = vpop.f32.mrb[0].mxu0
      %v4061 = vadd.f32 %v3900, %v4060
      %v4062 = vpop.f32.mrb[0].mxu0
      %v4063 = vpop.f32.mrb[0].mxu0
      %v4064 = vadd.f32 %v3903, %v4063
      %v4065 = vpop.f32.mrb[0].mxu0
      %4066 = vmatprep.mubr.bf16.mxu0 %v3168
      %4067 = vmatmul.mubr.bf16.gmra.mrb[0].mxu0 %v3167
      %v4068 = vpop.f32.mrb[0].mxu0
      %v4069 = vadd.f32 %v3908, %v4068
      %v4070 = vpop.f32.mrb[0].mxu0
      %v4071 = vpop.f32.mrb[0].mxu0
      %v4072 = vadd.f32 %v3911, %v4071
      %v4073 = vpop.f32.mrb[0].mxu0
      %4074 = vmatprep.mubr.bf16.mxu0 %v3177
      %4075 = vmatmul.mubr.bf16.gmra.mrb[0].mxu0 %v3176
      %v4076 = vpop.f32.mrb[0].mxu0
      %v4077 = vadd.f32 %v3916, %v4076
      %v4078 = vpop.f32.mrb[0].mxu0
      %v4079 = vpop.f32.mrb[0].mxu0
      %v4080 = vadd.f32 %v3919, %v4079
      %v4081 = vpop.f32.mrb[0].mxu0
      %4082 = vmatprep.mubr.bf16.mxu0 %v3186
      %4083 = vmatmul.mubr.bf16.gmra.mrb[0].mxu0 %v3185
      %v4084 = vpop.f32.mrb[0].mxu0
      %v4085 = vadd.f32 %v3924, %v4084
      %v4086 = vpop.f32.mrb[0].mxu0
      %v4087 = vpop.f32.mrb[0].mxu0
      %v4088 = vadd.f32 %v3927, %v4087
      %v4089 = vpop.f32.mrb[0].mxu0
      %4090 = vmatprep.mubr.bf16.mxu0 %v3195
      %4091 = vmatmul.mubr.bf16.gmra.mrb[0].mxu0 %v3194
      %v4092 = vpop.f32.mrb[0].mxu0
      %v4093 = vadd.f32 %v3932, %v4092
      %v4094 = vpop.f32.mrb[0].mxu0
      %v4095 = vpop.f32.mrb[0].mxu0
      %v4096 = vadd.f32 %v3935, %v4095
      %v4097 = vpop.f32.mrb[0].mxu0
      %4098 = vdwg.mxu0
      %4099 = vmatprep.subr.bf16.mxu0 0
      %4100 = vmatpush1.bf16.msra.mxu0 %v3665
      %4101 = vmatprep.subr.bf16.mxu0 0
      %4102 = vmatpush1.bf16.msra.mxu0 %v3666
      %4103 = vmatprep.subr.bf16.mxu0 0
      %4104 = vmatpush1.bf16.msra.mxu0 %v3667
      %4105 = vmatprep.subr.bf16.mxu0 0
      %4106 = vmatpush1.bf16.msra.mxu0 %v3668
      %4107 = vmatprep.subr.bf16.mxu0 0
      %4108 = vmatpush1.bf16.msra.mxu0 %v3669
      %4109 = vmatprep.subr.bf16.mxu0 0
      %4110 = vmatpush1.bf16.msra.mxu0 %v3670
      %4111 = vmatprep.subr.bf16.mxu0 0
      %4112 = vmatpush1.bf16.msra.mxu0 %v3671
      %4113 = vmatprep.subr.bf16.mxu0 0
      %4114 = vmatpush1.bf16.msra.mxu0 %v3672
      %4115 = vmatprep.subr.bf16.mxu0 0
      %4116 = vmatpush1.bf16.msra.mxu0 %v3673
      %4117 = vmatprep.subr.bf16.mxu0 0
      %4118 = vmatpush1.bf16.msra.mxu0 %v3674
      %4119 = vmatprep.subr.bf16.mxu0 0
      %4120 = vmatpush1.bf16.msra.mxu0 %v3675
      %4121 = vmatprep.subr.bf16.mxu0 0
      %4122 = vmatpush1.bf16.msra.mxu0 %v3676
      %4123 = vmatprep.subr.bf16.mxu0 0
      %4124 = vmatpush1.bf16.msra.mxu0 %v3677
      %4125 = vmatprep.subr.bf16.mxu0 0
      %4126 = vmatpush1.bf16.msra.mxu0 %v3678
      %4127 = vmatprep.subr.bf16.mxu0 0
      %4128 = vmatpush1.bf16.msra.mxu0 %v3679
      %4129 = vmatprep.subr.bf16.mxu0 0
      %4130 = vmatpush1.bf16.msra.mxu0 %v3680
      %4131 = vmatprep.mubr.bf16.mxu0 %v3062
      %4132 = vmatmul.mubr.bf16.gmra.mrb[0].mxu0 %v3061
      %v4133 = vpop.f32.mrb[0].mxu0
      %v4134 = vadd.f32 %v3973, %v4133
      %v4135 = vpop.f32.mrb[0].mxu0
      %v4136 = vpop.f32.mrb[0].mxu0
      %v4137 = vadd.f32 %v3976, %v4136
      %v4138 = vpop.f32.mrb[0].mxu0
      %4139 = vmatprep.mubr.bf16.mxu0 %v3071
      %4140 = vmatmul.mubr.bf16.gmra.mrb[0].mxu0 %v3070
      %v4141 = vpop.f32.mrb[0].mxu0
      %v4142 = vadd.f32 %v3981, %v4141
      %v4143 = vpop.f32.mrb[0].mxu0
      %v4144 = vpop.f32.mrb[0].mxu0
      %v4145 = vadd.f32 %v3984, %v4144
      %v4146 = vpop.f32.mrb[0].mxu0
      %4147 = vmatprep.mubr.bf16.mxu0 %v3080
      %4148 = vmatmul.mubr.bf16.gmra.mrb[0].mxu0 %v3079
      %v4149 = vpop.f32.mrb[0].mxu0
      %v4150 = vadd.f32 %v3989, %v4149
      %v4151 = vpop.f32.mrb[0].mxu0
      %v4152 = vpop.f32.mrb[0].mxu0
      %v4153 = vadd.f32 %v3992, %v4152
      %v4154 = vpop.f32.mrb[0].mxu0
      %4155 = vmatprep.mubr.bf16.mxu0 %v3089
      %4156 = vmatmul.mubr.bf16.gmra.mrb[0].mxu0 %v3088
      %v4157 = vpop.f32.mrb[0].mxu0
      %v4158 = vadd.f32 %v3997, %v4157
      %v4159 = vpop.f32.mrb[0].mxu0
      %v4160 = vpop.f32.mrb[0].mxu0
      %v4161 = vadd.f32 %v4000, %v4160
      %v4162 = vpop.f32.mrb[0].mxu0
      %4163 = vmatprep.mubr.bf16.mxu0 %v3098
      %4164 = vmatmul.mubr.bf16.gmra.mrb[0].mxu0 %v3097
      %v4165 = vpop.f32.mrb[0].mxu0
      %v4166 = vadd.f32 %v4005, %v4165
      %v4167 = vpop.f32.mrb[0].mxu0
      %v4168 = vpop.f32.mrb[0].mxu0
      %v4169 = vadd.f32 %v4008, %v4168
      %v4170 = vpop.f32.mrb[0].mxu0
      %4171 = vmatprep.mubr.bf16.mxu0 %v3107
      %4172 = vmatmul.mubr.bf16.gmra.mrb[0].mxu0 %v3106
      %v4173 = vpop.f32.mrb[0].mxu0
      %v4174 = vadd.f32 %v4013, %v4173
      %v4175 = vpop.f32.mrb[0].mxu0
      %v4176 = vpop.f32.mrb[0].mxu0
      %v4177 = vadd.f32 %v4016, %v4176
      %v4178 = vpop.f32.mrb[0].mxu0
      %4179 = vmatprep.mubr.bf16.mxu0 %v3116
      %4180 = vmatmul.mubr.bf16.gmra.mrb[0].mxu0 %v3115
      %v4181 = vpop.f32.mrb[0].mxu0
      %v4182 = vadd.f32 %v4021, %v4181
      %v4183 = vpop.f32.mrb[0].mxu0
      %v4184 = vpop.f32.mrb[0].mxu0
      %v4185 = vadd.f32 %v4024, %v4184
      %v4186 = vpop.f32.mrb[0].mxu0
      %4187 = vmatprep.mubr.bf16.mxu0 %v3125
      %4188 = vmatmul.mubr.bf16.gmra.mrb[0].mxu0 %v3124
      %v4189 = vpop.f32.mrb[0].mxu0
      %v4190 = vadd.f32 %v4029, %v4189
      %v4191 = vpop.f32.mrb[0].mxu0
      %v4192 = vpop.f32.mrb[0].mxu0
      %v4193 = vadd.f32 %v4032, %v4192
      %v4194 = vpop.f32.mrb[0].mxu0
      %4195 = vmatprep.mubr.bf16.mxu0 %v3134
      %4196 = vmatmul.mubr.bf16.gmra.mrb[0].mxu0 %v3133
      %v4197 = vpop.f32.mrb[0].mxu0
      %v4198 = vadd.f32 %v4037, %v4197
      %v4199 = vpop.f32.mrb[0].mxu0
      %v4200 = vpop.f32.mrb[0].mxu0
      %v4201 = vadd.f32 %v4040, %v4200
      %v4202 = vpop.f32.mrb[0].mxu0
      %4203 = vmatprep.mubr.bf16.mxu0 %v3143
      %4204 = vmatmul.mubr.bf16.gmra.mrb[0].mxu0 %v3142
      %v4205 = vpop.f32.mrb[0].mxu0
      %v4206 = vadd.f32 %v4045, %v4205
      %v4207 = vpop.f32.mrb[0].mxu0
      %v4208 = vpop.f32.mrb[0].mxu0
      %v4209 = vadd.f32 %v4048, %v4208
      %v4210 = vpop.f32.mrb[0].mxu0
      %4211 = vmatprep.mubr.bf16.mxu0 %v3152
      %4212 = vmatmul.mubr.bf16.gmra.mrb[0].mxu0 %v3151
      %v4213 = vpop.f32.mrb[0].mxu0
      %v4214 = vadd.f32 %v4053, %v4213
      %v4215 = vpop.f32.mrb[0].mxu0
      %v4216 = vpop.f32.mrb[0].mxu0
      %v4217 = vadd.f32 %v4056, %v4216
      %v4218 = vpop.f32.mrb[0].mxu0
      %4219 = vmatprep.mubr.bf16.mxu0 %v3161
      %4220 = vmatmul.mubr.bf16.gmra.mrb[0].mxu0 %v3160
      %v4221 = vpop.f32.mrb[0].mxu0
      %v4222 = vadd.f32 %v4061, %v4221
      %v4223 = vpop.f32.mrb[0].mxu0
      %v4224 = vpop.f32.mrb[0].mxu0
      %v4225 = vadd.f32 %v4064, %v4224
      %v4226 = vpop.f32.mrb[0].mxu0
      %4227 = vmatprep.mubr.bf16.mxu0 %v3170
      %4228 = vmatmul.mubr.bf16.gmra.mrb[0].mxu0 %v3169
      %v4229 = vpop.f32.mrb[0].mxu0
      %v4230 = vadd.f32 %v4069, %v4229
      %v4231 = vpop.f32.mrb[0].mxu0
      %v4232 = vpop.f32.mrb[0].mxu0
      %v4233 = vadd.f32 %v4072, %v4232
      %v4234 = vpop.f32.mrb[0].mxu0
      %4235 = vmatprep.mubr.bf16.mxu0 %v3179
      %4236 = vmatmul.mubr.bf16.gmra.mrb[0].mxu0 %v3178
      %v4237 = vpop.f32.mrb[0].mxu0
      %v4238 = vadd.f32 %v4077, %v4237
      %v4239 = vpop.f32.mrb[0].mxu0
      %v4240 = vpop.f32.mrb[0].mxu0
      %v4241 = vadd.f32 %v4080, %v4240
      %v4242 = vpop.f32.mrb[0].mxu0
      %4243 = vmatprep.mubr.bf16.mxu0 %v3188
      %4244 = vmatmul.mubr.bf16.gmra.mrb[0].mxu0 %v3187
      %v4245 = vpop.f32.mrb[0].mxu0
      %v4246 = vadd.f32 %v4085, %v4245
      %v4247 = vpop.f32.mrb[0].mxu0
      %v4248 = vpop.f32.mrb[0].mxu0
      %v4249 = vadd.f32 %v4088, %v4248
      %v4250 = vpop.f32.mrb[0].mxu0
      %4251 = vmatprep.mubr.bf16.mxu0 %v3197
      %4252 = vmatmul.mubr.bf16.gmra.mrb[0].mxu0 %v3196
      %v4253 = vpop.f32.mrb[0].mxu0
      %v4254 = vadd.f32 %v4093, %v4253
      %v4255 = vpop.f32.mrb[0].mxu0
      %v4256 = vpop.f32.mrb[0].mxu0
      %v4257 = vadd.f32 %v4096, %v4256
      %v4258 = vpop.f32.mrb[0].mxu0
      %4259 = vdwg.mxu0
      %4260 = vmatprep.subr.bf16.mxu0 0
      %4261 = vmatpush1.bf16.msra.mxu0 %v3681
      %4262 = vmatprep.subr.bf16.mxu0 0
      %4263 = vmatpush1.bf16.msra.mxu0 %v3682
      %4264 = vmatprep.subr.bf16.mxu0 0
      %4265 = vmatpush1.bf16.msra.mxu0 %v3683
      %4266 = vmatprep.subr.bf16.mxu0 0
      %4267 = vmatpush1.bf16.msra.mxu0 %v3684
      %4268 = vmatprep.subr.bf16.mxu0 0
      %4269 = vmatpush1.bf16.msra.mxu0 %v3685
      %4270 = vmatprep.subr.bf16.mxu0 0
      %4271 = vmatpush1.bf16.msra.mxu0 %v3686
      %4272 = vmatprep.subr.bf16.mxu0 0
      %4273 = vmatpush1.bf16.msra.mxu0 %v3687
      %4274 = vmatprep.subr.bf16.mxu0 0
      %4275 = vmatpush1.bf16.msra.mxu0 %v3688
      %4276 = vmatprep.subr.bf16.mxu0 0
      %4277 = vmatpush1.bf16.msra.mxu0 %v3689
      %4278 = vmatprep.subr.bf16.mxu0 0
      %4279 = vmatpush1.bf16.msra.mxu0 %v3690
      %4280 = vmatprep.subr.bf16.mxu0 0
      %4281 = vmatpush1.bf16.msra.mxu0 %v3691
      %4282 = vmatprep.subr.bf16.mxu0 0
      %4283 = vmatpush1.bf16.msra.mxu0 %v3692
      %4284 = vmatprep.subr.bf16.mxu0 0
      %4285 = vmatpush1.bf16.msra.mxu0 %v3693
      %4286 = vmatprep.subr.bf16.mxu0 0
      %4287 = vmatpush1.bf16.msra.mxu0 %v3694
      %4288 = vmatprep.subr.bf16.mxu0 0
      %4289 = vmatpush1.bf16.msra.mxu0 %v3695
      %4290 = vmatprep.subr.bf16.mxu0 0
      %4291 = vmatpush1.bf16.msra.mxu0 %v3696
      %4292 = vmatprep.mubr.bf16.mxu0 %v3064
      %4293 = vmatmul.mubr.bf16.gmra.mrb[0].mxu0 %v3063
      %v4294 = vpop.f32.mrb[0].mxu0
      %v4295 = vadd.f32 %v4134, %v4294
      %v4296 = vpop.f32.mrb[0].mxu0
      %v4297 = vpop.f32.mrb[0].mxu0
      %v4298 = vadd.f32 %v4137, %v4297
      %v4299 = vpop.f32.mrb[0].mxu0
      %4300 = vmatprep.mubr.bf16.mxu0 %v3073
      %4301 = vmatmul.mubr.bf16.gmra.mrb[0].mxu0 %v3072
      %v4302 = vpop.f32.mrb[0].mxu0
      %v4303 = vadd.f32 %v4142, %v4302
      %v4304 = vpop.f32.mrb[0].mxu0
      %v4305 = vpop.f32.mrb[0].mxu0
      %v4306 = vadd.f32 %v4145, %v4305
      %v4307 = vpop.f32.mrb[0].mxu0
      %4308 = vmatprep.mubr.bf16.mxu0 %v3082
      %4309 = vmatmul.mubr.bf16.gmra.mrb[0].mxu0 %v3081
      %v4310 = vpop.f32.mrb[0].mxu0
      %v4311 = vadd.f32 %v4150, %v4310
      %v4312 = vpop.f32.mrb[0].mxu0
      %v4313 = vpop.f32.mrb[0].mxu0
      %v4314 = vadd.f32 %v4153, %v4313
      %v4315 = vpop.f32.mrb[0].mxu0
      %4316 = vmatprep.mubr.bf16.mxu0 %v3091
      %4317 = vmatmul.mubr.bf16.gmra.mrb[0].mxu0 %v3090
      %v4318 = vpop.f32.mrb[0].mxu0
      %v4319 = vadd.f32 %v4158, %v4318
      %v4320 = vpop.f32.mrb[0].mxu0
      %v4321 = vpop.f32.mrb[0].mxu0
      %v4322 = vadd.f32 %v4161, %v4321
      %v4323 = vpop.f32.mrb[0].mxu0
      %4324 = vmatprep.mubr.bf16.mxu0 %v3100
      %4325 = vmatmul.mubr.bf16.gmra.mrb[0].mxu0 %v3099
      %v4326 = vpop.f32.mrb[0].mxu0
      %v4327 = vadd.f32 %v4166, %v4326
      %v4328 = vpop.f32.mrb[0].mxu0
      %v4329 = vpop.f32.mrb[0].mxu0
      %v4330 = vadd.f32 %v4169, %v4329
      %v4331 = vpop.f32.mrb[0].mxu0
      %4332 = vmatprep.mubr.bf16.mxu0 %v3109
      %4333 = vmatmul.mubr.bf16.gmra.mrb[0].mxu0 %v3108
      %v4334 = vpop.f32.mrb[0].mxu0
      %v4335 = vadd.f32 %v4174, %v4334
      %v4336 = vpop.f32.mrb[0].mxu0
      %v4337 = vpop.f32.mrb[0].mxu0
      %v4338 = vadd.f32 %v4177, %v4337
      %v4339 = vpop.f32.mrb[0].mxu0
      %4340 = vmatprep.mubr.bf16.mxu0 %v3118
      %4341 = vmatmul.mubr.bf16.gmra.mrb[0].mxu0 %v3117
      %v4342 = vpop.f32.mrb[0].mxu0
      %v4343 = vadd.f32 %v4182, %v4342
      %v4344 = vpop.f32.mrb[0].mxu0
      %v4345 = vpop.f32.mrb[0].mxu0
      %v4346 = vadd.f32 %v4185, %v4345
      %v4347 = vpop.f32.mrb[0].mxu0
      %4348 = vmatprep.mubr.bf16.mxu0 %v3127
      %4349 = vmatmul.mubr.bf16.gmra.mrb[0].mxu0 %v3126
      %v4350 = vpop.f32.mrb[0].mxu0
      %v4351 = vadd.f32 %v4190, %v4350
      %v4352 = vpop.f32.mrb[0].mxu0
      %v4353 = vpop.f32.mrb[0].mxu0
      %v4354 = vadd.f32 %v4193, %v4353
      %v4355 = vpop.f32.mrb[0].mxu0
      %4356 = vmatprep.mubr.bf16.mxu0 %v3136
      %4357 = vmatmul.mubr.bf16.gmra.mrb[0].mxu0 %v3135
      %v4358 = vpop.f32.mrb[0].mxu0
      %v4359 = vadd.f32 %v4198, %v4358
      %v4360 = vpop.f32.mrb[0].mxu0
      %v4361 = vpop.f32.mrb[0].mxu0
      %v4362 = vadd.f32 %v4201, %v4361
      %v4363 = vpop.f32.mrb[0].mxu0
      %4364 = vmatprep.mubr.bf16.mxu0 %v3145
      %4365 = vmatmul.mubr.bf16.gmra.mrb[0].mxu0 %v3144
      %v4366 = vpop.f32.mrb[0].mxu0
      %v4367 = vadd.f32 %v4206, %v4366
      %v4368 = vpop.f32.mrb[0].mxu0
      %v4369 = vpop.f32.mrb[0].mxu0
      %v4370 = vadd.f32 %v4209, %v4369
      %v4371 = vpop.f32.mrb[0].mxu0
      %4372 = vmatprep.mubr.bf16.mxu0 %v3154
      %4373 = vmatmul.mubr.bf16.gmra.mrb[0].mxu0 %v3153
      %v4374 = vpop.f32.mrb[0].mxu0
      %v4375 = vadd.f32 %v4214, %v4374
      %v4376 = vpop.f32.mrb[0].mxu0
      %v4377 = vpop.f32.mrb[0].mxu0
      %v4378 = vadd.f32 %v4217, %v4377
      %v4379 = vpop.f32.mrb[0].mxu0
      %4380 = vmatprep.mubr.bf16.mxu0 %v3163
      %4381 = vmatmul.mubr.bf16.gmra.mrb[0].mxu0 %v3162
      %v4382 = vpop.f32.mrb[0].mxu0
      %v4383 = vadd.f32 %v4222, %v4382
      %v4384 = vpop.f32.mrb[0].mxu0
      %v4385 = vpop.f32.mrb[0].mxu0
      %v4386 = vadd.f32 %v4225, %v4385
      %v4387 = vpop.f32.mrb[0].mxu0
      %4388 = vmatprep.mubr.bf16.mxu0 %v3172
      %4389 = vmatmul.mubr.bf16.gmra.mrb[0].mxu0 %v3171
      %v4390 = vpop.f32.mrb[0].mxu0
      %v4391 = vadd.f32 %v4230, %v4390
      %v4392 = vpop.f32.mrb[0].mxu0
      %v4393 = vpop.f32.mrb[0].mxu0
      %v4394 = vadd.f32 %v4233, %v4393
      %v4395 = vpop.f32.mrb[0].mxu0
      %4396 = vmatprep.mubr.bf16.mxu0 %v3181
      %4397 = vmatmul.mubr.bf16.gmra.mrb[0].mxu0 %v3180
      %v4398 = vpop.f32.mrb[0].mxu0
      %v4399 = vadd.f32 %v4238, %v4398
      %v4400 = vpop.f32.mrb[0].mxu0
      %v4401 = vpop.f32.mrb[0].mxu0
      %v4402 = vadd.f32 %v4241, %v4401
      %v4403 = vpop.f32.mrb[0].mxu0
      %4404 = vmatprep.mubr.bf16.mxu0 %v3190
      %4405 = vmatmul.mubr.bf16.gmra.mrb[0].mxu0 %v3189
      %v4406 = vpop.f32.mrb[0].mxu0
      %v4407 = vadd.f32 %v4246, %v4406
      %v4408 = vpop.f32.mrb[0].mxu0
      %v4409 = vpop.f32.mrb[0].mxu0
      %v4410 = vadd.f32 %v4249, %v4409
      %v4411 = vpop.f32.mrb[0].mxu0
      %4412 = vmatprep.mubr.bf16.mxu0 %v3199
      %4413 = vmatmul.mubr.bf16.gmra.mrb[0].mxu0 %v3198
      %v4414 = vpop.f32.mrb[0].mxu0
      %v4415 = vadd.f32 %v4254, %v4414
      %v4416 = vpop.f32.mrb[0].mxu0
      %v4417 = vpop.f32.mrb[0].mxu0
      %v4418 = vadd.f32 %v4257, %v4417
      %v4419 = vpop.f32.mrb[0].mxu0
      %4420 = vdwg.mxu0
      %4421 = vmatprep.subr.bf16.mxu0 0
      %4422 = vmatpush1.bf16.msra.mxu0 %v3697
      %4423 = vmatprep.subr.bf16.mxu0 0
      %4424 = vmatpush1.bf16.msra.mxu0 %v3698
      %4425 = vmatprep.subr.bf16.mxu0 0
      %4426 = vmatpush1.bf16.msra.mxu0 %v3699
      %4427 = vmatprep.subr.bf16.mxu0 0
      %4428 = vmatpush1.bf16.msra.mxu0 %v3700
      %4429 = vmatprep.subr.bf16.mxu0 0
      %4430 = vmatpush1.bf16.msra.mxu0 %v3701
      %4431 = vmatprep.subr.bf16.mxu0 0
      %4432 = vmatpush1.bf16.msra.mxu0 %v3702
      %4433 = vmatprep.subr.bf16.mxu0 0
      %4434 = vmatpush1.bf16.msra.mxu0 %v3703
      %4435 = vmatprep.subr.bf16.mxu0 0
      %4436 = vmatpush1.bf16.msra.mxu0 %v3704
      %4437 = vmatprep.subr.bf16.mxu0 0
      %4438 = vmatpush1.bf16.msra.mxu0 0
      %4439 = vmatprep.subr.bf16.mxu0 0
      %4440 = vmatpush1.bf16.msra.mxu0 0
      %4441 = vmatprep.subr.bf16.mxu0 0
      %4442 = vmatpush1.bf16.msra.mxu0 0
      %4443 = vmatprep.subr.bf16.mxu0 0
      %4444 = vmatpush1.bf16.msra.mxu0 0
      %4445 = vmatprep.subr.bf16.mxu0 0
      %4446 = vmatpush1.bf16.msra.mxu0 0
      %4447 = vmatprep.subr.bf16.mxu0 0
      %4448 = vmatpush1.bf16.msra.mxu0 0
      %4449 = vmatprep.subr.bf16.mxu0 0
      %4450 = vmatpush1.bf16.msra.mxu0 0
      %4451 = vmatprep.subr.bf16.mxu0 0
      %4452 = vmatpush1.bf16.msra.mxu0 0
      %4453 = vmatprep.mubr.bf16.mxu0 0
      %4454 = vmatmul.mubr.bf16.gmra.mrb[0].mxu0 %v3065
      %v4455 = vpop.f32.mrb[0].mxu0
      %v4456 = vadd.f32 %v4295, %v4455
      %v4457 = vpop.f32.mrb[0].mxu0
      %v4458 = vpop.f32.mrb[0].mxu0
      %v4459 = vadd.f32 %v4298, %v4458
      %v4460 = vpop.f32.mrb[0].mxu0
      %4461 = vmatprep.mubr.bf16.mxu0 0
      %4462 = vmatmul.mubr.bf16.gmra.mrb[0].mxu0 %v3074
      %v4463 = vpop.f32.mrb[0].mxu0
      %v4464 = vadd.f32 %v4303, %v4463
      %v4465 = vpop.f32.mrb[0].mxu0
      %v4466 = vpop.f32.mrb[0].mxu0
      %v4467 = vadd.f32 %v4306, %v4466
      %v4468 = vpop.f32.mrb[0].mxu0
      %4469 = vmatprep.mubr.bf16.mxu0 0
      %4470 = vmatmul.mubr.bf16.gmra.mrb[0].mxu0 %v3083
      %v4471 = vpop.f32.mrb[0].mxu0
      %v4472 = vadd.f32 %v4311, %v4471
      %v4473 = vpop.f32.mrb[0].mxu0
      %v4474 = vpop.f32.mrb[0].mxu0
      %v4475 = vadd.f32 %v4314, %v4474
      %v4476 = vpop.f32.mrb[0].mxu0
      %4477 = vmatprep.mubr.bf16.mxu0 0
      %4478 = vmatmul.mubr.bf16.gmra.mrb[0].mxu0 %v3092
      %v4479 = vpop.f32.mrb[0].mxu0
      %v4480 = vadd.f32 %v4319, %v4479
      %v4481 = vpop.f32.mrb[0].mxu0
      %v4482 = vpop.f32.mrb[0].mxu0
      %v4483 = vadd.f32 %v4322, %v4482
      %v4484 = vpop.f32.mrb[0].mxu0
      %4485 = vmatprep.mubr.bf16.mxu0 0
      %4486 = vmatmul.mubr.bf16.gmra.mrb[0].mxu0 %v3101
      %v4487 = vpop.f32.mrb[0].mxu0
      %v4488 = vadd.f32 %v4327, %v4487
      %v4489 = vpop.f32.mrb[0].mxu0
      %v4490 = vpop.f32.mrb[0].mxu0
      %v4491 = vadd.f32 %v4330, %v4490
      %v4492 = vpop.f32.mrb[0].mxu0
      %4493 = vmatprep.mubr.bf16.mxu0 0
      %4494 = vmatmul.mubr.bf16.gmra.mrb[0].mxu0 %v3110
      %v4495 = vpop.f32.mrb[0].mxu0
      %v4496 = vadd.f32 %v4335, %v4495
      %v4497 = vpop.f32.mrb[0].mxu0
      %v4498 = vpop.f32.mrb[0].mxu0
      %v4499 = vadd.f32 %v4338, %v4498
      %v4500 = vpop.f32.mrb[0].mxu0
      %4501 = vmatprep.mubr.bf16.mxu0 0
      %4502 = vmatmul.mubr.bf16.gmra.mrb[0].mxu0 %v3119
      %v4503 = vpop.f32.mrb[0].mxu0
      %v4504 = vadd.f32 %v4343, %v4503
      %v4505 = vpop.f32.mrb[0].mxu0
      %v4506 = vpop.f32.mrb[0].mxu0
      %v4507 = vadd.f32 %v4346, %v4506
      %v4508 = vpop.f32.mrb[0].mxu0
      %4509 = vmatprep.mubr.bf16.mxu0 0
      %4510 = vmatmul.mubr.bf16.gmra.mrb[0].mxu0 %v3128
      %v4511 = vpop.f32.mrb[0].mxu0
      %v4512 = vadd.f32 %v4351, %v4511
      %v4513 = vpop.f32.mrb[0].mxu0
      %v4514 = vpop.f32.mrb[0].mxu0
      %v4515 = vadd.f32 %v4354, %v4514
      %v4516 = vpop.f32.mrb[0].mxu0
      %4517 = vmatprep.mubr.bf16.mxu0 0
      %4518 = vmatmul.mubr.bf16.gmra.mrb[0].mxu0 %v3137
      %v4519 = vpop.f32.mrb[0].mxu0
      %v4520 = vadd.f32 %v4359, %v4519
      %v4521 = vpop.f32.mrb[0].mxu0
      %v4522 = vpop.f32.mrb[0].mxu0
      %v4523 = vadd.f32 %v4362, %v4522
      %v4524 = vpop.f32.mrb[0].mxu0
      %4525 = vmatprep.mubr.bf16.mxu0 0
      %4526 = vmatmul.mubr.bf16.gmra.mrb[0].mxu0 %v3146
      %v4527 = vpop.f32.mrb[0].mxu0
      %v4528 = vadd.f32 %v4367, %v4527
      %v4529 = vpop.f32.mrb[0].mxu0
      %v4530 = vpop.f32.mrb[0].mxu0
      %v4531 = vadd.f32 %v4370, %v4530
      %v4532 = vpop.f32.mrb[0].mxu0
      %4533 = vmatprep.mubr.bf16.mxu0 0
      %4534 = vmatmul.mubr.bf16.gmra.mrb[0].mxu0 %v3155
      %v4535 = vpop.f32.mrb[0].mxu0
      %v4536 = vadd.f32 %v4375, %v4535
      %v4537 = vpop.f32.mrb[0].mxu0
      %v4538 = vpop.f32.mrb[0].mxu0
      %v4539 = vadd.f32 %v4378, %v4538
      %v4540 = vpop.f32.mrb[0].mxu0
      %4541 = vmatprep.mubr.bf16.mxu0 0
      %4542 = vmatmul.mubr.bf16.gmra.mrb[0].mxu0 %v3164
      %v4543 = vpop.f32.mrb[0].mxu0
      %v4544 = vadd.f32 %v4383, %v4543
      %v4545 = vpop.f32.mrb[0].mxu0
      %v4546 = vpop.f32.mrb[0].mxu0
      %v4547 = vadd.f32 %v4386, %v4546
      %v4548 = vpop.f32.mrb[0].mxu0
      %4549 = vmatprep.mubr.bf16.mxu0 0
      %4550 = vmatmul.mubr.bf16.gmra.mrb[0].mxu0 %v3173
      %v4551 = vpop.f32.mrb[0].mxu0
      %v4552 = vadd.f32 %v4391, %v4551
      %v4553 = vpop.f32.mrb[0].mxu0
      %v4554 = vpop.f32.mrb[0].mxu0
      %v4555 = vadd.f32 %v4394, %v4554
      %v4556 = vpop.f32.mrb[0].mxu0
      %4557 = vmatprep.mubr.bf16.mxu0 0
      %4558 = vmatmul.mubr.bf16.gmra.mrb[0].mxu0 %v3182
      %v4559 = vpop.f32.mrb[0].mxu0
      %v4560 = vadd.f32 %v4399, %v4559
      %v4561 = vpop.f32.mrb[0].mxu0
      %v4562 = vpop.f32.mrb[0].mxu0
      %v4563 = vadd.f32 %v4402, %v4562
      %v4564 = vpop.f32.mrb[0].mxu0
      %4565 = vmatprep.mubr.bf16.mxu0 0
      %4566 = vmatmul.mubr.bf16.gmra.mrb[0].mxu0 %v3191
      %v4567 = vpop.f32.mrb[0].mxu0
      %v4568 = vadd.f32 %v4407, %v4567
      %v4569 = vpop.f32.mrb[0].mxu0
      %v4570 = vpop.f32.mrb[0].mxu0
      %v4571 = vadd.f32 %v4410, %v4570
      %v4572 = vpop.f32.mrb[0].mxu0
      %4573 = vmatprep.mubr.bf16.mxu0 0
      %4574 = vmatmul.mubr.bf16.gmra.mrb[0].mxu0 %v3200
      %v4575 = vpop.f32.mrb[0].mxu0
      %v4576 = vadd.f32 %v4415, %v4575
      %v4577 = vpop.f32.mrb[0].mxu0
      %v4578 = vpop.f32.mrb[0].mxu0
      %v4579 = vadd.f32 %v4418, %v4578
      %v4580 = vpop.f32.mrb[0].mxu0
      %4581 = vdwg.mxu0
      %v4582 = vpack.c.bf16 %v4459, %v4456
      %v4583 = vpack.c.bf16 %v4467, %v4464
      %v4584 = vpack.c.bf16 %v4475, %v4472
      %v4585 = vpack.c.bf16 %v4483, %v4480
      %v4586 = vpack.c.bf16 %v4491, %v4488
      %v4587 = vpack.c.bf16 %v4499, %v4496
      %v4588 = vpack.c.bf16 %v4507, %v4504
      %v4589 = vpack.c.bf16 %v4515, %v4512
      %v4590 = vpack.c.bf16 %v4523, %v4520
      %v4591 = vpack.c.bf16 %v4531, %v4528
      %v4592 = vpack.c.bf16 %v4539, %v4536
      %v4593 = vpack.c.bf16 %v4547, %v4544
      %v4594 = vpack.c.bf16 %v4555, %v4552
      %v4595 = vpack.c.bf16 %v4563, %v4560
      %v4596 = vpack.c.bf16 %v4571, %v4568
      %v4597 = vpack.c.bf16 %v4579, %v4576
      %v4614 = vunpack.c.l.b16 %v4582
      %v4615 = vunpack.c.h.b16 %v4582
      %v4616 = vunpack.c.l.b16 %v4583
      %v4617 = vunpack.c.h.b16 %v4583
      %v4618 = vunpack.c.l.b16 %v4584
      %v4619 = vunpack.c.h.b16 %v4584
      %v4620 = vunpack.c.l.b16 %v4585
      %v4621 = vunpack.c.h.b16 %v4585
      %v4622 = vunpack.c.l.b16 %v4586
      %v4623 = vunpack.c.h.b16 %v4586
      %v4624 = vunpack.c.l.b16 %v4587
      %v4625 = vunpack.c.h.b16 %v4587
      %v4626 = vunpack.c.l.b16 %v4588
      %v4627 = vunpack.c.h.b16 %v4588
      %v4628 = vunpack.c.l.b16 %v4589
      %v4629 = vunpack.c.h.b16 %v4589
      %v4630 = vunpack.c.l.b16 %v4590
      %v4631 = vunpack.c.h.b16 %v4590
      %v4632 = vunpack.c.l.b16 %v4591
      %v4633 = vunpack.c.h.b16 %v4591
      %v4634 = vunpack.c.l.b16 %v4592
      %v4635 = vunpack.c.h.b16 %v4592
      %v4636 = vunpack.c.l.b16 %v4593
      %v4637 = vunpack.c.h.b16 %v4593
      %v4638 = vunpack.c.l.b16 %v4594
      %v4639 = vunpack.c.h.b16 %v4594
      %v4640 = vunpack.c.l.b16 %v4595
      %v4641 = vunpack.c.h.b16 %v4595
      %v4642 = vunpack.c.l.b16 %v4596
      %v4643 = vunpack.c.h.b16 %v4596
      %v4644 = vunpack.c.l.b16 %v4597
      %v4645 = vunpack.c.h.b16 %v4597
      %v4646 = vpack.c.b16 %v4614, %v4614
      %v4647 = vpack.c.b16 %v4615, %v4615
      %v4648 = vpack.c.b16 %v4616, %v4616
      %v4649 = vpack.c.b16 %v4617, %v4617
      %v4650 = vpack.c.b16 %v4618, %v4618
      %v4651 = vpack.c.b16 %v4619, %v4619
      %v4652 = vpack.c.b16 %v4620, %v4620
      %v4653 = vpack.c.b16 %v4621, %v4621
      %v4654 = vpack.c.b16 %v4622, %v4622
      %v4655 = vpack.c.b16 %v4623, %v4623
      %v4656 = vpack.c.b16 %v4624, %v4624
      %v4657 = vpack.c.b16 %v4625, %v4625
      %v4658 = vpack.c.b16 %v4626, %v4626
      %v4659 = vpack.c.b16 %v4627, %v4627
      %v4660 = vpack.c.b16 %v4628, %v4628
      %v4661 = vpack.c.b16 %v4629, %v4629
      %v4662 = vpack.c.b16 %v4630, %v4630
      %v4663 = vpack.c.b16 %v4631, %v4631
      %v4664 = vpack.c.b16 %v4632, %v4632
      %v4665 = vpack.c.b16 %v4633, %v4633
      %v4666 = vpack.c.b16 %v4634, %v4634
      %v4667 = vpack.c.b16 %v4635, %v4635
      %v4668 = vpack.c.b16 %v4636, %v4636
      %v4669 = vpack.c.b16 %v4637, %v4637
      %v4670 = vpack.c.b16 %v4638, %v4638
      %v4671 = vpack.c.b16 %v4639, %v4639
      %v4672 = vpack.c.b16 %v4640, %v4640
      %v4673 = vpack.c.b16 %v4641, %v4641
      %v4674 = vpack.c.b16 %v4642, %v4642
      %v4675 = vpack.c.b16 %v4643, %v4643
      %v4676 = vpack.c.b16 %v4644, %v4644
      %v4677 = vpack.c.b16 %v4645, %v4645
      %4710 = vst [vmem:[%s287] sm:$0xf] %v4646
      %4711 = vst [vmem:[%s287 + $0x4] sm:$0xf] %v4647
      %4712 = vst [vmem:[%s287 + $0x8] sm:$0xf] %v4648
      %4713 = vst [vmem:[%s287 + $0xc] sm:$0xf] %v4649
      %4714 = vst [vmem:[%s287 + $0x10] sm:$0xf] %v4650
      %4715 = vst [vmem:[%s287 + $0x14] sm:$0xf] %v4651
      %4716 = vst [vmem:[%s287 + $0x18] sm:$0xf] %v4652
      %4717 = vst [vmem:[%s287 + $0x1c] sm:$0xf] %v4653
      %4718 = vst [vmem:[%s287 + $0x20] sm:$0xf] %v4654
      %4719 = vst [vmem:[%s287 + $0x24] sm:$0xf] %v4655
      %4720 = vst [vmem:[%s287 + $0x28] sm:$0xf] %v4656
      %4721 = vst [vmem:[%s287 + $0x2c] sm:$0xf] %v4657
      %4722 = vst [vmem:[%s287 + $0x30] sm:$0xf] %v4658
      %4723 = vst [vmem:[%s287 + $0x34] sm:$0xf] %v4659
      %4724 = vst [vmem:[%s287 + $0x38] sm:$0xf] %v4660
      %4725 = vst [vmem:[%s287 + $0x3c] sm:$0xf] %v4661
      %4726 = vst [vmem:[%s287 + $0x40] sm:$0xf] %v4662
      %4727 = vst [vmem:[%s287 + $0x44] sm:$0xf] %v4663
      %4728 = vst [vmem:[%s287 + $0x48] sm:$0xf] %v4664
      %4729 = vst [vmem:[%s287 + $0x4c] sm:$0xf] %v4665
      %4730 = vst [vmem:[%s287 + $0x50] sm:$0xf] %v4666
      %4731 = vst [vmem:[%s287 + $0x54] sm:$0xf] %v4667
      %4732 = vst [vmem:[%s287 + $0x58] sm:$0xf] %v4668
      %4733 = vst [vmem:[%s287 + $0x5c] sm:$0xf] %v4669
      %4734 = vst [vmem:[%s287 + $0x60] sm:$0xf] %v4670
      %4735 = vst [vmem:[%s287 + $0x64] sm:$0xf] %v4671
      %4736 = vst [vmem:[%s287 + $0x68] sm:$0xf] %v4672
      %4737 = vst [vmem:[%s287 + $0x6c] sm:$0xf] %v4673
      %4738 = vst [vmem:[%s287 + $0x70] sm:$0xf] %v4674
      %4739 = vst [vmem:[%s287 + $0x74] sm:$0xf] %v4675
      %4740 = vst [vmem:[%s287 + $0x78] sm:$0xf] %v4676
      %4741 = vst [vmem:[%s287 + $0x7c] sm:$0xf] %v4677
      %p4742 = scmp.eq.s32.totalorder %s23, 0
      // Predicated region
      $region37: #{block_forward.5} parent=35 // pred_check
        %p4743 = pneg %p4742
      $region38: #{block_forward.5} parent=35 // pred_check_branch
        %4745 = sbr.rel (%p4743) target = $region40
      $region39: #{block_forward.5} parent=35 // pred_region
        %4746 = vst [vmem:[%s292] sm:$0xff] 0.0
        %4747 = vst [vmem:[%s296] sm:$0xff] 0.0
      $region40: #{block_forward.5} parent=35 // pred_fallthru
        _
      %v4748 = vld [vmem:[%s292] sm:$0xff]
      %v4749 = vadd.f32 %v4456, %v4459
      %v4750 = vadd.f32 %v4749, %v4464
      %v4751 = vadd.f32 %v4750, %v4467
      %v4752 = vadd.f32 %v4751, %v4472
      %v4753 = vadd.f32 %v4752, %v4475
      %v4754 = vadd.f32 %v4753, %v4480
      %v4755 = vadd.f32 %v4754, %v4483
      %v4756 = vadd.f32 %v4755, %v4488
      %v4757 = vadd.f32 %v4756, %v4491
      %v4758 = vadd.f32 %v4757, %v4496
      %v4759 = vadd.f32 %v4758, %v4499
      %v4760 = vadd.f32 %v4759, %v4504
      %v4761 = vadd.f32 %v4760, %v4507
      %v4762 = vadd.f32 %v4761, %v4512
      %v4763 = vadd.f32 %v4762, %v4515
      %v4764 = vadd.f32 %v4763, %v4520
      %v4765 = vadd.f32 %v4764, %v4523
      %v4766 = vadd.f32 %v4765, %v4528
      %v4767 = vadd.f32 %v4766, %v4531
      %v4768 = vadd.f32 %v4767, %v4536
      %v4769 = vadd.f32 %v4768, %v4539
      %v4770 = vadd.f32 %v4769, %v4544
      %v4771 = vadd.f32 %v4770, %v4547
      %v4772 = vadd.f32 %v4771, %v4552
      %v4773 = vadd.f32 %v4772, %v4555
      %v4774 = vadd.f32 %v4773, %v4560
      %v4775 = vadd.f32 %v4774, %v4563
      %v4776 = vadd.f32 %v4775, %v4568
      %v4777 = vadd.f32 %v4776, %v4571
      %v4778 = vadd.f32 %v4777, %v4576
      %v4779 = vadd.f32 %v4778, %v4579
      %v4780 = vadd.f32 %v4748, %v4779
      %4781 = vst [vmem:[%s292] sm:$0xff] %v4780
      %v4782 = vld [vmem:[%s296] sm:$0xff]
      %v4783 = vmul.f32 %v4456, %v4456
      %v4784 = vmul.f32 %v4459, %v4459
      %v4785 = vmul.f32 %v4464, %v4464
      %v4786 = vmul.f32 %v4467, %v4467
      %v4787 = vmul.f32 %v4472, %v4472
      %v4788 = vmul.f32 %v4475, %v4475
      %v4789 = vmul.f32 %v4480, %v4480
      %v4790 = vmul.f32 %v4483, %v4483
      %v4791 = vmul.f32 %v4488, %v4488
      %v4792 = vmul.f32 %v4491, %v4491
      %v4793 = vmul.f32 %v4496, %v4496
      %v4794 = vmul.f32 %v4499, %v4499
      %v4795 = vmul.f32 %v4504, %v4504
      %v4796 = vmul.f32 %v4507, %v4507
      %v4797 = vmul.f32 %v4512, %v4512
      %v4798 = vmul.f32 %v4515, %v4515
      %v4799 = vmul.f32 %v4520, %v4520
      %v4800 = vmul.f32 %v4523, %v4523
      %v4801 = vmul.f32 %v4528, %v4528
      %v4802 = vmul.f32 %v4531, %v4531
      %v4803 = vmul.f32 %v4536, %v4536
      %v4804 = vmul.f32 %v4539, %v4539
      %v4805 = vmul.f32 %v4544, %v4544
      %v4806 = vmul.f32 %v4547, %v4547
      %v4807 = vmul.f32 %v4552, %v4552
      %v4808 = vmul.f32 %v4555, %v4555
      %v4809 = vmul.f32 %v4560, %v4560
      %v4810 = vmul.f32 %v4563, %v4563
      %v4811 = vmul.f32 %v4568, %v4568
      %v4812 = vmul.f32 %v4571, %v4571
      %v4813 = vmul.f32 %v4576, %v4576
      %v4814 = vmul.f32 %v4579, %v4579
      %v4815 = vadd.f32 %v4783, %v4784
      %v4816 = vadd.f32 %v4815, %v4785
      %v4817 = vadd.f32 %v4816, %v4786
      %v4818 = vadd.f32 %v4817, %v4787
      %v4819 = vadd.f32 %v4818, %v4788
      %v4820 = vadd.f32 %v4819, %v4789
      %v4821 = vadd.f32 %v4820, %v4790
      %v4822 = vadd.f32 %v4821, %v4791
      %v4823 = vadd.f32 %v4822, %v4792
      %v4824 = vadd.f32 %v4823, %v4793
      %v4825 = vadd.f32 %v4824, %v4794
      %v4826 = vadd.f32 %v4825, %v4795
      %v4827 = vadd.f32 %v4826, %v4796
      %v4828 = vadd.f32 %v4827, %v4797
      %v4829 = vadd.f32 %v4828, %v4798
      %v4830 = vadd.f32 %v4829, %v4799
      %v4831 = vadd.f32 %v4830, %v4800
      %v4832 = vadd.f32 %v4831, %v4801
      %v4833 = vadd.f32 %v4832, %v4802
      %v4834 = vadd.f32 %v4833, %v4803
      %v4835 = vadd.f32 %v4834, %v4804
      %v4836 = vadd.f32 %v4835, %v4805
      %v4837 = vadd.f32 %v4836, %v4806
      %v4838 = vadd.f32 %v4837, %v4807
      %v4839 = vadd.f32 %v4838, %v4808
      %v4840 = vadd.f32 %v4839, %v4809
      %v4841 = vadd.f32 %v4840, %v4810
      %v4842 = vadd.f32 %v4841, %v4811
      %v4843 = vadd.f32 %v4842, %v4812
      %v4844 = vadd.f32 %v4843, %v4813
      %v4845 = vadd.f32 %v4844, %v4814
      %v4846 = vadd.f32 %v4782, %v4845
      %4847 = vst [vmem:[%s296] sm:$0xff] %v4846
      %s4848 = sadd.s32 %s22, %s23
      %p4849 = scmp.lt.s32.totalorder %s4848, 1
      %s4850 = scalar_select %p4849, %s4848, 1
      %s4851 = smul.addr %s4850, 32
      %s4852 = smul.addr %s4851, 4
      %s4853 = scalar_lea.vmem %s4, %s4852
      %p4854 = scmp.lt.s32.totalorder %s22, 1
      %s4855 = scalar_select %p4854, %s22, 1
      %s4856 = smul.addr %s4855, 8
      %s4857 = scalar_lea.vmem %s5, %s4856
      %p4858 = scmp.lt.s32.totalorder %s22, 1
      %s4859 = scalar_select %p4858, %s22, 1
      %s4860 = smul.addr %s4859, 8
      %s4861 = scalar_lea.vmem %s6, %s4860
      // Predicated region
      $region41: #{block_forward.5} parent=35 // pred_check
        %p4862 = pneg %p141
      $region42: #{block_forward.5} parent=35 // pred_check_branch
        %4864 = sbr.rel (%p4862) target = $region44
      $region43: #{block_forward.5} parent=35 // pred_region
        %s4865 = sadd.s32 %s22, %s23
      $region44: #{block_forward.5} parent=35 // pred_fallthru
        _
      // Predicated region
      $region45: #{block_forward.5} parent=35 // pred_check
        %p4866 = pneg %p167
      $region46: #{block_forward.5} parent=35 // pred_check_branch
        %4868 = sbr.rel (%p4866) target = $region48
      $region47: #{block_forward.5} parent=35 // pred_region
        _
      $region48: #{block_forward.5} parent=35 // pred_fallthru
        _
      // Predicated region
      $region49: #{block_forward.5} parent=35 // pred_check
        %p4869 = pneg %p193
      $region50: #{block_forward.5} parent=35 // pred_check_branch
        %4871 = sbr.rel (%p4869) target = $region52
      $region51: #{block_forward.5} parent=35 // pred_region
        _
      $region52: #{block_forward.5} parent=35 // pred_fallthru
        _
    $region36: #{block_forward.5} parent=5 // pred_fallthru
      _
    %p4872 = scmp.le.s32.totalorder 2, %s13
    // Predicated region
    $region53: #{block_forward.5} parent=5 // pred_check
      %p4873 = pneg %p4872
    $region54: #{block_forward.5} parent=5 // pred_check_branch
      %4875 = sbr.rel (%p4873) target = $region56
    $region55: #{block_forward.5} parent=5 // pred_region
      %s4876 = ssub.s32 %s13, 2
      // Predicated region
      $region57: #{block_forward.5} parent=55 // pred_check
        %p4877 = pneg %p147
      $region58: #{block_forward.5} parent=55 // pred_check_branch
        %4879 = sbr.rel (%p4877) target = $region60
      $region59: #{block_forward.5} parent=55 // pred_region
        %s4880 = sadd.s32 %s24, %s25
        %p4881 = scmp.lt.s32.totalorder %s4880, 1
        %s4882 = scalar_select %p4881, %s4880, 1
        %s4883 = smul.addr %s4882, 32
        %s4884 = smul.addr %s4883, 4
        %s4885 = scalar_lea.vmem %s4, %s4884
      $region60: #{block_forward.5} parent=55 // pred_fallthru
        _
      // Predicated region
      $region61: #{block_forward.5} parent=55 // pred_check
        %p4886 = pneg %p173
      $region62: #{block_forward.5} parent=55 // pred_check_branch
        %4888 = sbr.rel (%p4886) target = $region64
      $region63: #{block_forward.5} parent=55 // pred_region
        %p4889 = scmp.lt.s32.totalorder %s24, 1
        %s4890 = scalar_select %p4889, %s24, 1
        %s4891 = smul.addr %s4890, 8
        %s4892 = scalar_lea.vmem %s5, %s4891
      $region64: #{block_forward.5} parent=55 // pred_fallthru
        _
      // Predicated region
      $region65: #{block_forward.5} parent=55 // pred_check
        %p4893 = pneg %p199
      $region66: #{block_forward.5} parent=55 // pred_check_branch
        %4895 = sbr.rel (%p4893) target = $region68
      $region67: #{block_forward.5} parent=55 // pred_region
        %p4896 = scmp.lt.s32.totalorder %s24, 1
        %s4897 = scalar_select %p4896, %s24, 1
        %s4898 = smul.addr %s4897, 8
        %s4899 = scalar_lea.vmem %s6, %s4898
      $region68: #{block_forward.5} parent=55 // pred_fallthru
        _
    $region56: #{block_forward.5} parent=5 // pred_fallthru
      _
  $region6: #{block_forward.5} parent=0 // loop_footer
    %s17 = sadd.s32 1, %s13
  $region7: #{block_forward.5} parent=0 // loop_footer_branch
    %12 = sbr.rel target = $region3
  $region8: #{block_forward.5} parent=0 // loop_exit
    _

</llo_original>
